<compile_context>
chip_gen: v7x
topology: tpu7x:2x2x1
jax: 0.10.0
libtpu: 0.0.40
codegen_flags: <defaults>
</compile_context>

<pallas_src>
import math
import functools

import jax
import jax.numpy as jnp
from jax.experimental import pallas as pl
from jax.experimental.pallas import tpu as pltpu

_LN_EPS = 1e-5


def _detect_vmem_bytes():
    try:
        return int(pltpu.get_tpu_info().vmem_capacity_bytes)
    except Exception:
        return 64 * 1024 * 1024          # conservative (v7x-class) fallback


_VMEM_BYTES = _detect_vmem_bytes()
_BIG_VMEM = _VMEM_BYTES >= 128 * 1024 * 1024           # v5e / v6e
_ROW_TILE_CAP = 1024 if _BIG_VMEM else 512              # v7x (64 MiB): stay modest
_VMEM_LIMIT = (100 * 1024 * 1024) if _BIG_VMEM else (48 * 1024 * 1024)


def _row_tile(m):
    return m if m <= _ROW_TILE_CAP else _ROW_TILE_CAP


def _layernorm(z, g, b, eps):
    mu = jnp.mean(z, axis=-1, keepdims=True)
    var = jnp.mean((z - mu) ** 2, axis=-1, keepdims=True)
    return (z - mu) * jax.lax.rsqrt(var + eps) * g + b


# ----------------------- fused self-attention + norm2 -----------------------

def _self_attn_kernel(tgt_ref, pos_ref, wq_ref, bq_ref, wk_ref, bk_ref,
                      wv_ref, bv_ref, wo_ref, bo_ref, g_ref, bb_ref,
                      o_ref, acc_ref, *, scale, eps):
    h = pl.program_id(1)

    @pl.when(h == 0)
    def _():
        acc_ref[...] = jnp.zeros_like(acc_ref)

    tgt = tgt_ref[0]                                  # (L, d)
    x = tgt + pos_ref[0]                              # q = k = tgt + query_pos
    q = jnp.dot(x, wq_ref[0], preferred_element_type=jnp.float32) + bq_ref[0]
    k = jnp.dot(x, wk_ref[0], preferred_element_type=jnp.float32) + bk_ref[0]
    v = jnp.dot(tgt, wv_ref[0], preferred_element_type=jnp.float32) + bv_ref[0]

    # single small (L, hd) operand transpose per grid step (XLU has slack here)
    s = jnp.einsum("qd,kd->qk", q, k, preferred_element_type=jnp.float32) * scale
    s = s - jnp.max(s, axis=-1, keepdims=True)
    p = jnp.exp(s)
    p = p * pl.reciprocal(jnp.sum(p, axis=-1, keepdims=True), approx=True)
    av = jnp.dot(p, v, preferred_element_type=jnp.float32)           # (L, hd)
    acc_ref[...] += jnp.dot(av, wo_ref[0], preferred_element_type=jnp.float32)

    @pl.when(h == pl.num_programs(1) - 1)
    def _():
        z = tgt.astype(jnp.float32) + acc_ref[...] + bo_ref[...]     # dropout2 = id
        o_ref[0] = _layernorm(z, g_ref[...], bb_ref[...], eps).astype(o_ref.dtype)


def pallas_self_attn_block(p, tgt, query_pos, n_heads, gamma, beta, eps=_LN_EPS):
    B, L, d = tgt.shape
    hd = d // n_heads
    scale = 1.0 / math.sqrt(hd)
    return pl.pallas_call(
        functools.partial(_self_attn_kernel, scale=scale, eps=eps),
        out_shape=jax.ShapeDtypeStruct((B, L, d), tgt.dtype),
        grid=(B, n_heads),
        in_specs=[
            pl.BlockSpec((1, L, d), lambda b, h: (b, 0, 0)),
            pl.BlockSpec((1, L, d), lambda b, h: (b, 0, 0)),
            pl.BlockSpec((1, d, hd), lambda b, h: (h, 0, 0)),
            pl.BlockSpec((1, 1, hd), lambda b, h: (h, 0, 0)),
            pl.BlockSpec((1, d, hd), lambda b, h: (h, 0, 0)),
            pl.BlockSpec((1, 1, hd), lambda b, h: (h, 0, 0)),
            pl.BlockSpec((1, d, hd), lambda b, h: (h, 0, 0)),
            pl.BlockSpec((1, 1, hd), lambda b, h: (h, 0, 0)),
            pl.BlockSpec((1, hd, d), lambda b, h: (h, 0, 0)),
            pl.BlockSpec((1, d), lambda b, h: (0, 0)),
            pl.BlockSpec((1, d), lambda b, h: (0, 0)),
            pl.BlockSpec((1, d), lambda b, h: (0, 0)),
        ],
        out_specs=pl.BlockSpec((1, L, d), lambda b, h: (b, 0, 0)),
        scratch_shapes=[pltpu.VMEM((L, d), jnp.float32)],
        compiler_params=pltpu.CompilerParams(
            dimension_semantics=("parallel", "arbitrary"),
            vmem_limit_bytes=_VMEM_LIMIT),
    )(tgt, query_pos, p["wq"], p["bq"], p["wk"], p["bk"], p["wv"], p["bv"],
      p["wo"], p["bo"].reshape(1, d), gamma.reshape(1, d), beta.reshape(1, d))


# ------------- fused dual value projection (one pass over src) -------------

def _dual_linear_kernel(x_ref, w1_ref, b1_ref, w2_ref, b2_ref, o1_ref, o2_ref):
    x = x_ref[...]
    o1_ref[...] = (jnp.dot(x, w1_ref[...], preferred_element_type=jnp.float32)
                   + b1_ref[...]).astype(o1_ref.dtype)
    o2_ref[...] = (jnp.dot(x, w2_ref[...], preferred_element_type=jnp.float32)
                   + b2_ref[...]).astype(o2_ref.dtype)


def pallas_dual_linear(x, w1, b1, w2, b2):
    """(x @ w1 + b1, x @ w2 + b2) with a single pass over x (largest activation)."""
    M, K = x.shape
    N1, N2 = w1.shape[1], w2.shape[1]
    TM = _row_tile(M)
    return pl.pallas_call(
        _dual_linear_kernel,
        out_shape=(jax.ShapeDtypeStruct((M, N1), x.dtype),
                   jax.ShapeDtypeStruct((M, N2), x.dtype)),
        grid=(pl.cdiv(M, TM),),
        in_specs=[
            pl.BlockSpec((TM, K), lambda i: (i, 0)),
            pl.BlockSpec((K, N1), lambda i: (0, 0)),
            pl.BlockSpec((1, N1), lambda i: (0, 0)),
            pl.BlockSpec((K, N2), lambda i: (0, 0)),
            pl.BlockSpec((1, N2), lambda i: (0, 0)),
        ],
        out_specs=(pl.BlockSpec((TM, N1), lambda i: (i, 0)),
                   pl.BlockSpec((TM, N2), lambda i: (i, 0))),
        compiler_params=pltpu.CompilerParams(
            dimension_semantics=("parallel",), vmem_limit_bytes=_VMEM_LIMIT),
    )(x, w1, b1.reshape(1, N1), w2, b2.reshape(1, N2))


# ------ fused sampling proj + softmax + sampling-locations + corner math ------

def _sampling_kernel(q_ref, rx_ref, ry_ref, w_ref, b_ref,
                     lw_ref, lh_ref, ls_ref, hc_ref, grp_ref,
                     idx_ref, wts_ref, *, hlp, n_heads):
    proj = jnp.dot(q_ref[0], w_ref[0], preferred_element_type=jnp.float32) + b_ref[0]
    offx = proj[:, :hlp]
    offy = proj[:, hlp:2 * hlp]
    logits = proj[:, 2 * hlp:]

    # per-head softmax over (levels x points): row-max shift (softmax is shift
    # invariant) + block-diagonal group-sum matmul => no in-kernel reshapes.
    logits = logits - jnp.max(logits, axis=-1, keepdims=True)
    e = jnp.exp(logits)
    denom = jnp.dot(e, grp_ref[...], preferred_element_type=jnp.float32)
    aw = e * pl.reciprocal(denom, approx=True)

    Wc, Hc, Sc, hc = lw_ref[...], lh_ref[...], ls_ref[...], hc_ref[...]

    # grid_sample(align_corners=False) pixel coords: ref*W + off - 0.5 (precomputed
    # refx/refy already hold ref*W - 0.5).
    px = offx + rx_ref[0]
    py = offy + ry_ref[0]
    x0 = jnp.floor(px)
    y0 = jnp.floor(py)
    x1 = x0 + 1.0
    y1 = y0 + 1.0
    wx1 = px - x0
    wx0 = 1.0 - wx1
    wy1 = py - y0
    wy0 = 1.0 - wy1

    idxs, ws = [], []
    for cx, cy, cw in ((x0, y0, wx0 * wy0), (x1, y0, wx1 * wy0),
                       (x0, y1, wx0 * wy1), (x1, y1, wx1 * wy1)):
        valid = (cx >= 0.0) & (cx <= Wc - 1.0) & (cy >= 0.0) & (cy <= Hc - 1.0)
        xi = jnp.clip(cx, 0.0, Wc - 1.0)
        yi = jnp.clip(cy, 0.0, Hc - 1.0)
        base = Sc + yi * Wc + xi                      # row into flattened value
        idxs.append(base * float(n_heads) + hc)       # row into (Len_in*nH) layout
        ws.append(jnp.where(valid, cw, 0.0) * aw)     # bilinear * zero-pad * softmax
    idx_ref[0] = jnp.concatenate(idxs, axis=-1).astype(jnp.int32)
    wts_ref[0] = jnp.concatenate(ws, axis=-1).astype(wts_ref.dtype)


def pallas_sampling(q, rx, ry, w, b, lvl_w, lvl_h, lvl_s, hcol, grp, *, n_heads, hlp):
    S, Mr, d = q.shape
    TM = _row_tile(Mr)
    return pl.pallas_call(
        functools.partial(_sampling_kernel, hlp=hlp, n_heads=n_heads),
        out_shape=(jax.ShapeDtypeStruct((S, Mr, 4 * hlp), jnp.int32),
                   jax.ShapeDtypeStruct((S, Mr, 4 * hlp), jnp.float32)),
        grid=(S, pl.cdiv(Mr, TM)),
        in_specs=[
            pl.BlockSpec((1, TM, d), lambda s, i: (s, i, 0)),
            pl.BlockSpec((1, TM, hlp), lambda s, i: (s, i, 0)),
            pl.BlockSpec((1, TM, hlp), lambda s, i: (s, i, 0)),
            pl.BlockSpec((1, d, 3 * hlp), lambda s, i: (s, 0, 0)),
            pl.BlockSpec((1, 1, 3 * hlp), lambda s, i: (s, 0, 0)),
            pl.BlockSpec((1, hlp), lambda s, i: (0, 0)),
            pl.BlockSpec((1, hlp), lambda s, i: (0, 0)),
            pl.BlockSpec((1, hlp), lambda s, i: (0, 0)),
            pl.BlockSpec((1, hlp), lambda s, i: (0, 0)),
            pl.BlockSpec((hlp, hlp), lambda s, i: (0, 0)),
        ],
        out_specs=(pl.BlockSpec((1, TM, 4 * hlp), lambda s, i: (s, i, 0)),
                   pl.BlockSpec((1, TM, 4 * hlp), lambda s, i: (s, i, 0))),
        compiler_params=pltpu.CompilerParams(
            dimension_semantics=("parallel", "parallel"),
            vmem_limit_bytes=_VMEM_LIMIT),
    )(q, rx, ry, w, b, lvl_w, lvl_h, lvl_s, hcol, grp)


# --------- branched out_proj + LN + FFN + LN (detect & track in one call) ---------

def _branch_epilogue_kernel(agg_ref, res_ref, ow_ref, ob_ref, g1_ref, bn1_ref,
                            w1_ref, b1_ref, w2_ref, b2_ref, g2_ref, bn2_ref,
                            o_ref, *, eps):
    y = jnp.dot(agg_ref[0], ow_ref[0], preferred_element_type=jnp.float32) + ob_ref[0]
    z1 = _layernorm(res_ref[0].astype(jnp.float32) + y, g1_ref[0], bn1_ref[0], eps)
    h = jnp.dot(z1, w1_ref[0], preferred_element_type=jnp.float32) + b1_ref[0]
    h = jnp.maximum(h, 0.0)
    y2 = jnp.dot(h, w2_ref[0], preferred_element_type=jnp.float32) + b2_ref[0]
    o_ref[0] = _layernorm(z1 + y2, g2_ref[0], bn2_ref[0], eps).astype(o_ref.dtype)


def pallas_branch_epilogue(agg, res, ow, ob, g1, bn1, w1, b1, w2, b2, g2, bn2,
                           eps=_LN_EPS):
    S, Mr, d = agg.shape
    dffn = w1.shape[-1]
    TM = _row_tile(Mr)
    wspec = lambda s, i: (s, 0, 0)
    xspec = lambda s, i: (s, i, 0)
    return pl.pallas_call(
        functools.partial(_branch_epilogue_kernel, eps=eps),
        out_shape=jax.ShapeDtypeStruct((S, Mr, d), agg.dtype),
        grid=(S, pl.cdiv(Mr, TM)),
        in_specs=[
            pl.BlockSpec((1, TM, d), xspec),
            pl.BlockSpec((1, TM, d), xspec),
            pl.BlockSpec((1, d, d), wspec),
            pl.BlockSpec((1, 1, d), wspec),
            pl.BlockSpec((1, 1, d), wspec),
            pl.BlockSpec((1, 1, d), wspec),
            pl.BlockSpec((1, d, dffn), wspec),
            pl.BlockSpec((1, 1, dffn), wspec),
            pl.BlockSpec((1, dffn, d), wspec),
            pl.BlockSpec((1, 1, d), wspec),
            pl.BlockSpec((1, 1, d), wspec),
            pl.BlockSpec((1, 1, d), wspec),
        ],
        out_specs=pl.BlockSpec((1, TM, d), xspec),
        compiler_params=pltpu.CompilerParams(
            dimension_semantics=("parallel", "parallel"),
            vmem_limit_bytes=_VMEM_LIMIT),
    )(agg, res, ow, ob, g1, bn1, w1, b1, w2, b2, g2, bn2)


# ----------------------------- decoder layer forward -----------------------------

def decoder_layer_forward(params, cfg, tgt, query_pos, reference_points, src,
                          spatial_shapes_py, level_start_index_py,
                          src_padding_mask=None):
    B, L, d = tgt.shape
    nH, nL, nP = cfg["n_heads"], cfg["n_levels"], cfg["n_points"]
    num_q = cfg["num_queries"]
    num_track = L - num_q
    hd = d // nH
    nLP = nL * nP
    hlp = nH * nLP
    J = 4 * nLP

    # --- self attention + dropout2(identity) + norm2: one fused kernel ---
    tgt = pallas_self_attn_block(params["self_attn"], tgt, query_pos, nH,
                                 params["norm2_g"], params["norm2_b"])

    detect_tgt, track_tgt = tgt[:, :num_q], tgt[:, num_q:]
    detect_q, track_q = query_pos[:, :num_q], query_pos[:, num_q:]
    det_ref, trk_ref = reference_points[:, :num_q], reference_points[:, num_q:]

    # --- shared value projection for both deformable attns: ONE pass over src ---
    ca, ta = params["cross_attn"], params["temporal_cross_attn"]
    Len_in = src.shape[1]
    v_c, v_t = pallas_dual_linear(src.reshape(B * Len_in, d),
                                  ca["value_w"], ca["value_b"],
                                  ta["value_w"], ta["value_b"])
    v_c = v_c.reshape(B, Len_in, d)
    v_t = v_t.reshape(B, Len_in, d)
    if src_padding_mask is not None:
        v_c = jnp.where(src_padding_mask[..., None], 0.0, v_c)
        v_t = jnp.where(src_padding_mask[..., None], 0.0, v_t)
    # free (contiguous) reshape -> (B, Len_in*nH, hd); gather row = value_row*nH + head
    v_c = v_c.reshape(B, Len_in * nH, hd)
    v_t = v_t.reshape(B, Len_in * nH, hd)

    # --- fused offset/attn-weight projection + softmax + sampling-location math ---
    Wl = jnp.array([float(w_) for (_, w_) in spatial_shapes_py], jnp.float32)
    Hl = jnp.array([float(h_) for (h_, _) in spatial_shapes_py], jnp.float32)
    Sl = jnp.array([float(s_) for s_ in level_start_index_py], jnp.float32)

    def col(v):                      # per-(head, level, point) column constant
        return jnp.broadcast_to(v[None, :, None], (nH, nL, nP)).reshape(1, hlp)

    lvl_w, lvl_h, lvl_s = col(Wl), col(Hl), col(Sl)
    hcol = jnp.broadcast_to(jnp.arange(nH, dtype=jnp.float32)[:, None, None],
                            (nH, nL, nP)).reshape(1, hlp)
    grp = jnp.kron(jnp.eye(nH, dtype=jnp.float32),
                   jnp.ones((nLP, nLP), jnp.float32))        # per-head group sums

    def ref_cols(ref):               # (B, Lq, nL, 2) -> (B*Lq, hlp) pixel-ref columns
        Lq = ref.shape[1]
        rx = ref[..., 0] * Wl - 0.5
        ry = ref[..., 1] * Hl - 0.5
        rx = jnp.broadcast_to(rx[:, :, None, :, None], (B, Lq, nH, nL, nP))
        ry = jnp.broadcast_to(ry[:, :, None, :, None], (B, Lq, nH, nL, nP))
        return rx.reshape(B * Lq, hlp), ry.reshape(B * Lq, hlp)

    det_q_rows = (detect_tgt + detect_q).reshape(B * num_q, d)
    trk_q_rows = track_q.reshape(B * num_track, d)     # temporal branch queries = pos
    det_rx, det_ry = ref_cols(det_ref)
    trk_rx, trk_ry = ref_cols(trk_ref)

    Md, Mt = B * num_q, B * num_track
    Mr = max(Md, Mt)

    def pad_stack(a_det, a_trk):
        a_det = jnp.pad(a_det, ((0, Mr - Md), (0, 0)))
        a_trk = jnp.pad(a_trk, ((0, Mr - Mt), (0, 0)))
        return jnp.stack([a_det, a_trk], axis=0)

    q_rows = pad_stack(det_q_rows, trk_q_rows)
    rx = pad_stack(det_rx, trk_rx)
    ry = pad_stack(det_ry, trk_ry)
    w_offaw = jnp.stack([ca["off_aw_w"], ta["off_aw_w"]], axis=0)
    b_offaw = jnp.stack([ca["off_aw_b"].reshape(1, -1),
                         ta["off_aw_b"].reshape(1, -1)], axis=0)

    idx, wts = pallas_sampling(q_rows, rx, ry, w_offaw, b_offaw,
                               lvl_w, lvl_h, lvl_s, hcol, grp,
                               n_heads=nH, hlp=hlp)

    # --- bilinear gather + weighted reduction (small XLA ops; no value transpose) ---
    # TODO(synk): the data-dependent row gather itself stays in XLA; Mosaic has no
    # safe arbitrary-row vector gather primitive for this access pattern.
    def branch_agg(s, M_s, Lq, value2):
        i = idx[s, :M_s].reshape(B, Lq, 4, nH, nLP)
        w = wts[s, :M_s].reshape(B, Lq, 4, nH, nLP)
        i = jnp.transpose(i, (0, 1, 3, 2, 4)).reshape(B, Lq * nH * J)
        w = jnp.transpose(w, (0, 1, 3, 2, 4)).reshape(B, Lq, nH, J)
        g = jnp.take_along_axis(value2, i[..., None], axis=1)
        g = g.reshape(B, Lq, nH, J, hd)
        out = jnp.einsum("bqhjd,bqhj->bqhd", g, w)
        return out.reshape(B * Lq, d)

    agg_det = branch_agg(0, Md, num_q, v_c)
    agg_trk = branch_agg(1, Mt, num_track, v_t)

    # --- branched out_proj + residual + norm1/norm4 + FFN + residual + norm3/norm5 ---
    # TODO(synk): MSDeformAttn attn_mode='temporal_attn' internals are not in the
    # reference source; modeled with standard deformable-attn math and its own params.
    agg = pad_stack(agg_det, agg_trk)
    res = pad_stack(detect_tgt.reshape(Md, d), track_tgt.reshape(Mt, d))

    def st(a, b):
        return jnp.stack([a, b], axis=0)

    out = pallas_branch_epilogue(
        agg, res,
        st(ca["out_w"], ta["out_w"]),
        st(ca["out_b"].reshape(1, d), ta["out_b"].reshape(1, d)),
        st(params["norm1_g"].reshape(1, d), params["norm4_g"].reshape(1, d)),
        st(params["norm1_b"].reshape(1, d), params["norm4_b"].reshape(1, d)),
        st(params["linear1_w"], params["linear3_w"]),
        st(params["linear1_b"].reshape(1, -1), params["linear3_b"].reshape(1, -1)),
        st(params["linear2_w"], params["linear4_w"]),
        st(params["linear2_b"].reshape(1, d), params["linear4_b"].reshape(1, d)),
        st(params["norm3_g"].reshape(1, d), params["norm5_g"].reshape(1, d)),
        st(params["norm3_b"].reshape(1, d), params["norm5_b"].reshape(1, d)),
    )
    detect_out = out[0, :Md].reshape(B, num_q, d)
    track_out = out[1, :Mt].reshape(B, num_track, d)
    return jnp.concatenate([detect_out, track_out], axis=1)


# ----------------------------- parameter init -----------------------------

def init_params(key, d_model, d_ffn, n_heads, n_levels, n_points):
    keys = iter(jax.random.split(key, 64))
    hd = d_model // n_heads
    hlp = n_heads * n_levels * n_points

    def w(shape, scale=0.02):
        return jax.random.normal(next(keys), shape, dtype=jnp.float32) * scale

    def z(shape):
        return jnp.zeros(shape, jnp.float32)

    def o(shape):
        return jnp.ones(shape, jnp.float32)

    def deform():
        # off_aw_w column layout: [x-offsets hlp | y-offsets hlp | attn logits hlp],
        # each group ordered (head, level, point).  A real port permutes the PyTorch
        # sampling_offsets / attention_weights weights into this layout.
        return dict(value_w=w((d_model, d_model)), value_b=z((d_model,)),
                    off_aw_w=w((d_model, 3 * hlp)),
                    off_aw_b=jnp.concatenate([w((2 * hlp,), 0.01), z((hlp,))]),
                    out_w=w((d_model, d_model)), out_b=z((d_model,)))

    return dict(
        # self-attention weights stored pre-split per head so BlockSpec slices them
        self_attn=dict(
            wq=w((n_heads, d_model, hd)), bq=z((n_heads, 1, hd)),
            wk=w((n_heads, d_model, hd)), bk=z((n_heads, 1, hd)),
            wv=w((n_heads, d_model, hd)), bv=z((n_heads, 1, hd)),
            wo=w((n_heads, hd, d_model)), bo=z((d_model,))),
        cross_attn=deform(),
        temporal_cross_attn=deform(),
        norm1_g=o((d_model,)), norm1_b=z((d_model,)),
        norm2_g=o((d_model,)), norm2_b=z((d_model,)),
        norm3_g=o((d_model,)), norm3_b=z((d_model,)),
        norm4_g=o((d_model,)), norm4_b=z((d_model,)),
        norm5_g=o((d_model,)), norm5_b=z((d_model,)),
        linear1_w=w((d_model, d_ffn)), linear1_b=z((d_ffn,)),
        linear2_w=w((d_ffn, d_model)), linear2_b=z((d_model,)),
        linear3_w=w((d_model, d_ffn)), linear3_b=z((d_ffn,)),
        linear4_w=w((d_ffn, d_model)), linear4_b=z((d_model,)),
    )


# ----------------------------- main -----------------------------

if __name__ == "__main__":
    cfg = dict(d_model=128, d_ffn=256, n_heads=8, n_levels=2, n_points=2,
               num_queries=8)
    B = 2
    num_track = 8
    L = cfg["num_queries"] + num_track
    spatial_shapes_py = ((8, 8), (4, 4))            # (H, W) per level
    level_start_index_py = (0, 64)
    Len_in = sum(h * w for h, w in spatial_shapes_py)

    key = jax.random.PRNGKey(0)
    kp, k1, k2, k3, k4 = jax.random.split(key, 5)
    params = init_params(kp, cfg["d_model"], cfg["d_ffn"],
                         cfg["n_heads"], cfg["n_levels"], cfg["n_points"])

    tgt = jax.random.normal(k1, (B, L, cfg["d_model"]), dtype=jnp.float32)
    query_pos = jax.random.normal(k2, (B, L, cfg["d_model"]), dtype=jnp.float32)
    reference_points = jax.random.uniform(k3, (B, L, cfg["n_levels"], 2),
                                          dtype=jnp.float32)
    src = jax.random.normal(k4, (B, Len_in, cfg["d_model"]), dtype=jnp.float32)

    @jax.jit
    def fwd(params, tgt, query_pos, reference_points, src):
        return decoder_layer_forward(params, cfg, tgt, query_pos, reference_points,
                                     src, spatial_shapes_py, level_start_index_py,
                                     None)

    out = jax.block_until_ready(fwd(params, tgt, query_pos, reference_points, src))
    assert out.shape == (B, L, cfg["d_model"])
    assert bool(jnp.all(jnp.isfinite(out)))
    print("KERNEL_OK")
</pallas_src>

<mosaic_0001>
module attributes {stable_mosaic.version = 11 : i64} {
  func.func private @main(%arg0: i32) attributes {dimension_semantics = [#tpu.dimension_semantics<core_parallel>], iteration_bounds = array<i64: 2>, tpu.core_type = #tpu.core_type<sc_scalar_subcore>, window_params = []} {
    return
  }
}

module attributes {stable_mosaic.version = 11 : i64} {
  func.func private @main(%arg0: i32) attributes {dimension_semantics = [#tpu.dimension_semantics<core_parallel>], iteration_bounds = array<i64: 2>, tpu.core_type = #tpu.core_type<sc_scalar_subcore>, window_params = []} {
    return
  }
}

module attributes {stable_mosaic.version = 11 : i64} {
  func.func @_self_attn_kernel(%arg0: i32, %arg1: i32, %arg2: memref<1x16x128xf32, #tpu.memory_space<vmem>>, %arg3: memref<1x16x128xf32, #tpu.memory_space<vmem>>, %arg4: memref<1x128x16xf32, #tpu.memory_space<vmem>>, %arg5: memref<1x1x16xf32, #tpu.memory_space<vmem>>, %arg6: memref<1x128x16xf32, #tpu.memory_space<vmem>>, %arg7: memref<1x1x16xf32, #tpu.memory_space<vmem>>, %arg8: memref<1x128x16xf32, #tpu.memory_space<vmem>>, %arg9: memref<1x1x16xf32, #tpu.memory_space<vmem>>, %arg10: memref<1x16x128xf32, #tpu.memory_space<vmem>>, %arg11: memref<1x128xf32, #tpu.memory_space<vmem>>, %arg12: memref<1x128xf32, #tpu.memory_space<vmem>>, %arg13: memref<1x128xf32, #tpu.memory_space<vmem>>, %arg14: memref<1x16x128xf32, #tpu.memory_space<vmem>>, %arg15: memref<16x128xf32, #tpu.memory_space<vmem>>) attributes {dimension_semantics = [#tpu.dimension_semantics<parallel>, #tpu.dimension_semantics<arbitrary>], iteration_bounds = array<i64: 2, 8>, scalar_prefetch = 0 : i64, scratch_operands = 1 : i64, tpu.core_type = #tpu.core_type<tc>, window_params = [{transform_indices = @transform_0, window_bounds = array<i64: 1, 16, 128>}, {transform_indices = @transform_1, window_bounds = array<i64: 1, 16, 128>}, {transform_indices = @transform_2, window_bounds = array<i64: 1, 128, 16>}, {transform_indices = @transform_3, window_bounds = array<i64: 1, 1, 16>}, {transform_indices = @transform_4, window_bounds = array<i64: 1, 128, 16>}, {transform_indices = @transform_5, window_bounds = array<i64: 1, 1, 16>}, {transform_indices = @transform_6, window_bounds = array<i64: 1, 128, 16>}, {transform_indices = @transform_7, window_bounds = array<i64: 1, 1, 16>}, {transform_indices = @transform_8, window_bounds = array<i64: 1, 16, 128>}, {pipeline_mode = #tpu.pipeline_mode<synchronous>, transform_indices = @transform_9, window_bounds = array<i64: 1, 128>}, {pipeline_mode = #tpu.pipeline_mode<synchronous>, transform_indices = @transform_10, window_bounds = array<i64: 1, 128>}, {pipeline_mode = #tpu.pipeline_mode<synchronous>, transform_indices = @transform_11, window_bounds = array<i64: 1, 128>}, {transform_indices = @transform_12, window_bounds = array<i64: 1, 16, 128>}]} {
    %c0_i32 = arith.constant 0 : i32
    %0 = arith.cmpi eq, %arg1, %c0_i32 : i32
    %1 = arith.extui %0 : i1 to i32
    %c0_i32_0 = arith.constant 0 : i32
    %2 = arith.cmpi ne, %1, %c0_i32_0 : i32
    scf.if %2 {
      %cst_40 = arith.constant 0.000000e+00 : f32
      %52 = vector.broadcast %cst_40 : f32 to vector<16x128xf32>
      %c0_41 = arith.constant 0 : index
      %c0_42 = arith.constant 0 : index
      %53 = vector.load %arg15[%c0_41, %c0_42] : memref<16x128xf32, #tpu.memory_space<vmem>>, vector<16x128xf32>
      tpu.vector_store %arg15[%c0_41, %c0_42], %52 {strides = array<i32>} : memref<16x128xf32, #tpu.memory_space<vmem>>, vector<16x128xf32>,
    } else {
    }
    %c0 = arith.constant 0 : index
    %c0_1 = arith.constant 0 : index
    %c0_2 = arith.constant 0 : index
    %3 = vector.load %arg2[%c0, %c0_1, %c0_2] : memref<1x16x128xf32, #tpu.memory_space<vmem>>, vector<1x16x128xf32>
    %4 = vector.shape_cast %3 : vector<1x16x128xf32> to vector<16x128xf32>
    %c0_3 = arith.constant 0 : index
    %c0_4 = arith.constant 0 : index
    %c0_5 = arith.constant 0 : index
    %5 = vector.load %arg3[%c0_3, %c0_4, %c0_5] : memref<1x16x128xf32, #tpu.memory_space<vmem>>, vector<1x16x128xf32>
    %6 = vector.shape_cast %5 : vector<1x16x128xf32> to vector<16x128xf32>
    %7 = arith.addf %4, %6 : vector<16x128xf32>
    %c0_6 = arith.constant 0 : index
    %c0_7 = arith.constant 0 : index
    %c0_8 = arith.constant 0 : index
    %8 = vector.load %arg4[%c0_6, %c0_7, %c0_8] : memref<1x128x16xf32, #tpu.memory_space<vmem>>, vector<1x128x16xf32>
    %9 = vector.shape_cast %8 : vector<1x128x16xf32> to vector<128x16xf32>
    %cst = arith.constant dense<0.000000e+00> : vector<16x16xf32>
    %10 = tpu.matmul %7, %9, %cst {dimension_numbers = #tpu.dot_dimension_numbers<[1], [0], [0], [1], [0, 0, 1, 1], [], []>} : vector<16x128xf32>, vector<128x16xf32>, vector<16x16xf32> -> vector<16x16xf32>
    %c0_9 = arith.constant 0 : index
    %c0_10 = arith.constant 0 : index
    %c0_11 = arith.constant 0 : index
    %11 = vector.load %arg5[%c0_9, %c0_10, %c0_11] : memref<1x1x16xf32, #tpu.memory_space<vmem>>, vector<1x1x16xf32>
    %12 = vector.shape_cast %11 : vector<1x1x16xf32> to vector<1x16xf32>
    %13 = vector.broadcast %12 : vector<1x16xf32> to vector<16x16xf32>
    %14 = arith.addf %10, %13 : vector<16x16xf32>
    %c0_12 = arith.constant 0 : index
    %c0_13 = arith.constant 0 : index
    %c0_14 = arith.constant 0 : index
    %15 = vector.load %arg6[%c0_12, %c0_13, %c0_14] : memref<1x128x16xf32, #tpu.memory_space<vmem>>, vector<1x128x16xf32>
    %16 = vector.shape_cast %15 : vector<1x128x16xf32> to vector<128x16xf32>
    %cst_15 = arith.constant dense<0.000000e+00> : vector<16x16xf32>
    %17 = tpu.matmul %7, %16, %cst_15 {dimension_numbers = #tpu.dot_dimension_numbers<[1], [0], [0], [1], [0, 0, 1, 1], [], []>} : vector<16x128xf32>, vector<128x16xf32>, vector<16x16xf32> -> vector<16x16xf32>
    %c0_16 = arith.constant 0 : index
    %c0_17 = arith.constant 0 : index
    %c0_18 = arith.constant 0 : index
    %18 = vector.load %arg7[%c0_16, %c0_17, %c0_18] : memref<1x1x16xf32, #tpu.memory_space<vmem>>, vector<1x1x16xf32>
    %19 = vector.shape_cast %18 : vector<1x1x16xf32> to vector<1x16xf32>
    %20 = vector.broadcast %19 : vector<1x16xf32> to vector<16x16xf32>
    %21 = arith.addf %17, %20 : vector<16x16xf32>
    %c0_19 = arith.constant 0 : index
    %c0_20 = arith.constant 0 : index
    %c0_21 = arith.constant 0 : index
    %22 = vector.load %arg8[%c0_19, %c0_20, %c0_21] : memref<1x128x16xf32, #tpu.memory_space<vmem>>, vector<1x128x16xf32>
    %23 = vector.shape_cast %22 : vector<1x128x16xf32> to vector<128x16xf32>
    %cst_22 = arith.constant dense<0.000000e+00> : vector<16x16xf32>
    %24 = tpu.matmul %4, %23, %cst_22 {dimension_numbers = #tpu.dot_dimension_numbers<[1], [0], [0], [1], [0, 0, 1, 1], [], []>} : vector<16x128xf32>, vector<128x16xf32>, vector<16x16xf32> -> vector<16x16xf32>
    %c0_23 = arith.constant 0 : index
    %c0_24 = arith.constant 0 : index
    %c0_25 = arith.constant 0 : index
    %25 = vector.load %arg9[%c0_23, %c0_24, %c0_25] : memref<1x1x16xf32, #tpu.memory_space<vmem>>, vector<1x1x16xf32>
    %26 = vector.shape_cast %25 : vector<1x1x16xf32> to vector<1x16xf32>
    %27 = vector.broadcast %26 : vector<1x16xf32> to vector<16x16xf32>
    %28 = arith.addf %24, %27 : vector<16x16xf32>
    "tpu.trace_start"() <{level = 10 : i32, message = "qd,kd->qk"}> : () -> ()
    %cst_26 = arith.constant dense<0.000000e+00> : vector<16x16xf32>
    %29 = tpu.matmul %14, %21, %cst_26 {dimension_numbers = #tpu.dot_dimension_numbers<[1], [1], [0], [0], [0, 0, 1, 0], [], []>} : vector<16x16xf32>, vector<16x16xf32>, vector<16x16xf32> -> vector<16x16xf32>
    "tpu.trace_stop"() : () -> ()
    %cst_27 = arith.constant 2.500000e-01 : f32
    %30 = vector.broadcast %cst_27 : f32 to vector<16x16xf32>
    %31 = arith.mulf %29, %30 : vector<16x16xf32>
    %cst_28 = arith.constant dense<0xFF800000> : vector<16xf32>
    %32 = vector.multi_reduction <maximumf>, %31, %cst_28 [1] : vector<16x16xf32> to vector<16xf32>
    %33 = vector.shape_cast %32 : vector<16xf32> to vector<16x1xf32>
    %34 = vector.broadcast %33 : vector<16x1xf32> to vector<16x16xf32>
    %35 = arith.subf %31, %34 : vector<16x16xf32>
    %36 = math.exp %35 : vector<16x16xf32>
    %cst_29 = arith.constant dense<0.000000e+00> : vector<16xf32>
    %37 = vector.multi_reduction <add>, %36, %cst_29 [1] : vector<16x16xf32> to vector<16xf32>
    %38 = vector.shape_cast %37 : vector<16xf32> to vector<16x1xf32>
    %39 = tpu.reciprocal %38 {approx = true} : vector<16x1xf32> -> vector<16x1xf32>
    %40 = vector.broadcast %39 : vector<16x1xf32> to vector<16x16xf32>
    %41 = arith.mulf %36, %40 : vector<16x16xf32>
    %cst_30 = arith.constant dense<0.000000e+00> : vector<16x16xf32>
    %42 = tpu.matmul %41, %28, %cst_30 {dimension_numbers = #tpu.dot_dimension_numbers<[1], [0], [0], [1], [0, 0, 1, 1], [], []>} : vector<16x16xf32>, vector<16x16xf32>, vector<16x16xf32> -> vector<16x16xf32>
    %c0_31 = arith.constant 0 : index
    %c0_32 = arith.constant 0 : index
    %43 = vector.load %arg15[%c0_31, %c0_32] : memref<16x128xf32, #tpu.memory_space<vmem>>, vector<16x128xf32>
    %c0_33 = arith.constant 0 : index
    %c0_34 = arith.constant 0 : index
    %c0_35 = arith.constant 0 : index
    %44 = vector.load %arg10[%c0_33, %c0_34, %c0_35] : memref<1x16x128xf32, #tpu.memory_space<vmem>>, vector<1x16x128xf32>
    %45 = vector.shape_cast %44 : vector<1x16x128xf32> to vector<16x128xf32>
    %cst_36 = arith.constant dense<0.000000e+00> : vector<16x128xf32>
    %46 = tpu.matmul %42, %45, %cst_36 {dimension_numbers = #tpu.dot_dimension_numbers<[1], [0], [0], [1], [0, 0, 1, 1], [], []>} : vector<16x16xf32>, vector<16x128xf32>, vector<16x128xf32> -> vector<16x128xf32>
    %47 = arith.addf %43, %46 : vector<16x128xf32>
    %c0_37 = arith.constant 0 : index
    %c0_38 = arith.constant 0 : index
    %48 = vector.load %arg15[%c0_37, %c0_38] : memref<16x128xf32, #tpu.memory_space<vmem>>, vector<16x128xf32>
    tpu.vector_store %arg15[%c0_37, %c0_38], %47 {strides = array<i32>} : memref<16x128xf32, #tpu.memory_space<vmem>>, vector<16x128xf32>,
    %c7_i32 = arith.constant 7 : i32
    %49 = arith.cmpi eq, %arg1, %c7_i32 : i32
    %50 = arith.extui %49 : i1 to i32
    %c0_i32_39 = arith.constant 0 : i32
    %51 = arith.cmpi ne, %50, %c0_i32_39 : i32
    scf.if %51 {
      %c0_40 = arith.constant 0 : index
      %c0_41 = arith.constant 0 : index
      %52 = vector.load %arg15[%c0_40, %c0_41] : memref<16x128xf32, #tpu.memory_space<vmem>>, vector<16x128xf32>
      %53 = arith.addf %4, %52 : vector<16x128xf32>
      %c0_42 = arith.constant 0 : index
      %c0_43 = arith.constant 0 : index
      %54 = vector.load %arg11[%c0_42, %c0_43] : memref<1x128xf32, #tpu.memory_space<vmem>>, vector<1x128xf32>
      %55 = vector.broadcast %54 : vector<1x128xf32> to vector<16x128xf32>
      %56 = arith.addf %53, %55 : vector<16x128xf32>
      %c0_44 = arith.constant 0 : index
      %c0_45 = arith.constant 0 : index
      %57 = vector.load %arg12[%c0_44, %c0_45] : memref<1x128xf32, #tpu.memory_space<vmem>>, vector<1x128xf32>
      %c0_46 = arith.constant 0 : index
      %c0_47 = arith.constant 0 : index
      %58 = vector.load %arg13[%c0_46, %c0_47] : memref<1x128xf32, #tpu.memory_space<vmem>>, vector<1x128xf32>
      %cst_48 = arith.constant dense<0.000000e+00> : vector<16xf32>
      %59 = vector.multi_reduction <add>, %56, %cst_48 [1] : vector<16x128xf32> to vector<16xf32>
      %60 = vector.shape_cast %59 : vector<16xf32> to vector<16x1xf32>
      %cst_49 = arith.constant 1.280000e+02 : f32
      %61 = vector.broadcast %cst_49 : f32 to vector<16x1xf32>
      %62 = arith.divf %60, %61 : vector<16x1xf32>
      %63 = vector.broadcast %62 : vector<16x1xf32> to vector<16x128xf32>
      %64 = arith.subf %56, %63 : vector<16x128xf32>
      %65 = arith.mulf %64, %64 : vector<16x128xf32>
      %cst_50 = arith.constant dense<0.000000e+00> : vector<16xf32>
      %66 = vector.multi_reduction <add>, %65, %cst_50 [1] : vector<16x128xf32> to vector<16xf32>
      %67 = vector.shape_cast %66 : vector<16xf32> to vector<16x1xf32>
      %cst_51 = arith.constant 1.280000e+02 : f32
      %68 = vector.broadcast %cst_51 : f32 to vector<16x1xf32>
      %69 = arith.divf %67, %68 : vector<16x1xf32>
      %70 = vector.broadcast %62 : vector<16x1xf32> to vector<16x128xf32>
      %71 = arith.subf %56, %70 : vector<16x128xf32>
      %cst_52 = arith.constant 9.99999974E-6 : f32
      %72 = vector.broadcast %cst_52 : f32 to vector<16x1xf32>
      %73 = arith.addf %69, %72 : vector<16x1xf32>
      %74 = math.rsqrt %73 : vector<16x1xf32>
      %75 = vector.broadcast %74 : vector<16x1xf32> to vector<16x128xf32>
      %76 = arith.mulf %71, %75 : vector<16x128xf32>
      %77 = vector.broadcast %57 : vector<1x128xf32> to vector<16x128xf32>
      %78 = arith.mulf %76, %77 : vector<16x128xf32>
      %79 = vector.broadcast %58 : vector<1x128xf32> to vector<16x128xf32>
      %80 = arith.addf %78, %79 : vector<16x128xf32>
      %c0_53 = arith.constant 0 : index
      %c0_54 = arith.constant 0 : index
      %c0_55 = arith.constant 0 : index
      %81 = vector.load %arg14[%c0_53, %c0_54, %c0_55] : memref<1x16x128xf32, #tpu.memory_space<vmem>>, vector<1x16x128xf32>
      %82 = vector.shape_cast %81 : vector<1x16x128xf32> to vector<16x128xf32>
      %83 = vector.shape_cast %80 : vector<16x128xf32> to vector<1x16x128xf32>
      tpu.vector_store %arg14[%c0_53, %c0_54, %c0_55], %83 {strides = array<i32>} : memref<1x16x128xf32, #tpu.memory_space<vmem>>, vector<1x16x128xf32>,
    } else {
    }
    return
  }
  func.func @transform_0(%arg0: i32, %arg1: i32) -> (i32, i32, i32) {
    %c0_i32 = arith.constant 0 : i32
    %c0_i32_0 = arith.constant 0 : i32
    %c0_i32_1 = arith.constant 0 : i32
    return %arg0, %c0_i32, %c0_i32_0 : i32, i32, i32
  }
  func.func @transform_1(%arg0: i32, %arg1: i32) -> (i32, i32, i32) {
    %c0_i32 = arith.constant 0 : i32
    %c0_i32_0 = arith.constant 0 : i32
    %c0_i32_1 = arith.constant 0 : i32
    return %arg0, %c0_i32, %c0_i32_0 : i32, i32, i32
  }
  func.func @transform_2(%arg0: i32, %arg1: i32) -> (i32, i32, i32) {
    %c0_i32 = arith.constant 0 : i32
    %c0_i32_0 = arith.constant 0 : i32
    %c0_i32_1 = arith.constant 0 : i32
    return %arg1, %c0_i32, %c0_i32_0 : i32, i32, i32
  }
  func.func @transform_3(%arg0: i32, %arg1: i32) -> (i32, i32, i32) {
    %c0_i32 = arith.constant 0 : i32
    %c0_i32_0 = arith.constant 0 : i32
    %c0_i32_1 = arith.constant 0 : i32
    return %arg1, %c0_i32, %c0_i32_0 : i32, i32, i32
  }
  func.func @transform_4(%arg0: i32, %arg1: i32) -> (i32, i32, i32) {
    %c0_i32 = arith.constant 0 : i32
    %c0_i32_0 = arith.constant 0 : i32
    %c0_i32_1 = arith.constant 0 : i32
    return %arg1, %c0_i32, %c0_i32_0 : i32, i32, i32
  }
  func.func @transform_5(%arg0: i32, %arg1: i32) -> (i32, i32, i32) {
    %c0_i32 = arith.constant 0 : i32
    %c0_i32_0 = arith.constant 0 : i32
    %c0_i32_1 = arith.constant 0 : i32
    return %arg1, %c0_i32, %c0_i32_0 : i32, i32, i32
  }
  func.func @transform_6(%arg0: i32, %arg1: i32) -> (i32, i32, i32) {
    %c0_i32 = arith.constant 0 : i32
    %c0_i32_0 = arith.constant 0 : i32
    %c0_i32_1 = arith.constant 0 : i32
    return %arg1, %c0_i32, %c0_i32_0 : i32, i32, i32
  }
  func.func @transform_7(%arg0: i32, %arg1: i32) -> (i32, i32, i32) {
    %c0_i32 = arith.constant 0 : i32
    %c0_i32_0 = arith.constant 0 : i32
    %c0_i32_1 = arith.constant 0 : i32
    return %arg1, %c0_i32, %c0_i32_0 : i32, i32, i32
  }
  func.func @transform_8(%arg0: i32, %arg1: i32) -> (i32, i32, i32) {
    %c0_i32 = arith.constant 0 : i32
    %c0_i32_0 = arith.constant 0 : i32
    %c0_i32_1 = arith.constant 0 : i32
    return %arg1, %c0_i32, %c0_i32_0 : i32, i32, i32
  }
  func.func @transform_9(%arg0: i32, %arg1: i32) -> (i32, i32) {
    %c0_i32 = arith.constant 0 : i32
    %c0_i32_0 = arith.constant 0 : i32
    %c0_i32_1 = arith.constant 0 : i32
    return %c0_i32, %c0_i32_0 : i32, i32
  }
  func.func @transform_10(%arg0: i32, %arg1: i32) -> (i32, i32) {
    %c0_i32 = arith.constant 0 : i32
    %c0_i32_0 = arith.constant 0 : i32
    %c0_i32_1 = arith.constant 0 : i32
    return %c0_i32, %c0_i32_0 : i32, i32
  }
  func.func @transform_11(%arg0: i32, %arg1: i32) -> (i32, i32) {
    %c0_i32 = arith.constant 0 : i32
    %c0_i32_0 = arith.constant 0 : i32
    %c0_i32_1 = arith.constant 0 : i32
    return %c0_i32, %c0_i32_0 : i32, i32
  }
  func.func @transform_12(%arg0: i32, %arg1: i32) -> (i32, i32, i32) {
    %c0_i32 = arith.constant 0 : i32
    %c0_i32_0 = arith.constant 0 : i32
    %c0_i32_1 = arith.constant 0 : i32
    return %arg0, %c0_i32, %c0_i32_0 : i32, i32, i32
  }
}

module attributes {stable_mosaic.version = 11 : i64} {
  func.func @_sampling_kernel(%arg0: i32, %arg1: i32, %arg2: memref<1x16x128xf32, #tpu.memory_space<vmem>>, %arg3: memref<1x16x32xf32, #tpu.memory_space<vmem>>, %arg4: memref<1x16x32xf32, #tpu.memory_space<vmem>>, %arg5: memref<1x128x96xf32, #tpu.memory_space<vmem>>, %arg6: memref<1x1x96xf32, #tpu.memory_space<vmem>>, %arg7: memref<1x32xf32, #tpu.memory_space<vmem>>, %arg8: memref<1x32xf32, #tpu.memory_space<vmem>>, %arg9: memref<1x32xf32, #tpu.memory_space<vmem>>, %arg10: memref<1x32xf32, #tpu.memory_space<vmem>>, %arg11: memref<32x32xf32, #tpu.memory_space<vmem>>, %arg12: memref<1x16x128xi32, #tpu.memory_space<vmem>>, %arg13: memref<1x16x128xf32, #tpu.memory_space<vmem>>) attributes {dimension_semantics = [#tpu.dimension_semantics<parallel>, #tpu.dimension_semantics<parallel>], iteration_bounds = array<i64: 2, 1>, scalar_prefetch = 0 : i64, scratch_operands = 0 : i64, tpu.core_type = #tpu.core_type<tc>, window_params = [{transform_indices = @transform_0, window_bounds = array<i64: 1, 16, 128>}, {transform_indices = @transform_1, window_bounds = array<i64: 1, 16, 32>}, {transform_indices = @transform_2, window_bounds = array<i64: 1, 16, 32>}, {transform_indices = @transform_3, window_bounds = array<i64: 1, 128, 96>}, {transform_indices = @transform_4, window_bounds = array<i64: 1, 1, 96>}, {pipeline_mode = #tpu.pipeline_mode<synchronous>, transform_indices = @transform_5, window_bounds = array<i64: 1, 32>}, {pipeline_mode = #tpu.pipeline_mode<synchronous>, transform_indices = @transform_6, window_bounds = array<i64: 1, 32>}, {pipeline_mode = #tpu.pipeline_mode<synchronous>, transform_indices = @transform_7, window_bounds = array<i64: 1, 32>}, {pipeline_mode = #tpu.pipeline_mode<synchronous>, transform_indices = @transform_8, window_bounds = array<i64: 1, 32>}, {pipeline_mode = #tpu.pipeline_mode<synchronous>, transform_indices = @transform_9, window_bounds = array<i64: 32, 32>}, {transform_indices = @transform_10, window_bounds = array<i64: 1, 16, 128>}, {transform_indices = @transform_11, window_bounds = array<i64: 1, 16, 128>}]} {
    %c0 = arith.constant 0 : index
    %c0_0 = arith.constant 0 : index
    %c0_1 = arith.constant 0 : index
    %0 = vector.load %arg2[%c0, %c0_0, %c0_1] : memref<1x16x128xf32, #tpu.memory_space<vmem>>, vector<1x16x128xf32>
    %1 = vector.shape_cast %0 : vector<1x16x128xf32> to vector<16x128xf32>
    %c0_2 = arith.constant 0 : index
    %c0_3 = arith.constant 0 : index
    %c0_4 = arith.constant 0 : index
    %2 = vector.load %arg5[%c0_2, %c0_3, %c0_4] : memref<1x128x96xf32, #tpu.memory_space<vmem>>, vector<1x128x96xf32>
    %3 = vector.shape_cast %2 : vector<1x128x96xf32> to vector<128x96xf32>
    %cst = arith.constant dense<0.000000e+00> : vector<16x96xf32>
    %4 = tpu.matmul %1, %3, %cst {dimension_numbers = #tpu.dot_dimension_numbers<[1], [0], [0], [1], [0, 0, 1, 1], [], []>} : vector<16x128xf32>, vector<128x96xf32>, vector<16x96xf32> -> vector<16x96xf32>
    %c0_5 = arith.constant 0 : index
    %c0_6 = arith.constant 0 : index
    %c0_7 = arith.constant 0 : index
    %5 = vector.load %arg6[%c0_5, %c0_6, %c0_7] : memref<1x1x96xf32, #tpu.memory_space<vmem>>, vector<1x1x96xf32>
    %6 = vector.shape_cast %5 : vector<1x1x96xf32> to vector<1x96xf32>
    %7 = vector.broadcast %6 : vector<1x96xf32> to vector<16x96xf32>
    %8 = arith.addf %4, %7 : vector<16x96xf32>
    %9 = vector.extract_strided_slice %8 {offsets = [0, 0], sizes = [16, 32], strides = [1, 1]} : vector<16x96xf32> to vector<16x32xf32>
    %10 = vector.extract_strided_slice %8 {offsets = [0, 32], sizes = [16, 32], strides = [1, 1]} : vector<16x96xf32> to vector<16x32xf32>
    %11 = vector.extract_strided_slice %8 {offsets = [0, 64], sizes = [16, 32], strides = [1, 1]} : vector<16x96xf32> to vector<16x32xf32>
    %cst_8 = arith.constant dense<0xFF800000> : vector<16xf32>
    %12 = vector.multi_reduction <maximumf>, %11, %cst_8 [1] : vector<16x32xf32> to vector<16xf32>
    %13 = vector.shape_cast %12 : vector<16xf32> to vector<16x1xf32>
    %14 = vector.broadcast %13 : vector<16x1xf32> to vector<16x32xf32>
    %15 = arith.subf %11, %14 : vector<16x32xf32>
    %16 = math.exp %15 : vector<16x32xf32>
    %c0_9 = arith.constant 0 : index
    %c0_10 = arith.constant 0 : index
    %17 = vector.load %arg11[%c0_9, %c0_10] : memref<32x32xf32, #tpu.memory_space<vmem>>, vector<32x32xf32>
    %cst_11 = arith.constant dense<0.000000e+00> : vector<16x32xf32>
    %18 = tpu.matmul %16, %17, %cst_11 {dimension_numbers = #tpu.dot_dimension_numbers<[1], [0], [0], [1], [0, 0, 1, 1], [], []>} : vector<16x32xf32>, vector<32x32xf32>, vector<16x32xf32> -> vector<16x32xf32>
    %19 = tpu.reciprocal %18 {approx = true} : vector<16x32xf32> -> vector<16x32xf32>
    %20 = arith.mulf %16, %19 : vector<16x32xf32>
    %c0_12 = arith.constant 0 : index
    %c0_13 = arith.constant 0 : index
    %21 = vector.load %arg7[%c0_12, %c0_13] : memref<1x32xf32, #tpu.memory_space<vmem>>, vector<1x32xf32>
    %c0_14 = arith.constant 0 : index
    %c0_15 = arith.constant 0 : index
    %22 = vector.load %arg8[%c0_14, %c0_15] : memref<1x32xf32, #tpu.memory_space<vmem>>, vector<1x32xf32>
    %c0_16 = arith.constant 0 : index
    %c0_17 = arith.constant 0 : index
    %23 = vector.load %arg9[%c0_16, %c0_17] : memref<1x32xf32, #tpu.memory_space<vmem>>, vector<1x32xf32>
    %c0_18 = arith.constant 0 : index
    %c0_19 = arith.constant 0 : index
    %24 = vector.load %arg10[%c0_18, %c0_19] : memref<1x32xf32, #tpu.memory_space<vmem>>, vector<1x32xf32>
    %c0_20 = arith.constant 0 : index
    %c0_21 = arith.constant 0 : index
    %c0_22 = arith.constant 0 : index
    %25 = vector.load %arg3[%c0_20, %c0_21, %c0_22] : memref<1x16x32xf32, #tpu.memory_space<vmem>>, vector<1x16x32xf32>
    %26 = vector.shape_cast %25 : vector<1x16x32xf32> to vector<16x32xf32>
    %27 = arith.addf %9, %26 : vector<16x32xf32>
    %c0_23 = arith.constant 0 : index
    %c0_24 = arith.constant 0 : index
    %c0_25 = arith.constant 0 : index
    %28 = vector.load %arg4[%c0_23, %c0_24, %c0_25] : memref<1x16x32xf32, #tpu.memory_space<vmem>>, vector<1x16x32xf32>
    %29 = vector.shape_cast %28 : vector<1x16x32xf32> to vector<16x32xf32>
    %30 = arith.addf %10, %29 : vector<16x32xf32>
    %31 = math.floor %27 : vector<16x32xf32>
    %32 = math.floor %30 : vector<16x32xf32>
    %cst_26 = arith.constant 1.000000e+00 : f32
    %33 = vector.broadcast %cst_26 : f32 to vector<16x32xf32>
    %34 = arith.addf %31, %33 : vector<16x32xf32>
    %cst_27 = arith.constant 1.000000e+00 : f32
    %35 = vector.broadcast %cst_27 : f32 to vector<16x32xf32>
    %36 = arith.addf %32, %35 : vector<16x32xf32>
    %37 = arith.subf %27, %31 : vector<16x32xf32>
    %cst_28 = arith.constant 1.000000e+00 : f32
    %38 = vector.broadcast %cst_28 : f32 to vector<16x32xf32>
    %39 = arith.subf %38, %37 : vector<16x32xf32>
    %40 = arith.subf %30, %32 : vector<16x32xf32>
    %cst_29 = arith.constant 1.000000e+00 : f32
    %41 = vector.broadcast %cst_29 : f32 to vector<16x32xf32>
    %42 = arith.subf %41, %40 : vector<16x32xf32>
    %43 = arith.mulf %39, %42 : vector<16x32xf32>
    %44 = arith.mulf %37, %42 : vector<16x32xf32>
    %45 = arith.mulf %39, %40 : vector<16x32xf32>
    %46 = arith.mulf %37, %40 : vector<16x32xf32>
    %cst_30 = arith.constant 0.000000e+00 : f32
    %47 = vector.broadcast %cst_30 : f32 to vector<16x32xf32>
    %48 = arith.cmpf oge, %31, %47 : vector<16x32xf32>
    %cst_31 = arith.constant 1.000000e+00 : f32
    %49 = vector.broadcast %cst_31 : f32 to vector<1x32xf32>
    %50 = arith.subf %21, %49 : vector<1x32xf32>
    %51 = vector.broadcast %50 : vector<1x32xf32> to vector<16x32xf32>
    %52 = arith.cmpf ole, %31, %51 : vector<16x32xf32>
    %53 = arith.andi %48, %52 : vector<16x32xi1>
    %cst_32 = arith.constant 0.000000e+00 : f32
    %54 = vector.broadcast %cst_32 : f32 to vector<16x32xf32>
    %55 = arith.cmpf oge, %32, %54 : vector<16x32xf32>
    %56 = arith.andi %53, %55 : vector<16x32xi1>
    %cst_33 = arith.constant 1.000000e+00 : f32
    %57 = vector.broadcast %cst_33 : f32 to vector<1x32xf32>
    %58 = arith.subf %22, %57 : vector<1x32xf32>
    %59 = vector.broadcast %58 : vector<1x32xf32> to vector<16x32xf32>
    %60 = arith.cmpf ole, %32, %59 : vector<16x32xf32>
    %61 = arith.andi %56, %60 : vector<16x32xi1>
    %cst_34 = arith.constant 1.000000e+00 : f32
    %62 = vector.broadcast %cst_34 : f32 to vector<1x32xf32>
    %63 = arith.subf %21, %62 : vector<1x32xf32>
    %cst_35 = arith.constant 0.000000e+00 : f32
    %64 = vector.broadcast %cst_35 : f32 to vector<16x32xf32>
    %65 = arith.maximumf %64, %31 : vector<16x32xf32>
    %66 = vector.broadcast %63 : vector<1x32xf32> to vector<16x32xf32>
    %67 = arith.minimumf %66, %65 : vector<16x32xf32>
    %cst_36 = arith.constant 1.000000e+00 : f32
    %68 = vector.broadcast %cst_36 : f32 to vector<1x32xf32>
    %69 = arith.subf %22, %68 : vector<1x32xf32>
    %cst_37 = arith.constant 0.000000e+00 : f32
    %70 = vector.broadcast %cst_37 : f32 to vector<16x32xf32>
    %71 = arith.maximumf %70, %32 : vector<16x32xf32>
    %72 = vector.broadcast %69 : vector<1x32xf32> to vector<16x32xf32>
    %73 = arith.minimumf %72, %71 : vector<16x32xf32>
    %74 = vector.broadcast %21 : vector<1x32xf32> to vector<16x32xf32>
    %75 = arith.mulf %73, %74 : vector<16x32xf32>
    %76 = vector.broadcast %23 : vector<1x32xf32> to vector<16x32xf32>
    %77 = arith.addf %76, %75 : vector<16x32xf32>
    %78 = arith.addf %77, %67 : vector<16x32xf32>
    %cst_38 = arith.constant 8.000000e+00 : f32
    %79 = vector.broadcast %cst_38 : f32 to vector<16x32xf32>
    %80 = arith.mulf %78, %79 : vector<16x32xf32>
    %81 = vector.broadcast %24 : vector<1x32xf32> to vector<16x32xf32>
    %82 = arith.addf %80, %81 : vector<16x32xf32>
    %cst_39 = arith.constant 0.000000e+00 : f32
    %83 = vector.broadcast %cst_39 : f32 to vector<16x32xf32>
    %84 = arith.select %61, %43, %83 : vector<16x32xi1>, vector<16x32xf32>
    %85 = arith.mulf %84, %20 : vector<16x32xf32>
    %cst_40 = arith.constant 0.000000e+00 : f32
    %86 = vector.broadcast %cst_40 : f32 to vector<16x32xf32>
    %87 = arith.cmpf oge, %34, %86 : vector<16x32xf32>
    %cst_41 = arith.constant 1.000000e+00 : f32
    %88 = vector.broadcast %cst_41 : f32 to vector<1x32xf32>
    %89 = arith.subf %21, %88 : vector<1x32xf32>
    %90 = vector.broadcast %89 : vector<1x32xf32> to vector<16x32xf32>
    %91 = arith.cmpf ole, %34, %90 : vector<16x32xf32>
    %92 = arith.andi %87, %91 : vector<16x32xi1>
    %cst_42 = arith.constant 0.000000e+00 : f32
    %93 = vector.broadcast %cst_42 : f32 to vector<16x32xf32>
    %94 = arith.cmpf oge, %32, %93 : vector<16x32xf32>
    %95 = arith.andi %92, %94 : vector<16x32xi1>
    %cst_43 = arith.constant 1.000000e+00 : f32
    %96 = vector.broadcast %cst_43 : f32 to vector<1x32xf32>
    %97 = arith.subf %22, %96 : vector<1x32xf32>
    %98 = vector.broadcast %97 : vector<1x32xf32> to vector<16x32xf32>
    %99 = arith.cmpf ole, %32, %98 : vector<16x32xf32>
    %100 = arith.andi %95, %99 : vector<16x32xi1>
    %cst_44 = arith.constant 1.000000e+00 : f32
    %101 = vector.broadcast %cst_44 : f32 to vector<1x32xf32>
    %102 = arith.subf %21, %101 : vector<1x32xf32>
    %cst_45 = arith.constant 0.000000e+00 : f32
    %103 = vector.broadcast %cst_45 : f32 to vector<16x32xf32>
    %104 = arith.maximumf %103, %34 : vector<16x32xf32>
    %105 = vector.broadcast %102 : vector<1x32xf32> to vector<16x32xf32>
    %106 = arith.minimumf %105, %104 : vector<16x32xf32>
    %cst_46 = arith.constant 1.000000e+00 : f32
    %107 = vector.broadcast %cst_46 : f32 to vector<1x32xf32>
    %108 = arith.subf %22, %107 : vector<1x32xf32>
    %cst_47 = arith.constant 0.000000e+00 : f32
    %109 = vector.broadcast %cst_47 : f32 to vector<16x32xf32>
    %110 = arith.maximumf %109, %32 : vector<16x32xf32>
    %111 = vector.broadcast %108 : vector<1x32xf32> to vector<16x32xf32>
    %112 = arith.minimumf %111, %110 : vector<16x32xf32>
    %113 = vector.broadcast %21 : vector<1x32xf32> to vector<16x32xf32>
    %114 = arith.mulf %112, %113 : vector<16x32xf32>
    %115 = vector.broadcast %23 : vector<1x32xf32> to vector<16x32xf32>
    %116 = arith.addf %115, %114 : vector<16x32xf32>
    %117 = arith.addf %116, %106 : vector<16x32xf32>
    %cst_48 = arith.constant 8.000000e+00 : f32
    %118 = vector.broadcast %cst_48 : f32 to vector<16x32xf32>
    %119 = arith.mulf %117, %118 : vector<16x32xf32>
    %120 = vector.broadcast %24 : vector<1x32xf32> to vector<16x32xf32>
    %121 = arith.addf %119, %120 : vector<16x32xf32>
    %cst_49 = arith.constant 0.000000e+00 : f32
    %122 = vector.broadcast %cst_49 : f32 to vector<16x32xf32>
    %123 = arith.select %100, %44, %122 : vector<16x32xi1>, vector<16x32xf32>
    %124 = arith.mulf %123, %20 : vector<16x32xf32>
    %cst_50 = arith.constant 0.000000e+00 : f32
    %125 = vector.broadcast %cst_50 : f32 to vector<16x32xf32>
    %126 = arith.cmpf oge, %31, %125 : vector<16x32xf32>
    %cst_51 = arith.constant 1.000000e+00 : f32
    %127 = vector.broadcast %cst_51 : f32 to vector<1x32xf32>
    %128 = arith.subf %21, %127 : vector<1x32xf32>
    %129 = vector.broadcast %128 : vector<1x32xf32> to vector<16x32xf32>
    %130 = arith.cmpf ole, %31, %129 : vector<16x32xf32>
    %131 = arith.andi %126, %130 : vector<16x32xi1>
    %cst_52 = arith.constant 0.000000e+00 : f32
    %132 = vector.broadcast %cst_52 : f32 to vector<16x32xf32>
    %133 = arith.cmpf oge, %36, %132 : vector<16x32xf32>
    %134 = arith.andi %131, %133 : vector<16x32xi1>
    %cst_53 = arith.constant 1.000000e+00 : f32
    %135 = vector.broadcast %cst_53 : f32 to vector<1x32xf32>
    %136 = arith.subf %22, %135 : vector<1x32xf32>
    %137 = vector.broadcast %136 : vector<1x32xf32> to vector<16x32xf32>
    %138 = arith.cmpf ole, %36, %137 : vector<16x32xf32>
    %139 = arith.andi %134, %138 : vector<16x32xi1>
    %cst_54 = arith.constant 1.000000e+00 : f32
    %140 = vector.broadcast %cst_54 : f32 to vector<1x32xf32>
    %141 = arith.subf %21, %140 : vector<1x32xf32>
    %cst_55 = arith.constant 0.000000e+00 : f32
    %142 = vector.broadcast %cst_55 : f32 to vector<16x32xf32>
    %143 = arith.maximumf %142, %31 : vector<16x32xf32>
    %144 = vector.broadcast %141 : vector<1x32xf32> to vector<16x32xf32>
    %145 = arith.minimumf %144, %143 : vector<16x32xf32>
    %cst_56 = arith.constant 1.000000e+00 : f32
    %146 = vector.broadcast %cst_56 : f32 to vector<1x32xf32>
    %147 = arith.subf %22, %146 : vector<1x32xf32>
    %cst_57 = arith.constant 0.000000e+00 : f32
    %148 = vector.broadcast %cst_57 : f32 to vector<16x32xf32>
    %149 = arith.maximumf %148, %36 : vector<16x32xf32>
    %150 = vector.broadcast %147 : vector<1x32xf32> to vector<16x32xf32>
    %151 = arith.minimumf %150, %149 : vector<16x32xf32>
    %152 = vector.broadcast %21 : vector<1x32xf32> to vector<16x32xf32>
    %153 = arith.mulf %151, %152 : vector<16x32xf32>
    %154 = vector.broadcast %23 : vector<1x32xf32> to vector<16x32xf32>
    %155 = arith.addf %154, %153 : vector<16x32xf32>
    %156 = arith.addf %155, %145 : vector<16x32xf32>
    %cst_58 = arith.constant 8.000000e+00 : f32
    %157 = vector.broadcast %cst_58 : f32 to vector<16x32xf32>
    %158 = arith.mulf %156, %157 : vector<16x32xf32>
    %159 = vector.broadcast %24 : vector<1x32xf32> to vector<16x32xf32>
    %160 = arith.addf %158, %159 : vector<16x32xf32>
    %cst_59 = arith.constant 0.000000e+00 : f32
    %161 = vector.broadcast %cst_59 : f32 to vector<16x32xf32>
    %162 = arith.select %139, %45, %161 : vector<16x32xi1>, vector<16x32xf32>
    %163 = arith.mulf %162, %20 : vector<16x32xf32>
    %cst_60 = arith.constant 0.000000e+00 : f32
    %164 = vector.broadcast %cst_60 : f32 to vector<16x32xf32>
    %165 = arith.cmpf oge, %34, %164 : vector<16x32xf32>
    %cst_61 = arith.constant 1.000000e+00 : f32
    %166 = vector.broadcast %cst_61 : f32 to vector<1x32xf32>
    %167 = arith.subf %21, %166 : vector<1x32xf32>
    %168 = vector.broadcast %167 : vector<1x32xf32> to vector<16x32xf32>
    %169 = arith.cmpf ole, %34, %168 : vector<16x32xf32>
    %170 = arith.andi %165, %169 : vector<16x32xi1>
    %cst_62 = arith.constant 0.000000e+00 : f32
    %171 = vector.broadcast %cst_62 : f32 to vector<16x32xf32>
    %172 = arith.cmpf oge, %36, %171 : vector<16x32xf32>
    %173 = arith.andi %170, %172 : vector<16x32xi1>
    %cst_63 = arith.constant 1.000000e+00 : f32
    %174 = vector.broadcast %cst_63 : f32 to vector<1x32xf32>
    %175 = arith.subf %22, %174 : vector<1x32xf32>
    %176 = vector.broadcast %175 : vector<1x32xf32> to vector<16x32xf32>
    %177 = arith.cmpf ole, %36, %176 : vector<16x32xf32>
    %178 = arith.andi %173, %177 : vector<16x32xi1>
    %cst_64 = arith.constant 1.000000e+00 : f32
    %179 = vector.broadcast %cst_64 : f32 to vector<1x32xf32>
    %180 = arith.subf %21, %179 : vector<1x32xf32>
    %cst_65 = arith.constant 0.000000e+00 : f32
    %181 = vector.broadcast %cst_65 : f32 to vector<16x32xf32>
    %182 = arith.maximumf %181, %34 : vector<16x32xf32>
    %183 = vector.broadcast %180 : vector<1x32xf32> to vector<16x32xf32>
    %184 = arith.minimumf %183, %182 : vector<16x32xf32>
    %cst_66 = arith.constant 1.000000e+00 : f32
    %185 = vector.broadcast %cst_66 : f32 to vector<1x32xf32>
    %186 = arith.subf %22, %185 : vector<1x32xf32>
    %cst_67 = arith.constant 0.000000e+00 : f32
    %187 = vector.broadcast %cst_67 : f32 to vector<16x32xf32>
    %188 = arith.maximumf %187, %36 : vector<16x32xf32>
    %189 = vector.broadcast %186 : vector<1x32xf32> to vector<16x32xf32>
    %190 = arith.minimumf %189, %188 : vector<16x32xf32>
    %191 = vector.broadcast %21 : vector<1x32xf32> to vector<16x32xf32>
    %192 = arith.mulf %190, %191 : vector<16x32xf32>
    %193 = vector.broadcast %23 : vector<1x32xf32> to vector<16x32xf32>
    %194 = arith.addf %193, %192 : vector<16x32xf32>
    %195 = arith.addf %194, %184 : vector<16x32xf32>
    %cst_68 = arith.constant 8.000000e+00 : f32
    %196 = vector.broadcast %cst_68 : f32 to vector<16x32xf32>
    %197 = arith.mulf %195, %196 : vector<16x32xf32>
    %198 = vector.broadcast %24 : vector<1x32xf32> to vector<16x32xf32>
    %199 = arith.addf %197, %198 : vector<16x32xf32>
    %cst_69 = arith.constant 0.000000e+00 : f32
    %200 = vector.broadcast %cst_69 : f32 to vector<16x32xf32>
    %201 = arith.select %178, %46, %200 : vector<16x32xi1>, vector<16x32xf32>
    %202 = arith.mulf %201, %20 : vector<16x32xf32>
    %203 = tpu.concatenate %82, %121, %160, %199 in 1 : vector<16x32xf32>, vector<16x32xf32>, vector<16x32xf32>, vector<16x32xf32> -> vector<16x128xf32>
    %204 = arith.fptosi %203 : vector<16x128xf32> to vector<16x128xi32>
    %c0_70 = arith.constant 0 : index
    %c0_71 = arith.constant 0 : index
    %c0_72 = arith.constant 0 : index
    %205 = vector.load %arg12[%c0_70, %c0_71, %c0_72] : memref<1x16x128xi32, #tpu.memory_space<vmem>>, vector<1x16x128xi32>
    %206 = vector.shape_cast %205 : vector<1x16x128xi32> to vector<16x128xi32>
    %207 = vector.shape_cast %204 : vector<16x128xi32> to vector<1x16x128xi32>
    tpu.vector_store %arg12[%c0_70, %c0_71, %c0_72], %207 {strides = array<i32>} : memref<1x16x128xi32, #tpu.memory_space<vmem>>, vector<1x16x128xi32>,
    %208 = tpu.concatenate %85, %124, %163, %202 in 1 : vector<16x32xf32>, vector<16x32xf32>, vector<16x32xf32>, vector<16x32xf32> -> vector<16x128xf32>
    %c0_73 = arith.constant 0 : index
    %c0_74 = arith.constant 0 : index
    %c0_75 = arith.constant 0 : index
    %209 = vector.load %arg13[%c0_73, %c0_74, %c0_75] : memref<1x16x128xf32, #tpu.memory_space<vmem>>, vector<1x16x128xf32>
    %210 = vector.shape_cast %209 : vector<1x16x128xf32> to vector<16x128xf32>
    %211 = vector.shape_cast %208 : vector<16x128xf32> to vector<1x16x128xf32>
    tpu.vector_store %arg13[%c0_73, %c0_74, %c0_75], %211 {strides = array<i32>} : memref<1x16x128xf32, #tpu.memory_space<vmem>>, vector<1x16x128xf32>,
    return
  }
  func.func @transform_0(%arg0: i32, %arg1: i32) -> (i32, i32, i32) {
    %c0_i32 = arith.constant 0 : i32
    %c0_i32_0 = arith.constant 0 : i32
    return %arg0, %arg1, %c0_i32 : i32, i32, i32
  }
  func.func @transform_1(%arg0: i32, %arg1: i32) -> (i32, i32, i32) {
    %c0_i32 = arith.constant 0 : i32
    %c0_i32_0 = arith.constant 0 : i32
    return %arg0, %arg1, %c0_i32 : i32, i32, i32
  }
  func.func @transform_2(%arg0: i32, %arg1: i32) -> (i32, i32, i32) {
    %c0_i32 = arith.constant 0 : i32
    %c0_i32_0 = arith.constant 0 : i32
    return %arg0, %arg1, %c0_i32 : i32, i32, i32
  }
  func.func @transform_3(%arg0: i32, %arg1: i32) -> (i32, i32, i32) {
    %c0_i32 = arith.constant 0 : i32
    %c0_i32_0 = arith.constant 0 : i32
    %c0_i32_1 = arith.constant 0 : i32
    return %arg0, %c0_i32, %c0_i32_0 : i32, i32, i32
  }
  func.func @transform_4(%arg0: i32, %arg1: i32) -> (i32, i32, i32) {
    %c0_i32 = arith.constant 0 : i32
    %c0_i32_0 = arith.constant 0 : i32
    %c0_i32_1 = arith.constant 0 : i32
    return %arg0, %c0_i32, %c0_i32_0 : i32, i32, i32
  }
  func.func @transform_5(%arg0: i32, %arg1: i32) -> (i32, i32) {
    %c0_i32 = arith.constant 0 : i32
    %c0_i32_0 = arith.constant 0 : i32
    %c0_i32_1 = arith.constant 0 : i32
    return %c0_i32, %c0_i32_0 : i32, i32
  }
  func.func @transform_6(%arg0: i32, %arg1: i32) -> (i32, i32) {
    %c0_i32 = arith.constant 0 : i32
    %c0_i32_0 = arith.constant 0 : i32
    %c0_i32_1 = arith.constant 0 : i32
    return %c0_i32, %c0_i32_0 : i32, i32
  }
  func.func @transform_7(%arg0: i32, %arg1: i32) -> (i32, i32) {
    %c0_i32 = arith.constant 0 : i32
    %c0_i32_0 = arith.constant 0 : i32
    %c0_i32_1 = arith.constant 0 : i32
    return %c0_i32, %c0_i32_0 : i32, i32
  }
  func.func @transform_8(%arg0: i32, %arg1: i32) -> (i32, i32) {
    %c0_i32 = arith.constant 0 : i32
    %c0_i32_0 = arith.constant 0 : i32
    %c0_i32_1 = arith.constant 0 : i32
    return %c0_i32, %c0_i32_0 : i32, i32
  }
  func.func @transform_9(%arg0: i32, %arg1: i32) -> (i32, i32) {
    %c0_i32 = arith.constant 0 : i32
    %c0_i32_0 = arith.constant 0 : i32
    %c0_i32_1 = arith.constant 0 : i32
    return %c0_i32, %c0_i32_0 : i32, i32
  }
  func.func @transform_10(%arg0: i32, %arg1: i32) -> (i32, i32, i32) {
    %c0_i32 = arith.constant 0 : i32
    %c0_i32_0 = arith.constant 0 : i32
    return %arg0, %arg1, %c0_i32 : i32, i32, i32
  }
  func.func @transform_11(%arg0: i32, %arg1: i32) -> (i32, i32, i32) {
    %c0_i32 = arith.constant 0 : i32
    %c0_i32_0 = arith.constant 0 : i32
    return %arg0, %arg1, %c0_i32 : i32, i32, i32
  }
}

module attributes {stable_mosaic.version = 11 : i64} {
  func.func @_dual_linear_kernel(%arg0: i32, %arg1: memref<160x128xf32, #tpu.memory_space<vmem>>, %arg2: memref<128x128xf32, #tpu.memory_space<vmem>>, %arg3: memref<1x128xf32, #tpu.memory_space<vmem>>, %arg4: memref<128x128xf32, #tpu.memory_space<vmem>>, %arg5: memref<1x128xf32, #tpu.memory_space<vmem>>, %arg6: memref<160x128xf32, #tpu.memory_space<vmem>>, %arg7: memref<160x128xf32, #tpu.memory_space<vmem>>) attributes {dimension_semantics = [#tpu.dimension_semantics<parallel>], iteration_bounds = array<i64: 1>, scalar_prefetch = 0 : i64, scratch_operands = 0 : i64, tpu.core_type = #tpu.core_type<tc>, window_params = [{transform_indices = @transform_0, window_bounds = array<i64: 160, 128>}, {pipeline_mode = #tpu.pipeline_mode<synchronous>, transform_indices = @transform_1, window_bounds = array<i64: 128, 128>}, {pipeline_mode = #tpu.pipeline_mode<synchronous>, transform_indices = @transform_2, window_bounds = array<i64: 1, 128>}, {pipeline_mode = #tpu.pipeline_mode<synchronous>, transform_indices = @transform_3, window_bounds = array<i64: 128, 128>}, {pipeline_mode = #tpu.pipeline_mode<synchronous>, transform_indices = @transform_4, window_bounds = array<i64: 1, 128>}, {transform_indices = @transform_5, window_bounds = array<i64: 160, 128>}, {transform_indices = @transform_6, window_bounds = array<i64: 160, 128>}]} {
    %c0 = arith.constant 0 : index
    %c0_0 = arith.constant 0 : index
    %0 = vector.load %arg1[%c0, %c0_0] : memref<160x128xf32, #tpu.memory_space<vmem>>, vector<160x128xf32>
    %c0_1 = arith.constant 0 : index
    %c0_2 = arith.constant 0 : index
    %1 = vector.load %arg2[%c0_1, %c0_2] : memref<128x128xf32, #tpu.memory_space<vmem>>, vector<128x128xf32>
    %cst = arith.constant dense<0.000000e+00> : vector<160x128xf32>
    %2 = tpu.matmul %0, %1, %cst {dimension_numbers = #tpu.dot_dimension_numbers<[1], [0], [0], [1], [0, 0, 1, 1], [], []>} : vector<160x128xf32>, vector<128x128xf32>, vector<160x128xf32> -> vector<160x128xf32>
    %c0_3 = arith.constant 0 : index
    %c0_4 = arith.constant 0 : index
    %3 = vector.load %arg3[%c0_3, %c0_4] : memref<1x128xf32, #tpu.memory_space<vmem>>, vector<1x128xf32>
    %4 = vector.broadcast %3 : vector<1x128xf32> to vector<160x128xf32>
    %5 = arith.addf %2, %4 : vector<160x128xf32>
    %c0_5 = arith.constant 0 : index
    %c0_6 = arith.constant 0 : index
    %6 = vector.load %arg6[%c0_5, %c0_6] : memref<160x128xf32, #tpu.memory_space<vmem>>, vector<160x128xf32>
    tpu.vector_store %arg6[%c0_5, %c0_6], %5 {strides = array<i32>} : memref<160x128xf32, #tpu.memory_space<vmem>>, vector<160x128xf32>,
    %c0_7 = arith.constant 0 : index
    %c0_8 = arith.constant 0 : index
    %7 = vector.load %arg4[%c0_7, %c0_8] : memref<128x128xf32, #tpu.memory_space<vmem>>, vector<128x128xf32>
    %cst_9 = arith.constant dense<0.000000e+00> : vector<160x128xf32>
    %8 = tpu.matmul %0, %7, %cst_9 {dimension_numbers = #tpu.dot_dimension_numbers<[1], [0], [0], [1], [0, 0, 1, 1], [], []>} : vector<160x128xf32>, vector<128x128xf32>, vector<160x128xf32> -> vector<160x128xf32>
    %c0_10 = arith.constant 0 : index
    %c0_11 = arith.constant 0 : index
    %9 = vector.load %arg5[%c0_10, %c0_11] : memref<1x128xf32, #tpu.memory_space<vmem>>, vector<1x128xf32>
    %10 = vector.broadcast %9 : vector<1x128xf32> to vector<160x128xf32>
    %11 = arith.addf %8, %10 : vector<160x128xf32>
    %c0_12 = arith.constant 0 : index
    %c0_13 = arith.constant 0 : index
    %12 = vector.load %arg7[%c0_12, %c0_13] : memref<160x128xf32, #tpu.memory_space<vmem>>, vector<160x128xf32>
    tpu.vector_store %arg7[%c0_12, %c0_13], %11 {strides = array<i32>} : memref<160x128xf32, #tpu.memory_space<vmem>>, vector<160x128xf32>,
    return
  }
  func.func @transform_0(%arg0: i32) -> (i32, i32) {
    %c0_i32 = arith.constant 0 : i32
    %c0_i32_0 = arith.constant 0 : i32
    return %arg0, %c0_i32 : i32, i32
  }
  func.func @transform_1(%arg0: i32) -> (i32, i32) {
    %c0_i32 = arith.constant 0 : i32
    %c0_i32_0 = arith.constant 0 : i32
    %c0_i32_1 = arith.constant 0 : i32
    return %c0_i32, %c0_i32_0 : i32, i32
  }
  func.func @transform_2(%arg0: i32) -> (i32, i32) {
    %c0_i32 = arith.constant 0 : i32
    %c0_i32_0 = arith.constant 0 : i32
    %c0_i32_1 = arith.constant 0 : i32
    return %c0_i32, %c0_i32_0 : i32, i32
  }
  func.func @transform_3(%arg0: i32) -> (i32, i32) {
    %c0_i32 = arith.constant 0 : i32
    %c0_i32_0 = arith.constant 0 : i32
    %c0_i32_1 = arith.constant 0 : i32
    return %c0_i32, %c0_i32_0 : i32, i32
  }
  func.func @transform_4(%arg0: i32) -> (i32, i32) {
    %c0_i32 = arith.constant 0 : i32
    %c0_i32_0 = arith.constant 0 : i32
    %c0_i32_1 = arith.constant 0 : i32
    return %c0_i32, %c0_i32_0 : i32, i32
  }
  func.func @transform_5(%arg0: i32) -> (i32, i32) {
    %c0_i32 = arith.constant 0 : i32
    %c0_i32_0 = arith.constant 0 : i32
    return %arg0, %c0_i32 : i32, i32
  }
  func.func @transform_6(%arg0: i32) -> (i32, i32) {
    %c0_i32 = arith.constant 0 : i32
    %c0_i32_0 = arith.constant 0 : i32
    return %arg0, %c0_i32 : i32, i32
  }
}

module attributes {stable_mosaic.version = 11 : i64} {
  func.func @_branch_epilogue_kernel(%arg0: i32, %arg1: i32, %arg2: memref<1x16x128xf32, #tpu.memory_space<vmem>>, %arg3: memref<1x16x128xf32, #tpu.memory_space<vmem>>, %arg4: memref<1x128x128xf32, #tpu.memory_space<vmem>>, %arg5: memref<1x1x128xf32, #tpu.memory_space<vmem>>, %arg6: memref<1x1x128xf32, #tpu.memory_space<vmem>>, %arg7: memref<1x1x128xf32, #tpu.memory_space<vmem>>, %arg8: memref<1x128x256xf32, #tpu.memory_space<vmem>>, %arg9: memref<1x1x256xf32, #tpu.memory_space<vmem>>, %arg10: memref<1x256x128xf32, #tpu.memory_space<vmem>>, %arg11: memref<1x1x128xf32, #tpu.memory_space<vmem>>, %arg12: memref<1x1x128xf32, #tpu.memory_space<vmem>>, %arg13: memref<1x1x128xf32, #tpu.memory_space<vmem>>, %arg14: memref<1x16x128xf32, #tpu.memory_space<vmem>>) attributes {dimension_semantics = [#tpu.dimension_semantics<parallel>, #tpu.dimension_semantics<parallel>], iteration_bounds = array<i64: 2, 1>, scalar_prefetch = 0 : i64, scratch_operands = 0 : i64, tpu.core_type = #tpu.core_type<tc>, window_params = [{transform_indices = @transform_0, window_bounds = array<i64: 1, 16, 128>}, {transform_indices = @transform_1, window_bounds = array<i64: 1, 16, 128>}, {transform_indices = @transform_2, window_bounds = array<i64: 1, 128, 128>}, {transform_indices = @transform_3, window_bounds = array<i64: 1, 1, 128>}, {transform_indices = @transform_4, window_bounds = array<i64: 1, 1, 128>}, {transform_indices = @transform_5, window_bounds = array<i64: 1, 1, 128>}, {transform_indices = @transform_6, window_bounds = array<i64: 1, 128, 256>}, {transform_indices = @transform_7, window_bounds = array<i64: 1, 1, 256>}, {transform_indices = @transform_8, window_bounds = array<i64: 1, 256, 128>}, {transform_indices = @transform_9, window_bounds = array<i64: 1, 1, 128>}, {transform_indices = @transform_10, window_bounds = array<i64: 1, 1, 128>}, {transform_indices = @transform_11, window_bounds = array<i64: 1, 1, 128>}, {transform_indices = @transform_12, window_bounds = array<i64: 1, 16, 128>}]} {
    %c0 = arith.constant 0 : index
    %c0_0 = arith.constant 0 : index
    %c0_1 = arith.constant 0 : index
    %0 = vector.load %arg2[%c0, %c0_0, %c0_1] : memref<1x16x128xf32, #tpu.memory_space<vmem>>, vector<1x16x128xf32>
    %1 = vector.shape_cast %0 : vector<1x16x128xf32> to vector<16x128xf32>
    %c0_2 = arith.constant 0 : index
    %c0_3 = arith.constant 0 : index
    %c0_4 = arith.constant 0 : index
    %2 = vector.load %arg4[%c0_2, %c0_3, %c0_4] : memref<1x128x128xf32, #tpu.memory_space<vmem>>, vector<1x128x128xf32>
    %3 = vector.shape_cast %2 : vector<1x128x128xf32> to vector<128x128xf32>
    %cst = arith.constant dense<0.000000e+00> : vector<16x128xf32>
    %4 = tpu.matmul %1, %3, %cst {dimension_numbers = #tpu.dot_dimension_numbers<[1], [0], [0], [1], [0, 0, 1, 1], [], []>} : vector<16x128xf32>, vector<128x128xf32>, vector<16x128xf32> -> vector<16x128xf32>
    %c0_5 = arith.constant 0 : index
    %c0_6 = arith.constant 0 : index
    %c0_7 = arith.constant 0 : index
    %5 = vector.load %arg5[%c0_5, %c0_6, %c0_7] : memref<1x1x128xf32, #tpu.memory_space<vmem>>, vector<1x1x128xf32>
    %6 = vector.shape_cast %5 : vector<1x1x128xf32> to vector<1x128xf32>
    %7 = vector.broadcast %6 : vector<1x128xf32> to vector<16x128xf32>
    %8 = arith.addf %4, %7 : vector<16x128xf32>
    %c0_8 = arith.constant 0 : index
    %c0_9 = arith.constant 0 : index
    %c0_10 = arith.constant 0 : index
    %9 = vector.load %arg3[%c0_8, %c0_9, %c0_10] : memref<1x16x128xf32, #tpu.memory_space<vmem>>, vector<1x16x128xf32>
    %10 = vector.shape_cast %9 : vector<1x16x128xf32> to vector<16x128xf32>
    %11 = arith.addf %10, %8 : vector<16x128xf32>
    %c0_11 = arith.constant 0 : index
    %c0_12 = arith.constant 0 : index
    %c0_13 = arith.constant 0 : index
    %12 = vector.load %arg6[%c0_11, %c0_12, %c0_13] : memref<1x1x128xf32, #tpu.memory_space<vmem>>, vector<1x1x128xf32>
    %13 = vector.shape_cast %12 : vector<1x1x128xf32> to vector<1x128xf32>
    %c0_14 = arith.constant 0 : index
    %c0_15 = arith.constant 0 : index
    %c0_16 = arith.constant 0 : index
    %14 = vector.load %arg7[%c0_14, %c0_15, %c0_16] : memref<1x1x128xf32, #tpu.memory_space<vmem>>, vector<1x1x128xf32>
    %15 = vector.shape_cast %14 : vector<1x1x128xf32> to vector<1x128xf32>
    %cst_17 = arith.constant dense<0.000000e+00> : vector<16xf32>
    %16 = vector.multi_reduction <add>, %11, %cst_17 [1] : vector<16x128xf32> to vector<16xf32>
    %17 = vector.shape_cast %16 : vector<16xf32> to vector<16x1xf32>
    %cst_18 = arith.constant 1.280000e+02 : f32
    %18 = vector.broadcast %cst_18 : f32 to vector<16x1xf32>
    %19 = arith.divf %17, %18 : vector<16x1xf32>
    %20 = vector.broadcast %19 : vector<16x1xf32> to vector<16x128xf32>
    %21 = arith.subf %11, %20 : vector<16x128xf32>
    %22 = arith.mulf %21, %21 : vector<16x128xf32>
    %cst_19 = arith.constant dense<0.000000e+00> : vector<16xf32>
    %23 = vector.multi_reduction <add>, %22, %cst_19 [1] : vector<16x128xf32> to vector<16xf32>
    %24 = vector.shape_cast %23 : vector<16xf32> to vector<16x1xf32>
    %cst_20 = arith.constant 1.280000e+02 : f32
    %25 = vector.broadcast %cst_20 : f32 to vector<16x1xf32>
    %26 = arith.divf %24, %25 : vector<16x1xf32>
    %27 = vector.broadcast %19 : vector<16x1xf32> to vector<16x128xf32>
    %28 = arith.subf %11, %27 : vector<16x128xf32>
    %cst_21 = arith.constant 9.99999974E-6 : f32
    %29 = vector.broadcast %cst_21 : f32 to vector<16x1xf32>
    %30 = arith.addf %26, %29 : vector<16x1xf32>
    %31 = math.rsqrt %30 : vector<16x1xf32>
    %32 = vector.broadcast %31 : vector<16x1xf32> to vector<16x128xf32>
    %33 = arith.mulf %28, %32 : vector<16x128xf32>
    %34 = vector.broadcast %13 : vector<1x128xf32> to vector<16x128xf32>
    %35 = arith.mulf %33, %34 : vector<16x128xf32>
    %36 = vector.broadcast %15 : vector<1x128xf32> to vector<16x128xf32>
    %37 = arith.addf %35, %36 : vector<16x128xf32>
    %c0_22 = arith.constant 0 : index
    %c0_23 = arith.constant 0 : index
    %c0_24 = arith.constant 0 : index
    %38 = vector.load %arg8[%c0_22, %c0_23, %c0_24] : memref<1x128x256xf32, #tpu.memory_space<vmem>>, vector<1x128x256xf32>
    %39 = vector.shape_cast %38 : vector<1x128x256xf32> to vector<128x256xf32>
    %cst_25 = arith.constant dense<0.000000e+00> : vector<16x256xf32>
    %40 = tpu.matmul %37, %39, %cst_25 {dimension_numbers = #tpu.dot_dimension_numbers<[1], [0], [0], [1], [0, 0, 1, 1], [], []>} : vector<16x128xf32>, vector<128x256xf32>, vector<16x256xf32> -> vector<16x256xf32>
    %c0_26 = arith.constant 0 : index
    %c0_27 = arith.constant 0 : index
    %c0_28 = arith.constant 0 : index
    %41 = vector.load %arg9[%c0_26, %c0_27, %c0_28] : memref<1x1x256xf32, #tpu.memory_space<vmem>>, vector<1x1x256xf32>
    %42 = vector.shape_cast %41 : vector<1x1x256xf32> to vector<1x256xf32>
    %43 = vector.broadcast %42 : vector<1x256xf32> to vector<16x256xf32>
    %44 = arith.addf %40, %43 : vector<16x256xf32>
    %cst_29 = arith.constant 0.000000e+00 : f32
    %45 = vector.broadcast %cst_29 : f32 to vector<16x256xf32>
    %46 = arith.maximumf %44, %45 : vector<16x256xf32>
    %c0_30 = arith.constant 0 : index
    %c0_31 = arith.constant 0 : index
    %c0_32 = arith.constant 0 : index
    %47 = vector.load %arg10[%c0_30, %c0_31, %c0_32] : memref<1x256x128xf32, #tpu.memory_space<vmem>>, vector<1x256x128xf32>
    %48 = vector.shape_cast %47 : vector<1x256x128xf32> to vector<256x128xf32>
    %cst_33 = arith.constant dense<0.000000e+00> : vector<16x128xf32>
    %49 = tpu.matmul %46, %48, %cst_33 {dimension_numbers = #tpu.dot_dimension_numbers<[1], [0], [0], [1], [0, 0, 1, 1], [], []>} : vector<16x256xf32>, vector<256x128xf32>, vector<16x128xf32> -> vector<16x128xf32>
    %c0_34 = arith.constant 0 : index
    %c0_35 = arith.constant 0 : index
    %c0_36 = arith.constant 0 : index
    %50 = vector.load %arg11[%c0_34, %c0_35, %c0_36] : memref<1x1x128xf32, #tpu.memory_space<vmem>>, vector<1x1x128xf32>
    %51 = vector.shape_cast %50 : vector<1x1x128xf32> to vector<1x128xf32>
    %52 = vector.broadcast %51 : vector<1x128xf32> to vector<16x128xf32>
    %53 = arith.addf %49, %52 : vector<16x128xf32>
    %54 = arith.addf %37, %53 : vector<16x128xf32>
    %c0_37 = arith.constant 0 : index
    %c0_38 = arith.constant 0 : index
    %c0_39 = arith.constant 0 : index
    %55 = vector.load %arg12[%c0_37, %c0_38, %c0_39] : memref<1x1x128xf32, #tpu.memory_space<vmem>>, vector<1x1x128xf32>
    %56 = vector.shape_cast %55 : vector<1x1x128xf32> to vector<1x128xf32>
    %c0_40 = arith.constant 0 : index
    %c0_41 = arith.constant 0 : index
    %c0_42 = arith.constant 0 : index
    %57 = vector.load %arg13[%c0_40, %c0_41, %c0_42] : memref<1x1x128xf32, #tpu.memory_space<vmem>>, vector<1x1x128xf32>
    %58 = vector.shape_cast %57 : vector<1x1x128xf32> to vector<1x128xf32>
    %cst_43 = arith.constant dense<0.000000e+00> : vector<16xf32>
    %59 = vector.multi_reduction <add>, %54, %cst_43 [1] : vector<16x128xf32> to vector<16xf32>
    %60 = vector.shape_cast %59 : vector<16xf32> to vector<16x1xf32>
    %cst_44 = arith.constant 1.280000e+02 : f32
    %61 = vector.broadcast %cst_44 : f32 to vector<16x1xf32>
    %62 = arith.divf %60, %61 : vector<16x1xf32>
    %63 = vector.broadcast %62 : vector<16x1xf32> to vector<16x128xf32>
    %64 = arith.subf %54, %63 : vector<16x128xf32>
    %65 = arith.mulf %64, %64 : vector<16x128xf32>
    %cst_45 = arith.constant dense<0.000000e+00> : vector<16xf32>
    %66 = vector.multi_reduction <add>, %65, %cst_45 [1] : vector<16x128xf32> to vector<16xf32>
    %67 = vector.shape_cast %66 : vector<16xf32> to vector<16x1xf32>
    %cst_46 = arith.constant 1.280000e+02 : f32
    %68 = vector.broadcast %cst_46 : f32 to vector<16x1xf32>
    %69 = arith.divf %67, %68 : vector<16x1xf32>
    %70 = vector.broadcast %62 : vector<16x1xf32> to vector<16x128xf32>
    %71 = arith.subf %54, %70 : vector<16x128xf32>
    %cst_47 = arith.constant 9.99999974E-6 : f32
    %72 = vector.broadcast %cst_47 : f32 to vector<16x1xf32>
    %73 = arith.addf %69, %72 : vector<16x1xf32>
    %74 = math.rsqrt %73 : vector<16x1xf32>
    %75 = vector.broadcast %74 : vector<16x1xf32> to vector<16x128xf32>
    %76 = arith.mulf %71, %75 : vector<16x128xf32>
    %77 = vector.broadcast %56 : vector<1x128xf32> to vector<16x128xf32>
    %78 = arith.mulf %76, %77 : vector<16x128xf32>
    %79 = vector.broadcast %58 : vector<1x128xf32> to vector<16x128xf32>
    %80 = arith.addf %78, %79 : vector<16x128xf32>
    %c0_48 = arith.constant 0 : index
    %c0_49 = arith.constant 0 : index
    %c0_50 = arith.constant 0 : index
    %81 = vector.load %arg14[%c0_48, %c0_49, %c0_50] : memref<1x16x128xf32, #tpu.memory_space<vmem>>, vector<1x16x128xf32>
    %82 = vector.shape_cast %81 : vector<1x16x128xf32> to vector<16x128xf32>
    %83 = vector.shape_cast %80 : vector<16x128xf32> to vector<1x16x128xf32>
    tpu.vector_store %arg14[%c0_48, %c0_49, %c0_50], %83 {strides = array<i32>} : memref<1x16x128xf32, #tpu.memory_space<vmem>>, vector<1x16x128xf32>,
    return
  }
  func.func @transform_0(%arg0: i32, %arg1: i32) -> (i32, i32, i32) {
    %c0_i32 = arith.constant 0 : i32
    %c0_i32_0 = arith.constant 0 : i32
    return %arg0, %arg1, %c0_i32 : i32, i32, i32
  }
  func.func @transform_1(%arg0: i32, %arg1: i32) -> (i32, i32, i32) {
    %c0_i32 = arith.constant 0 : i32
    %c0_i32_0 = arith.constant 0 : i32
    return %arg0, %arg1, %c0_i32 : i32, i32, i32
  }
  func.func @transform_2(%arg0: i32, %arg1: i32) -> (i32, i32, i32) {
    %c0_i32 = arith.constant 0 : i32
    %c0_i32_0 = arith.constant 0 : i32
    %c0_i32_1 = arith.constant 0 : i32
    return %arg0, %c0_i32, %c0_i32_0 : i32, i32, i32
  }
  func.func @transform_3(%arg0: i32, %arg1: i32) -> (i32, i32, i32) {
    %c0_i32 = arith.constant 0 : i32
    %c0_i32_0 = arith.constant 0 : i32
    %c0_i32_1 = arith.constant 0 : i32
    return %arg0, %c0_i32, %c0_i32_0 : i32, i32, i32
  }
  func.func @transform_4(%arg0: i32, %arg1: i32) -> (i32, i32, i32) {
    %c0_i32 = arith.constant 0 : i32
    %c0_i32_0 = arith.constant 0 : i32
    %c0_i32_1 = arith.constant 0 : i32
    return %arg0, %c0_i32, %c0_i32_0 : i32, i32, i32
  }
  func.func @transform_5(%arg0: i32, %arg1: i32) -> (i32, i32, i32) {
    %c0_i32 = arith.constant 0 : i32
    %c0_i32_0 = arith.constant 0 : i32
    %c0_i32_1 = arith.constant 0 : i32
    return %arg0, %c0_i32, %c0_i32_0 : i32, i32, i32
  }
  func.func @transform_6(%arg0: i32, %arg1: i32) -> (i32, i32, i32) {
    %c0_i32 = arith.constant 0 : i32
    %c0_i32_0 = arith.constant 0 : i32
    %c0_i32_1 = arith.constant 0 : i32
    return %arg0, %c0_i32, %c0_i32_0 : i32, i32, i32
  }
  func.func @transform_7(%arg0: i32, %arg1: i32) -> (i32, i32, i32) {
    %c0_i32 = arith.constant 0 : i32
    %c0_i32_0 = arith.constant 0 : i32
    %c0_i32_1 = arith.constant 0 : i32
    return %arg0, %c0_i32, %c0_i32_0 : i32, i32, i32
  }
  func.func @transform_8(%arg0: i32, %arg1: i32) -> (i32, i32, i32) {
    %c0_i32 = arith.constant 0 : i32
    %c0_i32_0 = arith.constant 0 : i32
    %c0_i32_1 = arith.constant 0 : i32
    return %arg0, %c0_i32, %c0_i32_0 : i32, i32, i32
  }
  func.func @transform_9(%arg0: i32, %arg1: i32) -> (i32, i32, i32) {
    %c0_i32 = arith.constant 0 : i32
    %c0_i32_0 = arith.constant 0 : i32
    %c0_i32_1 = arith.constant 0 : i32
    return %arg0, %c0_i32, %c0_i32_0 : i32, i32, i32
  }
  func.func @transform_10(%arg0: i32, %arg1: i32) -> (i32, i32, i32) {
    %c0_i32 = arith.constant 0 : i32
    %c0_i32_0 = arith.constant 0 : i32
    %c0_i32_1 = arith.constant 0 : i32
    return %arg0, %c0_i32, %c0_i32_0 : i32, i32, i32
  }
  func.func @transform_11(%arg0: i32, %arg1: i32) -> (i32, i32, i32) {
    %c0_i32 = arith.constant 0 : i32
    %c0_i32_0 = arith.constant 0 : i32
    %c0_i32_1 = arith.constant 0 : i32
    return %arg0, %c0_i32, %c0_i32_0 : i32, i32, i32
  }
  func.func @transform_12(%arg0: i32, %arg1: i32) -> (i32, i32, i32) {
    %c0_i32 = arith.constant 0 : i32
    %c0_i32_0 = arith.constant 0 : i32
    return %arg0, %arg1, %c0_i32 : i32, i32, i32
  }
}

</mosaic_0001>

<llo_original>
// kernel: squeeze.14
$region0: #{squeeze.14}
  %s0 = inlined_call_operand.vmem [shape: s32[1,16,128], index: 0, kind: input, shape index: {}]
  %s1 = inlined_call_operand.vmem [shape: s32[2,8,4,8,4], index: 1, kind: output, shape index: {}]
  $region1: #{squeeze.14} parent=0
    #allocation0 [shape = 'u8[524288]{0}', space=vmem, size = 0x80000, scoped, tag = 'scoped mem for output reshape']
    %v2 = vld [vmem:[%s0] sm:$0xff]
    %vm3 = vcmask 64512
    %4 = vst.msk [vmem:[#allocation0] ss:$8 sm:$0xf] %vm3, %v2
    %5 = vst.msk [vmem:[#allocation0] ss:$8 sm:$0xf0] %vm3, %v2
    %s6 = scalar_lea.vmem %s0, 8
    %v7 = vld [vmem:[%s6] sm:$0xff]
    %vm8 = vcmask 64512
    %s9 = scalar_lea.vmem [#allocation0], 64
    %10 = vst.msk [vmem:[%s9] ss:$8 sm:$0xf] %vm8, %v7
    %s11 = scalar_lea.vmem [#allocation0], 64
    %12 = vst.msk [vmem:[%s11] ss:$8 sm:$0xf0] %vm8, %v7
    %s13 = scalar_lea.vmem %s0, 16
    %v14 = vld [vmem:[%s13] sm:$0xff]
    %vm15 = vcmask 64512
    %s16 = scalar_lea.vmem [#allocation0], 128
    %17 = vst.msk [vmem:[%s16] ss:$8 sm:$0xf] %vm15, %v14
    %s18 = scalar_lea.vmem [#allocation0], 128
    %19 = vst.msk [vmem:[%s18] ss:$8 sm:$0xf0] %vm15, %v14
    %s20 = scalar_lea.vmem %s0, 24
    %v21 = vld [vmem:[%s20] sm:$0xff]
    %vm22 = vcmask 64512
    %s23 = scalar_lea.vmem [#allocation0], 192
    %24 = vst.msk [vmem:[%s23] ss:$8 sm:$0xf] %vm22, %v21
    %s25 = scalar_lea.vmem [#allocation0], 192
    %26 = vst.msk [vmem:[%s25] ss:$8 sm:$0xf0] %vm22, %v21
    %s27 = scalar_lea.vmem %s0, 32
    %v28 = vld [vmem:[%s27] sm:$0xff]
    %vm29 = vcmask 64512
    %s30 = scalar_lea.vmem [#allocation0], 256
    %31 = vst.msk [vmem:[%s30] ss:$8 sm:$0xf] %vm29, %v28
    %s32 = scalar_lea.vmem [#allocation0], 256
    %33 = vst.msk [vmem:[%s32] ss:$8 sm:$0xf0] %vm29, %v28
    %s34 = scalar_lea.vmem %s0, 40
    %v35 = vld [vmem:[%s34] sm:$0xff]
    %vm36 = vcmask 64512
    %s37 = scalar_lea.vmem [#allocation0], 320
    %38 = vst.msk [vmem:[%s37] ss:$8 sm:$0xf] %vm36, %v35
    %s39 = scalar_lea.vmem [#allocation0], 320
    %40 = vst.msk [vmem:[%s39] ss:$8 sm:$0xf0] %vm36, %v35
    %s41 = scalar_lea.vmem %s0, 48
    %v42 = vld [vmem:[%s41] sm:$0xff]
    %vm43 = vcmask 64512
    %s44 = scalar_lea.vmem [#allocation0], 384
    %45 = vst.msk [vmem:[%s44] ss:$8 sm:$0xf] %vm43, %v42
    %s46 = scalar_lea.vmem [#allocation0], 384
    %47 = vst.msk [vmem:[%s46] ss:$8 sm:$0xf0] %vm43, %v42
    %s48 = scalar_lea.vmem %s0, 56
    %v49 = vld [vmem:[%s48] sm:$0xff]
    %vm50 = vcmask 64512
    %s51 = scalar_lea.vmem [#allocation0], 448
    %52 = vst.msk [vmem:[%s51] ss:$8 sm:$0xf] %vm50, %v49
    %s53 = scalar_lea.vmem [#allocation0], 448
    %54 = vst.msk [vmem:[%s53] ss:$8 sm:$0xf0] %vm50, %v49
    %s55 = scalar_lea.vmem %s0, 64
    %v56 = vld [vmem:[%s55] sm:$0xff]
    %vm57 = vcmask 64512
    %s58 = scalar_lea.vmem [#allocation0], 512
    %59 = vst.msk [vmem:[%s58] ss:$8 sm:$0xf] %vm57, %v56
    %s60 = scalar_lea.vmem [#allocation0], 512
    %61 = vst.msk [vmem:[%s60] ss:$8 sm:$0xf0] %vm57, %v56
    %s62 = scalar_lea.vmem %s0, 72
    %v63 = vld [vmem:[%s62] sm:$0xff]
    %vm64 = vcmask 64512
    %s65 = scalar_lea.vmem [#allocation0], 576
    %66 = vst.msk [vmem:[%s65] ss:$8 sm:$0xf] %vm64, %v63
    %s67 = scalar_lea.vmem [#allocation0], 576
    %68 = vst.msk [vmem:[%s67] ss:$8 sm:$0xf0] %vm64, %v63
    %s69 = scalar_lea.vmem %s0, 80
    %v70 = vld [vmem:[%s69] sm:$0xff]
    %vm71 = vcmask 64512
    %s72 = scalar_lea.vmem [#allocation0], 640
    %73 = vst.msk [vmem:[%s72] ss:$8 sm:$0xf] %vm71, %v70
    %s74 = scalar_lea.vmem [#allocation0], 640
    %75 = vst.msk [vmem:[%s74] ss:$8 sm:$0xf0] %vm71, %v70
    %s76 = scalar_lea.vmem %s0, 88
    %v77 = vld [vmem:[%s76] sm:$0xff]
    %vm78 = vcmask 64512
    %s79 = scalar_lea.vmem [#allocation0], 704
    %80 = vst.msk [vmem:[%s79] ss:$8 sm:$0xf] %vm78, %v77
    %s81 = scalar_lea.vmem [#allocation0], 704
    %82 = vst.msk [vmem:[%s81] ss:$8 sm:$0xf0] %vm78, %v77
    %s83 = scalar_lea.vmem %s0, 96
    %v84 = vld [vmem:[%s83] sm:$0xff]
    %vm85 = vcmask 64512
    %s86 = scalar_lea.vmem [#allocation0], 768
    %87 = vst.msk [vmem:[%s86] ss:$8 sm:$0xf] %vm85, %v84
    %s88 = scalar_lea.vmem [#allocation0], 768
    %89 = vst.msk [vmem:[%s88] ss:$8 sm:$0xf0] %vm85, %v84
    %s90 = scalar_lea.vmem %s0, 104
    %v91 = vld [vmem:[%s90] sm:$0xff]
    %vm92 = vcmask 64512
    %s93 = scalar_lea.vmem [#allocation0], 832
    %94 = vst.msk [vmem:[%s93] ss:$8 sm:$0xf] %vm92, %v91
    %s95 = scalar_lea.vmem [#allocation0], 832
    %96 = vst.msk [vmem:[%s95] ss:$8 sm:$0xf0] %vm92, %v91
    %s97 = scalar_lea.vmem %s0, 112
    %v98 = vld [vmem:[%s97] sm:$0xff]
    %vm99 = vcmask 64512
    %s100 = scalar_lea.vmem [#allocation0], 896
    %101 = vst.msk [vmem:[%s100] ss:$8 sm:$0xf] %vm99, %v98
    %s102 = scalar_lea.vmem [#allocation0], 896
    %103 = vst.msk [vmem:[%s102] ss:$8 sm:$0xf0] %vm99, %v98
    %s104 = scalar_lea.vmem %s0, 120
    %v105 = vld [vmem:[%s104] sm:$0xff]
    %vm106 = vcmask 64512
    %s107 = scalar_lea.vmem [#allocation0], 960
    %108 = vst.msk [vmem:[%s107] ss:$8 sm:$0xf] %vm106, %v105
    %s109 = scalar_lea.vmem [#allocation0], 960
    %110 = vst.msk [vmem:[%s109] ss:$8 sm:$0xf0] %vm106, %v105
    %v111 = vld [vmem:[%s0] sm:$0xff]
    %112 = vrot.lane.b32.xlu0 %v111, 120
    %v113 = vpop.permute.xlu0 %112
    %vm114 = vcmask 64512
    %s115 = scalar_lea.vmem [#allocation0], 1
    %116 = vst.msk [vmem:[%s115] ss:$8 sm:$0xf] %vm114, %v113
    %s117 = scalar_lea.vmem [#allocation0], 1
    %118 = vst.msk [vmem:[%s117] ss:$8 sm:$0xf0] %vm114, %v113
    %s119 = scalar_lea.vmem %s0, 8
    %v120 = vld [vmem:[%s119] sm:$0xff]
    %121 = vrot.lane.b32.xlu0 %v120, 120
    %v122 = vpop.permute.xlu0 %121
    %vm123 = vcmask 64512
    %s124 = scalar_lea.vmem [#allocation0], 65
    %125 = vst.msk [vmem:[%s124] ss:$8 sm:$0xf] %vm123, %v122
    %s126 = scalar_lea.vmem [#allocation0], 65
    %127 = vst.msk [vmem:[%s126] ss:$8 sm:$0xf0] %vm123, %v122
    %s128 = scalar_lea.vmem %s0, 16
    %v129 = vld [vmem:[%s128] sm:$0xff]
    %130 = vrot.lane.b32.xlu0 %v129, 120
    %v131 = vpop.permute.xlu0 %130
    %vm132 = vcmask 64512
    %s133 = scalar_lea.vmem [#allocation0], 129
    %134 = vst.msk [vmem:[%s133] ss:$8 sm:$0xf] %vm132, %v131
    %s135 = scalar_lea.vmem [#allocation0], 129
    %136 = vst.msk [vmem:[%s135] ss:$8 sm:$0xf0] %vm132, %v131
    %s137 = scalar_lea.vmem %s0, 24
    %v138 = vld [vmem:[%s137] sm:$0xff]
    %139 = vrot.lane.b32.xlu0 %v138, 120
    %v140 = vpop.permute.xlu0 %139
    %vm141 = vcmask 64512
    %s142 = scalar_lea.vmem [#allocation0], 193
    %143 = vst.msk [vmem:[%s142] ss:$8 sm:$0xf] %vm141, %v140
    %s144 = scalar_lea.vmem [#allocation0], 193
    %145 = vst.msk [vmem:[%s144] ss:$8 sm:$0xf0] %vm141, %v140
    %s146 = scalar_lea.vmem %s0, 32
    %v147 = vld [vmem:[%s146] sm:$0xff]
    %148 = vrot.lane.b32.xlu0 %v147, 120
    %v149 = vpop.permute.xlu0 %148
    %vm150 = vcmask 64512
    %s151 = scalar_lea.vmem [#allocation0], 257
    %152 = vst.msk [vmem:[%s151] ss:$8 sm:$0xf] %vm150, %v149
    %s153 = scalar_lea.vmem [#allocation0], 257
    %154 = vst.msk [vmem:[%s153] ss:$8 sm:$0xf0] %vm150, %v149
    %s155 = scalar_lea.vmem %s0, 40
    %v156 = vld [vmem:[%s155] sm:$0xff]
    %157 = vrot.lane.b32.xlu0 %v156, 120
    %v158 = vpop.permute.xlu0 %157
    %vm159 = vcmask 64512
    %s160 = scalar_lea.vmem [#allocation0], 321
    %161 = vst.msk [vmem:[%s160] ss:$8 sm:$0xf] %vm159, %v158
    %s162 = scalar_lea.vmem [#allocation0], 321
    %163 = vst.msk [vmem:[%s162] ss:$8 sm:$0xf0] %vm159, %v158
    %s164 = scalar_lea.vmem %s0, 48
    %v165 = vld [vmem:[%s164] sm:$0xff]
    %166 = vrot.lane.b32.xlu0 %v165, 120
    %v167 = vpop.permute.xlu0 %166
    %vm168 = vcmask 64512
    %s169 = scalar_lea.vmem [#allocation0], 385
    %170 = vst.msk [vmem:[%s169] ss:$8 sm:$0xf] %vm168, %v167
    %s171 = scalar_lea.vmem [#allocation0], 385
    %172 = vst.msk [vmem:[%s171] ss:$8 sm:$0xf0] %vm168, %v167
    %s173 = scalar_lea.vmem %s0, 56
    %v174 = vld [vmem:[%s173] sm:$0xff]
    %175 = vrot.lane.b32.xlu0 %v174, 120
    %v176 = vpop.permute.xlu0 %175
    %vm177 = vcmask 64512
    %s178 = scalar_lea.vmem [#allocation0], 449
    %179 = vst.msk [vmem:[%s178] ss:$8 sm:$0xf] %vm177, %v176
    %s180 = scalar_lea.vmem [#allocation0], 449
    %181 = vst.msk [vmem:[%s180] ss:$8 sm:$0xf0] %vm177, %v176
    %s182 = scalar_lea.vmem %s0, 64
    %v183 = vld [vmem:[%s182] sm:$0xff]
    %184 = vrot.lane.b32.xlu0 %v183, 120
    %v185 = vpop.permute.xlu0 %184
    %vm186 = vcmask 64512
    %s187 = scalar_lea.vmem [#allocation0], 513
    %188 = vst.msk [vmem:[%s187] ss:$8 sm:$0xf] %vm186, %v185
    %s189 = scalar_lea.vmem [#allocation0], 513
    %190 = vst.msk [vmem:[%s189] ss:$8 sm:$0xf0] %vm186, %v185
    %s191 = scalar_lea.vmem %s0, 72
    %v192 = vld [vmem:[%s191] sm:$0xff]
    %193 = vrot.lane.b32.xlu0 %v192, 120
    %v194 = vpop.permute.xlu0 %193
    %vm195 = vcmask 64512
    %s196 = scalar_lea.vmem [#allocation0], 577
    %197 = vst.msk [vmem:[%s196] ss:$8 sm:$0xf] %vm195, %v194
    %s198 = scalar_lea.vmem [#allocation0], 577
    %199 = vst.msk [vmem:[%s198] ss:$8 sm:$0xf0] %vm195, %v194
    %s200 = scalar_lea.vmem %s0, 80
    %v201 = vld [vmem:[%s200] sm:$0xff]
    %202 = vrot.lane.b32.xlu0 %v201, 120
    %v203 = vpop.permute.xlu0 %202
    %vm204 = vcmask 64512
    %s205 = scalar_lea.vmem [#allocation0], 641
    %206 = vst.msk [vmem:[%s205] ss:$8 sm:$0xf] %vm204, %v203
    %s207 = scalar_lea.vmem [#allocation0], 641
    %208 = vst.msk [vmem:[%s207] ss:$8 sm:$0xf0] %vm204, %v203
    %s209 = scalar_lea.vmem %s0, 88
    %v210 = vld [vmem:[%s209] sm:$0xff]
    %211 = vrot.lane.b32.xlu0 %v210, 120
    %v212 = vpop.permute.xlu0 %211
    %vm213 = vcmask 64512
    %s214 = scalar_lea.vmem [#allocation0], 705
    %215 = vst.msk [vmem:[%s214] ss:$8 sm:$0xf] %vm213, %v212
    %s216 = scalar_lea.vmem [#allocation0], 705
    %217 = vst.msk [vmem:[%s216] ss:$8 sm:$0xf0] %vm213, %v212
    %s218 = scalar_lea.vmem %s0, 96
    %v219 = vld [vmem:[%s218] sm:$0xff]
    %220 = vrot.lane.b32.xlu0 %v219, 120
    %v221 = vpop.permute.xlu0 %220
    %vm222 = vcmask 64512
    %s223 = scalar_lea.vmem [#allocation0], 769
    %224 = vst.msk [vmem:[%s223] ss:$8 sm:$0xf] %vm222, %v221
    %s225 = scalar_lea.vmem [#allocation0], 769
    %226 = vst.msk [vmem:[%s225] ss:$8 sm:$0xf0] %vm222, %v221
    %s227 = scalar_lea.vmem %s0, 104
    %v228 = vld [vmem:[%s227] sm:$0xff]
    %229 = vrot.lane.b32.xlu0 %v228, 120
    %v230 = vpop.permute.xlu0 %229
    %vm231 = vcmask 64512
    %s232 = scalar_lea.vmem [#allocation0], 833
    %233 = vst.msk [vmem:[%s232] ss:$8 sm:$0xf] %vm231, %v230
    %s234 = scalar_lea.vmem [#allocation0], 833
    %235 = vst.msk [vmem:[%s234] ss:$8 sm:$0xf0] %vm231, %v230
    %s236 = scalar_lea.vmem %s0, 112
    %v237 = vld [vmem:[%s236] sm:$0xff]
    %238 = vrot.lane.b32.xlu0 %v237, 120
    %v239 = vpop.permute.xlu0 %238
    %vm240 = vcmask 64512
    %s241 = scalar_lea.vmem [#allocation0], 897
    %242 = vst.msk [vmem:[%s241] ss:$8 sm:$0xf] %vm240, %v239
    %s243 = scalar_lea.vmem [#allocation0], 897
    %244 = vst.msk [vmem:[%s243] ss:$8 sm:$0xf0] %vm240, %v239
    %s245 = scalar_lea.vmem %s0, 120
    %v246 = vld [vmem:[%s245] sm:$0xff]
    %247 = vrot.lane.b32.xlu0 %v246, 120
    %v248 = vpop.permute.xlu0 %247
    %vm249 = vcmask 64512
    %s250 = scalar_lea.vmem [#allocation0], 961
    %251 = vst.msk [vmem:[%s250] ss:$8 sm:$0xf] %vm249, %v248
    %s252 = scalar_lea.vmem [#allocation0], 961
    %253 = vst.msk [vmem:[%s252] ss:$8 sm:$0xf0] %vm249, %v248
    %s255 = sshllo.u32 0, 2
    %v257 = vld [vmem:[#allocation0] sm:%s255]
    %s258 = sshllo.u32 0, 2
    %259 = vst [vmem:[%s1] sm:%s258] %v257
    %s260 = scalar_lea.vmem [#allocation0], 8
    %v261 = vld [vmem:[%s260] sm:%s255]
    %s262 = sshllo.u32 0, 2
    %s263 = scalar_lea.vmem %s1, 2
    %264 = vst [vmem:[%s263] sm:%s262] %v261
    %s265 = scalar_lea.vmem [#allocation0], 16
    %v266 = vld [vmem:[%s265] sm:%s255]
    %s267 = sshllo.u32 0, 2
    %s268 = smul.addr 2, 2
    %s269 = scalar_lea.vmem %s1, %s268
    %270 = vst [vmem:[%s269] sm:%s267] %v266
    %s271 = scalar_lea.vmem [#allocation0], 24
    %v272 = vld [vmem:[%s271] sm:%s255]
    %s273 = sshllo.u32 0, 2
    %s274 = smul.addr 2, 3
    %s275 = scalar_lea.vmem %s1, %s274
    %276 = vst [vmem:[%s275] sm:%s273] %v272
    %s277 = scalar_lea.vmem [#allocation0], 32
    %v278 = vld [vmem:[%s277] sm:%s255]
    %s279 = sshllo.u32 0, 2
    %s280 = smul.addr 2, 4
    %s281 = scalar_lea.vmem %s1, %s280
    %282 = vst [vmem:[%s281] sm:%s279] %v278
    %s283 = scalar_lea.vmem [#allocation0], 40
    %v284 = vld [vmem:[%s283] sm:%s255]
    %s285 = sshllo.u32 0, 2
    %s286 = smul.addr 2, 5
    %s287 = scalar_lea.vmem %s1, %s286
    %288 = vst [vmem:[%s287] sm:%s285] %v284
    %s289 = scalar_lea.vmem [#allocation0], 48
    %v290 = vld [vmem:[%s289] sm:%s255]
    %s291 = sshllo.u32 0, 2
    %s292 = smul.addr 2, 6
    %s293 = scalar_lea.vmem %s1, %s292
    %294 = vst [vmem:[%s293] sm:%s291] %v290
    %s295 = scalar_lea.vmem [#allocation0], 56
    %v296 = vld [vmem:[%s295] sm:%s255]
    %s297 = sshllo.u32 0, 2
    %s298 = smul.addr 2, 7
    %s299 = scalar_lea.vmem %s1, %s298
    %300 = vst [vmem:[%s299] sm:%s297] %v296
    %s301 = scalar_lea.vmem [#allocation0], 64
    %v302 = vld [vmem:[%s301] sm:%s255]
    %s303 = sshllo.u32 0, 2
    %s304 = smul.addr 2, 8
    %s305 = scalar_lea.vmem %s1, %s304
    %306 = vst [vmem:[%s305] sm:%s303] %v302
    %s307 = scalar_lea.vmem [#allocation0], 72
    %v308 = vld [vmem:[%s307] sm:%s255]
    %s309 = sshllo.u32 0, 2
    %s310 = smul.addr 2, 9
    %s311 = scalar_lea.vmem %s1, %s310
    %312 = vst [vmem:[%s311] sm:%s309] %v308
    %s313 = scalar_lea.vmem [#allocation0], 80
    %v314 = vld [vmem:[%s313] sm:%s255]
    %s315 = sshllo.u32 0, 2
    %s316 = smul.addr 2, 10
    %s317 = scalar_lea.vmem %s1, %s316
    %318 = vst [vmem:[%s317] sm:%s315] %v314
    %s319 = scalar_lea.vmem [#allocation0], 88
    %v320 = vld [vmem:[%s319] sm:%s255]
    %s321 = sshllo.u32 0, 2
    %s322 = smul.addr 2, 11
    %s323 = scalar_lea.vmem %s1, %s322
    %324 = vst [vmem:[%s323] sm:%s321] %v320
    %s325 = scalar_lea.vmem [#allocation0], 96
    %v326 = vld [vmem:[%s325] sm:%s255]
    %s327 = sshllo.u32 0, 2
    %s328 = smul.addr 2, 12
    %s329 = scalar_lea.vmem %s1, %s328
    %330 = vst [vmem:[%s329] sm:%s327] %v326
    %s331 = scalar_lea.vmem [#allocation0], 104
    %v332 = vld [vmem:[%s331] sm:%s255]
    %s333 = sshllo.u32 0, 2
    %s334 = smul.addr 2, 13
    %s335 = scalar_lea.vmem %s1, %s334
    %336 = vst [vmem:[%s335] sm:%s333] %v332
    %s337 = scalar_lea.vmem [#allocation0], 112
    %v338 = vld [vmem:[%s337] sm:%s255]
    %s339 = sshllo.u32 0, 2
    %s340 = smul.addr 2, 14
    %s341 = scalar_lea.vmem %s1, %s340
    %342 = vst [vmem:[%s341] sm:%s339] %v338
    %s343 = scalar_lea.vmem [#allocation0], 120
    %v344 = vld [vmem:[%s343] sm:%s255]
    %s345 = sshllo.u32 0, 2
    %s346 = smul.addr 2, 15
    %s347 = scalar_lea.vmem %s1, %s346
    %348 = vst [vmem:[%s347] sm:%s345] %v344
    %s349 = scalar_lea.vmem [#allocation0], 128
    %v350 = vld [vmem:[%s349] sm:%s255]
    %s351 = sshllo.u32 0, 2
    %s352 = smul.addr 2, 16
    %s353 = scalar_lea.vmem %s1, %s352
    %354 = vst [vmem:[%s353] sm:%s351] %v350
    %s355 = scalar_lea.vmem [#allocation0], 136
    %v356 = vld [vmem:[%s355] sm:%s255]
    %s357 = sshllo.u32 0, 2
    %s358 = smul.addr 2, 17
    %s359 = scalar_lea.vmem %s1, %s358
    %360 = vst [vmem:[%s359] sm:%s357] %v356
    %s361 = scalar_lea.vmem [#allocation0], 144
    %v362 = vld [vmem:[%s361] sm:%s255]
    %s363 = sshllo.u32 0, 2
    %s364 = smul.addr 2, 18
    %s365 = scalar_lea.vmem %s1, %s364
    %366 = vst [vmem:[%s365] sm:%s363] %v362
    %s367 = scalar_lea.vmem [#allocation0], 152
    %v368 = vld [vmem:[%s367] sm:%s255]
    %s369 = sshllo.u32 0, 2
    %s370 = smul.addr 2, 19
    %s371 = scalar_lea.vmem %s1, %s370
    %372 = vst [vmem:[%s371] sm:%s369] %v368
    %s373 = scalar_lea.vmem [#allocation0], 160
    %v374 = vld [vmem:[%s373] sm:%s255]
    %s375 = sshllo.u32 0, 2
    %s376 = smul.addr 2, 20
    %s377 = scalar_lea.vmem %s1, %s376
    %378 = vst [vmem:[%s377] sm:%s375] %v374
    %s379 = scalar_lea.vmem [#allocation0], 168
    %v380 = vld [vmem:[%s379] sm:%s255]
    %s381 = sshllo.u32 0, 2
    %s382 = smul.addr 2, 21
    %s383 = scalar_lea.vmem %s1, %s382
    %384 = vst [vmem:[%s383] sm:%s381] %v380
    %s385 = scalar_lea.vmem [#allocation0], 176
    %v386 = vld [vmem:[%s385] sm:%s255]
    %s387 = sshllo.u32 0, 2
    %s388 = smul.addr 2, 22
    %s389 = scalar_lea.vmem %s1, %s388
    %390 = vst [vmem:[%s389] sm:%s387] %v386
    %s391 = scalar_lea.vmem [#allocation0], 184
    %v392 = vld [vmem:[%s391] sm:%s255]
    %s393 = sshllo.u32 0, 2
    %s394 = smul.addr 2, 23
    %s395 = scalar_lea.vmem %s1, %s394
    %396 = vst [vmem:[%s395] sm:%s393] %v392
    %s397 = scalar_lea.vmem [#allocation0], 192
    %v398 = vld [vmem:[%s397] sm:%s255]
    %s399 = sshllo.u32 0, 2
    %s400 = smul.addr 2, 24
    %s401 = scalar_lea.vmem %s1, %s400
    %402 = vst [vmem:[%s401] sm:%s399] %v398
    %s403 = scalar_lea.vmem [#allocation0], 200
    %v404 = vld [vmem:[%s403] sm:%s255]
    %s405 = sshllo.u32 0, 2
    %s406 = smul.addr 2, 25
    %s407 = scalar_lea.vmem %s1, %s406
    %408 = vst [vmem:[%s407] sm:%s405] %v404
    %s409 = scalar_lea.vmem [#allocation0], 208
    %v410 = vld [vmem:[%s409] sm:%s255]
    %s411 = sshllo.u32 0, 2
    %s412 = smul.addr 2, 26
    %s413 = scalar_lea.vmem %s1, %s412
    %414 = vst [vmem:[%s413] sm:%s411] %v410
    %s415 = scalar_lea.vmem [#allocation0], 216
    %v416 = vld [vmem:[%s415] sm:%s255]
    %s417 = sshllo.u32 0, 2
    %s418 = smul.addr 2, 27
    %s419 = scalar_lea.vmem %s1, %s418
    %420 = vst [vmem:[%s419] sm:%s417] %v416
    %s421 = scalar_lea.vmem [#allocation0], 224
    %v422 = vld [vmem:[%s421] sm:%s255]
    %s423 = sshllo.u32 0, 2
    %s424 = smul.addr 2, 28
    %s425 = scalar_lea.vmem %s1, %s424
    %426 = vst [vmem:[%s425] sm:%s423] %v422
    %s427 = scalar_lea.vmem [#allocation0], 232
    %v428 = vld [vmem:[%s427] sm:%s255]
    %s429 = sshllo.u32 0, 2
    %s430 = smul.addr 2, 29
    %s431 = scalar_lea.vmem %s1, %s430
    %432 = vst [vmem:[%s431] sm:%s429] %v428
    %s433 = scalar_lea.vmem [#allocation0], 240
    %v434 = vld [vmem:[%s433] sm:%s255]
    %s435 = sshllo.u32 0, 2
    %s436 = smul.addr 2, 30
    %s437 = scalar_lea.vmem %s1, %s436
    %438 = vst [vmem:[%s437] sm:%s435] %v434
    %s439 = scalar_lea.vmem [#allocation0], 248
    %v440 = vld [vmem:[%s439] sm:%s255]
    %s441 = sshllo.u32 0, 2
    %s442 = smul.addr 2, 31
    %s443 = scalar_lea.vmem %s1, %s442
    %444 = vst [vmem:[%s443] sm:%s441] %v440
    %s445 = scalar_lea.vmem [#allocation0], 256
    %v446 = vld [vmem:[%s445] sm:%s255]
    %s447 = sshllo.u32 0, 2
    %s448 = smul.addr 2, 32
    %s449 = scalar_lea.vmem %s1, %s448
    %450 = vst [vmem:[%s449] sm:%s447] %v446
    %s451 = scalar_lea.vmem [#allocation0], 264
    %v452 = vld [vmem:[%s451] sm:%s255]
    %s453 = sshllo.u32 0, 2
    %s454 = smul.addr 2, 33
    %s455 = scalar_lea.vmem %s1, %s454
    %456 = vst [vmem:[%s455] sm:%s453] %v452
    %s457 = scalar_lea.vmem [#allocation0], 272
    %v458 = vld [vmem:[%s457] sm:%s255]
    %s459 = sshllo.u32 0, 2
    %s460 = smul.addr 2, 34
    %s461 = scalar_lea.vmem %s1, %s460
    %462 = vst [vmem:[%s461] sm:%s459] %v458
    %s463 = scalar_lea.vmem [#allocation0], 280
    %v464 = vld [vmem:[%s463] sm:%s255]
    %s465 = sshllo.u32 0, 2
    %s466 = smul.addr 2, 35
    %s467 = scalar_lea.vmem %s1, %s466
    %468 = vst [vmem:[%s467] sm:%s465] %v464
    %s469 = scalar_lea.vmem [#allocation0], 288
    %v470 = vld [vmem:[%s469] sm:%s255]
    %s471 = sshllo.u32 0, 2
    %s472 = smul.addr 2, 36
    %s473 = scalar_lea.vmem %s1, %s472
    %474 = vst [vmem:[%s473] sm:%s471] %v470
    %s475 = scalar_lea.vmem [#allocation0], 296
    %v476 = vld [vmem:[%s475] sm:%s255]
    %s477 = sshllo.u32 0, 2
    %s478 = smul.addr 2, 37
    %s479 = scalar_lea.vmem %s1, %s478
    %480 = vst [vmem:[%s479] sm:%s477] %v476
    %s481 = scalar_lea.vmem [#allocation0], 304
    %v482 = vld [vmem:[%s481] sm:%s255]
    %s483 = sshllo.u32 0, 2
    %s484 = smul.addr 2, 38
    %s485 = scalar_lea.vmem %s1, %s484
    %486 = vst [vmem:[%s485] sm:%s483] %v482
    %s487 = scalar_lea.vmem [#allocation0], 312
    %v488 = vld [vmem:[%s487] sm:%s255]
    %s489 = sshllo.u32 0, 2
    %s490 = smul.addr 2, 39
    %s491 = scalar_lea.vmem %s1, %s490
    %492 = vst [vmem:[%s491] sm:%s489] %v488
    %s493 = scalar_lea.vmem [#allocation0], 320
    %v494 = vld [vmem:[%s493] sm:%s255]
    %s495 = sshllo.u32 0, 2
    %s496 = smul.addr 2, 40
    %s497 = scalar_lea.vmem %s1, %s496
    %498 = vst [vmem:[%s497] sm:%s495] %v494
    %s499 = scalar_lea.vmem [#allocation0], 328
    %v500 = vld [vmem:[%s499] sm:%s255]
    %s501 = sshllo.u32 0, 2
    %s502 = smul.addr 2, 41
    %s503 = scalar_lea.vmem %s1, %s502
    %504 = vst [vmem:[%s503] sm:%s501] %v500
    %s505 = scalar_lea.vmem [#allocation0], 336
    %v506 = vld [vmem:[%s505] sm:%s255]
    %s507 = sshllo.u32 0, 2
    %s508 = smul.addr 2, 42
    %s509 = scalar_lea.vmem %s1, %s508
    %510 = vst [vmem:[%s509] sm:%s507] %v506
    %s511 = scalar_lea.vmem [#allocation0], 344
    %v512 = vld [vmem:[%s511] sm:%s255]
    %s513 = sshllo.u32 0, 2
    %s514 = smul.addr 2, 43
    %s515 = scalar_lea.vmem %s1, %s514
    %516 = vst [vmem:[%s515] sm:%s513] %v512
    %s517 = scalar_lea.vmem [#allocation0], 352
    %v518 = vld [vmem:[%s517] sm:%s255]
    %s519 = sshllo.u32 0, 2
    %s520 = smul.addr 2, 44
    %s521 = scalar_lea.vmem %s1, %s520
    %522 = vst [vmem:[%s521] sm:%s519] %v518
    %s523 = scalar_lea.vmem [#allocation0], 360
    %v524 = vld [vmem:[%s523] sm:%s255]
    %s525 = sshllo.u32 0, 2
    %s526 = smul.addr 2, 45
    %s527 = scalar_lea.vmem %s1, %s526
    %528 = vst [vmem:[%s527] sm:%s525] %v524
    %s529 = scalar_lea.vmem [#allocation0], 368
    %v530 = vld [vmem:[%s529] sm:%s255]
    %s531 = sshllo.u32 0, 2
    %s532 = smul.addr 2, 46
    %s533 = scalar_lea.vmem %s1, %s532
    %534 = vst [vmem:[%s533] sm:%s531] %v530
    %s535 = scalar_lea.vmem [#allocation0], 376
    %v536 = vld [vmem:[%s535] sm:%s255]
    %s537 = sshllo.u32 0, 2
    %s538 = smul.addr 2, 47
    %s539 = scalar_lea.vmem %s1, %s538
    %540 = vst [vmem:[%s539] sm:%s537] %v536
    %s541 = scalar_lea.vmem [#allocation0], 384
    %v542 = vld [vmem:[%s541] sm:%s255]
    %s543 = sshllo.u32 0, 2
    %s544 = smul.addr 2, 48
    %s545 = scalar_lea.vmem %s1, %s544
    %546 = vst [vmem:[%s545] sm:%s543] %v542
    %s547 = scalar_lea.vmem [#allocation0], 392
    %v548 = vld [vmem:[%s547] sm:%s255]
    %s549 = sshllo.u32 0, 2
    %s550 = smul.addr 2, 49
    %s551 = scalar_lea.vmem %s1, %s550
    %552 = vst [vmem:[%s551] sm:%s549] %v548
    %s553 = scalar_lea.vmem [#allocation0], 400
    %v554 = vld [vmem:[%s553] sm:%s255]
    %s555 = sshllo.u32 0, 2
    %s556 = smul.addr 2, 50
    %s557 = scalar_lea.vmem %s1, %s556
    %558 = vst [vmem:[%s557] sm:%s555] %v554
    %s559 = scalar_lea.vmem [#allocation0], 408
    %v560 = vld [vmem:[%s559] sm:%s255]
    %s561 = sshllo.u32 0, 2
    %s562 = smul.addr 2, 51
    %s563 = scalar_lea.vmem %s1, %s562
    %564 = vst [vmem:[%s563] sm:%s561] %v560
    %s565 = scalar_lea.vmem [#allocation0], 416
    %v566 = vld [vmem:[%s565] sm:%s255]
    %s567 = sshllo.u32 0, 2
    %s568 = smul.addr 2, 52
    %s569 = scalar_lea.vmem %s1, %s568
    %570 = vst [vmem:[%s569] sm:%s567] %v566
    %s571 = scalar_lea.vmem [#allocation0], 424
    %v572 = vld [vmem:[%s571] sm:%s255]
    %s573 = sshllo.u32 0, 2
    %s574 = smul.addr 2, 53
    %s575 = scalar_lea.vmem %s1, %s574
    %576 = vst [vmem:[%s575] sm:%s573] %v572
    %s577 = scalar_lea.vmem [#allocation0], 432
    %v578 = vld [vmem:[%s577] sm:%s255]
    %s579 = sshllo.u32 0, 2
    %s580 = smul.addr 2, 54
    %s581 = scalar_lea.vmem %s1, %s580
    %582 = vst [vmem:[%s581] sm:%s579] %v578
    %s583 = scalar_lea.vmem [#allocation0], 440
    %v584 = vld [vmem:[%s583] sm:%s255]
    %s585 = sshllo.u32 0, 2
    %s586 = smul.addr 2, 55
    %s587 = scalar_lea.vmem %s1, %s586
    %588 = vst [vmem:[%s587] sm:%s585] %v584
    %s589 = scalar_lea.vmem [#allocation0], 448
    %v590 = vld [vmem:[%s589] sm:%s255]
    %s591 = sshllo.u32 0, 2
    %s592 = smul.addr 2, 56
    %s593 = scalar_lea.vmem %s1, %s592
    %594 = vst [vmem:[%s593] sm:%s591] %v590
    %s595 = scalar_lea.vmem [#allocation0], 456
    %v596 = vld [vmem:[%s595] sm:%s255]
    %s597 = sshllo.u32 0, 2
    %s598 = smul.addr 2, 57
    %s599 = scalar_lea.vmem %s1, %s598
    %600 = vst [vmem:[%s599] sm:%s597] %v596
    %s601 = scalar_lea.vmem [#allocation0], 464
    %v602 = vld [vmem:[%s601] sm:%s255]
    %s603 = sshllo.u32 0, 2
    %s604 = smul.addr 2, 58
    %s605 = scalar_lea.vmem %s1, %s604
    %606 = vst [vmem:[%s605] sm:%s603] %v602
    %s607 = scalar_lea.vmem [#allocation0], 472
    %v608 = vld [vmem:[%s607] sm:%s255]
    %s609 = sshllo.u32 0, 2
    %s610 = smul.addr 2, 59
    %s611 = scalar_lea.vmem %s1, %s610
    %612 = vst [vmem:[%s611] sm:%s609] %v608
    %s613 = scalar_lea.vmem [#allocation0], 480
    %v614 = vld [vmem:[%s613] sm:%s255]
    %s615 = sshllo.u32 0, 2
    %s616 = smul.addr 2, 60
    %s617 = scalar_lea.vmem %s1, %s616
    %618 = vst [vmem:[%s617] sm:%s615] %v614
    %s619 = scalar_lea.vmem [#allocation0], 488
    %v620 = vld [vmem:[%s619] sm:%s255]
    %s621 = sshllo.u32 0, 2
    %s622 = smul.addr 2, 61
    %s623 = scalar_lea.vmem %s1, %s622
    %624 = vst [vmem:[%s623] sm:%s621] %v620
    %s625 = scalar_lea.vmem [#allocation0], 496
    %v626 = vld [vmem:[%s625] sm:%s255]
    %s627 = sshllo.u32 0, 2
    %s628 = smul.addr 2, 62
    %s629 = scalar_lea.vmem %s1, %s628
    %630 = vst [vmem:[%s629] sm:%s627] %v626
    %s631 = scalar_lea.vmem [#allocation0], 504
    %v632 = vld [vmem:[%s631] sm:%s255]
    %s633 = sshllo.u32 0, 2
    %s634 = smul.addr 2, 63
    %s635 = scalar_lea.vmem %s1, %s634
    %636 = vst [vmem:[%s635] sm:%s633] %v632
    %s637 = scalar_lea.vmem [#allocation0], 512
    %v638 = vld [vmem:[%s637] sm:%s255]
    %s639 = sshllo.u32 0, 2
    %s640 = smul.addr 2, 64
    %s641 = scalar_lea.vmem %s1, %s640
    %642 = vst [vmem:[%s641] sm:%s639] %v638
    %s643 = scalar_lea.vmem [#allocation0], 520
    %v644 = vld [vmem:[%s643] sm:%s255]
    %s645 = sshllo.u32 0, 2
    %s646 = smul.addr 2, 65
    %s647 = scalar_lea.vmem %s1, %s646
    %648 = vst [vmem:[%s647] sm:%s645] %v644
    %s649 = scalar_lea.vmem [#allocation0], 528
    %v650 = vld [vmem:[%s649] sm:%s255]
    %s651 = sshllo.u32 0, 2
    %s652 = smul.addr 2, 66
    %s653 = scalar_lea.vmem %s1, %s652
    %654 = vst [vmem:[%s653] sm:%s651] %v650
    %s655 = scalar_lea.vmem [#allocation0], 536
    %v656 = vld [vmem:[%s655] sm:%s255]
    %s657 = sshllo.u32 0, 2
    %s658 = smul.addr 2, 67
    %s659 = scalar_lea.vmem %s1, %s658
    %660 = vst [vmem:[%s659] sm:%s657] %v656
    %s661 = scalar_lea.vmem [#allocation0], 544
    %v662 = vld [vmem:[%s661] sm:%s255]
    %s663 = sshllo.u32 0, 2
    %s664 = smul.addr 2, 68
    %s665 = scalar_lea.vmem %s1, %s664
    %666 = vst [vmem:[%s665] sm:%s663] %v662
    %s667 = scalar_lea.vmem [#allocation0], 552
    %v668 = vld [vmem:[%s667] sm:%s255]
    %s669 = sshllo.u32 0, 2
    %s670 = smul.addr 2, 69
    %s671 = scalar_lea.vmem %s1, %s670
    %672 = vst [vmem:[%s671] sm:%s669] %v668
    %s673 = scalar_lea.vmem [#allocation0], 560
    %v674 = vld [vmem:[%s673] sm:%s255]
    %s675 = sshllo.u32 0, 2
    %s676 = smul.addr 2, 70
    %s677 = scalar_lea.vmem %s1, %s676
    %678 = vst [vmem:[%s677] sm:%s675] %v674
    %s679 = scalar_lea.vmem [#allocation0], 568
    %v680 = vld [vmem:[%s679] sm:%s255]
    %s681 = sshllo.u32 0, 2
    %s682 = smul.addr 2, 71
    %s683 = scalar_lea.vmem %s1, %s682
    %684 = vst [vmem:[%s683] sm:%s681] %v680
    %s685 = scalar_lea.vmem [#allocation0], 576
    %v686 = vld [vmem:[%s685] sm:%s255]
    %s687 = sshllo.u32 0, 2
    %s688 = smul.addr 2, 72
    %s689 = scalar_lea.vmem %s1, %s688
    %690 = vst [vmem:[%s689] sm:%s687] %v686
    %s691 = scalar_lea.vmem [#allocation0], 584
    %v692 = vld [vmem:[%s691] sm:%s255]
    %s693 = sshllo.u32 0, 2
    %s694 = smul.addr 2, 73
    %s695 = scalar_lea.vmem %s1, %s694
    %696 = vst [vmem:[%s695] sm:%s693] %v692
    %s697 = scalar_lea.vmem [#allocation0], 592
    %v698 = vld [vmem:[%s697] sm:%s255]
    %s699 = sshllo.u32 0, 2
    %s700 = smul.addr 2, 74
    %s701 = scalar_lea.vmem %s1, %s700
    %702 = vst [vmem:[%s701] sm:%s699] %v698
    %s703 = scalar_lea.vmem [#allocation0], 600
    %v704 = vld [vmem:[%s703] sm:%s255]
    %s705 = sshllo.u32 0, 2
    %s706 = smul.addr 2, 75
    %s707 = scalar_lea.vmem %s1, %s706
    %708 = vst [vmem:[%s707] sm:%s705] %v704
    %s709 = scalar_lea.vmem [#allocation0], 608
    %v710 = vld [vmem:[%s709] sm:%s255]
    %s711 = sshllo.u32 0, 2
    %s712 = smul.addr 2, 76
    %s713 = scalar_lea.vmem %s1, %s712
    %714 = vst [vmem:[%s713] sm:%s711] %v710
    %s715 = scalar_lea.vmem [#allocation0], 616
    %v716 = vld [vmem:[%s715] sm:%s255]
    %s717 = sshllo.u32 0, 2
    %s718 = smul.addr 2, 77
    %s719 = scalar_lea.vmem %s1, %s718
    %720 = vst [vmem:[%s719] sm:%s717] %v716
    %s721 = scalar_lea.vmem [#allocation0], 624
    %v722 = vld [vmem:[%s721] sm:%s255]
    %s723 = sshllo.u32 0, 2
    %s724 = smul.addr 2, 78
    %s725 = scalar_lea.vmem %s1, %s724
    %726 = vst [vmem:[%s725] sm:%s723] %v722
    %s727 = scalar_lea.vmem [#allocation0], 632
    %v728 = vld [vmem:[%s727] sm:%s255]
    %s729 = sshllo.u32 0, 2
    %s730 = smul.addr 2, 79
    %s731 = scalar_lea.vmem %s1, %s730
    %732 = vst [vmem:[%s731] sm:%s729] %v728
    %s733 = scalar_lea.vmem [#allocation0], 640
    %v734 = vld [vmem:[%s733] sm:%s255]
    %s735 = sshllo.u32 0, 2
    %s736 = smul.addr 2, 80
    %s737 = scalar_lea.vmem %s1, %s736
    %738 = vst [vmem:[%s737] sm:%s735] %v734
    %s739 = scalar_lea.vmem [#allocation0], 648
    %v740 = vld [vmem:[%s739] sm:%s255]
    %s741 = sshllo.u32 0, 2
    %s742 = smul.addr 2, 81
    %s743 = scalar_lea.vmem %s1, %s742
    %744 = vst [vmem:[%s743] sm:%s741] %v740
    %s745 = scalar_lea.vmem [#allocation0], 656
    %v746 = vld [vmem:[%s745] sm:%s255]
    %s747 = sshllo.u32 0, 2
    %s748 = smul.addr 2, 82
    %s749 = scalar_lea.vmem %s1, %s748
    %750 = vst [vmem:[%s749] sm:%s747] %v746
    %s751 = scalar_lea.vmem [#allocation0], 664
    %v752 = vld [vmem:[%s751] sm:%s255]
    %s753 = sshllo.u32 0, 2
    %s754 = smul.addr 2, 83
    %s755 = scalar_lea.vmem %s1, %s754
    %756 = vst [vmem:[%s755] sm:%s753] %v752
    %s757 = scalar_lea.vmem [#allocation0], 672
    %v758 = vld [vmem:[%s757] sm:%s255]
    %s759 = sshllo.u32 0, 2
    %s760 = smul.addr 2, 84
    %s761 = scalar_lea.vmem %s1, %s760
    %762 = vst [vmem:[%s761] sm:%s759] %v758
    %s763 = scalar_lea.vmem [#allocation0], 680
    %v764 = vld [vmem:[%s763] sm:%s255]
    %s765 = sshllo.u32 0, 2
    %s766 = smul.addr 2, 85
    %s767 = scalar_lea.vmem %s1, %s766
    %768 = vst [vmem:[%s767] sm:%s765] %v764
    %s769 = scalar_lea.vmem [#allocation0], 688
    %v770 = vld [vmem:[%s769] sm:%s255]
    %s771 = sshllo.u32 0, 2
    %s772 = smul.addr 2, 86
    %s773 = scalar_lea.vmem %s1, %s772
    %774 = vst [vmem:[%s773] sm:%s771] %v770
    %s775 = scalar_lea.vmem [#allocation0], 696
    %v776 = vld [vmem:[%s775] sm:%s255]
    %s777 = sshllo.u32 0, 2
    %s778 = smul.addr 2, 87
    %s779 = scalar_lea.vmem %s1, %s778
    %780 = vst [vmem:[%s779] sm:%s777] %v776
    %s781 = scalar_lea.vmem [#allocation0], 704
    %v782 = vld [vmem:[%s781] sm:%s255]
    %s783 = sshllo.u32 0, 2
    %s784 = smul.addr 2, 88
    %s785 = scalar_lea.vmem %s1, %s784
    %786 = vst [vmem:[%s785] sm:%s783] %v782
    %s787 = scalar_lea.vmem [#allocation0], 712
    %v788 = vld [vmem:[%s787] sm:%s255]
    %s789 = sshllo.u32 0, 2
    %s790 = smul.addr 2, 89
    %s791 = scalar_lea.vmem %s1, %s790
    %792 = vst [vmem:[%s791] sm:%s789] %v788
    %s793 = scalar_lea.vmem [#allocation0], 720
    %v794 = vld [vmem:[%s793] sm:%s255]
    %s795 = sshllo.u32 0, 2
    %s796 = smul.addr 2, 90
    %s797 = scalar_lea.vmem %s1, %s796
    %798 = vst [vmem:[%s797] sm:%s795] %v794
    %s799 = scalar_lea.vmem [#allocation0], 728
    %v800 = vld [vmem:[%s799] sm:%s255]
    %s801 = sshllo.u32 0, 2
    %s802 = smul.addr 2, 91
    %s803 = scalar_lea.vmem %s1, %s802
    %804 = vst [vmem:[%s803] sm:%s801] %v800
    %s805 = scalar_lea.vmem [#allocation0], 736
    %v806 = vld [vmem:[%s805] sm:%s255]
    %s807 = sshllo.u32 0, 2
    %s808 = smul.addr 2, 92
    %s809 = scalar_lea.vmem %s1, %s808
    %810 = vst [vmem:[%s809] sm:%s807] %v806
    %s811 = scalar_lea.vmem [#allocation0], 744
    %v812 = vld [vmem:[%s811] sm:%s255]
    %s813 = sshllo.u32 0, 2
    %s814 = smul.addr 2, 93
    %s815 = scalar_lea.vmem %s1, %s814
    %816 = vst [vmem:[%s815] sm:%s813] %v812
    %s817 = scalar_lea.vmem [#allocation0], 752
    %v818 = vld [vmem:[%s817] sm:%s255]
    %s819 = sshllo.u32 0, 2
    %s820 = smul.addr 2, 94
    %s821 = scalar_lea.vmem %s1, %s820
    %822 = vst [vmem:[%s821] sm:%s819] %v818
    %s823 = scalar_lea.vmem [#allocation0], 760
    %v824 = vld [vmem:[%s823] sm:%s255]
    %s825 = sshllo.u32 0, 2
    %s826 = smul.addr 2, 95
    %s827 = scalar_lea.vmem %s1, %s826
    %828 = vst [vmem:[%s827] sm:%s825] %v824
    %s829 = scalar_lea.vmem [#allocation0], 768
    %v830 = vld [vmem:[%s829] sm:%s255]
    %s831 = sshllo.u32 0, 2
    %s832 = smul.addr 2, 96
    %s833 = scalar_lea.vmem %s1, %s832
    %834 = vst [vmem:[%s833] sm:%s831] %v830
    %s835 = scalar_lea.vmem [#allocation0], 776
    %v836 = vld [vmem:[%s835] sm:%s255]
    %s837 = sshllo.u32 0, 2
    %s838 = smul.addr 2, 97
    %s839 = scalar_lea.vmem %s1, %s838
    %840 = vst [vmem:[%s839] sm:%s837] %v836
    %s841 = scalar_lea.vmem [#allocation0], 784
    %v842 = vld [vmem:[%s841] sm:%s255]
    %s843 = sshllo.u32 0, 2
    %s844 = smul.addr 2, 98
    %s845 = scalar_lea.vmem %s1, %s844
    %846 = vst [vmem:[%s845] sm:%s843] %v842
    %s847 = scalar_lea.vmem [#allocation0], 792
    %v848 = vld [vmem:[%s847] sm:%s255]
    %s849 = sshllo.u32 0, 2
    %s850 = smul.addr 2, 99
    %s851 = scalar_lea.vmem %s1, %s850
    %852 = vst [vmem:[%s851] sm:%s849] %v848
    %s853 = scalar_lea.vmem [#allocation0], 800
    %v854 = vld [vmem:[%s853] sm:%s255]
    %s855 = sshllo.u32 0, 2
    %s856 = smul.addr 2, 100
    %s857 = scalar_lea.vmem %s1, %s856
    %858 = vst [vmem:[%s857] sm:%s855] %v854
    %s859 = scalar_lea.vmem [#allocation0], 808
    %v860 = vld [vmem:[%s859] sm:%s255]
    %s861 = sshllo.u32 0, 2
    %s862 = smul.addr 2, 101
    %s863 = scalar_lea.vmem %s1, %s862
    %864 = vst [vmem:[%s863] sm:%s861] %v860
    %s865 = scalar_lea.vmem [#allocation0], 816
    %v866 = vld [vmem:[%s865] sm:%s255]
    %s867 = sshllo.u32 0, 2
    %s868 = smul.addr 2, 102
    %s869 = scalar_lea.vmem %s1, %s868
    %870 = vst [vmem:[%s869] sm:%s867] %v866
    %s871 = scalar_lea.vmem [#allocation0], 824
    %v872 = vld [vmem:[%s871] sm:%s255]
    %s873 = sshllo.u32 0, 2
    %s874 = smul.addr 2, 103
    %s875 = scalar_lea.vmem %s1, %s874
    %876 = vst [vmem:[%s875] sm:%s873] %v872
    %s877 = scalar_lea.vmem [#allocation0], 832
    %v878 = vld [vmem:[%s877] sm:%s255]
    %s879 = sshllo.u32 0, 2
    %s880 = smul.addr 2, 104
    %s881 = scalar_lea.vmem %s1, %s880
    %882 = vst [vmem:[%s881] sm:%s879] %v878
    %s883 = scalar_lea.vmem [#allocation0], 840
    %v884 = vld [vmem:[%s883] sm:%s255]
    %s885 = sshllo.u32 0, 2
    %s886 = smul.addr 2, 105
    %s887 = scalar_lea.vmem %s1, %s886
    %888 = vst [vmem:[%s887] sm:%s885] %v884
    %s889 = scalar_lea.vmem [#allocation0], 848
    %v890 = vld [vmem:[%s889] sm:%s255]
    %s891 = sshllo.u32 0, 2
    %s892 = smul.addr 2, 106
    %s893 = scalar_lea.vmem %s1, %s892
    %894 = vst [vmem:[%s893] sm:%s891] %v890
    %s895 = scalar_lea.vmem [#allocation0], 856
    %v896 = vld [vmem:[%s895] sm:%s255]
    %s897 = sshllo.u32 0, 2
    %s898 = smul.addr 2, 107
    %s899 = scalar_lea.vmem %s1, %s898
    %900 = vst [vmem:[%s899] sm:%s897] %v896
    %s901 = scalar_lea.vmem [#allocation0], 864
    %v902 = vld [vmem:[%s901] sm:%s255]
    %s903 = sshllo.u32 0, 2
    %s904 = smul.addr 2, 108
    %s905 = scalar_lea.vmem %s1, %s904
    %906 = vst [vmem:[%s905] sm:%s903] %v902
    %s907 = scalar_lea.vmem [#allocation0], 872
    %v908 = vld [vmem:[%s907] sm:%s255]
    %s909 = sshllo.u32 0, 2
    %s910 = smul.addr 2, 109
    %s911 = scalar_lea.vmem %s1, %s910
    %912 = vst [vmem:[%s911] sm:%s909] %v908
    %s913 = scalar_lea.vmem [#allocation0], 880
    %v914 = vld [vmem:[%s913] sm:%s255]
    %s915 = sshllo.u32 0, 2
    %s916 = smul.addr 2, 110
    %s917 = scalar_lea.vmem %s1, %s916
    %918 = vst [vmem:[%s917] sm:%s915] %v914
    %s919 = scalar_lea.vmem [#allocation0], 888
    %v920 = vld [vmem:[%s919] sm:%s255]
    %s921 = sshllo.u32 0, 2
    %s922 = smul.addr 2, 111
    %s923 = scalar_lea.vmem %s1, %s922
    %924 = vst [vmem:[%s923] sm:%s921] %v920
    %s925 = scalar_lea.vmem [#allocation0], 896
    %v926 = vld [vmem:[%s925] sm:%s255]
    %s927 = sshllo.u32 0, 2
    %s928 = smul.addr 2, 112
    %s929 = scalar_lea.vmem %s1, %s928
    %930 = vst [vmem:[%s929] sm:%s927] %v926
    %s931 = scalar_lea.vmem [#allocation0], 904
    %v932 = vld [vmem:[%s931] sm:%s255]
    %s933 = sshllo.u32 0, 2
    %s934 = smul.addr 2, 113
    %s935 = scalar_lea.vmem %s1, %s934
    %936 = vst [vmem:[%s935] sm:%s933] %v932
    %s937 = scalar_lea.vmem [#allocation0], 912
    %v938 = vld [vmem:[%s937] sm:%s255]
    %s939 = sshllo.u32 0, 2
    %s940 = smul.addr 2, 114
    %s941 = scalar_lea.vmem %s1, %s940
    %942 = vst [vmem:[%s941] sm:%s939] %v938
    %s943 = scalar_lea.vmem [#allocation0], 920
    %v944 = vld [vmem:[%s943] sm:%s255]
    %s945 = sshllo.u32 0, 2
    %s946 = smul.addr 2, 115
    %s947 = scalar_lea.vmem %s1, %s946
    %948 = vst [vmem:[%s947] sm:%s945] %v944
    %s949 = scalar_lea.vmem [#allocation0], 928
    %v950 = vld [vmem:[%s949] sm:%s255]
    %s951 = sshllo.u32 0, 2
    %s952 = smul.addr 2, 116
    %s953 = scalar_lea.vmem %s1, %s952
    %954 = vst [vmem:[%s953] sm:%s951] %v950
    %s955 = scalar_lea.vmem [#allocation0], 936
    %v956 = vld [vmem:[%s955] sm:%s255]
    %s957 = sshllo.u32 0, 2
    %s958 = smul.addr 2, 117
    %s959 = scalar_lea.vmem %s1, %s958
    %960 = vst [vmem:[%s959] sm:%s957] %v956
    %s961 = scalar_lea.vmem [#allocation0], 944
    %v962 = vld [vmem:[%s961] sm:%s255]
    %s963 = sshllo.u32 0, 2
    %s964 = smul.addr 2, 118
    %s965 = scalar_lea.vmem %s1, %s964
    %966 = vst [vmem:[%s965] sm:%s963] %v962
    %s967 = scalar_lea.vmem [#allocation0], 952
    %v968 = vld [vmem:[%s967] sm:%s255]
    %s969 = sshllo.u32 0, 2
    %s970 = smul.addr 2, 119
    %s971 = scalar_lea.vmem %s1, %s970
    %972 = vst [vmem:[%s971] sm:%s969] %v968
    %s973 = scalar_lea.vmem [#allocation0], 960
    %v974 = vld [vmem:[%s973] sm:%s255]
    %s975 = sshllo.u32 0, 2
    %s976 = smul.addr 2, 120
    %s977 = scalar_lea.vmem %s1, %s976
    %978 = vst [vmem:[%s977] sm:%s975] %v974
    %s979 = scalar_lea.vmem [#allocation0], 968
    %v980 = vld [vmem:[%s979] sm:%s255]
    %s981 = sshllo.u32 0, 2
    %s982 = smul.addr 2, 121
    %s983 = scalar_lea.vmem %s1, %s982
    %984 = vst [vmem:[%s983] sm:%s981] %v980
    %s985 = scalar_lea.vmem [#allocation0], 976
    %v986 = vld [vmem:[%s985] sm:%s255]
    %s987 = sshllo.u32 0, 2
    %s988 = smul.addr 2, 122
    %s989 = scalar_lea.vmem %s1, %s988
    %990 = vst [vmem:[%s989] sm:%s987] %v986
    %s991 = scalar_lea.vmem [#allocation0], 984
    %v992 = vld [vmem:[%s991] sm:%s255]
    %s993 = sshllo.u32 0, 2
    %s994 = smul.addr 2, 123
    %s995 = scalar_lea.vmem %s1, %s994
    %996 = vst [vmem:[%s995] sm:%s993] %v992
    %s997 = scalar_lea.vmem [#allocation0], 992
    %v998 = vld [vmem:[%s997] sm:%s255]
    %s999 = sshllo.u32 0, 2
    %s1000 = smul.addr 2, 124
    %s1001 = scalar_lea.vmem %s1, %s1000
    %1002 = vst [vmem:[%s1001] sm:%s999] %v998
    %s1003 = scalar_lea.vmem [#allocation0], 1000
    %v1004 = vld [vmem:[%s1003] sm:%s255]
    %s1005 = sshllo.u32 0, 2
    %s1006 = smul.addr 2, 125
    %s1007 = scalar_lea.vmem %s1, %s1006
    %1008 = vst [vmem:[%s1007] sm:%s1005] %v1004
    %s1009 = scalar_lea.vmem [#allocation0], 1008
    %v1010 = vld [vmem:[%s1009] sm:%s255]
    %s1011 = sshllo.u32 0, 2
    %s1012 = smul.addr 2, 126
    %s1013 = scalar_lea.vmem %s1, %s1012
    %1014 = vst [vmem:[%s1013] sm:%s1011] %v1010
    %s1015 = scalar_lea.vmem [#allocation0], 1016
    %v1016 = vld [vmem:[%s1015] sm:%s255]
    %s1017 = sshllo.u32 0, 2
    %s1018 = smul.addr 2, 127
    %s1019 = scalar_lea.vmem %s1, %s1018
    %1020 = vst [vmem:[%s1019] sm:%s1017] %v1016

// kernel: fwd.4
$region0: #{fwd.4}
  #allocation0 [shape = 'u32[]', space=smem, size = 0x4, offset = 0x4, fixed_abs, tag = 'smem constant byte address 0x4 - core index']
  #allocation1 [shape = 'u32[144,128]{1,0:T(1,128)}', space=vmem, size = 0x12000, scoped, tag = 'internal scratch']
  #allocation2 [shape = 'f32[16,128]{1,0:T(8,128)}', space=vmem, size = 0x2000, scoped, tag = 'scratch operand']
  %s0 = inlined_call_operand.vmem [shape: f32[2,16,128], index: 0, kind: input, shape index: {}]
  %s1 = inlined_call_operand.vmem [shape: f32[2,16,128], index: 1, kind: input, shape index: {}]
  %s2 = inlined_call_operand.vmem [shape: f32[8,128,16], index: 2, kind: input, shape index: {}]
  %s3 = inlined_call_operand.vmem [shape: f32[8,1,16], index: 3, kind: input, shape index: {}]
  %s4 = inlined_call_operand.vmem [shape: f32[8,128,16], index: 4, kind: input, shape index: {}]
  %s5 = inlined_call_operand.vmem [shape: f32[8,1,16], index: 5, kind: input, shape index: {}]
  %s6 = inlined_call_operand.vmem [shape: f32[8,128,16], index: 6, kind: input, shape index: {}]
  %s7 = inlined_call_operand.vmem [shape: f32[8,1,16], index: 7, kind: input, shape index: {}]
  %s8 = inlined_call_operand.vmem [shape: f32[8,16,128], index: 8, kind: input, shape index: {}]
  %s9 = inlined_call_operand.vmem [shape: f32[1,128], index: 9, kind: input, shape index: {}]
  %s10 = inlined_call_operand.vmem [shape: f32[1,128], index: 10, kind: input, shape index: {}]
  %s11 = inlined_call_operand.vmem [shape: f32[1,128], index: 11, kind: input, shape index: {}]
  %s12 = inlined_call_operand.vmem [shape: f32[2,16,128], index: 12, kind: output, shape index: {}]
  %s13 = sld [smem:[#allocation0]]
  $region89: #{fwd.4} parent=0
    _
  %s15 = ssub.s32 1, %s13
  %s16 = scalar_select 0, %s15, %s13
  loop: start=0, step=1, limit=18
  $region2: #{fwd.4} parent=0 // loop_pre_header
    _
  $region3: #{fwd.4} parent=0 // loop_header
    %s18 = sphi 0, %s22
    %p19 = scmp.ge.s32.totalorder %s18, 18
    %s25 = sphi 0, %s37
    %s26 = sphi 0, %s33
    %s27 = sphi 0, %s25
    %s28 = sphi 0, %s26
    %s29 = sphi 0, %s27
    %s30 = sphi 0, %s28
    %s40 = sphi 0, %s42
    %s43 = sphi 0, %s40
    %s44 = sphi 0, %s43
    %s60 = sphi 0, %s44
    %s66 = sphi 0, %s68
    %s69 = sphi 0, %s66
    %s70 = sphi 0, %s69
    %s86 = sphi 0, %s70
    %s92 = sphi 0, %s94
    %s95 = sphi 0, %s92
    %s96 = sphi 0, %s95
    %s112 = sphi 0, %s96
    %s118 = sphi 0, %s120
    %s121 = sphi 0, %s118
    %s122 = sphi 0, %s121
    %s138 = sphi 0, %s122
    %s144 = sphi 0, %s146
    %s147 = sphi 0, %s144
    %s148 = sphi 0, %s147
    %s164 = sphi 0, %s148
    %s170 = sphi 0, %s172
    %s173 = sphi 0, %s170
    %s174 = sphi 0, %s173
    %s190 = sphi 0, %s174
    %s196 = sphi 0, %s198
    %s199 = sphi 0, %s196
    %s200 = sphi 0, %s199
    %s216 = sphi 0, %s200
    %s222 = sphi 0, %s224
    %s225 = sphi 0, %s222
    %s226 = sphi 0, %s225
    %s242 = sphi 0, %s226
    %s248 = sphi 0, %s250
    %s251 = sphi 0, %s248
    %s252 = sphi 0, %s251
    %s268 = sphi 0, %s252
    %s272 = sphi 0, %s272
    %s274 = sphi 0, %s272
    %s275 = sphi 0, %s274
    %s289 = sphi 0, %s275
    %s293 = sphi 0, %s293
    %s295 = sphi 0, %s293
    %s296 = sphi 0, %s295
    %s310 = sphi 0, %s296
    %s314 = sphi 0, %s314
    %s316 = sphi 0, %s314
    %s317 = sphi 0, %s316
    %s331 = sphi 0, %s317
    %s337 = sphi 0, %s339
    %s340 = sphi 0, %s337
    %s341 = sphi 0, %s340
    %s357 = sphi 0, %s341
  $region4: #{fwd.4} parent=0 // loop_header_branch
    %21 = sbr.rel (%p19) target = $region8
  $region5: #{fwd.4} parent=0 // loop_body
    %s23 = ssub.s32 %s18, 1
    %s24 = ssub.s32 %s18, 2
    %s31 = sadd.s32 1, %s26
    %p32 = scmp.ge.s32.totalorder %s31, 8
    %s33 = scalar_select %p32, 0, %s31
    %s34 = sadd.s32 1, %s25
    %s35 = scalar_select %p32, %s34, %s25
    %p36 = scmp.ge.s32.totalorder %s35, 2
    %s37 = scalar_select %p36, 0, %s35
    %s38 = ssub.s32 %s25, %s37
    %p39 = scmp.eq.s32.totalorder %s38, 0
    %s41 = sadd.s32 %s40, 1
    %s42 = scalar_select %p39, %s40, %s41
    %p45 = pneg %p39
    %p46 = scmp.eq.s32.totalorder %s18, 15
    %p47 = por %p45, %p46
    %p48 = scmp.ne.s32.totalorder %s40, %s43
    %p49 = scmp.eq.s32.totalorder %s18, 0
    %p50 = por %p48, %p49
    %p51 = scmp.ne.s32.totalorder %s40, %s43
    %p52 = scmp.eq.s32.totalorder %s23, 15
    %p53 = por %p51, %p52
    %p54 = scmp.ne.s32.totalorder %s43, %s44
    %p55 = scmp.eq.s32.totalorder %s23, 0
    %p56 = por %p54, %p55
    %p57 = scmp.ne.s32.totalorder %s43, %s44
    %p58 = scmp.eq.s32.totalorder %s24, 15
    %p59 = por %p57, %p58
    %p61 = scmp.ne.s32.totalorder %s44, %s60
    %p62 = scmp.eq.s32.totalorder %s24, 0
    %p63 = por %p61, %p62
    %s64 = ssub.s32 %s25, %s37
    %p65 = scmp.eq.s32.totalorder %s64, 0
    %s67 = sadd.s32 %s66, 1
    %s68 = scalar_select %p65, %s66, %s67
    %p71 = pneg %p65
    %p72 = scmp.eq.s32.totalorder %s18, 15
    %p73 = por %p71, %p72
    %p74 = scmp.ne.s32.totalorder %s66, %s69
    %p75 = scmp.eq.s32.totalorder %s18, 0
    %p76 = por %p74, %p75
    %p77 = scmp.ne.s32.totalorder %s66, %s69
    %p78 = scmp.eq.s32.totalorder %s23, 15
    %p79 = por %p77, %p78
    %p80 = scmp.ne.s32.totalorder %s69, %s70
    %p81 = scmp.eq.s32.totalorder %s23, 0
    %p82 = por %p80, %p81
    %p83 = scmp.ne.s32.totalorder %s69, %s70
    %p84 = scmp.eq.s32.totalorder %s24, 15
    %p85 = por %p83, %p84
    %p87 = scmp.ne.s32.totalorder %s70, %s86
    %p88 = scmp.eq.s32.totalorder %s24, 0
    %p89 = por %p87, %p88
    %s90 = ssub.s32 %s26, %s33
    %p91 = scmp.eq.s32.totalorder %s90, 0
    %s93 = sadd.s32 %s92, 1
    %s94 = scalar_select %p91, %s92, %s93
    %p97 = pneg %p91
    %p98 = scmp.eq.s32.totalorder %s18, 15
    %p99 = por %p97, %p98
    %p100 = scmp.ne.s32.totalorder %s92, %s95
    %p101 = scmp.eq.s32.totalorder %s18, 0
    %p102 = por %p100, %p101
    %p103 = scmp.ne.s32.totalorder %s92, %s95
    %p104 = scmp.eq.s32.totalorder %s23, 15
    %p105 = por %p103, %p104
    %p106 = scmp.ne.s32.totalorder %s95, %s96
    %p107 = scmp.eq.s32.totalorder %s23, 0
    %p108 = por %p106, %p107
    %p109 = scmp.ne.s32.totalorder %s95, %s96
    %p110 = scmp.eq.s32.totalorder %s24, 15
    %p111 = por %p109, %p110
    %p113 = scmp.ne.s32.totalorder %s96, %s112
    %p114 = scmp.eq.s32.totalorder %s24, 0
    %p115 = por %p113, %p114
    %s116 = ssub.s32 %s26, %s33
    %p117 = scmp.eq.s32.totalorder %s116, 0
    %s119 = sadd.s32 %s118, 1
    %s120 = scalar_select %p117, %s118, %s119
    %p123 = pneg %p117
    %p124 = scmp.eq.s32.totalorder %s18, 15
    %p125 = por %p123, %p124
    %p126 = scmp.ne.s32.totalorder %s118, %s121
    %p127 = scmp.eq.s32.totalorder %s18, 0
    %p128 = por %p126, %p127
    %p129 = scmp.ne.s32.totalorder %s118, %s121
    %p130 = scmp.eq.s32.totalorder %s23, 15
    %p131 = por %p129, %p130
    %p132 = scmp.ne.s32.totalorder %s121, %s122
    %p133 = scmp.eq.s32.totalorder %s23, 0
    %p134 = por %p132, %p133
    %p135 = scmp.ne.s32.totalorder %s121, %s122
    %p136 = scmp.eq.s32.totalorder %s24, 15
    %p137 = por %p135, %p136
    %p139 = scmp.ne.s32.totalorder %s122, %s138
    %p140 = scmp.eq.s32.totalorder %s24, 0
    %p141 = por %p139, %p140
    %s142 = ssub.s32 %s26, %s33
    %p143 = scmp.eq.s32.totalorder %s142, 0
    %s145 = sadd.s32 %s144, 1
    %s146 = scalar_select %p143, %s144, %s145
    %p149 = pneg %p143
    %p150 = scmp.eq.s32.totalorder %s18, 15
    %p151 = por %p149, %p150
    %p152 = scmp.ne.s32.totalorder %s144, %s147
    %p153 = scmp.eq.s32.totalorder %s18, 0
    %p154 = por %p152, %p153
    %p155 = scmp.ne.s32.totalorder %s144, %s147
    %p156 = scmp.eq.s32.totalorder %s23, 15
    %p157 = por %p155, %p156
    %p158 = scmp.ne.s32.totalorder %s147, %s148
    %p159 = scmp.eq.s32.totalorder %s23, 0
    %p160 = por %p158, %p159
    %p161 = scmp.ne.s32.totalorder %s147, %s148
    %p162 = scmp.eq.s32.totalorder %s24, 15
    %p163 = por %p161, %p162
    %p165 = scmp.ne.s32.totalorder %s148, %s164
    %p166 = scmp.eq.s32.totalorder %s24, 0
    %p167 = por %p165, %p166
    %s168 = ssub.s32 %s26, %s33
    %p169 = scmp.eq.s32.totalorder %s168, 0
    %s171 = sadd.s32 %s170, 1
    %s172 = scalar_select %p169, %s170, %s171
    %p175 = pneg %p169
    %p176 = scmp.eq.s32.totalorder %s18, 15
    %p177 = por %p175, %p176
    %p178 = scmp.ne.s32.totalorder %s170, %s173
    %p179 = scmp.eq.s32.totalorder %s18, 0
    %p180 = por %p178, %p179
    %p181 = scmp.ne.s32.totalorder %s170, %s173
    %p182 = scmp.eq.s32.totalorder %s23, 15
    %p183 = por %p181, %p182
    %p184 = scmp.ne.s32.totalorder %s173, %s174
    %p185 = scmp.eq.s32.totalorder %s23, 0
    %p186 = por %p184, %p185
    %p187 = scmp.ne.s32.totalorder %s173, %s174
    %p188 = scmp.eq.s32.totalorder %s24, 15
    %p189 = por %p187, %p188
    %p191 = scmp.ne.s32.totalorder %s174, %s190
    %p192 = scmp.eq.s32.totalorder %s24, 0
    %p193 = por %p191, %p192
    %s194 = ssub.s32 %s26, %s33
    %p195 = scmp.eq.s32.totalorder %s194, 0
    %s197 = sadd.s32 %s196, 1
    %s198 = scalar_select %p195, %s196, %s197
    %p201 = pneg %p195
    %p202 = scmp.eq.s32.totalorder %s18, 15
    %p203 = por %p201, %p202
    %p204 = scmp.ne.s32.totalorder %s196, %s199
    %p205 = scmp.eq.s32.totalorder %s18, 0
    %p206 = por %p204, %p205
    %p207 = scmp.ne.s32.totalorder %s196, %s199
    %p208 = scmp.eq.s32.totalorder %s23, 15
    %p209 = por %p207, %p208
    %p210 = scmp.ne.s32.totalorder %s199, %s200
    %p211 = scmp.eq.s32.totalorder %s23, 0
    %p212 = por %p210, %p211
    %p213 = scmp.ne.s32.totalorder %s199, %s200
    %p214 = scmp.eq.s32.totalorder %s24, 15
    %p215 = por %p213, %p214
    %p217 = scmp.ne.s32.totalorder %s200, %s216
    %p218 = scmp.eq.s32.totalorder %s24, 0
    %p219 = por %p217, %p218
    %s220 = ssub.s32 %s26, %s33
    %p221 = scmp.eq.s32.totalorder %s220, 0
    %s223 = sadd.s32 %s222, 1
    %s224 = scalar_select %p221, %s222, %s223
    %p227 = pneg %p221
    %p228 = scmp.eq.s32.totalorder %s18, 15
    %p229 = por %p227, %p228
    %p230 = scmp.ne.s32.totalorder %s222, %s225
    %p231 = scmp.eq.s32.totalorder %s18, 0
    %p232 = por %p230, %p231
    %p233 = scmp.ne.s32.totalorder %s222, %s225
    %p234 = scmp.eq.s32.totalorder %s23, 15
    %p235 = por %p233, %p234
    %p236 = scmp.ne.s32.totalorder %s225, %s226
    %p237 = scmp.eq.s32.totalorder %s23, 0
    %p238 = por %p236, %p237
    %p239 = scmp.ne.s32.totalorder %s225, %s226
    %p240 = scmp.eq.s32.totalorder %s24, 15
    %p241 = por %p239, %p240
    %p243 = scmp.ne.s32.totalorder %s226, %s242
    %p244 = scmp.eq.s32.totalorder %s24, 0
    %p245 = por %p243, %p244
    %s246 = ssub.s32 %s26, %s33
    %p247 = scmp.eq.s32.totalorder %s246, 0
    %s249 = sadd.s32 %s248, 1
    %s250 = scalar_select %p247, %s248, %s249
    %p253 = pneg %p247
    %p254 = scmp.eq.s32.totalorder %s18, 15
    %p255 = por %p253, %p254
    %p256 = scmp.ne.s32.totalorder %s248, %s251
    %p257 = scmp.eq.s32.totalorder %s18, 0
    %p258 = por %p256, %p257
    %p259 = scmp.ne.s32.totalorder %s248, %s251
    %p260 = scmp.eq.s32.totalorder %s23, 15
    %p261 = por %p259, %p260
    %p262 = scmp.ne.s32.totalorder %s251, %s252
    %p263 = scmp.eq.s32.totalorder %s23, 0
    %p264 = por %p262, %p263
    %p265 = scmp.ne.s32.totalorder %s251, %s252
    %p266 = scmp.eq.s32.totalorder %s24, 15
    %p267 = por %p265, %p266
    %p269 = scmp.ne.s32.totalorder %s252, %s268
    %p270 = scmp.eq.s32.totalorder %s24, 0
    %p271 = por %p269, %p270
    %s273 = sadd.s32 %s272, 1
    %p276 = scmp.eq.s32.totalorder %s18, 15
    %p277 = scmp.ne.s32.totalorder %s272, %s274
    %p278 = scmp.eq.s32.totalorder %s18, 0
    %p279 = por %p277, %p278
    %p280 = scmp.ne.s32.totalorder %s272, %s274
    %p281 = scmp.eq.s32.totalorder %s23, 15
    %p282 = por %p280, %p281
    %p283 = scmp.ne.s32.totalorder %s274, %s275
    %p284 = scmp.eq.s32.totalorder %s23, 0
    %p285 = por %p283, %p284
    %p286 = scmp.ne.s32.totalorder %s274, %s275
    %p287 = scmp.eq.s32.totalorder %s24, 15
    %p288 = por %p286, %p287
    %p290 = scmp.ne.s32.totalorder %s275, %s289
    %p291 = scmp.eq.s32.totalorder %s24, 0
    %p292 = por %p290, %p291
    %s294 = sadd.s32 %s293, 1
    %p297 = scmp.eq.s32.totalorder %s18, 15
    %p298 = scmp.ne.s32.totalorder %s293, %s295
    %p299 = scmp.eq.s32.totalorder %s18, 0
    %p300 = por %p298, %p299
    %p301 = scmp.ne.s32.totalorder %s293, %s295
    %p302 = scmp.eq.s32.totalorder %s23, 15
    %p303 = por %p301, %p302
    %p304 = scmp.ne.s32.totalorder %s295, %s296
    %p305 = scmp.eq.s32.totalorder %s23, 0
    %p306 = por %p304, %p305
    %p307 = scmp.ne.s32.totalorder %s295, %s296
    %p308 = scmp.eq.s32.totalorder %s24, 15
    %p309 = por %p307, %p308
    %p311 = scmp.ne.s32.totalorder %s296, %s310
    %p312 = scmp.eq.s32.totalorder %s24, 0
    %p313 = por %p311, %p312
    %s315 = sadd.s32 %s314, 1
    %p318 = scmp.eq.s32.totalorder %s18, 15
    %p319 = scmp.ne.s32.totalorder %s314, %s316
    %p320 = scmp.eq.s32.totalorder %s18, 0
    %p321 = por %p319, %p320
    %p322 = scmp.ne.s32.totalorder %s314, %s316
    %p323 = scmp.eq.s32.totalorder %s23, 15
    %p324 = por %p322, %p323
    %p325 = scmp.ne.s32.totalorder %s316, %s317
    %p326 = scmp.eq.s32.totalorder %s23, 0
    %p327 = por %p325, %p326
    %p328 = scmp.ne.s32.totalorder %s316, %s317
    %p329 = scmp.eq.s32.totalorder %s24, 15
    %p330 = por %p328, %p329
    %p332 = scmp.ne.s32.totalorder %s317, %s331
    %p333 = scmp.eq.s32.totalorder %s24, 0
    %p334 = por %p332, %p333
    %s335 = ssub.s32 %s25, %s37
    %p336 = scmp.eq.s32.totalorder %s335, 0
    %s338 = sadd.s32 %s337, 1
    %s339 = scalar_select %p336, %s337, %s338
    %p342 = pneg %p336
    %p343 = scmp.eq.s32.totalorder %s18, 15
    %p344 = por %p342, %p343
    %p345 = scmp.ne.s32.totalorder %s337, %s340
    %p346 = scmp.eq.s32.totalorder %s18, 0
    %p347 = por %p345, %p346
    %p348 = scmp.ne.s32.totalorder %s337, %s340
    %p349 = scmp.eq.s32.totalorder %s23, 15
    %p350 = por %p348, %p349
    %p351 = scmp.ne.s32.totalorder %s340, %s341
    %p352 = scmp.eq.s32.totalorder %s23, 0
    %p353 = por %p351, %p352
    %p354 = scmp.ne.s32.totalorder %s340, %s341
    %p355 = scmp.eq.s32.totalorder %s24, 15
    %p356 = por %p354, %p355
    %p358 = scmp.ne.s32.totalorder %s341, %s357
    %p359 = scmp.eq.s32.totalorder %s24, 0
    %p360 = por %p358, %p359
    %p361 = scmp.le.s32.totalorder 1, %s18
    %p362 = scmp.lt.s32.totalorder %s18, 17
    %p363 = pnand %p361, %p362
    %p364 = pneg %p363
    // Predicated region
    $region9: #{fwd.4} parent=5 // pred_check
      _
    $region10: #{fwd.4} parent=5 // pred_check_branch
      %366 = sbr.rel (%p363) target = $region12
    $region11: #{fwd.4} parent=5 // pred_region
      %s367 = ssub.s32 %s18, 1
      // Predicated region
      $region13: #{fwd.4} parent=11 // pred_check
        %p368 = pneg %p285
      $region14: #{fwd.4} parent=11 // pred_check_branch
        %370 = sbr.rel (%p368) target = $region16
      $region15: #{fwd.4} parent=11 // pred_region
        _
      $region16: #{fwd.4} parent=11 // pred_fallthru
        _
      // Predicated region
      $region17: #{fwd.4} parent=11 // pred_check
        %p371 = pneg %p306
      $region18: #{fwd.4} parent=11 // pred_check_branch
        %373 = sbr.rel (%p371) target = $region20
      $region19: #{fwd.4} parent=11 // pred_region
        _
      $region20: #{fwd.4} parent=11 // pred_fallthru
        _
      // Predicated region
      $region21: #{fwd.4} parent=11 // pred_check
        %p374 = pneg %p327
      $region22: #{fwd.4} parent=11 // pred_check_branch
        %376 = sbr.rel (%p374) target = $region24
      $region23: #{fwd.4} parent=11 // pred_region
        _
      $region24: #{fwd.4} parent=11 // pred_fallthru
        _
    $region12: #{fwd.4} parent=5 // pred_fallthru
      _
    %p377 = scmp.lt.s32.totalorder %s18, 16
    // Predicated region
    $region25: #{fwd.4} parent=5 // pred_check
      %p378 = pneg %p377
    $region26: #{fwd.4} parent=5 // pred_check_branch
      %380 = sbr.rel (%p378) target = $region28
    $region27: #{fwd.4} parent=5 // pred_region
      // Predicated region
      $region29: #{fwd.4} parent=27 // pred_check
        %p381 = pneg %p50
      $region30: #{fwd.4} parent=27 // pred_check_branch
        %383 = sbr.rel (%p381) target = $region32
      $region31: #{fwd.4} parent=27 // pred_region
        %p384 = scmp.lt.s32.totalorder %s25, 1
        %s385 = scalar_select %p384, %s25, 1
        %s386 = smul.addr %s385, 2
        %s387 = smul.addr %s386, 8
        %s388 = scalar_lea.vmem %s0, %s387
      $region32: #{fwd.4} parent=27 // pred_fallthru
        _
      // Predicated region
      $region33: #{fwd.4} parent=27 // pred_check
        %p389 = pneg %p76
      $region34: #{fwd.4} parent=27 // pred_check_branch
        %391 = sbr.rel (%p389) target = $region36
      $region35: #{fwd.4} parent=27 // pred_region
        %p392 = scmp.lt.s32.totalorder %s25, 1
        %s393 = scalar_select %p392, %s25, 1
        %s394 = smul.addr %s393, 2
        %s395 = smul.addr %s394, 8
        %s396 = scalar_lea.vmem %s1, %s395
      $region36: #{fwd.4} parent=27 // pred_fallthru
        _
      // Predicated region
      $region37: #{fwd.4} parent=27 // pred_check
        %p397 = pneg %p102
      $region38: #{fwd.4} parent=27 // pred_check_branch
        %399 = sbr.rel (%p397) target = $region40
      $region39: #{fwd.4} parent=27 // pred_region
        %p400 = scmp.lt.s32.totalorder %s26, 7
        %s401 = scalar_select %p400, %s26, 7
        %s402 = smul.addr %s401, 16
        %s403 = smul.addr %s402, 8
        %s404 = scalar_lea.vmem %s2, %s403
      $region40: #{fwd.4} parent=27 // pred_fallthru
        _
      // Predicated region
      $region41: #{fwd.4} parent=27 // pred_check
        %p405 = pneg %p128
      $region42: #{fwd.4} parent=27 // pred_check_branch
        %407 = sbr.rel (%p405) target = $region44
      $region43: #{fwd.4} parent=27 // pred_region
        %p408 = scmp.lt.s32.totalorder %s26, 7
        %s409 = scalar_select %p408, %s26, 7
        %s410 = scalar_lea.vmem %s3, %s409
      $region44: #{fwd.4} parent=27 // pred_fallthru
        _
      // Predicated region
      $region45: #{fwd.4} parent=27 // pred_check
        %p411 = pneg %p154
      $region46: #{fwd.4} parent=27 // pred_check_branch
        %413 = sbr.rel (%p411) target = $region48
      $region47: #{fwd.4} parent=27 // pred_region
        %p414 = scmp.lt.s32.totalorder %s26, 7
        %s415 = scalar_select %p414, %s26, 7
        %s416 = smul.addr %s415, 16
        %s417 = smul.addr %s416, 8
        %s418 = scalar_lea.vmem %s4, %s417
      $region48: #{fwd.4} parent=27 // pred_fallthru
        _
      // Predicated region
      $region49: #{fwd.4} parent=27 // pred_check
        %p419 = pneg %p180
      $region50: #{fwd.4} parent=27 // pred_check_branch
        %421 = sbr.rel (%p419) target = $region52
      $region51: #{fwd.4} parent=27 // pred_region
        %p422 = scmp.lt.s32.totalorder %s26, 7
        %s423 = scalar_select %p422, %s26, 7
        %s424 = scalar_lea.vmem %s5, %s423
      $region52: #{fwd.4} parent=27 // pred_fallthru
        _
      // Predicated region
      $region53: #{fwd.4} parent=27 // pred_check
        %p425 = pneg %p206
      $region54: #{fwd.4} parent=27 // pred_check_branch
        %427 = sbr.rel (%p425) target = $region56
      $region55: #{fwd.4} parent=27 // pred_region
        %p428 = scmp.lt.s32.totalorder %s26, 7
        %s429 = scalar_select %p428, %s26, 7
        %s430 = smul.addr %s429, 16
        %s431 = smul.addr %s430, 8
        %s432 = scalar_lea.vmem %s6, %s431
      $region56: #{fwd.4} parent=27 // pred_fallthru
        _
      // Predicated region
      $region57: #{fwd.4} parent=27 // pred_check
        %p433 = pneg %p232
      $region58: #{fwd.4} parent=27 // pred_check_branch
        %435 = sbr.rel (%p433) target = $region60
      $region59: #{fwd.4} parent=27 // pred_region
        %p436 = scmp.lt.s32.totalorder %s26, 7
        %s437 = scalar_select %p436, %s26, 7
        %s438 = scalar_lea.vmem %s7, %s437
      $region60: #{fwd.4} parent=27 // pred_fallthru
        _
      // Predicated region
      $region61: #{fwd.4} parent=27 // pred_check
        %p439 = pneg %p258
      $region62: #{fwd.4} parent=27 // pred_check_branch
        %441 = sbr.rel (%p439) target = $region64
      $region63: #{fwd.4} parent=27 // pred_region
        %p442 = scmp.lt.s32.totalorder %s26, 7
        %s443 = scalar_select %p442, %s26, 7
        %s444 = smul.addr %s443, 2
        %s445 = smul.addr %s444, 8
        %s446 = scalar_lea.vmem %s8, %s445
      $region64: #{fwd.4} parent=27 // pred_fallthru
        _
    $region28: #{fwd.4} parent=5 // pred_fallthru
      _
    %p447 = scmp.le.s32.totalorder 1, %s18
    %p448 = scmp.lt.s32.totalorder %s18, 17
    %p449 = pnand %p447, %p448
    %p450 = pneg %p449
    // Predicated region
    $region65: #{fwd.4} parent=5 // pred_check
      _
    $region66: #{fwd.4} parent=5 // pred_check_branch
      %452 = sbr.rel (%p449) target = $region68
    $region67: #{fwd.4} parent=5 // pred_region
      %s453 = ssub.s32 %s18, 1
      %p454 = scmp.lt.s32.totalorder %s27, 1
      %s455 = scalar_select %p454, %s27, 1
      %s456 = smul.addr %s455, 2
      %s457 = smul.addr %s456, 8
      %s458 = scalar_lea.vmem %s0, %s457
      %p459 = pneg %p56
      %p460 = pneg %p53
      %p461 = scmp.lt.s32.totalorder %s27, 1
      %s462 = scalar_select %p461, %s27, 1
      %s463 = smul.addr %s462, 2
      %s464 = smul.addr %s463, 8
      %s465 = scalar_lea.vmem %s1, %s464
      %p466 = pneg %p82
      %p467 = pneg %p79
      %p468 = scmp.lt.s32.totalorder %s28, 7
      %s469 = scalar_select %p468, %s28, 7
      %s470 = smul.addr %s469, 16
      %s471 = smul.addr %s470, 8
      %s472 = scalar_lea.vmem %s2, %s471
      %p473 = pneg %p108
      %p474 = pneg %p105
      %p475 = scmp.lt.s32.totalorder %s28, 7
      %s476 = scalar_select %p475, %s28, 7
      %s477 = scalar_lea.vmem %s3, %s476
      %p478 = pneg %p134
      %p479 = pneg %p131
      %p480 = scmp.lt.s32.totalorder %s28, 7
      %s481 = scalar_select %p480, %s28, 7
      %s482 = smul.addr %s481, 16
      %s483 = smul.addr %s482, 8
      %s484 = scalar_lea.vmem %s4, %s483
      %p485 = pneg %p160
      %p486 = pneg %p157
      %p487 = scmp.lt.s32.totalorder %s28, 7
      %s488 = scalar_select %p487, %s28, 7
      %s489 = scalar_lea.vmem %s5, %s488
      %p490 = pneg %p186
      %p491 = pneg %p183
      %p492 = scmp.lt.s32.totalorder %s28, 7
      %s493 = scalar_select %p492, %s28, 7
      %s494 = smul.addr %s493, 16
      %s495 = smul.addr %s494, 8
      %s496 = scalar_lea.vmem %s6, %s495
      %p497 = pneg %p212
      %p498 = pneg %p209
      %p499 = scmp.lt.s32.totalorder %s28, 7
      %s500 = scalar_select %p499, %s28, 7
      %s501 = scalar_lea.vmem %s7, %s500
      %p502 = pneg %p238
      %p503 = pneg %p235
      %p504 = scmp.lt.s32.totalorder %s28, 7
      %s505 = scalar_select %p504, %s28, 7
      %s506 = smul.addr %s505, 2
      %s507 = smul.addr %s506, 8
      %s508 = scalar_lea.vmem %s8, %s507
      %p509 = pneg %p264
      %p510 = pneg %p261
      %p511 = pneg %p285
      %p512 = pneg %p282
      %p513 = pneg %p306
      %p514 = pneg %p303
      %p515 = pneg %p327
      %p516 = pneg %p324
      %p517 = pneg %p353
      %p518 = pneg %p350
      %p519 = scmp.lt.s32.totalorder %s27, 1
      %s520 = scalar_select %p519, %s27, 1
      %s521 = smul.addr %s520, 2
      %s522 = smul.addr %s521, 8
      %s523 = scalar_lea.vmem %s12, %s522
      %p524 = scmp.lt.s32.totalorder %s27, 1
      %s525 = scalar_select %p524, %s27, 1
      %s526 = smul.addr %s525, 2
      %s527 = smul.addr %s526, 8
      %s528 = scalar_lea.vmem %s0, %s527
      %p529 = scmp.lt.s32.totalorder %s27, 1
      %s530 = scalar_select %p529, %s27, 1
      %s531 = smul.addr %s530, 2
      %s532 = smul.addr %s531, 8
      %s533 = scalar_lea.vmem %s1, %s532
      %p534 = scmp.lt.s32.totalorder %s28, 7
      %s535 = scalar_select %p534, %s28, 7
      %s536 = smul.addr %s535, 16
      %s537 = smul.addr %s536, 8
      %s538 = scalar_lea.vmem %s2, %s537
      %p539 = scmp.lt.s32.totalorder %s28, 7
      %s540 = scalar_select %p539, %s28, 7
      %s541 = scalar_lea.vmem %s3, %s540
      %p542 = scmp.lt.s32.totalorder %s28, 7
      %s543 = scalar_select %p542, %s28, 7
      %s544 = smul.addr %s543, 16
      %s545 = smul.addr %s544, 8
      %s546 = scalar_lea.vmem %s4, %s545
      %p547 = scmp.lt.s32.totalorder %s28, 7
      %s548 = scalar_select %p547, %s28, 7
      %s549 = scalar_lea.vmem %s5, %s548
      %p550 = scmp.lt.s32.totalorder %s28, 7
      %s551 = scalar_select %p550, %s28, 7
      %s552 = smul.addr %s551, 16
      %s553 = smul.addr %s552, 8
      %s554 = scalar_lea.vmem %s6, %s553
      %p555 = scmp.lt.s32.totalorder %s28, 7
      %s556 = scalar_select %p555, %s28, 7
      %s557 = scalar_lea.vmem %s7, %s556
      %p558 = scmp.lt.s32.totalorder %s28, 7
      %s559 = scalar_select %p558, %s28, 7
      %s560 = smul.addr %s559, 2
      %s561 = smul.addr %s560, 8
      %s562 = scalar_lea.vmem %s8, %s561
      %p563 = scmp.lt.s32.totalorder %s27, 1
      %s564 = scalar_select %p563, %s27, 1
      %s565 = smul.addr %s564, 2
      %s566 = smul.addr %s565, 8
      %s567 = scalar_lea.vmem %s12, %s566
      %p568 = scmp.eq.s32.totalorder %s28, 0
      // Predicated region
      $region69: #{fwd.4} parent=67 // pred_check
        %p569 = pneg %p568
      $region70: #{fwd.4} parent=67 // pred_check_branch
        %571 = sbr.rel (%p569) target = $region72
      $region71: #{fwd.4} parent=67 // pred_region
        %572 = vst [vmem:[#allocation2] sm:$0xff] 0.0
        %573 = vst [vmem:[#allocation2 + $0x8] sm:$0xff] 0.0
      $region72: #{fwd.4} parent=67 // pred_fallthru
        _
      %v574 = vld [vmem:[%s528] sm:$0xff]
      %v575 = vld [vmem:[%s528 + $0x8] sm:$0xff]
      %v576 = vld [vmem:[%s533] sm:$0xff]
      %v577 = vld [vmem:[%s533 + $0x8] sm:$0xff]
      %v578 = vadd.f32 %v574, %v576
      %v579 = vadd.f32 %v575, %v577
      %v580 = vld [vmem:[%s538] sm:$0xff]
      %v581 = vld [vmem:[%s538 + $0x8] sm:$0xff]
      %v582 = vld [vmem:[%s538 + $0x10] sm:$0xff]
      %v583 = vld [vmem:[%s538 + $0x18] sm:$0xff]
      %v584 = vld [vmem:[%s538 + $0x20] sm:$0xff]
      %v585 = vld [vmem:[%s538 + $0x28] sm:$0xff]
      %v586 = vld [vmem:[%s538 + $0x30] sm:$0xff]
      %v587 = vld [vmem:[%s538 + $0x38] sm:$0xff]
      %v588 = vld [vmem:[%s538 + $0x40] sm:$0xff]
      %v589 = vld [vmem:[%s538 + $0x48] sm:$0xff]
      %v590 = vld [vmem:[%s538 + $0x50] sm:$0xff]
      %v591 = vld [vmem:[%s538 + $0x58] sm:$0xff]
      %v592 = vld [vmem:[%s538 + $0x60] sm:$0xff]
      %v593 = vld [vmem:[%s538 + $0x68] sm:$0xff]
      %v594 = vld [vmem:[%s538 + $0x70] sm:$0xff]
      %v595 = vld [vmem:[%s538 + $0x78] sm:$0xff]
      %v596 = vld [vmem:[%s541] sm:$0x1]
      %v598 = vlaneseq
      %v599 = vshrl.u32 %v598, 7
      %v600 = vsub.s32 0, %v599
      %v601 = vrot.slane %v596, %v600
      %603 = vmatprep.subr.mxu0 0.0
      %604 = vmatpush1.msra.mxu0 %v580
      %605 = vmatprep.subr.mxu0 0.0
      %606 = vmatpush1.msra.mxu0 %v581
      %607 = vmatprep.subr.mxu0 0.0
      %608 = vmatpush1.msra.mxu0 %v582
      %609 = vmatprep.subr.mxu0 0.0
      %610 = vmatpush1.msra.mxu0 %v583
      %611 = vmatprep.subr.mxu0 0.0
      %612 = vmatpush1.msra.mxu0 %v584
      %613 = vmatprep.subr.mxu0 0.0
      %614 = vmatpush1.msra.mxu0 %v585
      %615 = vmatprep.subr.mxu0 0.0
      %616 = vmatpush1.msra.mxu0 %v586
      %617 = vmatprep.subr.mxu0 0.0
      %618 = vmatpush1.msra.mxu0 %v587
      %619 = vmatprep.subr.mxu0 0.0
      %620 = vmatpush1.msra.mxu0 %v588
      %621 = vmatprep.subr.mxu0 0.0
      %622 = vmatpush1.msra.mxu0 %v589
      %623 = vmatprep.subr.mxu0 0.0
      %624 = vmatpush1.msra.mxu0 %v590
      %625 = vmatprep.subr.mxu0 0.0
      %626 = vmatpush1.msra.mxu0 %v591
      %627 = vmatprep.subr.mxu0 0.0
      %628 = vmatpush1.msra.mxu0 %v592
      %629 = vmatprep.subr.mxu0 0.0
      %630 = vmatpush1.msra.mxu0 %v593
      %631 = vmatprep.subr.mxu0 0.0
      %632 = vmatpush1.msra.mxu0 %v594
      %633 = vmatprep.subr.mxu0 0.0
      %634 = vmatpush1.msra.mxu0 %v595
      %635 = vmatprep.subr.mxu0 0.0
      %636 = vmatpush1.msra.mxu0 0.0
      %637 = vmatprep.subr.mxu0 0.0
      %638 = vmatpush1.msra.mxu0 0.0
      %639 = vmatprep.subr.mxu0 0.0
      %640 = vmatpush1.msra.mxu0 0.0
      %641 = vmatprep.subr.mxu0 0.0
      %642 = vmatpush1.msra.mxu0 0.0
      %643 = vmatprep.subr.mxu0 0.0
      %644 = vmatpush1.msra.mxu0 0.0
      %645 = vmatprep.subr.mxu0 0.0
      %646 = vmatpush1.msra.mxu0 0.0
      %647 = vmatprep.subr.mxu0 0.0
      %648 = vmatpush1.msra.mxu0 0.0
      %649 = vmatprep.subr.mxu0 0.0
      %650 = vmatpush1.msra.mxu0 0.0
      %651 = vmatprep.subr.mxu0 0.0
      %652 = vmatpush1.msra.mxu0 0.0
      %653 = vmatprep.subr.mxu0 0.0
      %654 = vmatpush1.msra.mxu0 0.0
      %655 = vmatprep.subr.mxu0 0.0
      %656 = vmatpush1.msra.mxu0 0.0
      %657 = vmatprep.subr.mxu0 0.0
      %658 = vmatpush1.msra.mxu0 0.0
      %659 = vmatprep.subr.mxu0 0.0
      %660 = vmatpush1.msra.mxu0 0.0
      %661 = vmatprep.subr.mxu0 0.0
      %662 = vmatpush1.msra.mxu0 0.0
      %663 = vmatprep.subr.mxu0 0.0
      %664 = vmatpush1.msra.mxu0 0.0
      %665 = vmatprep.subr.mxu0 0.0
      %666 = vmatpush1.msra.mxu0 0.0
      %667 = vmatprep.mubr.f32.mxu0 0.0
      %668 = vmatmul.mubr.f32.gmra.mrb[0].mxu0 %v578
      %v669 = vpop.f32.mrb[0].mxu0
      %v670 = vadd.f32 %v601, %v669
      %v671 = vpop.f32.mrb[0].mxu0
      %672 = vmatprep.mubr.f32.mxu0 0.0
      %673 = vmatmul.mubr.f32.gmra.mrb[0].mxu0 %v579
      %v674 = vpop.f32.mrb[0].mxu0
      %v675 = vadd.f32 %v601, %v674
      %v676 = vpop.f32.mrb[0].mxu0
      %677 = vdwg.mxu0
      %v678 = vld [vmem:[%s546] sm:$0xff]
      %v679 = vld [vmem:[%s546 + $0x8] sm:$0xff]
      %v680 = vld [vmem:[%s546 + $0x10] sm:$0xff]
      %v681 = vld [vmem:[%s546 + $0x18] sm:$0xff]
      %v682 = vld [vmem:[%s546 + $0x20] sm:$0xff]
      %v683 = vld [vmem:[%s546 + $0x28] sm:$0xff]
      %v684 = vld [vmem:[%s546 + $0x30] sm:$0xff]
      %v685 = vld [vmem:[%s546 + $0x38] sm:$0xff]
      %v686 = vld [vmem:[%s546 + $0x40] sm:$0xff]
      %v687 = vld [vmem:[%s546 + $0x48] sm:$0xff]
      %v688 = vld [vmem:[%s546 + $0x50] sm:$0xff]
      %v689 = vld [vmem:[%s546 + $0x58] sm:$0xff]
      %v690 = vld [vmem:[%s546 + $0x60] sm:$0xff]
      %v691 = vld [vmem:[%s546 + $0x68] sm:$0xff]
      %v692 = vld [vmem:[%s546 + $0x70] sm:$0xff]
      %v693 = vld [vmem:[%s546 + $0x78] sm:$0xff]
      %v694 = vld [vmem:[%s549] sm:$0x1]
      %v696 = vlaneseq
      %v697 = vshrl.u32 %v696, 7
      %v698 = vsub.s32 0, %v697
      %v699 = vrot.slane %v694, %v698
      %701 = vmatprep.subr.mxu0 0.0
      %702 = vmatpush1.msra.mxu0 %v678
      %703 = vmatprep.subr.mxu0 0.0
      %704 = vmatpush1.msra.mxu0 %v679
      %705 = vmatprep.subr.mxu0 0.0
      %706 = vmatpush1.msra.mxu0 %v680
      %707 = vmatprep.subr.mxu0 0.0
      %708 = vmatpush1.msra.mxu0 %v681
      %709 = vmatprep.subr.mxu0 0.0
      %710 = vmatpush1.msra.mxu0 %v682
      %711 = vmatprep.subr.mxu0 0.0
      %712 = vmatpush1.msra.mxu0 %v683
      %713 = vmatprep.subr.mxu0 0.0
      %714 = vmatpush1.msra.mxu0 %v684
      %715 = vmatprep.subr.mxu0 0.0
      %716 = vmatpush1.msra.mxu0 %v685
      %717 = vmatprep.subr.mxu0 0.0
      %718 = vmatpush1.msra.mxu0 %v686
      %719 = vmatprep.subr.mxu0 0.0
      %720 = vmatpush1.msra.mxu0 %v687
      %721 = vmatprep.subr.mxu0 0.0
      %722 = vmatpush1.msra.mxu0 %v688
      %723 = vmatprep.subr.mxu0 0.0
      %724 = vmatpush1.msra.mxu0 %v689
      %725 = vmatprep.subr.mxu0 0.0
      %726 = vmatpush1.msra.mxu0 %v690
      %727 = vmatprep.subr.mxu0 0.0
      %728 = vmatpush1.msra.mxu0 %v691
      %729 = vmatprep.subr.mxu0 0.0
      %730 = vmatpush1.msra.mxu0 %v692
      %731 = vmatprep.subr.mxu0 0.0
      %732 = vmatpush1.msra.mxu0 %v693
      %733 = vmatprep.subr.mxu0 0.0
      %734 = vmatpush1.msra.mxu0 0.0
      %735 = vmatprep.subr.mxu0 0.0
      %736 = vmatpush1.msra.mxu0 0.0
      %737 = vmatprep.subr.mxu0 0.0
      %738 = vmatpush1.msra.mxu0 0.0
      %739 = vmatprep.subr.mxu0 0.0
      %740 = vmatpush1.msra.mxu0 0.0
      %741 = vmatprep.subr.mxu0 0.0
      %742 = vmatpush1.msra.mxu0 0.0
      %743 = vmatprep.subr.mxu0 0.0
      %744 = vmatpush1.msra.mxu0 0.0
      %745 = vmatprep.subr.mxu0 0.0
      %746 = vmatpush1.msra.mxu0 0.0
      %747 = vmatprep.subr.mxu0 0.0
      %748 = vmatpush1.msra.mxu0 0.0
      %749 = vmatprep.subr.mxu0 0.0
      %750 = vmatpush1.msra.mxu0 0.0
      %751 = vmatprep.subr.mxu0 0.0
      %752 = vmatpush1.msra.mxu0 0.0
      %753 = vmatprep.subr.mxu0 0.0
      %754 = vmatpush1.msra.mxu0 0.0
      %755 = vmatprep.subr.mxu0 0.0
      %756 = vmatpush1.msra.mxu0 0.0
      %757 = vmatprep.subr.mxu0 0.0
      %758 = vmatpush1.msra.mxu0 0.0
      %759 = vmatprep.subr.mxu0 0.0
      %760 = vmatpush1.msra.mxu0 0.0
      %761 = vmatprep.subr.mxu0 0.0
      %762 = vmatpush1.msra.mxu0 0.0
      %763 = vmatprep.subr.mxu0 0.0
      %764 = vmatpush1.msra.mxu0 0.0
      %765 = vmatprep.mubr.f32.mxu0 0.0
      %766 = vmatmul.mubr.f32.gmra.mrb[0].mxu0 %v578
      %v767 = vpop.f32.mrb[0].mxu0
      %v768 = vadd.f32 %v699, %v767
      %v769 = vpop.f32.mrb[0].mxu0
      %770 = vmatprep.mubr.f32.mxu0 0.0
      %771 = vmatmul.mubr.f32.gmra.mrb[0].mxu0 %v579
      %v772 = vpop.f32.mrb[0].mxu0
      %v773 = vadd.f32 %v699, %v772
      %v774 = vpop.f32.mrb[0].mxu0
      %775 = vdwg.mxu0
      %v776 = vld [vmem:[%s554] sm:$0xff]
      %v777 = vld [vmem:[%s554 + $0x8] sm:$0xff]
      %v778 = vld [vmem:[%s554 + $0x10] sm:$0xff]
      %v779 = vld [vmem:[%s554 + $0x18] sm:$0xff]
      %v780 = vld [vmem:[%s554 + $0x20] sm:$0xff]
      %v781 = vld [vmem:[%s554 + $0x28] sm:$0xff]
      %v782 = vld [vmem:[%s554 + $0x30] sm:$0xff]
      %v783 = vld [vmem:[%s554 + $0x38] sm:$0xff]
      %v784 = vld [vmem:[%s554 + $0x40] sm:$0xff]
      %v785 = vld [vmem:[%s554 + $0x48] sm:$0xff]
      %v786 = vld [vmem:[%s554 + $0x50] sm:$0xff]
      %v787 = vld [vmem:[%s554 + $0x58] sm:$0xff]
      %v788 = vld [vmem:[%s554 + $0x60] sm:$0xff]
      %v789 = vld [vmem:[%s554 + $0x68] sm:$0xff]
      %v790 = vld [vmem:[%s554 + $0x70] sm:$0xff]
      %v791 = vld [vmem:[%s554 + $0x78] sm:$0xff]
      %v792 = vld [vmem:[%s557] sm:$0x1]
      %v794 = vlaneseq
      %v795 = vshrl.u32 %v794, 7
      %v796 = vsub.s32 0, %v795
      %v797 = vrot.slane %v792, %v796
      %799 = vmatprep.subr.mxu0 0.0
      %800 = vmatpush1.msra.mxu0 %v776
      %801 = vmatprep.subr.mxu0 0.0
      %802 = vmatpush1.msra.mxu0 %v777
      %803 = vmatprep.subr.mxu0 0.0
      %804 = vmatpush1.msra.mxu0 %v778
      %805 = vmatprep.subr.mxu0 0.0
      %806 = vmatpush1.msra.mxu0 %v779
      %807 = vmatprep.subr.mxu0 0.0
      %808 = vmatpush1.msra.mxu0 %v780
      %809 = vmatprep.subr.mxu0 0.0
      %810 = vmatpush1.msra.mxu0 %v781
      %811 = vmatprep.subr.mxu0 0.0
      %812 = vmatpush1.msra.mxu0 %v782
      %813 = vmatprep.subr.mxu0 0.0
      %814 = vmatpush1.msra.mxu0 %v783
      %815 = vmatprep.subr.mxu0 0.0
      %816 = vmatpush1.msra.mxu0 %v784
      %817 = vmatprep.subr.mxu0 0.0
      %818 = vmatpush1.msra.mxu0 %v785
      %819 = vmatprep.subr.mxu0 0.0
      %820 = vmatpush1.msra.mxu0 %v786
      %821 = vmatprep.subr.mxu0 0.0
      %822 = vmatpush1.msra.mxu0 %v787
      %823 = vmatprep.subr.mxu0 0.0
      %824 = vmatpush1.msra.mxu0 %v788
      %825 = vmatprep.subr.mxu0 0.0
      %826 = vmatpush1.msra.mxu0 %v789
      %827 = vmatprep.subr.mxu0 0.0
      %828 = vmatpush1.msra.mxu0 %v790
      %829 = vmatprep.subr.mxu0 0.0
      %830 = vmatpush1.msra.mxu0 %v791
      %831 = vmatprep.subr.mxu0 0.0
      %832 = vmatpush1.msra.mxu0 0.0
      %833 = vmatprep.subr.mxu0 0.0
      %834 = vmatpush1.msra.mxu0 0.0
      %835 = vmatprep.subr.mxu0 0.0
      %836 = vmatpush1.msra.mxu0 0.0
      %837 = vmatprep.subr.mxu0 0.0
      %838 = vmatpush1.msra.mxu0 0.0
      %839 = vmatprep.subr.mxu0 0.0
      %840 = vmatpush1.msra.mxu0 0.0
      %841 = vmatprep.subr.mxu0 0.0
      %842 = vmatpush1.msra.mxu0 0.0
      %843 = vmatprep.subr.mxu0 0.0
      %844 = vmatpush1.msra.mxu0 0.0
      %845 = vmatprep.subr.mxu0 0.0
      %846 = vmatpush1.msra.mxu0 0.0
      %847 = vmatprep.subr.mxu0 0.0
      %848 = vmatpush1.msra.mxu0 0.0
      %849 = vmatprep.subr.mxu0 0.0
      %850 = vmatpush1.msra.mxu0 0.0
      %851 = vmatprep.subr.mxu0 0.0
      %852 = vmatpush1.msra.mxu0 0.0
      %853 = vmatprep.subr.mxu0 0.0
      %854 = vmatpush1.msra.mxu0 0.0
      %855 = vmatprep.subr.mxu0 0.0
      %856 = vmatpush1.msra.mxu0 0.0
      %857 = vmatprep.subr.mxu0 0.0
      %858 = vmatpush1.msra.mxu0 0.0
      %859 = vmatprep.subr.mxu0 0.0
      %860 = vmatpush1.msra.mxu0 0.0
      %861 = vmatprep.subr.mxu0 0.0
      %862 = vmatpush1.msra.mxu0 0.0
      %863 = vmatprep.mubr.f32.mxu0 0.0
      %864 = vmatmul.mubr.f32.gmra.mrb[0].mxu0 %v574
      %v865 = vpop.f32.mrb[0].mxu0
      %v866 = vadd.f32 %v797, %v865
      %v867 = vpop.f32.mrb[0].mxu0
      %868 = vmatprep.mubr.f32.mxu0 0.0
      %869 = vmatmul.mubr.f32.gmra.mrb[0].mxu0 %v575
      %v870 = vpop.f32.mrb[0].mxu0
      %v871 = vadd.f32 %v797, %v870
      %v872 = vpop.f32.mrb[0].mxu0
      %873 = vdwg.mxu0
      %vm874 = vcmask 130048
      %v876 = vsel %vm874, %v670, 0
      %v879 = vsel %vm874, %v675, 0
      %v882 = vsel %vm874, %v768, 0
      %v885 = vsel %vm874, %v773, 0
      %887 = vmatprep.subr.mxu0 0.0
      %888 = vmatpush1.xpose.msra.mxu0 %v882
      %889 = vmatprep.subr.mxu0 0.0
      %890 = vmatpush1.xpose.msra.mxu0 %v885
      %891 = vmatprep.subr.mxu0 0.0
      %892 = vmatpush1.xpose.msra.mxu0 0.0
      %893 = vmatprep.subr.mxu0 0.0
      %894 = vmatpush1.xpose.msra.mxu0 0.0
      %895 = vmatprep.subr.mxu0 0.0
      %896 = vmatpush1.xpose.msra.mxu0 0.0
      %897 = vmatprep.subr.mxu0 0.0
      %898 = vmatpush1.xpose.msra.mxu0 0.0
      %899 = vmatprep.subr.mxu0 0.0
      %900 = vmatpush1.xpose.msra.mxu0 0.0
      %901 = vmatprep.subr.mxu0 0.0
      %902 = vmatpush1.xpose.msra.mxu0 0.0
      %903 = vmatprep.subr.mxu0 0.0
      %904 = vmatpush1.xpose.msra.mxu0 0.0
      %905 = vmatprep.subr.mxu0 0.0
      %906 = vmatpush1.xpose.msra.mxu0 0.0
      %907 = vmatprep.subr.mxu0 0.0
      %908 = vmatpush1.xpose.msra.mxu0 0.0
      %909 = vmatprep.subr.mxu0 0.0
      %910 = vmatpush1.xpose.msra.mxu0 0.0
      %911 = vmatprep.subr.mxu0 0.0
      %912 = vmatpush1.xpose.msra.mxu0 0.0
      %913 = vmatprep.subr.mxu0 0.0
      %914 = vmatpush1.xpose.msra.mxu0 0.0
      %915 = vmatprep.subr.mxu0 0.0
      %916 = vmatpush1.xpose.msra.mxu0 0.0
      %917 = vmatprep.subr.mxu0 0.0
      %918 = vmatpush1.xpose.msra.mxu0 0.0
      %919 = vmatprep.subr.mxu0 0.0
      %920 = vmatpush1.xpose.msra.mxu0 0.0
      %921 = vmatprep.subr.mxu0 0.0
      %922 = vmatpush1.xpose.msra.mxu0 0.0
      %923 = vmatprep.subr.mxu0 0.0
      %924 = vmatpush1.xpose.msra.mxu0 0.0
      %925 = vmatprep.subr.mxu0 0.0
      %926 = vmatpush1.xpose.msra.mxu0 0.0
      %927 = vmatprep.subr.mxu0 0.0
      %928 = vmatpush1.xpose.msra.mxu0 0.0
      %929 = vmatprep.subr.mxu0 0.0
      %930 = vmatpush1.xpose.msra.mxu0 0.0
      %931 = vmatprep.subr.mxu0 0.0
      %932 = vmatpush1.xpose.msra.mxu0 0.0
      %933 = vmatprep.subr.mxu0 0.0
      %934 = vmatpush1.xpose.msra.mxu0 0.0
      %935 = vmatprep.subr.mxu0 0.0
      %936 = vmatpush1.xpose.msra.mxu0 0.0
      %937 = vmatprep.subr.mxu0 0.0
      %938 = vmatpush1.xpose.msra.mxu0 0.0
      %939 = vmatprep.subr.mxu0 0.0
      %940 = vmatpush1.xpose.msra.mxu0 0.0
      %941 = vmatprep.subr.mxu0 0.0
      %942 = vmatpush1.xpose.msra.mxu0 0.0
      %943 = vmatprep.subr.mxu0 0.0
      %944 = vmatpush1.xpose.msra.mxu0 0.0
      %945 = vmatprep.subr.mxu0 0.0
      %946 = vmatpush1.xpose.msra.mxu0 0.0
      %947 = vmatprep.subr.mxu0 0.0
      %948 = vmatpush1.xpose.msra.mxu0 0.0
      %949 = vmatprep.subr.mxu0 0.0
      %950 = vmatpush1.xpose.msra.mxu0 0.0
      %951 = vmatprep.mubr.f32.mxu0 0.0
      %952 = vmatmul.mubr.f32.gmra.mrb[0].mxu0 %v876
      %v953 = vpop.f32.mrb[0].mxu0
      %v954 = vadd.f32 0.0, %v953
      %v955 = vpop.f32.mrb[0].mxu0
      %956 = vmatprep.mubr.f32.mxu0 0.0
      %957 = vmatmul.mubr.f32.gmra.mrb[0].mxu0 %v879
      %v958 = vpop.f32.mrb[0].mxu0
      %v959 = vadd.f32 0.0, %v958
      %v960 = vpop.f32.mrb[0].mxu0
      %961 = vdwg.mxu0
      %v962 = vmul.f32 %v954, 0.25
      %v963 = vmul.f32 %v959, 0.25
      %v964 = vsel %vm874, %v962, -inf
      %965 = vmax.xlane.f32.xlu0 %v964
      %v966 = vpop.xlane.xlu0 %965
      %v967 = vsel %vm874, %v963, -inf
      %968 = vmax.xlane.f32.xlu0 %v967
      %v969 = vpop.xlane.xlu0 %968
      %v970 = vsub.f32 %v962, %v966
      %v971 = vsub.f32 %v963, %v969
      %v972 = vmul.f32 %v970, 1.442695
      %v973 = vpow.pop %v972
      %v974 = vmul.f32 %v971, 1.442695
      %v975 = vpow.pop %v974
      %v976 = vsel %vm874, %v973, 0.0
      %977 = vadd.xlane.f32.xlu0 %v976
      %v978 = vpop.xlane.xlu0 %977
      %v979 = vsel %vm874, %v975, 0.0
      %980 = vadd.xlane.f32.xlu0 %v979
      %v981 = vpop.xlane.xlu0 %980
      %v982 = vrcp.pop %v978
      %v983 = vrcp.pop %v981
      %v984 = vmul.f32 %v973, %v982
      %v985 = vmul.f32 %v975, %v983
      %v987 = vsel %vm874, %v984, 0
      %v990 = vsel %vm874, %v985, 0
      %992 = vmatprep.subr.mxu0 0.0
      %993 = vmatpush1.msra.mxu0 %v866
      %994 = vmatprep.subr.mxu0 0.0
      %995 = vmatpush1.msra.mxu0 %v871
      %996 = vmatprep.subr.mxu0 0.0
      %997 = vmatpush1.msra.mxu0 0.0
      %998 = vmatprep.subr.mxu0 0.0
      %999 = vmatpush1.msra.mxu0 0.0
      %1000 = vmatprep.subr.mxu0 0.0
      %1001 = vmatpush1.msra.mxu0 0.0
      %1002 = vmatprep.subr.mxu0 0.0
      %1003 = vmatpush1.msra.mxu0 0.0
      %1004 = vmatprep.subr.mxu0 0.0
      %1005 = vmatpush1.msra.mxu0 0.0
      %1006 = vmatprep.subr.mxu0 0.0
      %1007 = vmatpush1.msra.mxu0 0.0
      %1008 = vmatprep.subr.mxu0 0.0
      %1009 = vmatpush1.msra.mxu0 0.0
      %1010 = vmatprep.subr.mxu0 0.0
      %1011 = vmatpush1.msra.mxu0 0.0
      %1012 = vmatprep.subr.mxu0 0.0
      %1013 = vmatpush1.msra.mxu0 0.0
      %1014 = vmatprep.subr.mxu0 0.0
      %1015 = vmatpush1.msra.mxu0 0.0
      %1016 = vmatprep.subr.mxu0 0.0
      %1017 = vmatpush1.msra.mxu0 0.0
      %1018 = vmatprep.subr.mxu0 0.0
      %1019 = vmatpush1.msra.mxu0 0.0
      %1020 = vmatprep.subr.mxu0 0.0
      %1021 = vmatpush1.msra.mxu0 0.0
      %1022 = vmatprep.subr.mxu0 0.0
      %1023 = vmatpush1.msra.mxu0 0.0
      %1024 = vmatprep.subr.mxu0 0.0
      %1025 = vmatpush1.msra.mxu0 0.0
      %1026 = vmatprep.subr.mxu0 0.0
      %1027 = vmatpush1.msra.mxu0 0.0
      %1028 = vmatprep.subr.mxu0 0.0
      %1029 = vmatpush1.msra.mxu0 0.0
      %1030 = vmatprep.subr.mxu0 0.0
      %1031 = vmatpush1.msra.mxu0 0.0
      %1032 = vmatprep.subr.mxu0 0.0
      %1033 = vmatpush1.msra.mxu0 0.0
      %1034 = vmatprep.subr.mxu0 0.0
      %1035 = vmatpush1.msra.mxu0 0.0
      %1036 = vmatprep.subr.mxu0 0.0
      %1037 = vmatpush1.msra.mxu0 0.0
      %1038 = vmatprep.subr.mxu0 0.0
      %1039 = vmatpush1.msra.mxu0 0.0
      %1040 = vmatprep.subr.mxu0 0.0
      %1041 = vmatpush1.msra.mxu0 0.0
      %1042 = vmatprep.subr.mxu0 0.0
      %1043 = vmatpush1.msra.mxu0 0.0
      %1044 = vmatprep.subr.mxu0 0.0
      %1045 = vmatpush1.msra.mxu0 0.0
      %1046 = vmatprep.subr.mxu0 0.0
      %1047 = vmatpush1.msra.mxu0 0.0
      %1048 = vmatprep.subr.mxu0 0.0
      %1049 = vmatpush1.msra.mxu0 0.0
      %1050 = vmatprep.subr.mxu0 0.0
      %1051 = vmatpush1.msra.mxu0 0.0
      %1052 = vmatprep.subr.mxu0 0.0
      %1053 = vmatpush1.msra.mxu0 0.0
      %1054 = vmatprep.subr.mxu0 0.0
      %1055 = vmatpush1.msra.mxu0 0.0
      %1056 = vmatprep.mubr.f32.mxu0 0.0
      %1057 = vmatmul.mubr.f32.gmra.mrb[0].mxu0 %v987
      %v1058 = vpop.f32.mrb[0].mxu0
      %v1059 = vadd.f32 0.0, %v1058
      %v1060 = vpop.f32.mrb[0].mxu0
      %1061 = vmatprep.mubr.f32.mxu0 0.0
      %1062 = vmatmul.mubr.f32.gmra.mrb[0].mxu0 %v990
      %v1063 = vpop.f32.mrb[0].mxu0
      %v1064 = vadd.f32 0.0, %v1063
      %v1065 = vpop.f32.mrb[0].mxu0
      %1066 = vdwg.mxu0
      %v1067 = vld [vmem:[#allocation2] sm:$0xff]
      %v1068 = vld [vmem:[#allocation2 + $0x8] sm:$0xff]
      %v1069 = vld [vmem:[%s562] sm:$0xff]
      %v1070 = vld [vmem:[%s562 + $0x8] sm:$0xff]
      %v1072 = vsel %vm874, %v1059, 0
      %v1075 = vsel %vm874, %v1064, 0
      %1077 = vmatprep.subr.mxu0 0.0
      %1078 = vmatpush1.msra.mxu0 %v1069
      %1079 = vmatprep.subr.mxu0 0.0
      %1080 = vmatpush1.msra.mxu0 %v1070
      %1081 = vmatprep.subr.mxu0 0.0
      %1082 = vmatpush1.msra.mxu0 0.0
      %1083 = vmatprep.subr.mxu0 0.0
      %1084 = vmatpush1.msra.mxu0 0.0
      %1085 = vmatprep.subr.mxu0 0.0
      %1086 = vmatpush1.msra.mxu0 0.0
      %1087 = vmatprep.subr.mxu0 0.0
      %1088 = vmatpush1.msra.mxu0 0.0
      %1089 = vmatprep.subr.mxu0 0.0
      %1090 = vmatpush1.msra.mxu0 0.0
      %1091 = vmatprep.subr.mxu0 0.0
      %1092 = vmatpush1.msra.mxu0 0.0
      %1093 = vmatprep.subr.mxu0 0.0
      %1094 = vmatpush1.msra.mxu0 0.0
      %1095 = vmatprep.subr.mxu0 0.0
      %1096 = vmatpush1.msra.mxu0 0.0
      %1097 = vmatprep.subr.mxu0 0.0
      %1098 = vmatpush1.msra.mxu0 0.0
      %1099 = vmatprep.subr.mxu0 0.0
      %1100 = vmatpush1.msra.mxu0 0.0
      %1101 = vmatprep.subr.mxu0 0.0
      %1102 = vmatpush1.msra.mxu0 0.0
      %1103 = vmatprep.subr.mxu0 0.0
      %1104 = vmatpush1.msra.mxu0 0.0
      %1105 = vmatprep.subr.mxu0 0.0
      %1106 = vmatpush1.msra.mxu0 0.0
      %1107 = vmatprep.subr.mxu0 0.0
      %1108 = vmatpush1.msra.mxu0 0.0
      %1109 = vmatprep.subr.mxu0 0.0
      %1110 = vmatpush1.msra.mxu0 0.0
      %1111 = vmatprep.subr.mxu0 0.0
      %1112 = vmatpush1.msra.mxu0 0.0
      %1113 = vmatprep.subr.mxu0 0.0
      %1114 = vmatpush1.msra.mxu0 0.0
      %1115 = vmatprep.subr.mxu0 0.0
      %1116 = vmatpush1.msra.mxu0 0.0
      %1117 = vmatprep.subr.mxu0 0.0
      %1118 = vmatpush1.msra.mxu0 0.0
      %1119 = vmatprep.subr.mxu0 0.0
      %1120 = vmatpush1.msra.mxu0 0.0
      %1121 = vmatprep.subr.mxu0 0.0
      %1122 = vmatpush1.msra.mxu0 0.0
      %1123 = vmatprep.subr.mxu0 0.0
      %1124 = vmatpush1.msra.mxu0 0.0
      %1125 = vmatprep.subr.mxu0 0.0
      %1126 = vmatpush1.msra.mxu0 0.0
      %1127 = vmatprep.subr.mxu0 0.0
      %1128 = vmatpush1.msra.mxu0 0.0
      %1129 = vmatprep.subr.mxu0 0.0
      %1130 = vmatpush1.msra.mxu0 0.0
      %1131 = vmatprep.subr.mxu0 0.0
      %1132 = vmatpush1.msra.mxu0 0.0
      %1133 = vmatprep.subr.mxu0 0.0
      %1134 = vmatpush1.msra.mxu0 0.0
      %1135 = vmatprep.subr.mxu0 0.0
      %1136 = vmatpush1.msra.mxu0 0.0
      %1137 = vmatprep.subr.mxu0 0.0
      %1138 = vmatpush1.msra.mxu0 0.0
      %1139 = vmatprep.subr.mxu0 0.0
      %1140 = vmatpush1.msra.mxu0 0.0
      %1141 = vmatprep.mubr.f32.mxu0 0.0
      %1142 = vmatmul.mubr.f32.gmra.mrb[0].mxu0 %v1072
      %v1143 = vpop.f32.mrb[0].mxu0
      %v1144 = vadd.f32 0.0, %v1143
      %v1145 = vpop.f32.mrb[0].mxu0
      %1146 = vmatprep.mubr.f32.mxu0 0.0
      %1147 = vmatmul.mubr.f32.gmra.mrb[0].mxu0 %v1075
      %v1148 = vpop.f32.mrb[0].mxu0
      %v1149 = vadd.f32 0.0, %v1148
      %v1150 = vpop.f32.mrb[0].mxu0
      %1151 = vdwg.mxu0
      %v1152 = vadd.f32 %v1067, %v1144
      %v1153 = vadd.f32 %v1068, %v1149
      %1154 = vst [vmem:[#allocation2] sm:$0xff] %v1152
      %1155 = vst [vmem:[#allocation2 + $0x8] sm:$0xff] %v1153
      %p1156 = scmp.eq.s32.totalorder %s28, 7
      // Predicated region
      $region73: #{fwd.4} parent=67 // pred_check
        %p1157 = pneg %p1156
      $region74: #{fwd.4} parent=67 // pred_check_branch
        %1159 = sbr.rel (%p1157) target = $region76
      $region75: #{fwd.4} parent=67 // pred_region
        %v1160 = vld [vmem:[#allocation2] sm:$0xff]
        %v1161 = vld [vmem:[#allocation2 + $0x8] sm:$0xff]
        %v1162 = vadd.f32 %v574, %v1160
        %v1163 = vadd.f32 %v575, %v1161
        %v1164 = vld [vmem:[%s9] sm:$0x1]
        %v1166 = vlaneseq
        %v1167 = vshrl.u32 %v1166, 7
        %v1168 = vsub.s32 0, %v1167
        %v1169 = vrot.slane %v1164, %v1168
        %v1171 = vadd.f32 %v1162, %v1169
        %v1172 = vadd.f32 %v1163, %v1169
        %v1173 = vld [vmem:[%s10] sm:$0x1]
        %v1174 = vld [vmem:[%s11] sm:$0x1]
        %1175 = vadd.xlane.f32.xlu0 %v1171
        %v1176 = vpop.xlane.xlu0 %1175
        %1177 = vadd.xlane.f32.xlu0 %v1172
        %v1178 = vpop.xlane.xlu0 %1177
        %v1179 = vrcp.pop 128.0
        %v1180 = vmul.f32 %v1176, %v1179
        %v1181 = vmul.f32 %v1178, %v1179
        %v1182 = vsub.f32 %v1171, %v1180
        %v1183 = vsub.f32 %v1172, %v1181
        %v1184 = vmul.f32 %v1182, %v1182
        %v1185 = vmul.f32 %v1183, %v1183
        %1186 = vadd.xlane.f32.xlu0 %v1184
        %v1187 = vpop.xlane.xlu0 %1186
        %1188 = vadd.xlane.f32.xlu0 %v1185
        %v1189 = vpop.xlane.xlu0 %1188
        %v1190 = vmul.f32 %v1187, %v1179
        %v1191 = vmul.f32 %v1189, %v1179
        %v1192 = vadd.f32 %v1190, 1e-05
        %v1193 = vadd.f32 %v1191, 1e-05
        %v1194 = vrsqrt.pop %v1192
        %v1195 = vrsqrt.pop %v1193
        %v1196 = vmul.f32 %v1182, %v1194
        %v1197 = vmul.f32 %v1183, %v1195
        %v1199 = vlaneseq
        %v1200 = vshrl.u32 %v1199, 7
        %v1201 = vsub.s32 0, %v1200
        %v1202 = vrot.slane %v1173, %v1201
        %v1204 = vmul.f32 %v1196, %v1202
        %v1205 = vmul.f32 %v1197, %v1202
        %v1207 = vlaneseq
        %v1208 = vshrl.u32 %v1207, 7
        %v1209 = vsub.s32 0, %v1208
        %v1210 = vrot.slane %v1174, %v1209
        %v1212 = vadd.f32 %v1204, %v1210
        %v1213 = vadd.f32 %v1205, %v1210
        %1214 = vst [vmem:[%s567] sm:$0xff] %v1212
        %1215 = vst [vmem:[%s567 + $0x8] sm:$0xff] %v1213
      $region76: #{fwd.4} parent=67 // pred_fallthru
        _
      %p1216 = scmp.lt.s32.totalorder %s27, 1
      %s1217 = scalar_select %p1216, %s27, 1
      %s1218 = smul.addr %s1217, 2
      %s1219 = smul.addr %s1218, 8
      %s1220 = scalar_lea.vmem %s12, %s1219
      // Predicated region
      $region77: #{fwd.4} parent=67 // pred_check
        %p1221 = pneg %p350
      $region78: #{fwd.4} parent=67 // pred_check_branch
        %1223 = sbr.rel (%p1221) target = $region80
      $region79: #{fwd.4} parent=67 // pred_region
        _
      $region80: #{fwd.4} parent=67 // pred_fallthru
        _
    $region68: #{fwd.4} parent=5 // pred_fallthru
      _
    %p1224 = scmp.le.s32.totalorder 2, %s18
    // Predicated region
    $region81: #{fwd.4} parent=5 // pred_check
      %p1225 = pneg %p1224
    $region82: #{fwd.4} parent=5 // pred_check_branch
      %1227 = sbr.rel (%p1225) target = $region84
    $region83: #{fwd.4} parent=5 // pred_region
      %s1228 = ssub.s32 %s18, 2
      // Predicated region
      $region85: #{fwd.4} parent=83 // pred_check
        %p1229 = pneg %p356
      $region86: #{fwd.4} parent=83 // pred_check_branch
        %1231 = sbr.rel (%p1229) target = $region88
      $region87: #{fwd.4} parent=83 // pred_region
        %p1232 = scmp.lt.s32.totalorder %s29, 1
        %s1233 = scalar_select %p1232, %s29, 1
        %s1234 = smul.addr %s1233, 2
        %s1235 = smul.addr %s1234, 8
        %s1236 = scalar_lea.vmem %s12, %s1235
      $region88: #{fwd.4} parent=83 // pred_fallthru
        _
    $region84: #{fwd.4} parent=5 // pred_fallthru
      _
  $region6: #{fwd.4} parent=0 // loop_footer
    %s22 = sadd.s32 1, %s18
  $region7: #{fwd.4} parent=0 // loop_footer_branch
    %17 = sbr.rel target = $region3
  $region8: #{fwd.4} parent=0 // loop_exit
    _

// kernel: fwd.6
$region0: #{fwd.6}
  #allocation0 [shape = 'u32[]', space=smem, size = 0x4, offset = 0x4, fixed_abs, tag = 'smem constant byte address 0x4 - core index']
  #allocation1 [shape = 'u32[144,128]{1,0:T(1,128)}', space=vmem, size = 0x12000, scoped, tag = 'internal scratch']
  %s0 = inlined_call_operand.vmem [shape: f32[2,16,128], index: 0, kind: input, shape index: {}]
  %s1 = inlined_call_operand.vmem [shape: f32[2,16,32], index: 1, kind: input, shape index: {}]
  %s2 = inlined_call_operand.vmem [shape: f32[2,16,32], index: 2, kind: input, shape index: {}]
  %s3 = inlined_call_operand.vmem [shape: f32[2,128,96], index: 3, kind: input, shape index: {}]
  %s4 = inlined_call_operand.vmem [shape: f32[2,1,96], index: 4, kind: input, shape index: {}]
  %s5 = inlined_call_operand.vmem [shape: f32[1,32], index: 5, kind: input, shape index: {}, may-alias: {5,6}]
  %s6 = inlined_call_operand.vmem [shape: f32[1,32], index: 6, kind: input, shape index: {}, may-alias: {5,6}]
  %s7 = inlined_call_operand.vmem [shape: f32[1,32], index: 7, kind: input, shape index: {}]
  %s8 = inlined_call_operand.vmem [shape: f32[1,32], index: 8, kind: input, shape index: {}]
  %s9 = inlined_call_operand.vmem [shape: f32[32,32], index: 9, kind: input, shape index: {}]
  %s10 = inlined_call_operand.vmem [shape: s32[2,16,128], index: 10, kind: output, shape index: {0}]
  %s11 = inlined_call_operand.vmem [shape: f32[2,16,128], index: 11, kind: output, shape index: {1}]
  %12 = xla_tuple %s10, %s11
  %s13 = sld [smem:[#allocation0]]
  $region81: #{fwd.6} parent=0
    _
  %s15 = ssub.s32 1, %s13
  %s16 = scalar_select 0, %s15, %s13
  loop: start=0, step=1, limit=4
  $region2: #{fwd.6} parent=0 // loop_pre_header
    _
  $region3: #{fwd.6} parent=0 // loop_header
    %s18 = sphi 0, %s22
    %p19 = scmp.ge.s32.totalorder %s18, 4
    %s25 = sphi 0, %s37
    %s26 = sphi 0, %s33
    %s27 = sphi 0, %s25
    %s28 = sphi 0, %s26
    %s29 = sphi 0, %s27
    %s30 = sphi 0, %s28
    %s42 = sphi 0, %s44
    %s45 = sphi 0, %s42
    %s46 = sphi 0, %s45
    %s62 = sphi 0, %s46
    %s70 = sphi 0, %s72
    %s73 = sphi 0, %s70
    %s74 = sphi 0, %s73
    %s90 = sphi 0, %s74
    %s98 = sphi 0, %s100
    %s101 = sphi 0, %s98
    %s102 = sphi 0, %s101
    %s118 = sphi 0, %s102
    %s124 = sphi 0, %s126
    %s127 = sphi 0, %s124
    %s128 = sphi 0, %s127
    %s144 = sphi 0, %s128
    %s150 = sphi 0, %s152
    %s153 = sphi 0, %s150
    %s154 = sphi 0, %s153
    %s170 = sphi 0, %s154
    %s174 = sphi 0, %s174
    %s176 = sphi 0, %s174
    %s177 = sphi 0, %s176
    %s191 = sphi 0, %s177
    %s195 = sphi 0, %s195
    %s197 = sphi 0, %s195
    %s198 = sphi 0, %s197
    %s212 = sphi 0, %s198
    %s216 = sphi 0, %s216
    %s218 = sphi 0, %s216
    %s219 = sphi 0, %s218
    %s233 = sphi 0, %s219
    %s237 = sphi 0, %s237
    %s239 = sphi 0, %s237
    %s240 = sphi 0, %s239
    %s254 = sphi 0, %s240
    %s258 = sphi 0, %s258
    %s260 = sphi 0, %s258
    %s261 = sphi 0, %s260
    %s275 = sphi 0, %s261
    %s283 = sphi 0, %s285
    %s286 = sphi 0, %s283
    %s287 = sphi 0, %s286
    %s303 = sphi 0, %s287
    %s311 = sphi 0, %s313
    %s314 = sphi 0, %s311
    %s315 = sphi 0, %s314
    %s331 = sphi 0, %s315
  $region4: #{fwd.6} parent=0 // loop_header_branch
    %21 = sbr.rel (%p19) target = $region8
  $region5: #{fwd.6} parent=0 // loop_body
    %s23 = ssub.s32 %s18, 1
    %s24 = ssub.s32 %s18, 2
    %s31 = sadd.s32 1, %s26
    %p32 = scmp.ge.s32.totalorder %s31, 1
    %s33 = scalar_select %p32, 0, %s31
    %s34 = sadd.s32 1, %s25
    %s35 = scalar_select %p32, %s34, %s25
    %p36 = scmp.ge.s32.totalorder %s35, 2
    %s37 = scalar_select %p36, 0, %s35
    %s38 = ssub.s32 %s25, %s37
    %s39 = ssub.s32 %s26, %s33
    %s40 = sor.u32 %s38, %s39
    %p41 = scmp.eq.s32.totalorder %s40, 0
    %s43 = sadd.s32 %s42, 1
    %s44 = scalar_select %p41, %s42, %s43
    %p47 = pneg %p41
    %p48 = scmp.eq.s32.totalorder %s18, 1
    %p49 = por %p47, %p48
    %p50 = scmp.ne.s32.totalorder %s42, %s45
    %p51 = scmp.eq.s32.totalorder %s18, 0
    %p52 = por %p50, %p51
    %p53 = scmp.ne.s32.totalorder %s42, %s45
    %p54 = scmp.eq.s32.totalorder %s23, 1
    %p55 = por %p53, %p54
    %p56 = scmp.ne.s32.totalorder %s45, %s46
    %p57 = scmp.eq.s32.totalorder %s23, 0
    %p58 = por %p56, %p57
    %p59 = scmp.ne.s32.totalorder %s45, %s46
    %p60 = scmp.eq.s32.totalorder %s24, 1
    %p61 = por %p59, %p60
    %p63 = scmp.ne.s32.totalorder %s46, %s62
    %p64 = scmp.eq.s32.totalorder %s24, 0
    %p65 = por %p63, %p64
    %s66 = ssub.s32 %s25, %s37
    %s67 = ssub.s32 %s26, %s33
    %s68 = sor.u32 %s66, %s67
    %p69 = scmp.eq.s32.totalorder %s68, 0
    %s71 = sadd.s32 %s70, 1
    %s72 = scalar_select %p69, %s70, %s71
    %p75 = pneg %p69
    %p76 = scmp.eq.s32.totalorder %s18, 1
    %p77 = por %p75, %p76
    %p78 = scmp.ne.s32.totalorder %s70, %s73
    %p79 = scmp.eq.s32.totalorder %s18, 0
    %p80 = por %p78, %p79
    %p81 = scmp.ne.s32.totalorder %s70, %s73
    %p82 = scmp.eq.s32.totalorder %s23, 1
    %p83 = por %p81, %p82
    %p84 = scmp.ne.s32.totalorder %s73, %s74
    %p85 = scmp.eq.s32.totalorder %s23, 0
    %p86 = por %p84, %p85
    %p87 = scmp.ne.s32.totalorder %s73, %s74
    %p88 = scmp.eq.s32.totalorder %s24, 1
    %p89 = por %p87, %p88
    %p91 = scmp.ne.s32.totalorder %s74, %s90
    %p92 = scmp.eq.s32.totalorder %s24, 0
    %p93 = por %p91, %p92
    %s94 = ssub.s32 %s25, %s37
    %s95 = ssub.s32 %s26, %s33
    %s96 = sor.u32 %s94, %s95
    %p97 = scmp.eq.s32.totalorder %s96, 0
    %s99 = sadd.s32 %s98, 1
    %s100 = scalar_select %p97, %s98, %s99
    %p103 = pneg %p97
    %p104 = scmp.eq.s32.totalorder %s18, 1
    %p105 = por %p103, %p104
    %p106 = scmp.ne.s32.totalorder %s98, %s101
    %p107 = scmp.eq.s32.totalorder %s18, 0
    %p108 = por %p106, %p107
    %p109 = scmp.ne.s32.totalorder %s98, %s101
    %p110 = scmp.eq.s32.totalorder %s23, 1
    %p111 = por %p109, %p110
    %p112 = scmp.ne.s32.totalorder %s101, %s102
    %p113 = scmp.eq.s32.totalorder %s23, 0
    %p114 = por %p112, %p113
    %p115 = scmp.ne.s32.totalorder %s101, %s102
    %p116 = scmp.eq.s32.totalorder %s24, 1
    %p117 = por %p115, %p116
    %p119 = scmp.ne.s32.totalorder %s102, %s118
    %p120 = scmp.eq.s32.totalorder %s24, 0
    %p121 = por %p119, %p120
    %s122 = ssub.s32 %s25, %s37
    %p123 = scmp.eq.s32.totalorder %s122, 0
    %s125 = sadd.s32 %s124, 1
    %s126 = scalar_select %p123, %s124, %s125
    %p129 = pneg %p123
    %p130 = scmp.eq.s32.totalorder %s18, 1
    %p131 = por %p129, %p130
    %p132 = scmp.ne.s32.totalorder %s124, %s127
    %p133 = scmp.eq.s32.totalorder %s18, 0
    %p134 = por %p132, %p133
    %p135 = scmp.ne.s32.totalorder %s124, %s127
    %p136 = scmp.eq.s32.totalorder %s23, 1
    %p137 = por %p135, %p136
    %p138 = scmp.ne.s32.totalorder %s127, %s128
    %p139 = scmp.eq.s32.totalorder %s23, 0
    %p140 = por %p138, %p139
    %p141 = scmp.ne.s32.totalorder %s127, %s128
    %p142 = scmp.eq.s32.totalorder %s24, 1
    %p143 = por %p141, %p142
    %p145 = scmp.ne.s32.totalorder %s128, %s144
    %p146 = scmp.eq.s32.totalorder %s24, 0
    %p147 = por %p145, %p146
    %s148 = ssub.s32 %s25, %s37
    %p149 = scmp.eq.s32.totalorder %s148, 0
    %s151 = sadd.s32 %s150, 1
    %s152 = scalar_select %p149, %s150, %s151
    %p155 = pneg %p149
    %p156 = scmp.eq.s32.totalorder %s18, 1
    %p157 = por %p155, %p156
    %p158 = scmp.ne.s32.totalorder %s150, %s153
    %p159 = scmp.eq.s32.totalorder %s18, 0
    %p160 = por %p158, %p159
    %p161 = scmp.ne.s32.totalorder %s150, %s153
    %p162 = scmp.eq.s32.totalorder %s23, 1
    %p163 = por %p161, %p162
    %p164 = scmp.ne.s32.totalorder %s153, %s154
    %p165 = scmp.eq.s32.totalorder %s23, 0
    %p166 = por %p164, %p165
    %p167 = scmp.ne.s32.totalorder %s153, %s154
    %p168 = scmp.eq.s32.totalorder %s24, 1
    %p169 = por %p167, %p168
    %p171 = scmp.ne.s32.totalorder %s154, %s170
    %p172 = scmp.eq.s32.totalorder %s24, 0
    %p173 = por %p171, %p172
    %s175 = sadd.s32 %s174, 1
    %p178 = scmp.eq.s32.totalorder %s18, 1
    %p179 = scmp.ne.s32.totalorder %s174, %s176
    %p180 = scmp.eq.s32.totalorder %s18, 0
    %p181 = por %p179, %p180
    %p182 = scmp.ne.s32.totalorder %s174, %s176
    %p183 = scmp.eq.s32.totalorder %s23, 1
    %p184 = por %p182, %p183
    %p185 = scmp.ne.s32.totalorder %s176, %s177
    %p186 = scmp.eq.s32.totalorder %s23, 0
    %p187 = por %p185, %p186
    %p188 = scmp.ne.s32.totalorder %s176, %s177
    %p189 = scmp.eq.s32.totalorder %s24, 1
    %p190 = por %p188, %p189
    %p192 = scmp.ne.s32.totalorder %s177, %s191
    %p193 = scmp.eq.s32.totalorder %s24, 0
    %p194 = por %p192, %p193
    %s196 = sadd.s32 %s195, 1
    %p199 = scmp.eq.s32.totalorder %s18, 1
    %p200 = scmp.ne.s32.totalorder %s195, %s197
    %p201 = scmp.eq.s32.totalorder %s18, 0
    %p202 = por %p200, %p201
    %p203 = scmp.ne.s32.totalorder %s195, %s197
    %p204 = scmp.eq.s32.totalorder %s23, 1
    %p205 = por %p203, %p204
    %p206 = scmp.ne.s32.totalorder %s197, %s198
    %p207 = scmp.eq.s32.totalorder %s23, 0
    %p208 = por %p206, %p207
    %p209 = scmp.ne.s32.totalorder %s197, %s198
    %p210 = scmp.eq.s32.totalorder %s24, 1
    %p211 = por %p209, %p210
    %p213 = scmp.ne.s32.totalorder %s198, %s212
    %p214 = scmp.eq.s32.totalorder %s24, 0
    %p215 = por %p213, %p214
    %s217 = sadd.s32 %s216, 1
    %p220 = scmp.eq.s32.totalorder %s18, 1
    %p221 = scmp.ne.s32.totalorder %s216, %s218
    %p222 = scmp.eq.s32.totalorder %s18, 0
    %p223 = por %p221, %p222
    %p224 = scmp.ne.s32.totalorder %s216, %s218
    %p225 = scmp.eq.s32.totalorder %s23, 1
    %p226 = por %p224, %p225
    %p227 = scmp.ne.s32.totalorder %s218, %s219
    %p228 = scmp.eq.s32.totalorder %s23, 0
    %p229 = por %p227, %p228
    %p230 = scmp.ne.s32.totalorder %s218, %s219
    %p231 = scmp.eq.s32.totalorder %s24, 1
    %p232 = por %p230, %p231
    %p234 = scmp.ne.s32.totalorder %s219, %s233
    %p235 = scmp.eq.s32.totalorder %s24, 0
    %p236 = por %p234, %p235
    %s238 = sadd.s32 %s237, 1
    %p241 = scmp.eq.s32.totalorder %s18, 1
    %p242 = scmp.ne.s32.totalorder %s237, %s239
    %p243 = scmp.eq.s32.totalorder %s18, 0
    %p244 = por %p242, %p243
    %p245 = scmp.ne.s32.totalorder %s237, %s239
    %p246 = scmp.eq.s32.totalorder %s23, 1
    %p247 = por %p245, %p246
    %p248 = scmp.ne.s32.totalorder %s239, %s240
    %p249 = scmp.eq.s32.totalorder %s23, 0
    %p250 = por %p248, %p249
    %p251 = scmp.ne.s32.totalorder %s239, %s240
    %p252 = scmp.eq.s32.totalorder %s24, 1
    %p253 = por %p251, %p252
    %p255 = scmp.ne.s32.totalorder %s240, %s254
    %p256 = scmp.eq.s32.totalorder %s24, 0
    %p257 = por %p255, %p256
    %s259 = sadd.s32 %s258, 1
    %p262 = scmp.eq.s32.totalorder %s18, 1
    %p263 = scmp.ne.s32.totalorder %s258, %s260
    %p264 = scmp.eq.s32.totalorder %s18, 0
    %p265 = por %p263, %p264
    %p266 = scmp.ne.s32.totalorder %s258, %s260
    %p267 = scmp.eq.s32.totalorder %s23, 1
    %p268 = por %p266, %p267
    %p269 = scmp.ne.s32.totalorder %s260, %s261
    %p270 = scmp.eq.s32.totalorder %s23, 0
    %p271 = por %p269, %p270
    %p272 = scmp.ne.s32.totalorder %s260, %s261
    %p273 = scmp.eq.s32.totalorder %s24, 1
    %p274 = por %p272, %p273
    %p276 = scmp.ne.s32.totalorder %s261, %s275
    %p277 = scmp.eq.s32.totalorder %s24, 0
    %p278 = por %p276, %p277
    %s279 = ssub.s32 %s25, %s37
    %s280 = ssub.s32 %s26, %s33
    %s281 = sor.u32 %s279, %s280
    %p282 = scmp.eq.s32.totalorder %s281, 0
    %s284 = sadd.s32 %s283, 1
    %s285 = scalar_select %p282, %s283, %s284
    %p288 = pneg %p282
    %p289 = scmp.eq.s32.totalorder %s18, 1
    %p290 = por %p288, %p289
    %p291 = scmp.ne.s32.totalorder %s283, %s286
    %p292 = scmp.eq.s32.totalorder %s18, 0
    %p293 = por %p291, %p292
    %p294 = scmp.ne.s32.totalorder %s283, %s286
    %p295 = scmp.eq.s32.totalorder %s23, 1
    %p296 = por %p294, %p295
    %p297 = scmp.ne.s32.totalorder %s286, %s287
    %p298 = scmp.eq.s32.totalorder %s23, 0
    %p299 = por %p297, %p298
    %p300 = scmp.ne.s32.totalorder %s286, %s287
    %p301 = scmp.eq.s32.totalorder %s24, 1
    %p302 = por %p300, %p301
    %p304 = scmp.ne.s32.totalorder %s287, %s303
    %p305 = scmp.eq.s32.totalorder %s24, 0
    %p306 = por %p304, %p305
    %s307 = ssub.s32 %s25, %s37
    %s308 = ssub.s32 %s26, %s33
    %s309 = sor.u32 %s307, %s308
    %p310 = scmp.eq.s32.totalorder %s309, 0
    %s312 = sadd.s32 %s311, 1
    %s313 = scalar_select %p310, %s311, %s312
    %p316 = pneg %p310
    %p317 = scmp.eq.s32.totalorder %s18, 1
    %p318 = por %p316, %p317
    %p319 = scmp.ne.s32.totalorder %s311, %s314
    %p320 = scmp.eq.s32.totalorder %s18, 0
    %p321 = por %p319, %p320
    %p322 = scmp.ne.s32.totalorder %s311, %s314
    %p323 = scmp.eq.s32.totalorder %s23, 1
    %p324 = por %p322, %p323
    %p325 = scmp.ne.s32.totalorder %s314, %s315
    %p326 = scmp.eq.s32.totalorder %s23, 0
    %p327 = por %p325, %p326
    %p328 = scmp.ne.s32.totalorder %s314, %s315
    %p329 = scmp.eq.s32.totalorder %s24, 1
    %p330 = por %p328, %p329
    %p332 = scmp.ne.s32.totalorder %s315, %s331
    %p333 = scmp.eq.s32.totalorder %s24, 0
    %p334 = por %p332, %p333
    %p335 = scmp.le.s32.totalorder 1, %s18
    %p336 = scmp.lt.s32.totalorder %s18, 3
    %p337 = pnand %p335, %p336
    %p338 = pneg %p337
    // Predicated region
    $region9: #{fwd.6} parent=5 // pred_check
      _
    $region10: #{fwd.6} parent=5 // pred_check_branch
      %340 = sbr.rel (%p337) target = $region12
    $region11: #{fwd.6} parent=5 // pred_region
      %s341 = ssub.s32 %s18, 1
      // Predicated region
      $region13: #{fwd.6} parent=11 // pred_check
        %p342 = pneg %p187
      $region14: #{fwd.6} parent=11 // pred_check_branch
        %344 = sbr.rel (%p342) target = $region16
      $region15: #{fwd.6} parent=11 // pred_region
        _
      $region16: #{fwd.6} parent=11 // pred_fallthru
        _
      // Predicated region
      $region17: #{fwd.6} parent=11 // pred_check
        %p345 = pneg %p208
      $region18: #{fwd.6} parent=11 // pred_check_branch
        %347 = sbr.rel (%p345) target = $region20
      $region19: #{fwd.6} parent=11 // pred_region
        _
      $region20: #{fwd.6} parent=11 // pred_fallthru
        _
      // Predicated region
      $region21: #{fwd.6} parent=11 // pred_check
        %p348 = pneg %p229
      $region22: #{fwd.6} parent=11 // pred_check_branch
        %350 = sbr.rel (%p348) target = $region24
      $region23: #{fwd.6} parent=11 // pred_region
        _
      $region24: #{fwd.6} parent=11 // pred_fallthru
        _
      // Predicated region
      $region25: #{fwd.6} parent=11 // pred_check
        %p351 = pneg %p250
      $region26: #{fwd.6} parent=11 // pred_check_branch
        %353 = sbr.rel (%p351) target = $region28
      $region27: #{fwd.6} parent=11 // pred_region
        _
      $region28: #{fwd.6} parent=11 // pred_fallthru
        _
      // Predicated region
      $region29: #{fwd.6} parent=11 // pred_check
        %p354 = pneg %p271
      $region30: #{fwd.6} parent=11 // pred_check_branch
        %356 = sbr.rel (%p354) target = $region32
      $region31: #{fwd.6} parent=11 // pred_region
        _
      $region32: #{fwd.6} parent=11 // pred_fallthru
        _
    $region12: #{fwd.6} parent=5 // pred_fallthru
      _
    %p357 = scmp.lt.s32.totalorder %s18, 2
    // Predicated region
    $region33: #{fwd.6} parent=5 // pred_check
      %p358 = pneg %p357
    $region34: #{fwd.6} parent=5 // pred_check_branch
      %360 = sbr.rel (%p358) target = $region36
    $region35: #{fwd.6} parent=5 // pred_region
      // Predicated region
      $region37: #{fwd.6} parent=35 // pred_check
        %p361 = pneg %p52
      $region38: #{fwd.6} parent=35 // pred_check_branch
        %363 = sbr.rel (%p361) target = $region40
      $region39: #{fwd.6} parent=35 // pred_region
        %s364 = smul.u32 2, %s26
        %p365 = scmp.lt.s32.totalorder %s25, 1
        %s366 = scalar_select %p365, %s25, 1
        %p367 = scmp.lt.s32.totalorder %s364, 1
        %s368 = scalar_select %p367, %s364, 1
        %s369 = smul.addr %s366, 2
        %s370 = sadd.s32 %s368, %s369
        %s371 = smul.addr %s370, 8
        %s372 = scalar_lea.vmem %s0, %s371
        %s373 = smul.u32 2, %s26
      $region40: #{fwd.6} parent=35 // pred_fallthru
        _
      // Predicated region
      $region41: #{fwd.6} parent=35 // pred_check
        %p374 = pneg %p80
      $region42: #{fwd.6} parent=35 // pred_check_branch
        %376 = sbr.rel (%p374) target = $region44
      $region43: #{fwd.6} parent=35 // pred_region
        %s377 = smul.u32 2, %s26
        %p378 = scmp.lt.s32.totalorder %s25, 1
        %s379 = scalar_select %p378, %s25, 1
        %p380 = scmp.lt.s32.totalorder %s377, 1
        %s381 = scalar_select %p380, %s377, 1
        %s382 = smul.addr %s379, 2
        %s383 = sadd.s32 %s381, %s382
        %s384 = smul.addr %s383, 8
        %s385 = scalar_lea.vmem %s1, %s384
        %s386 = smul.u32 2, %s26
      $region44: #{fwd.6} parent=35 // pred_fallthru
        _
      // Predicated region
      $region45: #{fwd.6} parent=35 // pred_check
        %p387 = pneg %p108
      $region46: #{fwd.6} parent=35 // pred_check_branch
        %389 = sbr.rel (%p387) target = $region48
      $region47: #{fwd.6} parent=35 // pred_region
        %s390 = smul.u32 2, %s26
        %p391 = scmp.lt.s32.totalorder %s25, 1
        %s392 = scalar_select %p391, %s25, 1
        %p393 = scmp.lt.s32.totalorder %s390, 1
        %s394 = scalar_select %p393, %s390, 1
        %s395 = smul.addr %s392, 2
        %s396 = sadd.s32 %s394, %s395
        %s397 = smul.addr %s396, 8
        %s398 = scalar_lea.vmem %s2, %s397
        %s399 = smul.u32 2, %s26
      $region48: #{fwd.6} parent=35 // pred_fallthru
        _
      // Predicated region
      $region49: #{fwd.6} parent=35 // pred_check
        %p400 = pneg %p134
      $region50: #{fwd.6} parent=35 // pred_check_branch
        %402 = sbr.rel (%p400) target = $region52
      $region51: #{fwd.6} parent=35 // pred_region
        %p403 = scmp.lt.s32.totalorder %s25, 1
        %s404 = scalar_select %p403, %s25, 1
        %s405 = smul.addr %s404, 16
        %s406 = smul.addr %s405, 8
        %s407 = scalar_lea.vmem %s3, %s406
      $region52: #{fwd.6} parent=35 // pred_fallthru
        _
      // Predicated region
      $region53: #{fwd.6} parent=35 // pred_check
        %p408 = pneg %p160
      $region54: #{fwd.6} parent=35 // pred_check_branch
        %410 = sbr.rel (%p408) target = $region56
      $region55: #{fwd.6} parent=35 // pred_region
        %p411 = scmp.lt.s32.totalorder %s25, 1
        %s412 = scalar_select %p411, %s25, 1
        %s413 = scalar_lea.vmem %s4, %s412
      $region56: #{fwd.6} parent=35 // pred_fallthru
        _
    $region36: #{fwd.6} parent=5 // pred_fallthru
      _
    %p414 = scmp.le.s32.totalorder 1, %s18
    %p415 = scmp.lt.s32.totalorder %s18, 3
    %p416 = pnand %p414, %p415
    %p417 = pneg %p416
    // Predicated region
    $region57: #{fwd.6} parent=5 // pred_check
      _
    $region58: #{fwd.6} parent=5 // pred_check_branch
      %419 = sbr.rel (%p416) target = $region60
    $region59: #{fwd.6} parent=5 // pred_region
      %s420 = ssub.s32 %s18, 1
      %s421 = smul.u32 2, %s28
      %p422 = scmp.lt.s32.totalorder %s27, 1
      %s423 = scalar_select %p422, %s27, 1
      %p424 = scmp.lt.s32.totalorder %s421, 1
      %s425 = scalar_select %p424, %s421, 1
      %s426 = smul.addr %s423, 2
      %s427 = sadd.s32 %s425, %s426
      %s428 = smul.addr %s427, 8
      %s429 = scalar_lea.vmem %s0, %s428
      %p430 = pneg %p58
      %p431 = pneg %p55
      %s432 = smul.u32 2, %s28
      %p433 = scmp.lt.s32.totalorder %s27, 1
      %s434 = scalar_select %p433, %s27, 1
      %p435 = scmp.lt.s32.totalorder %s432, 1
      %s436 = scalar_select %p435, %s432, 1
      %s437 = smul.addr %s434, 2
      %s438 = sadd.s32 %s436, %s437
      %s439 = smul.addr %s438, 8
      %s440 = scalar_lea.vmem %s1, %s439
      %p441 = pneg %p86
      %p442 = pneg %p83
      %s443 = smul.u32 2, %s28
      %p444 = scmp.lt.s32.totalorder %s27, 1
      %s445 = scalar_select %p444, %s27, 1
      %p446 = scmp.lt.s32.totalorder %s443, 1
      %s447 = scalar_select %p446, %s443, 1
      %s448 = smul.addr %s445, 2
      %s449 = sadd.s32 %s447, %s448
      %s450 = smul.addr %s449, 8
      %s451 = scalar_lea.vmem %s2, %s450
      %p452 = pneg %p114
      %p453 = pneg %p111
      %p454 = scmp.lt.s32.totalorder %s27, 1
      %s455 = scalar_select %p454, %s27, 1
      %s456 = smul.addr %s455, 16
      %s457 = smul.addr %s456, 8
      %s458 = scalar_lea.vmem %s3, %s457
      %p459 = pneg %p140
      %p460 = pneg %p137
      %p461 = scmp.lt.s32.totalorder %s27, 1
      %s462 = scalar_select %p461, %s27, 1
      %s463 = scalar_lea.vmem %s4, %s462
      %p464 = pneg %p166
      %p465 = pneg %p163
      %p466 = pneg %p187
      %p467 = pneg %p184
      %p468 = pneg %p208
      %p469 = pneg %p205
      %p470 = pneg %p229
      %p471 = pneg %p226
      %p472 = pneg %p250
      %p473 = pneg %p247
      %p474 = pneg %p271
      %p475 = pneg %p268
      %p476 = pneg %p299
      %p477 = pneg %p296
      %s478 = smul.u32 2, %s28
      %p479 = scmp.lt.s32.totalorder %s27, 1
      %s480 = scalar_select %p479, %s27, 1
      %p481 = scmp.lt.s32.totalorder %s478, 1
      %s482 = scalar_select %p481, %s478, 1
      %s483 = smul.addr %s480, 2
      %s484 = sadd.s32 %s482, %s483
      %s485 = smul.addr %s484, 8
      %s486 = scalar_lea.vmem %s10, %s485
      %p487 = pneg %p327
      %p488 = pneg %p324
      %s489 = smul.u32 2, %s28
      %p490 = scmp.lt.s32.totalorder %s27, 1
      %s491 = scalar_select %p490, %s27, 1
      %p492 = scmp.lt.s32.totalorder %s489, 1
      %s493 = scalar_select %p492, %s489, 1
      %s494 = smul.addr %s491, 2
      %s495 = sadd.s32 %s493, %s494
      %s496 = smul.addr %s495, 8
      %s497 = scalar_lea.vmem %s11, %s496
      %s498 = smul.u32 2, %s28
      %p499 = scmp.lt.s32.totalorder %s27, 1
      %s500 = scalar_select %p499, %s27, 1
      %p501 = scmp.lt.s32.totalorder %s498, 1
      %s502 = scalar_select %p501, %s498, 1
      %s503 = smul.addr %s500, 2
      %s504 = sadd.s32 %s502, %s503
      %s505 = smul.addr %s504, 8
      %s506 = scalar_lea.vmem %s0, %s505
      %s507 = smul.u32 2, %s28
      %s508 = smul.u32 2, %s28
      %p509 = scmp.lt.s32.totalorder %s27, 1
      %s510 = scalar_select %p509, %s27, 1
      %p511 = scmp.lt.s32.totalorder %s508, 1
      %s512 = scalar_select %p511, %s508, 1
      %s513 = smul.addr %s510, 2
      %s514 = sadd.s32 %s512, %s513
      %s515 = smul.addr %s514, 8
      %s516 = scalar_lea.vmem %s1, %s515
      %s517 = smul.u32 2, %s28
      %s518 = smul.u32 2, %s28
      %p519 = scmp.lt.s32.totalorder %s27, 1
      %s520 = scalar_select %p519, %s27, 1
      %p521 = scmp.lt.s32.totalorder %s518, 1
      %s522 = scalar_select %p521, %s518, 1
      %s523 = smul.addr %s520, 2
      %s524 = sadd.s32 %s522, %s523
      %s525 = smul.addr %s524, 8
      %s526 = scalar_lea.vmem %s2, %s525
      %s527 = smul.u32 2, %s28
      %p528 = scmp.lt.s32.totalorder %s27, 1
      %s529 = scalar_select %p528, %s27, 1
      %s530 = smul.addr %s529, 16
      %s531 = smul.addr %s530, 8
      %s532 = scalar_lea.vmem %s3, %s531
      %p533 = scmp.lt.s32.totalorder %s27, 1
      %s534 = scalar_select %p533, %s27, 1
      %s535 = scalar_lea.vmem %s4, %s534
      %s536 = smul.u32 2, %s28
      %p537 = scmp.lt.s32.totalorder %s27, 1
      %s538 = scalar_select %p537, %s27, 1
      %p539 = scmp.lt.s32.totalorder %s536, 1
      %s540 = scalar_select %p539, %s536, 1
      %s541 = smul.addr %s538, 2
      %s542 = sadd.s32 %s540, %s541
      %s543 = smul.addr %s542, 8
      %s544 = scalar_lea.vmem %s10, %s543
      %s545 = smul.u32 2, %s28
      %s546 = smul.u32 2, %s28
      %p547 = scmp.lt.s32.totalorder %s27, 1
      %s548 = scalar_select %p547, %s27, 1
      %p549 = scmp.lt.s32.totalorder %s546, 1
      %s550 = scalar_select %p549, %s546, 1
      %s551 = smul.addr %s548, 2
      %s552 = sadd.s32 %s550, %s551
      %s553 = smul.addr %s552, 8
      %s554 = scalar_lea.vmem %s11, %s553
      %s555 = smul.u32 2, %s28
      %v556 = vld [vmem:[%s506] sm:$0xff]
      %v557 = vld [vmem:[%s506 + $0x8] sm:$0xff]
      %v558 = vld [vmem:[%s532] sm:$0xff]
      %v559 = vld [vmem:[%s532 + $0x8] sm:$0xff]
      %v560 = vld [vmem:[%s532 + $0x10] sm:$0xff]
      %v561 = vld [vmem:[%s532 + $0x18] sm:$0xff]
      %v562 = vld [vmem:[%s532 + $0x20] sm:$0xff]
      %v563 = vld [vmem:[%s532 + $0x28] sm:$0xff]
      %v564 = vld [vmem:[%s532 + $0x30] sm:$0xff]
      %v565 = vld [vmem:[%s532 + $0x38] sm:$0xff]
      %v566 = vld [vmem:[%s532 + $0x40] sm:$0xff]
      %v567 = vld [vmem:[%s532 + $0x48] sm:$0xff]
      %v568 = vld [vmem:[%s532 + $0x50] sm:$0xff]
      %v569 = vld [vmem:[%s532 + $0x58] sm:$0xff]
      %v570 = vld [vmem:[%s532 + $0x60] sm:$0xff]
      %v571 = vld [vmem:[%s532 + $0x68] sm:$0xff]
      %v572 = vld [vmem:[%s532 + $0x70] sm:$0xff]
      %v573 = vld [vmem:[%s532 + $0x78] sm:$0xff]
      %v574 = vld [vmem:[%s535] sm:$0x1]
      %v576 = vlaneseq
      %v577 = vshrl.u32 %v576, 7
      %v578 = vsub.s32 0, %v577
      %v579 = vrot.slane %v574, %v578
      %581 = vmatprep.subr.mxu0 0.0
      %582 = vmatpush1.msra.mxu0 %v558
      %583 = vmatprep.subr.mxu0 0.0
      %584 = vmatpush1.msra.mxu0 %v559
      %585 = vmatprep.subr.mxu0 0.0
      %586 = vmatpush1.msra.mxu0 %v560
      %587 = vmatprep.subr.mxu0 0.0
      %588 = vmatpush1.msra.mxu0 %v561
      %589 = vmatprep.subr.mxu0 0.0
      %590 = vmatpush1.msra.mxu0 %v562
      %591 = vmatprep.subr.mxu0 0.0
      %592 = vmatpush1.msra.mxu0 %v563
      %593 = vmatprep.subr.mxu0 0.0
      %594 = vmatpush1.msra.mxu0 %v564
      %595 = vmatprep.subr.mxu0 0.0
      %596 = vmatpush1.msra.mxu0 %v565
      %597 = vmatprep.subr.mxu0 0.0
      %598 = vmatpush1.msra.mxu0 %v566
      %599 = vmatprep.subr.mxu0 0.0
      %600 = vmatpush1.msra.mxu0 %v567
      %601 = vmatprep.subr.mxu0 0.0
      %602 = vmatpush1.msra.mxu0 %v568
      %603 = vmatprep.subr.mxu0 0.0
      %604 = vmatpush1.msra.mxu0 %v569
      %605 = vmatprep.subr.mxu0 0.0
      %606 = vmatpush1.msra.mxu0 %v570
      %607 = vmatprep.subr.mxu0 0.0
      %608 = vmatpush1.msra.mxu0 %v571
      %609 = vmatprep.subr.mxu0 0.0
      %610 = vmatpush1.msra.mxu0 %v572
      %611 = vmatprep.subr.mxu0 0.0
      %612 = vmatpush1.msra.mxu0 %v573
      %613 = vmatprep.subr.mxu0 0.0
      %614 = vmatpush1.msra.mxu0 0.0
      %615 = vmatprep.subr.mxu0 0.0
      %616 = vmatpush1.msra.mxu0 0.0
      %617 = vmatprep.subr.mxu0 0.0
      %618 = vmatpush1.msra.mxu0 0.0
      %619 = vmatprep.subr.mxu0 0.0
      %620 = vmatpush1.msra.mxu0 0.0
      %621 = vmatprep.subr.mxu0 0.0
      %622 = vmatpush1.msra.mxu0 0.0
      %623 = vmatprep.subr.mxu0 0.0
      %624 = vmatpush1.msra.mxu0 0.0
      %625 = vmatprep.subr.mxu0 0.0
      %626 = vmatpush1.msra.mxu0 0.0
      %627 = vmatprep.subr.mxu0 0.0
      %628 = vmatpush1.msra.mxu0 0.0
      %629 = vmatprep.subr.mxu0 0.0
      %630 = vmatpush1.msra.mxu0 0.0
      %631 = vmatprep.subr.mxu0 0.0
      %632 = vmatpush1.msra.mxu0 0.0
      %633 = vmatprep.subr.mxu0 0.0
      %634 = vmatpush1.msra.mxu0 0.0
      %635 = vmatprep.subr.mxu0 0.0
      %636 = vmatpush1.msra.mxu0 0.0
      %637 = vmatprep.subr.mxu0 0.0
      %638 = vmatpush1.msra.mxu0 0.0
      %639 = vmatprep.subr.mxu0 0.0
      %640 = vmatpush1.msra.mxu0 0.0
      %641 = vmatprep.subr.mxu0 0.0
      %642 = vmatpush1.msra.mxu0 0.0
      %643 = vmatprep.subr.mxu0 0.0
      %644 = vmatpush1.msra.mxu0 0.0
      %645 = vmatprep.mubr.f32.mxu0 0.0
      %646 = vmatmul.mubr.f32.gmra.mrb[0].mxu0 %v556
      %v647 = vpop.f32.mrb[0].mxu0
      %v648 = vadd.f32 %v579, %v647
      %v649 = vpop.f32.mrb[0].mxu0
      %650 = vmatprep.mubr.f32.mxu0 0.0
      %651 = vmatmul.mubr.f32.gmra.mrb[0].mxu0 %v557
      %v652 = vpop.f32.mrb[0].mxu0
      %v653 = vadd.f32 %v579, %v652
      %v654 = vpop.f32.mrb[0].mxu0
      %655 = vdwg.mxu0
      %vm656 = vcmask 785920
      %v657 = vsel %vm656, %v648, -inf
      %658 = vmax.xlane.f32.xlu0 %v657
      %v659 = vpop.xlane.xlu0 %658
      %v660 = vsel %vm656, %v653, -inf
      %661 = vmax.xlane.f32.xlu0 %v660
      %v662 = vpop.xlane.xlu0 %661
      %v663 = vsub.f32 %v648, %v659
      %v664 = vsub.f32 %v653, %v662
      %v665 = vmul.f32 %v663, 1.442695
      %v666 = vpow.pop %v665
      %v667 = vmul.f32 %v664, 1.442695
      %v668 = vpow.pop %v667
      %v669 = vld [vmem:[%s9] sm:$0xff]
      %v670 = vld [vmem:[%s9 + $0x8] sm:$0xff]
      %v671 = vld [vmem:[%s9 + $0x10] sm:$0xff]
      %v672 = vld [vmem:[%s9 + $0x18] sm:$0xff]
      %675 = vrot.lane.b32.xlu0 %v666, 64
      %v676 = vpop.permute.xlu0 %675
      %677 = vrot.lane.b32.xlu0 %v668, 64
      %v678 = vpop.permute.xlu0 %677
      %vm679 = vcmask 261120
      %v680 = vsel %vm679, %v676, 0
      %v682 = vsel %vm679, %v678, 0
      %684 = vmatprep.subr.mxu0 0.0
      %685 = vmatpush1.msra.mxu0 %v669
      %686 = vmatprep.subr.mxu0 0.0
      %687 = vmatpush1.msra.mxu0 %v670
      %688 = vmatprep.subr.mxu0 0.0
      %689 = vmatpush1.msra.mxu0 %v671
      %690 = vmatprep.subr.mxu0 0.0
      %691 = vmatpush1.msra.mxu0 %v672
      %692 = vmatprep.subr.mxu0 0.0
      %693 = vmatpush1.msra.mxu0 0.0
      %694 = vmatprep.subr.mxu0 0.0
      %695 = vmatpush1.msra.mxu0 0.0
      %696 = vmatprep.subr.mxu0 0.0
      %697 = vmatpush1.msra.mxu0 0.0
      %698 = vmatprep.subr.mxu0 0.0
      %699 = vmatpush1.msra.mxu0 0.0
      %700 = vmatprep.subr.mxu0 0.0
      %701 = vmatpush1.msra.mxu0 0.0
      %702 = vmatprep.subr.mxu0 0.0
      %703 = vmatpush1.msra.mxu0 0.0
      %704 = vmatprep.subr.mxu0 0.0
      %705 = vmatpush1.msra.mxu0 0.0
      %706 = vmatprep.subr.mxu0 0.0
      %707 = vmatpush1.msra.mxu0 0.0
      %708 = vmatprep.subr.mxu0 0.0
      %709 = vmatpush1.msra.mxu0 0.0
      %710 = vmatprep.subr.mxu0 0.0
      %711 = vmatpush1.msra.mxu0 0.0
      %712 = vmatprep.subr.mxu0 0.0
      %713 = vmatpush1.msra.mxu0 0.0
      %714 = vmatprep.subr.mxu0 0.0
      %715 = vmatpush1.msra.mxu0 0.0
      %716 = vmatprep.subr.mxu0 0.0
      %717 = vmatpush1.msra.mxu0 0.0
      %718 = vmatprep.subr.mxu0 0.0
      %719 = vmatpush1.msra.mxu0 0.0
      %720 = vmatprep.subr.mxu0 0.0
      %721 = vmatpush1.msra.mxu0 0.0
      %722 = vmatprep.subr.mxu0 0.0
      %723 = vmatpush1.msra.mxu0 0.0
      %724 = vmatprep.subr.mxu0 0.0
      %725 = vmatpush1.msra.mxu0 0.0
      %726 = vmatprep.subr.mxu0 0.0
      %727 = vmatpush1.msra.mxu0 0.0
      %728 = vmatprep.subr.mxu0 0.0
      %729 = vmatpush1.msra.mxu0 0.0
      %730 = vmatprep.subr.mxu0 0.0
      %731 = vmatpush1.msra.mxu0 0.0
      %732 = vmatprep.subr.mxu0 0.0
      %733 = vmatpush1.msra.mxu0 0.0
      %734 = vmatprep.subr.mxu0 0.0
      %735 = vmatpush1.msra.mxu0 0.0
      %736 = vmatprep.subr.mxu0 0.0
      %737 = vmatpush1.msra.mxu0 0.0
      %738 = vmatprep.subr.mxu0 0.0
      %739 = vmatpush1.msra.mxu0 0.0
      %740 = vmatprep.subr.mxu0 0.0
      %741 = vmatpush1.msra.mxu0 0.0
      %742 = vmatprep.subr.mxu0 0.0
      %743 = vmatpush1.msra.mxu0 0.0
      %744 = vmatprep.subr.mxu0 0.0
      %745 = vmatpush1.msra.mxu0 0.0
      %746 = vmatprep.subr.mxu0 0.0
      %747 = vmatpush1.msra.mxu0 0.0
      %748 = vmatprep.mubr.f32.mxu0 0.0
      %749 = vmatmul.mubr.f32.gmra.mrb[0].mxu0 %v680
      %v750 = vpop.f32.mrb[0].mxu0
      %v751 = vadd.f32 0.0, %v750
      %v752 = vpop.f32.mrb[0].mxu0
      %753 = vmatprep.mubr.f32.mxu0 0.0
      %754 = vmatmul.mubr.f32.gmra.mrb[0].mxu0 %v682
      %v755 = vpop.f32.mrb[0].mxu0
      %v756 = vadd.f32 0.0, %v755
      %v757 = vpop.f32.mrb[0].mxu0
      %758 = vdwg.mxu0
      %v759 = vrcp.pop %v751
      %v760 = vrcp.pop %v756
      %763 = vrot.lane.b32.xlu0 %v759, 64
      %v764 = vpop.permute.xlu0 %763
      %765 = vrot.lane.b32.xlu0 %v760, 64
      %v766 = vpop.permute.xlu0 %765
      %v769 = vmul.f32 %v666, %v764
      %v770 = vmul.f32 %v668, %v766
      %v771 = vld [vmem:[%s5] sm:$0x1]
      %v772 = vld [vmem:[%s6] sm:$0x1]
      %v773 = vld [vmem:[%s7] sm:$0x1]
      %v774 = vld [vmem:[%s8] sm:$0x1]
      %v775 = vld [vmem:[%s516] sm:$0xff]
      %v776 = vld [vmem:[%s516 + $0x8] sm:$0xff]
      %v777 = vadd.f32 %v648, %v775
      %v778 = vadd.f32 %v653, %v776
      %v779 = vld [vmem:[%s526] sm:$0xff]
      %v780 = vld [vmem:[%s526 + $0x8] sm:$0xff]
      %783 = vrot.lane.b32.xlu0 %v779, 32
      %v784 = vpop.permute.xlu0 %783
      %785 = vrot.lane.b32.xlu0 %v780, 32
      %v786 = vpop.permute.xlu0 %785
      %v789 = vadd.f32 %v648, %v784
      %v790 = vadd.f32 %v653, %v786
      %v791 = vfloor.f32 %v777
      %v792 = vfloor.f32 %v778
      %v793 = vfloor.f32 %v789
      %v794 = vfloor.f32 %v790
      %v795 = vadd.f32 %v791, 1.0
      %v796 = vadd.f32 %v792, 1.0
      %v797 = vadd.f32 %v793, 1.0
      %v798 = vadd.f32 %v794, 1.0
      %v799 = vsub.f32 %v777, %v791
      %v800 = vsub.f32 %v778, %v792
      %v801 = vsub.f32 1.0, %v799
      %v802 = vsub.f32 1.0, %v800
      %v803 = vsub.f32 %v789, %v793
      %v804 = vsub.f32 %v790, %v794
      %v805 = vsub.f32 1.0, %v803
      %v806 = vsub.f32 1.0, %v804
      %809 = vrot.lane.b32.xlu0 %v805, 96
      %v810 = vpop.permute.xlu0 %809
      %811 = vrot.lane.b32.xlu0 %v806, 96
      %v812 = vpop.permute.xlu0 %811
      %v815 = vmul.f32 %v801, %v810
      %v816 = vmul.f32 %v802, %v812
      %v817 = vmul.f32 %v799, %v810
      %v818 = vmul.f32 %v800, %v812
      %821 = vrot.lane.b32.xlu0 %v803, 96
      %v822 = vpop.permute.xlu0 %821
      %823 = vrot.lane.b32.xlu0 %v804, 96
      %v824 = vpop.permute.xlu0 %823
      %v827 = vmul.f32 %v801, %v822
      %v828 = vmul.f32 %v802, %v824
      %v829 = vmul.f32 %v799, %v822
      %v830 = vmul.f32 %v800, %v824
      %vm831 = vcmp.ge.f32.partialorder %v791, 0.0
      %vm832 = vcmp.ge.f32.partialorder %v792, 0.0
      %v833 = vsub.f32 %v771, 1.0
      %v835 = vlaneseq
      %v836 = vshrl.u32 %v835, 7
      %v837 = vsub.s32 0, %v836
      %v838 = vrot.slane %v833, %v837
      %vm840 = vcmp.le.f32.partialorder %v791, %v838
      %vm841 = vcmp.le.f32.partialorder %v792, %v838
      %vm842 = vmand %vm831, %vm840
      %vm843 = vmand %vm832, %vm841
      %vm844 = vcmp.ge.f32.partialorder %v793, 0.0
      %vm845 = vcmp.ge.f32.partialorder %v794, 0.0
      %v846 = vsel %vm844, 1, 0
      %v847 = vsel %vm845, 1, 0
      %848 = vrot.lane.b32.xlu0 %v846, 96
      %v849 = vpop.permute.xlu0 %848
      %850 = vrot.lane.b32.xlu0 %v847, 96
      %v851 = vpop.permute.xlu0 %850
      %vm852 = vcmp.ne.s32.totalorder %v849, 0
      %vm853 = vcmp.ne.s32.totalorder %v851, 0
      %vm854 = vmand %vm842, %vm852
      %vm855 = vmand %vm843, %vm853
      %v856 = vsub.f32 %v772, 1.0
      %v858 = vlaneseq
      %v859 = vshrl.u32 %v858, 7
      %v860 = vsub.s32 0, %v859
      %v861 = vrot.slane %v856, %v860
      %863 = vrot.lane.b32.xlu0 %v861, 32
      %v864 = vpop.permute.xlu0 %863
      %vm866 = vcmp.le.f32.partialorder %v793, %v864
      %vm867 = vcmp.le.f32.partialorder %v794, %v864
      %v868 = vsel %vm866, 1, 0
      %v869 = vsel %vm867, 1, 0
      %870 = vrot.lane.b32.xlu0 %v868, 96
      %v871 = vpop.permute.xlu0 %870
      %872 = vrot.lane.b32.xlu0 %v869, 96
      %v873 = vpop.permute.xlu0 %872
      %vm874 = vcmp.ne.s32.totalorder %v871, 0
      %vm875 = vcmp.ne.s32.totalorder %v873, 0
      %vm876 = vmand %vm854, %vm874
      %vm877 = vmand %vm855, %vm875
      %v878 = vmax.f32 %v791, 0.0
      %v879 = vmax.f32 %v792, 0.0
      %v880 = vmin.f32 %v838, %v878
      %v881 = vmin.f32 %v838, %v879
      %v882 = vmax.f32 %v793, 0.0
      %v883 = vmax.f32 %v794, 0.0
      %886 = vrot.lane.b32.xlu0 %v882, 96
      %v887 = vpop.permute.xlu0 %886
      %888 = vrot.lane.b32.xlu0 %v883, 96
      %v889 = vpop.permute.xlu0 %888
      %v892 = vmin.f32 %v861, %v887
      %v893 = vmin.f32 %v861, %v889
      %v895 = vlaneseq
      %v896 = vshrl.u32 %v895, 7
      %v897 = vsub.s32 0, %v896
      %v898 = vrot.slane %v771, %v897
      %v900 = vmul.f32 %v892, %v898
      %v901 = vmul.f32 %v893, %v898
      %v903 = vlaneseq
      %v904 = vshrl.u32 %v903, 7
      %v905 = vsub.s32 0, %v904
      %v906 = vrot.slane %v773, %v905
      %v908 = vadd.f32 %v906, %v900
      %v909 = vadd.f32 %v906, %v901
      %v910 = vadd.f32 %v908, %v880
      %v911 = vadd.f32 %v909, %v881
      %v912 = vmul.f32 %v910, 8.0
      %v913 = vmul.f32 %v911, 8.0
      %v915 = vlaneseq
      %v916 = vshrl.u32 %v915, 7
      %v917 = vsub.s32 0, %v916
      %v918 = vrot.slane %v774, %v917
      %v920 = vadd.f32 %v912, %v918
      %v921 = vadd.f32 %v913, %v918
      %v922 = vsel %vm876, %v815, 0.0
      %v923 = vsel %vm877, %v816, 0.0
      %926 = vrot.lane.b32.xlu0 %v769, 64
      %v927 = vpop.permute.xlu0 %926
      %928 = vrot.lane.b32.xlu0 %v770, 64
      %v929 = vpop.permute.xlu0 %928
      %v932 = vmul.f32 %v922, %v927
      %v933 = vmul.f32 %v923, %v929
      %vm934 = vcmp.ge.f32.partialorder %v795, 0.0
      %vm935 = vcmp.ge.f32.partialorder %v796, 0.0
      %vm936 = vcmp.le.f32.partialorder %v795, %v838
      %vm937 = vcmp.le.f32.partialorder %v796, %v838
      %vm938 = vmand %vm934, %vm936
      %vm939 = vmand %vm935, %vm937
      %vm940 = vmand %vm938, %vm852
      %vm941 = vmand %vm939, %vm853
      %vm942 = vmand %vm940, %vm874
      %vm943 = vmand %vm941, %vm875
      %v944 = vmax.f32 %v795, 0.0
      %v945 = vmax.f32 %v796, 0.0
      %v946 = vmin.f32 %v838, %v944
      %v947 = vmin.f32 %v838, %v945
      %v948 = vadd.f32 %v908, %v946
      %v949 = vadd.f32 %v909, %v947
      %v950 = vmul.f32 %v948, 8.0
      %v951 = vmul.f32 %v949, 8.0
      %v952 = vadd.f32 %v950, %v918
      %v953 = vadd.f32 %v951, %v918
      %v954 = vsel %vm942, %v817, 0.0
      %v955 = vsel %vm943, %v818, 0.0
      %v956 = vmul.f32 %v954, %v927
      %v957 = vmul.f32 %v955, %v929
      %vm958 = vcmp.ge.f32.partialorder %v797, 0.0
      %vm959 = vcmp.ge.f32.partialorder %v798, 0.0
      %v960 = vsel %vm958, 1, 0
      %v961 = vsel %vm959, 1, 0
      %962 = vrot.lane.b32.xlu0 %v960, 96
      %v963 = vpop.permute.xlu0 %962
      %964 = vrot.lane.b32.xlu0 %v961, 96
      %v965 = vpop.permute.xlu0 %964
      %vm966 = vcmp.ne.s32.totalorder %v963, 0
      %vm967 = vcmp.ne.s32.totalorder %v965, 0
      %vm968 = vmand %vm842, %vm966
      %vm969 = vmand %vm843, %vm967
      %vm970 = vcmp.le.f32.partialorder %v797, %v864
      %vm971 = vcmp.le.f32.partialorder %v798, %v864
      %v972 = vsel %vm970, 1, 0
      %v973 = vsel %vm971, 1, 0
      %974 = vrot.lane.b32.xlu0 %v972, 96
      %v975 = vpop.permute.xlu0 %974
      %976 = vrot.lane.b32.xlu0 %v973, 96
      %v977 = vpop.permute.xlu0 %976
      %vm978 = vcmp.ne.s32.totalorder %v975, 0
      %vm979 = vcmp.ne.s32.totalorder %v977, 0
      %vm980 = vmand %vm968, %vm978
      %vm981 = vmand %vm969, %vm979
      %v982 = vmax.f32 %v797, 0.0
      %v983 = vmax.f32 %v798, 0.0
      %986 = vrot.lane.b32.xlu0 %v982, 96
      %v987 = vpop.permute.xlu0 %986
      %988 = vrot.lane.b32.xlu0 %v983, 96
      %v989 = vpop.permute.xlu0 %988
      %v992 = vmin.f32 %v861, %v987
      %v993 = vmin.f32 %v861, %v989
      %v994 = vmul.f32 %v992, %v898
      %v995 = vmul.f32 %v993, %v898
      %v996 = vadd.f32 %v906, %v994
      %v997 = vadd.f32 %v906, %v995
      %v998 = vadd.f32 %v996, %v880
      %v999 = vadd.f32 %v997, %v881
      %v1000 = vmul.f32 %v998, 8.0
      %v1001 = vmul.f32 %v999, 8.0
      %v1002 = vadd.f32 %v1000, %v918
      %v1003 = vadd.f32 %v1001, %v918
      %v1004 = vsel %vm980, %v827, 0.0
      %v1005 = vsel %vm981, %v828, 0.0
      %v1006 = vmul.f32 %v1004, %v927
      %v1007 = vmul.f32 %v1005, %v929
      %vm1008 = vmand %vm938, %vm966
      %vm1009 = vmand %vm939, %vm967
      %vm1010 = vmand %vm1008, %vm978
      %vm1011 = vmand %vm1009, %vm979
      %v1012 = vadd.f32 %v996, %v946
      %v1013 = vadd.f32 %v997, %v947
      %v1014 = vmul.f32 %v1012, 8.0
      %v1015 = vmul.f32 %v1013, 8.0
      %v1016 = vadd.f32 %v1014, %v918
      %v1017 = vadd.f32 %v1015, %v918
      %v1018 = vsel %vm1010, %v829, 0.0
      %v1019 = vsel %vm1011, %v830, 0.0
      %v1020 = vmul.f32 %v1018, %v927
      %v1021 = vmul.f32 %v1019, %v929
      %1024 = vrot.lane.b32.xlu0 %v952, 32
      %v1025 = vpop.permute.xlu0 %1024
      %1026 = vrot.lane.b32.xlu0 %v953, 32
      %v1027 = vpop.permute.xlu0 %1026
      %1032 = vrot.lane.b32.xlu0 %v1002, 64
      %v1033 = vpop.permute.xlu0 %1032
      %1034 = vrot.lane.b32.xlu0 %v1003, 64
      %v1035 = vpop.permute.xlu0 %1034
      %1040 = vrot.lane.b32.xlu0 %v1016, 96
      %v1041 = vpop.permute.xlu0 %1040
      %1042 = vrot.lane.b32.xlu0 %v1017, 96
      %v1043 = vpop.permute.xlu0 %1042
      %v1046 = vsel %vm679, %v920, %v1025
      %v1047 = vsel %vm679, %v921, %v1027
      %vm1048 = vcmask 523264
      %v1049 = vsel %vm1048, %v1046, %v1033
      %v1050 = vsel %vm1048, %v1047, %v1035
      %vm1051 = vcmask 785408
      %v1052 = vsel %vm1051, %v1049, %v1041
      %v1053 = vsel %vm1051, %v1050, %v1043
      %v1054 = vcvt.f32.s32.to.zero.pseudo %v1052
      %v1055 = vcvt.f32.s32.to.zero.pseudo %v1053
      %1056 = vst [vmem:[%s544] sm:$0xff] %v1054
      %1057 = vst [vmem:[%s544 + $0x8] sm:$0xff] %v1055
      %1060 = vrot.lane.b32.xlu0 %v956, 32
      %v1061 = vpop.permute.xlu0 %1060
      %1062 = vrot.lane.b32.xlu0 %v957, 32
      %v1063 = vpop.permute.xlu0 %1062
      %1068 = vrot.lane.b32.xlu0 %v1006, 64
      %v1069 = vpop.permute.xlu0 %1068
      %1070 = vrot.lane.b32.xlu0 %v1007, 64
      %v1071 = vpop.permute.xlu0 %1070
      %1076 = vrot.lane.b32.xlu0 %v1020, 96
      %v1077 = vpop.permute.xlu0 %1076
      %1078 = vrot.lane.b32.xlu0 %v1021, 96
      %v1079 = vpop.permute.xlu0 %1078
      %v1082 = vsel %vm679, %v932, %v1061
      %v1083 = vsel %vm679, %v933, %v1063
      %v1084 = vsel %vm1048, %v1082, %v1069
      %v1085 = vsel %vm1048, %v1083, %v1071
      %v1086 = vsel %vm1051, %v1084, %v1077
      %v1087 = vsel %vm1051, %v1085, %v1079
      %1088 = vst [vmem:[%s554] sm:$0xff] %v1086
      %1089 = vst [vmem:[%s554 + $0x8] sm:$0xff] %v1087
      %s1090 = smul.u32 2, %s28
      %p1091 = scmp.lt.s32.totalorder %s27, 1
      %s1092 = scalar_select %p1091, %s27, 1
      %p1093 = scmp.lt.s32.totalorder %s1090, 1
      %s1094 = scalar_select %p1093, %s1090, 1
      %s1095 = smul.addr %s1092, 2
      %s1096 = sadd.s32 %s1094, %s1095
      %s1097 = smul.addr %s1096, 8
      %s1098 = scalar_lea.vmem %s10, %s1097
      %s1099 = smul.u32 2, %s28
      %p1100 = scmp.lt.s32.totalorder %s27, 1
      %s1101 = scalar_select %p1100, %s27, 1
      %p1102 = scmp.lt.s32.totalorder %s1099, 1
      %s1103 = scalar_select %p1102, %s1099, 1
      %s1104 = smul.addr %s1101, 2
      %s1105 = sadd.s32 %s1103, %s1104
      %s1106 = smul.addr %s1105, 8
      %s1107 = scalar_lea.vmem %s11, %s1106
      // Predicated region
      $region61: #{fwd.6} parent=59 // pred_check
        %p1108 = pneg %p296
      $region62: #{fwd.6} parent=59 // pred_check_branch
        %1110 = sbr.rel (%p1108) target = $region64
      $region63: #{fwd.6} parent=59 // pred_region
        %s1111 = smul.u32 2, %s28
      $region64: #{fwd.6} parent=59 // pred_fallthru
        _
      // Predicated region
      $region65: #{fwd.6} parent=59 // pred_check
        %p1112 = pneg %p324
      $region66: #{fwd.6} parent=59 // pred_check_branch
        %1114 = sbr.rel (%p1112) target = $region68
      $region67: #{fwd.6} parent=59 // pred_region
        %s1115 = smul.u32 2, %s28
      $region68: #{fwd.6} parent=59 // pred_fallthru
        _
    $region60: #{fwd.6} parent=5 // pred_fallthru
      _
    %p1116 = scmp.le.s32.totalorder 2, %s18
    // Predicated region
    $region69: #{fwd.6} parent=5 // pred_check
      %p1117 = pneg %p1116
    $region70: #{fwd.6} parent=5 // pred_check_branch
      %1119 = sbr.rel (%p1117) target = $region72
    $region71: #{fwd.6} parent=5 // pred_region
      %s1120 = ssub.s32 %s18, 2
      // Predicated region
      $region73: #{fwd.6} parent=71 // pred_check
        %p1121 = pneg %p302
      $region74: #{fwd.6} parent=71 // pred_check_branch
        %1123 = sbr.rel (%p1121) target = $region76
      $region75: #{fwd.6} parent=71 // pred_region
        %s1124 = smul.u32 2, %s30
        %p1125 = scmp.lt.s32.totalorder %s29, 1
        %s1126 = scalar_select %p1125, %s29, 1
        %p1127 = scmp.lt.s32.totalorder %s1124, 1
        %s1128 = scalar_select %p1127, %s1124, 1
        %s1129 = smul.addr %s1126, 2
        %s1130 = sadd.s32 %s1128, %s1129
        %s1131 = smul.addr %s1130, 8
        %s1132 = scalar_lea.vmem %s10, %s1131
      $region76: #{fwd.6} parent=71 // pred_fallthru
        _
      // Predicated region
      $region77: #{fwd.6} parent=71 // pred_check
        %p1133 = pneg %p330
      $region78: #{fwd.6} parent=71 // pred_check_branch
        %1135 = sbr.rel (%p1133) target = $region80
      $region79: #{fwd.6} parent=71 // pred_region
        %s1136 = smul.u32 2, %s30
        %p1137 = scmp.lt.s32.totalorder %s29, 1
        %s1138 = scalar_select %p1137, %s29, 1
        %p1139 = scmp.lt.s32.totalorder %s1136, 1
        %s1140 = scalar_select %p1139, %s1136, 1
        %s1141 = smul.addr %s1138, 2
        %s1142 = sadd.s32 %s1140, %s1141
        %s1143 = smul.addr %s1142, 8
        %s1144 = scalar_lea.vmem %s11, %s1143
      $region80: #{fwd.6} parent=71 // pred_fallthru
        _
    $region72: #{fwd.6} parent=5 // pred_fallthru
      _
  $region6: #{fwd.6} parent=0 // loop_footer
    %s22 = sadd.s32 1, %s18
  $region7: #{fwd.6} parent=0 // loop_footer_branch
    %17 = sbr.rel target = $region3
  $region8: #{fwd.6} parent=0 // loop_exit
    _

// kernel: squeeze.15
$region0: #{squeeze.15}
  %s0 = inlined_call_operand.vmem [shape: f32[1,16,128], index: 0, kind: input, shape index: {}]
  %s1 = inlined_call_operand.vmem [shape: f32[2,8,4,8,4], index: 1, kind: output, shape index: {}]
  $region1: #{squeeze.15} parent=0
    #allocation0 [shape = 'u8[524288]{0}', space=vmem, size = 0x80000, scoped, tag = 'scoped mem for output reshape']
    %v2 = vld [vmem:[%s0] sm:$0xff]
    %vm3 = vcmask 64512
    %4 = vst.msk [vmem:[#allocation0] ss:$8 sm:$0xf] %vm3, %v2
    %5 = vst.msk [vmem:[#allocation0] ss:$8 sm:$0xf0] %vm3, %v2
    %s6 = scalar_lea.vmem %s0, 8
    %v7 = vld [vmem:[%s6] sm:$0xff]
    %vm8 = vcmask 64512
    %s9 = scalar_lea.vmem [#allocation0], 64
    %10 = vst.msk [vmem:[%s9] ss:$8 sm:$0xf] %vm8, %v7
    %s11 = scalar_lea.vmem [#allocation0], 64
    %12 = vst.msk [vmem:[%s11] ss:$8 sm:$0xf0] %vm8, %v7
    %s13 = scalar_lea.vmem %s0, 16
    %v14 = vld [vmem:[%s13] sm:$0xff]
    %vm15 = vcmask 64512
    %s16 = scalar_lea.vmem [#allocation0], 128
    %17 = vst.msk [vmem:[%s16] ss:$8 sm:$0xf] %vm15, %v14
    %s18 = scalar_lea.vmem [#allocation0], 128
    %19 = vst.msk [vmem:[%s18] ss:$8 sm:$0xf0] %vm15, %v14
    %s20 = scalar_lea.vmem %s0, 24
    %v21 = vld [vmem:[%s20] sm:$0xff]
    %vm22 = vcmask 64512
    %s23 = scalar_lea.vmem [#allocation0], 192
    %24 = vst.msk [vmem:[%s23] ss:$8 sm:$0xf] %vm22, %v21
    %s25 = scalar_lea.vmem [#allocation0], 192
    %26 = vst.msk [vmem:[%s25] ss:$8 sm:$0xf0] %vm22, %v21
    %s27 = scalar_lea.vmem %s0, 32
    %v28 = vld [vmem:[%s27] sm:$0xff]
    %vm29 = vcmask 64512
    %s30 = scalar_lea.vmem [#allocation0], 256
    %31 = vst.msk [vmem:[%s30] ss:$8 sm:$0xf] %vm29, %v28
    %s32 = scalar_lea.vmem [#allocation0], 256
    %33 = vst.msk [vmem:[%s32] ss:$8 sm:$0xf0] %vm29, %v28
    %s34 = scalar_lea.vmem %s0, 40
    %v35 = vld [vmem:[%s34] sm:$0xff]
    %vm36 = vcmask 64512
    %s37 = scalar_lea.vmem [#allocation0], 320
    %38 = vst.msk [vmem:[%s37] ss:$8 sm:$0xf] %vm36, %v35
    %s39 = scalar_lea.vmem [#allocation0], 320
    %40 = vst.msk [vmem:[%s39] ss:$8 sm:$0xf0] %vm36, %v35
    %s41 = scalar_lea.vmem %s0, 48
    %v42 = vld [vmem:[%s41] sm:$0xff]
    %vm43 = vcmask 64512
    %s44 = scalar_lea.vmem [#allocation0], 384
    %45 = vst.msk [vmem:[%s44] ss:$8 sm:$0xf] %vm43, %v42
    %s46 = scalar_lea.vmem [#allocation0], 384
    %47 = vst.msk [vmem:[%s46] ss:$8 sm:$0xf0] %vm43, %v42
    %s48 = scalar_lea.vmem %s0, 56
    %v49 = vld [vmem:[%s48] sm:$0xff]
    %vm50 = vcmask 64512
    %s51 = scalar_lea.vmem [#allocation0], 448
    %52 = vst.msk [vmem:[%s51] ss:$8 sm:$0xf] %vm50, %v49
    %s53 = scalar_lea.vmem [#allocation0], 448
    %54 = vst.msk [vmem:[%s53] ss:$8 sm:$0xf0] %vm50, %v49
    %s55 = scalar_lea.vmem %s0, 64
    %v56 = vld [vmem:[%s55] sm:$0xff]
    %vm57 = vcmask 64512
    %s58 = scalar_lea.vmem [#allocation0], 512
    %59 = vst.msk [vmem:[%s58] ss:$8 sm:$0xf] %vm57, %v56
    %s60 = scalar_lea.vmem [#allocation0], 512
    %61 = vst.msk [vmem:[%s60] ss:$8 sm:$0xf0] %vm57, %v56
    %s62 = scalar_lea.vmem %s0, 72
    %v63 = vld [vmem:[%s62] sm:$0xff]
    %vm64 = vcmask 64512
    %s65 = scalar_lea.vmem [#allocation0], 576
    %66 = vst.msk [vmem:[%s65] ss:$8 sm:$0xf] %vm64, %v63
    %s67 = scalar_lea.vmem [#allocation0], 576
    %68 = vst.msk [vmem:[%s67] ss:$8 sm:$0xf0] %vm64, %v63
    %s69 = scalar_lea.vmem %s0, 80
    %v70 = vld [vmem:[%s69] sm:$0xff]
    %vm71 = vcmask 64512
    %s72 = scalar_lea.vmem [#allocation0], 640
    %73 = vst.msk [vmem:[%s72] ss:$8 sm:$0xf] %vm71, %v70
    %s74 = scalar_lea.vmem [#allocation0], 640
    %75 = vst.msk [vmem:[%s74] ss:$8 sm:$0xf0] %vm71, %v70
    %s76 = scalar_lea.vmem %s0, 88
    %v77 = vld [vmem:[%s76] sm:$0xff]
    %vm78 = vcmask 64512
    %s79 = scalar_lea.vmem [#allocation0], 704
    %80 = vst.msk [vmem:[%s79] ss:$8 sm:$0xf] %vm78, %v77
    %s81 = scalar_lea.vmem [#allocation0], 704
    %82 = vst.msk [vmem:[%s81] ss:$8 sm:$0xf0] %vm78, %v77
    %s83 = scalar_lea.vmem %s0, 96
    %v84 = vld [vmem:[%s83] sm:$0xff]
    %vm85 = vcmask 64512
    %s86 = scalar_lea.vmem [#allocation0], 768
    %87 = vst.msk [vmem:[%s86] ss:$8 sm:$0xf] %vm85, %v84
    %s88 = scalar_lea.vmem [#allocation0], 768
    %89 = vst.msk [vmem:[%s88] ss:$8 sm:$0xf0] %vm85, %v84
    %s90 = scalar_lea.vmem %s0, 104
    %v91 = vld [vmem:[%s90] sm:$0xff]
    %vm92 = vcmask 64512
    %s93 = scalar_lea.vmem [#allocation0], 832
    %94 = vst.msk [vmem:[%s93] ss:$8 sm:$0xf] %vm92, %v91
    %s95 = scalar_lea.vmem [#allocation0], 832
    %96 = vst.msk [vmem:[%s95] ss:$8 sm:$0xf0] %vm92, %v91
    %s97 = scalar_lea.vmem %s0, 112
    %v98 = vld [vmem:[%s97] sm:$0xff]
    %vm99 = vcmask 64512
    %s100 = scalar_lea.vmem [#allocation0], 896
    %101 = vst.msk [vmem:[%s100] ss:$8 sm:$0xf] %vm99, %v98
    %s102 = scalar_lea.vmem [#allocation0], 896
    %103 = vst.msk [vmem:[%s102] ss:$8 sm:$0xf0] %vm99, %v98
    %s104 = scalar_lea.vmem %s0, 120
    %v105 = vld [vmem:[%s104] sm:$0xff]
    %vm106 = vcmask 64512
    %s107 = scalar_lea.vmem [#allocation0], 960
    %108 = vst.msk [vmem:[%s107] ss:$8 sm:$0xf] %vm106, %v105
    %s109 = scalar_lea.vmem [#allocation0], 960
    %110 = vst.msk [vmem:[%s109] ss:$8 sm:$0xf0] %vm106, %v105
    %v111 = vld [vmem:[%s0] sm:$0xff]
    %112 = vrot.lane.b32.xlu0 %v111, 120
    %v113 = vpop.permute.xlu0 %112
    %vm114 = vcmask 64512
    %s115 = scalar_lea.vmem [#allocation0], 1
    %116 = vst.msk [vmem:[%s115] ss:$8 sm:$0xf] %vm114, %v113
    %s117 = scalar_lea.vmem [#allocation0], 1
    %118 = vst.msk [vmem:[%s117] ss:$8 sm:$0xf0] %vm114, %v113
    %s119 = scalar_lea.vmem %s0, 8
    %v120 = vld [vmem:[%s119] sm:$0xff]
    %121 = vrot.lane.b32.xlu0 %v120, 120
    %v122 = vpop.permute.xlu0 %121
    %vm123 = vcmask 64512
    %s124 = scalar_lea.vmem [#allocation0], 65
    %125 = vst.msk [vmem:[%s124] ss:$8 sm:$0xf] %vm123, %v122
    %s126 = scalar_lea.vmem [#allocation0], 65
    %127 = vst.msk [vmem:[%s126] ss:$8 sm:$0xf0] %vm123, %v122
    %s128 = scalar_lea.vmem %s0, 16
    %v129 = vld [vmem:[%s128] sm:$0xff]
    %130 = vrot.lane.b32.xlu0 %v129, 120
    %v131 = vpop.permute.xlu0 %130
    %vm132 = vcmask 64512
    %s133 = scalar_lea.vmem [#allocation0], 129
    %134 = vst.msk [vmem:[%s133] ss:$8 sm:$0xf] %vm132, %v131
    %s135 = scalar_lea.vmem [#allocation0], 129
    %136 = vst.msk [vmem:[%s135] ss:$8 sm:$0xf0] %vm132, %v131
    %s137 = scalar_lea.vmem %s0, 24
    %v138 = vld [vmem:[%s137] sm:$0xff]
    %139 = vrot.lane.b32.xlu0 %v138, 120
    %v140 = vpop.permute.xlu0 %139
    %vm141 = vcmask 64512
    %s142 = scalar_lea.vmem [#allocation0], 193
    %143 = vst.msk [vmem:[%s142] ss:$8 sm:$0xf] %vm141, %v140
    %s144 = scalar_lea.vmem [#allocation0], 193
    %145 = vst.msk [vmem:[%s144] ss:$8 sm:$0xf0] %vm141, %v140
    %s146 = scalar_lea.vmem %s0, 32
    %v147 = vld [vmem:[%s146] sm:$0xff]
    %148 = vrot.lane.b32.xlu0 %v147, 120
    %v149 = vpop.permute.xlu0 %148
    %vm150 = vcmask 64512
    %s151 = scalar_lea.vmem [#allocation0], 257
    %152 = vst.msk [vmem:[%s151] ss:$8 sm:$0xf] %vm150, %v149
    %s153 = scalar_lea.vmem [#allocation0], 257
    %154 = vst.msk [vmem:[%s153] ss:$8 sm:$0xf0] %vm150, %v149
    %s155 = scalar_lea.vmem %s0, 40
    %v156 = vld [vmem:[%s155] sm:$0xff]
    %157 = vrot.lane.b32.xlu0 %v156, 120
    %v158 = vpop.permute.xlu0 %157
    %vm159 = vcmask 64512
    %s160 = scalar_lea.vmem [#allocation0], 321
    %161 = vst.msk [vmem:[%s160] ss:$8 sm:$0xf] %vm159, %v158
    %s162 = scalar_lea.vmem [#allocation0], 321
    %163 = vst.msk [vmem:[%s162] ss:$8 sm:$0xf0] %vm159, %v158
    %s164 = scalar_lea.vmem %s0, 48
    %v165 = vld [vmem:[%s164] sm:$0xff]
    %166 = vrot.lane.b32.xlu0 %v165, 120
    %v167 = vpop.permute.xlu0 %166
    %vm168 = vcmask 64512
    %s169 = scalar_lea.vmem [#allocation0], 385
    %170 = vst.msk [vmem:[%s169] ss:$8 sm:$0xf] %vm168, %v167
    %s171 = scalar_lea.vmem [#allocation0], 385
    %172 = vst.msk [vmem:[%s171] ss:$8 sm:$0xf0] %vm168, %v167
    %s173 = scalar_lea.vmem %s0, 56
    %v174 = vld [vmem:[%s173] sm:$0xff]
    %175 = vrot.lane.b32.xlu0 %v174, 120
    %v176 = vpop.permute.xlu0 %175
    %vm177 = vcmask 64512
    %s178 = scalar_lea.vmem [#allocation0], 449
    %179 = vst.msk [vmem:[%s178] ss:$8 sm:$0xf] %vm177, %v176
    %s180 = scalar_lea.vmem [#allocation0], 449
    %181 = vst.msk [vmem:[%s180] ss:$8 sm:$0xf0] %vm177, %v176
    %s182 = scalar_lea.vmem %s0, 64
    %v183 = vld [vmem:[%s182] sm:$0xff]
    %184 = vrot.lane.b32.xlu0 %v183, 120
    %v185 = vpop.permute.xlu0 %184
    %vm186 = vcmask 64512
    %s187 = scalar_lea.vmem [#allocation0], 513
    %188 = vst.msk [vmem:[%s187] ss:$8 sm:$0xf] %vm186, %v185
    %s189 = scalar_lea.vmem [#allocation0], 513
    %190 = vst.msk [vmem:[%s189] ss:$8 sm:$0xf0] %vm186, %v185
    %s191 = scalar_lea.vmem %s0, 72
    %v192 = vld [vmem:[%s191] sm:$0xff]
    %193 = vrot.lane.b32.xlu0 %v192, 120
    %v194 = vpop.permute.xlu0 %193
    %vm195 = vcmask 64512
    %s196 = scalar_lea.vmem [#allocation0], 577
    %197 = vst.msk [vmem:[%s196] ss:$8 sm:$0xf] %vm195, %v194
    %s198 = scalar_lea.vmem [#allocation0], 577
    %199 = vst.msk [vmem:[%s198] ss:$8 sm:$0xf0] %vm195, %v194
    %s200 = scalar_lea.vmem %s0, 80
    %v201 = vld [vmem:[%s200] sm:$0xff]
    %202 = vrot.lane.b32.xlu0 %v201, 120
    %v203 = vpop.permute.xlu0 %202
    %vm204 = vcmask 64512
    %s205 = scalar_lea.vmem [#allocation0], 641
    %206 = vst.msk [vmem:[%s205] ss:$8 sm:$0xf] %vm204, %v203
    %s207 = scalar_lea.vmem [#allocation0], 641
    %208 = vst.msk [vmem:[%s207] ss:$8 sm:$0xf0] %vm204, %v203
    %s209 = scalar_lea.vmem %s0, 88
    %v210 = vld [vmem:[%s209] sm:$0xff]
    %211 = vrot.lane.b32.xlu0 %v210, 120
    %v212 = vpop.permute.xlu0 %211
    %vm213 = vcmask 64512
    %s214 = scalar_lea.vmem [#allocation0], 705
    %215 = vst.msk [vmem:[%s214] ss:$8 sm:$0xf] %vm213, %v212
    %s216 = scalar_lea.vmem [#allocation0], 705
    %217 = vst.msk [vmem:[%s216] ss:$8 sm:$0xf0] %vm213, %v212
    %s218 = scalar_lea.vmem %s0, 96
    %v219 = vld [vmem:[%s218] sm:$0xff]
    %220 = vrot.lane.b32.xlu0 %v219, 120
    %v221 = vpop.permute.xlu0 %220
    %vm222 = vcmask 64512
    %s223 = scalar_lea.vmem [#allocation0], 769
    %224 = vst.msk [vmem:[%s223] ss:$8 sm:$0xf] %vm222, %v221
    %s225 = scalar_lea.vmem [#allocation0], 769
    %226 = vst.msk [vmem:[%s225] ss:$8 sm:$0xf0] %vm222, %v221
    %s227 = scalar_lea.vmem %s0, 104
    %v228 = vld [vmem:[%s227] sm:$0xff]
    %229 = vrot.lane.b32.xlu0 %v228, 120
    %v230 = vpop.permute.xlu0 %229
    %vm231 = vcmask 64512
    %s232 = scalar_lea.vmem [#allocation0], 833
    %233 = vst.msk [vmem:[%s232] ss:$8 sm:$0xf] %vm231, %v230
    %s234 = scalar_lea.vmem [#allocation0], 833
    %235 = vst.msk [vmem:[%s234] ss:$8 sm:$0xf0] %vm231, %v230
    %s236 = scalar_lea.vmem %s0, 112
    %v237 = vld [vmem:[%s236] sm:$0xff]
    %238 = vrot.lane.b32.xlu0 %v237, 120
    %v239 = vpop.permute.xlu0 %238
    %vm240 = vcmask 64512
    %s241 = scalar_lea.vmem [#allocation0], 897
    %242 = vst.msk [vmem:[%s241] ss:$8 sm:$0xf] %vm240, %v239
    %s243 = scalar_lea.vmem [#allocation0], 897
    %244 = vst.msk [vmem:[%s243] ss:$8 sm:$0xf0] %vm240, %v239
    %s245 = scalar_lea.vmem %s0, 120
    %v246 = vld [vmem:[%s245] sm:$0xff]
    %247 = vrot.lane.b32.xlu0 %v246, 120
    %v248 = vpop.permute.xlu0 %247
    %vm249 = vcmask 64512
    %s250 = scalar_lea.vmem [#allocation0], 961
    %251 = vst.msk [vmem:[%s250] ss:$8 sm:$0xf] %vm249, %v248
    %s252 = scalar_lea.vmem [#allocation0], 961
    %253 = vst.msk [vmem:[%s252] ss:$8 sm:$0xf0] %vm249, %v248
    %s255 = sshllo.u32 0, 2
    %v257 = vld [vmem:[#allocation0] sm:%s255]
    %s258 = sshllo.u32 0, 2
    %259 = vst [vmem:[%s1] sm:%s258] %v257
    %s260 = scalar_lea.vmem [#allocation0], 8
    %v261 = vld [vmem:[%s260] sm:%s255]
    %s262 = sshllo.u32 0, 2
    %s263 = scalar_lea.vmem %s1, 2
    %264 = vst [vmem:[%s263] sm:%s262] %v261
    %s265 = scalar_lea.vmem [#allocation0], 16
    %v266 = vld [vmem:[%s265] sm:%s255]
    %s267 = sshllo.u32 0, 2
    %s268 = smul.addr 2, 2
    %s269 = scalar_lea.vmem %s1, %s268
    %270 = vst [vmem:[%s269] sm:%s267] %v266
    %s271 = scalar_lea.vmem [#allocation0], 24
    %v272 = vld [vmem:[%s271] sm:%s255]
    %s273 = sshllo.u32 0, 2
    %s274 = smul.addr 2, 3
    %s275 = scalar_lea.vmem %s1, %s274
    %276 = vst [vmem:[%s275] sm:%s273] %v272
    %s277 = scalar_lea.vmem [#allocation0], 32
    %v278 = vld [vmem:[%s277] sm:%s255]
    %s279 = sshllo.u32 0, 2
    %s280 = smul.addr 2, 4
    %s281 = scalar_lea.vmem %s1, %s280
    %282 = vst [vmem:[%s281] sm:%s279] %v278
    %s283 = scalar_lea.vmem [#allocation0], 40
    %v284 = vld [vmem:[%s283] sm:%s255]
    %s285 = sshllo.u32 0, 2
    %s286 = smul.addr 2, 5
    %s287 = scalar_lea.vmem %s1, %s286
    %288 = vst [vmem:[%s287] sm:%s285] %v284
    %s289 = scalar_lea.vmem [#allocation0], 48
    %v290 = vld [vmem:[%s289] sm:%s255]
    %s291 = sshllo.u32 0, 2
    %s292 = smul.addr 2, 6
    %s293 = scalar_lea.vmem %s1, %s292
    %294 = vst [vmem:[%s293] sm:%s291] %v290
    %s295 = scalar_lea.vmem [#allocation0], 56
    %v296 = vld [vmem:[%s295] sm:%s255]
    %s297 = sshllo.u32 0, 2
    %s298 = smul.addr 2, 7
    %s299 = scalar_lea.vmem %s1, %s298
    %300 = vst [vmem:[%s299] sm:%s297] %v296
    %s301 = scalar_lea.vmem [#allocation0], 64
    %v302 = vld [vmem:[%s301] sm:%s255]
    %s303 = sshllo.u32 0, 2
    %s304 = smul.addr 2, 8
    %s305 = scalar_lea.vmem %s1, %s304
    %306 = vst [vmem:[%s305] sm:%s303] %v302
    %s307 = scalar_lea.vmem [#allocation0], 72
    %v308 = vld [vmem:[%s307] sm:%s255]
    %s309 = sshllo.u32 0, 2
    %s310 = smul.addr 2, 9
    %s311 = scalar_lea.vmem %s1, %s310
    %312 = vst [vmem:[%s311] sm:%s309] %v308
    %s313 = scalar_lea.vmem [#allocation0], 80
    %v314 = vld [vmem:[%s313] sm:%s255]
    %s315 = sshllo.u32 0, 2
    %s316 = smul.addr 2, 10
    %s317 = scalar_lea.vmem %s1, %s316
    %318 = vst [vmem:[%s317] sm:%s315] %v314
    %s319 = scalar_lea.vmem [#allocation0], 88
    %v320 = vld [vmem:[%s319] sm:%s255]
    %s321 = sshllo.u32 0, 2
    %s322 = smul.addr 2, 11
    %s323 = scalar_lea.vmem %s1, %s322
    %324 = vst [vmem:[%s323] sm:%s321] %v320
    %s325 = scalar_lea.vmem [#allocation0], 96
    %v326 = vld [vmem:[%s325] sm:%s255]
    %s327 = sshllo.u32 0, 2
    %s328 = smul.addr 2, 12
    %s329 = scalar_lea.vmem %s1, %s328
    %330 = vst [vmem:[%s329] sm:%s327] %v326
    %s331 = scalar_lea.vmem [#allocation0], 104
    %v332 = vld [vmem:[%s331] sm:%s255]
    %s333 = sshllo.u32 0, 2
    %s334 = smul.addr 2, 13
    %s335 = scalar_lea.vmem %s1, %s334
    %336 = vst [vmem:[%s335] sm:%s333] %v332
    %s337 = scalar_lea.vmem [#allocation0], 112
    %v338 = vld [vmem:[%s337] sm:%s255]
    %s339 = sshllo.u32 0, 2
    %s340 = smul.addr 2, 14
    %s341 = scalar_lea.vmem %s1, %s340
    %342 = vst [vmem:[%s341] sm:%s339] %v338
    %s343 = scalar_lea.vmem [#allocation0], 120
    %v344 = vld [vmem:[%s343] sm:%s255]
    %s345 = sshllo.u32 0, 2
    %s346 = smul.addr 2, 15
    %s347 = scalar_lea.vmem %s1, %s346
    %348 = vst [vmem:[%s347] sm:%s345] %v344
    %s349 = scalar_lea.vmem [#allocation0], 128
    %v350 = vld [vmem:[%s349] sm:%s255]
    %s351 = sshllo.u32 0, 2
    %s352 = smul.addr 2, 16
    %s353 = scalar_lea.vmem %s1, %s352
    %354 = vst [vmem:[%s353] sm:%s351] %v350
    %s355 = scalar_lea.vmem [#allocation0], 136
    %v356 = vld [vmem:[%s355] sm:%s255]
    %s357 = sshllo.u32 0, 2
    %s358 = smul.addr 2, 17
    %s359 = scalar_lea.vmem %s1, %s358
    %360 = vst [vmem:[%s359] sm:%s357] %v356
    %s361 = scalar_lea.vmem [#allocation0], 144
    %v362 = vld [vmem:[%s361] sm:%s255]
    %s363 = sshllo.u32 0, 2
    %s364 = smul.addr 2, 18
    %s365 = scalar_lea.vmem %s1, %s364
    %366 = vst [vmem:[%s365] sm:%s363] %v362
    %s367 = scalar_lea.vmem [#allocation0], 152
    %v368 = vld [vmem:[%s367] sm:%s255]
    %s369 = sshllo.u32 0, 2
    %s370 = smul.addr 2, 19
    %s371 = scalar_lea.vmem %s1, %s370
    %372 = vst [vmem:[%s371] sm:%s369] %v368
    %s373 = scalar_lea.vmem [#allocation0], 160
    %v374 = vld [vmem:[%s373] sm:%s255]
    %s375 = sshllo.u32 0, 2
    %s376 = smul.addr 2, 20
    %s377 = scalar_lea.vmem %s1, %s376
    %378 = vst [vmem:[%s377] sm:%s375] %v374
    %s379 = scalar_lea.vmem [#allocation0], 168
    %v380 = vld [vmem:[%s379] sm:%s255]
    %s381 = sshllo.u32 0, 2
    %s382 = smul.addr 2, 21
    %s383 = scalar_lea.vmem %s1, %s382
    %384 = vst [vmem:[%s383] sm:%s381] %v380
    %s385 = scalar_lea.vmem [#allocation0], 176
    %v386 = vld [vmem:[%s385] sm:%s255]
    %s387 = sshllo.u32 0, 2
    %s388 = smul.addr 2, 22
    %s389 = scalar_lea.vmem %s1, %s388
    %390 = vst [vmem:[%s389] sm:%s387] %v386
    %s391 = scalar_lea.vmem [#allocation0], 184
    %v392 = vld [vmem:[%s391] sm:%s255]
    %s393 = sshllo.u32 0, 2
    %s394 = smul.addr 2, 23
    %s395 = scalar_lea.vmem %s1, %s394
    %396 = vst [vmem:[%s395] sm:%s393] %v392
    %s397 = scalar_lea.vmem [#allocation0], 192
    %v398 = vld [vmem:[%s397] sm:%s255]
    %s399 = sshllo.u32 0, 2
    %s400 = smul.addr 2, 24
    %s401 = scalar_lea.vmem %s1, %s400
    %402 = vst [vmem:[%s401] sm:%s399] %v398
    %s403 = scalar_lea.vmem [#allocation0], 200
    %v404 = vld [vmem:[%s403] sm:%s255]
    %s405 = sshllo.u32 0, 2
    %s406 = smul.addr 2, 25
    %s407 = scalar_lea.vmem %s1, %s406
    %408 = vst [vmem:[%s407] sm:%s405] %v404
    %s409 = scalar_lea.vmem [#allocation0], 208
    %v410 = vld [vmem:[%s409] sm:%s255]
    %s411 = sshllo.u32 0, 2
    %s412 = smul.addr 2, 26
    %s413 = scalar_lea.vmem %s1, %s412
    %414 = vst [vmem:[%s413] sm:%s411] %v410
    %s415 = scalar_lea.vmem [#allocation0], 216
    %v416 = vld [vmem:[%s415] sm:%s255]
    %s417 = sshllo.u32 0, 2
    %s418 = smul.addr 2, 27
    %s419 = scalar_lea.vmem %s1, %s418
    %420 = vst [vmem:[%s419] sm:%s417] %v416
    %s421 = scalar_lea.vmem [#allocation0], 224
    %v422 = vld [vmem:[%s421] sm:%s255]
    %s423 = sshllo.u32 0, 2
    %s424 = smul.addr 2, 28
    %s425 = scalar_lea.vmem %s1, %s424
    %426 = vst [vmem:[%s425] sm:%s423] %v422
    %s427 = scalar_lea.vmem [#allocation0], 232
    %v428 = vld [vmem:[%s427] sm:%s255]
    %s429 = sshllo.u32 0, 2
    %s430 = smul.addr 2, 29
    %s431 = scalar_lea.vmem %s1, %s430
    %432 = vst [vmem:[%s431] sm:%s429] %v428
    %s433 = scalar_lea.vmem [#allocation0], 240
    %v434 = vld [vmem:[%s433] sm:%s255]
    %s435 = sshllo.u32 0, 2
    %s436 = smul.addr 2, 30
    %s437 = scalar_lea.vmem %s1, %s436
    %438 = vst [vmem:[%s437] sm:%s435] %v434
    %s439 = scalar_lea.vmem [#allocation0], 248
    %v440 = vld [vmem:[%s439] sm:%s255]
    %s441 = sshllo.u32 0, 2
    %s442 = smul.addr 2, 31
    %s443 = scalar_lea.vmem %s1, %s442
    %444 = vst [vmem:[%s443] sm:%s441] %v440
    %s445 = scalar_lea.vmem [#allocation0], 256
    %v446 = vld [vmem:[%s445] sm:%s255]
    %s447 = sshllo.u32 0, 2
    %s448 = smul.addr 2, 32
    %s449 = scalar_lea.vmem %s1, %s448
    %450 = vst [vmem:[%s449] sm:%s447] %v446
    %s451 = scalar_lea.vmem [#allocation0], 264
    %v452 = vld [vmem:[%s451] sm:%s255]
    %s453 = sshllo.u32 0, 2
    %s454 = smul.addr 2, 33
    %s455 = scalar_lea.vmem %s1, %s454
    %456 = vst [vmem:[%s455] sm:%s453] %v452
    %s457 = scalar_lea.vmem [#allocation0], 272
    %v458 = vld [vmem:[%s457] sm:%s255]
    %s459 = sshllo.u32 0, 2
    %s460 = smul.addr 2, 34
    %s461 = scalar_lea.vmem %s1, %s460
    %462 = vst [vmem:[%s461] sm:%s459] %v458
    %s463 = scalar_lea.vmem [#allocation0], 280
    %v464 = vld [vmem:[%s463] sm:%s255]
    %s465 = sshllo.u32 0, 2
    %s466 = smul.addr 2, 35
    %s467 = scalar_lea.vmem %s1, %s466
    %468 = vst [vmem:[%s467] sm:%s465] %v464
    %s469 = scalar_lea.vmem [#allocation0], 288
    %v470 = vld [vmem:[%s469] sm:%s255]
    %s471 = sshllo.u32 0, 2
    %s472 = smul.addr 2, 36
    %s473 = scalar_lea.vmem %s1, %s472
    %474 = vst [vmem:[%s473] sm:%s471] %v470
    %s475 = scalar_lea.vmem [#allocation0], 296
    %v476 = vld [vmem:[%s475] sm:%s255]
    %s477 = sshllo.u32 0, 2
    %s478 = smul.addr 2, 37
    %s479 = scalar_lea.vmem %s1, %s478
    %480 = vst [vmem:[%s479] sm:%s477] %v476
    %s481 = scalar_lea.vmem [#allocation0], 304
    %v482 = vld [vmem:[%s481] sm:%s255]
    %s483 = sshllo.u32 0, 2
    %s484 = smul.addr 2, 38
    %s485 = scalar_lea.vmem %s1, %s484
    %486 = vst [vmem:[%s485] sm:%s483] %v482
    %s487 = scalar_lea.vmem [#allocation0], 312
    %v488 = vld [vmem:[%s487] sm:%s255]
    %s489 = sshllo.u32 0, 2
    %s490 = smul.addr 2, 39
    %s491 = scalar_lea.vmem %s1, %s490
    %492 = vst [vmem:[%s491] sm:%s489] %v488
    %s493 = scalar_lea.vmem [#allocation0], 320
    %v494 = vld [vmem:[%s493] sm:%s255]
    %s495 = sshllo.u32 0, 2
    %s496 = smul.addr 2, 40
    %s497 = scalar_lea.vmem %s1, %s496
    %498 = vst [vmem:[%s497] sm:%s495] %v494
    %s499 = scalar_lea.vmem [#allocation0], 328
    %v500 = vld [vmem:[%s499] sm:%s255]
    %s501 = sshllo.u32 0, 2
    %s502 = smul.addr 2, 41
    %s503 = scalar_lea.vmem %s1, %s502
    %504 = vst [vmem:[%s503] sm:%s501] %v500
    %s505 = scalar_lea.vmem [#allocation0], 336
    %v506 = vld [vmem:[%s505] sm:%s255]
    %s507 = sshllo.u32 0, 2
    %s508 = smul.addr 2, 42
    %s509 = scalar_lea.vmem %s1, %s508
    %510 = vst [vmem:[%s509] sm:%s507] %v506
    %s511 = scalar_lea.vmem [#allocation0], 344
    %v512 = vld [vmem:[%s511] sm:%s255]
    %s513 = sshllo.u32 0, 2
    %s514 = smul.addr 2, 43
    %s515 = scalar_lea.vmem %s1, %s514
    %516 = vst [vmem:[%s515] sm:%s513] %v512
    %s517 = scalar_lea.vmem [#allocation0], 352
    %v518 = vld [vmem:[%s517] sm:%s255]
    %s519 = sshllo.u32 0, 2
    %s520 = smul.addr 2, 44
    %s521 = scalar_lea.vmem %s1, %s520
    %522 = vst [vmem:[%s521] sm:%s519] %v518
    %s523 = scalar_lea.vmem [#allocation0], 360
    %v524 = vld [vmem:[%s523] sm:%s255]
    %s525 = sshllo.u32 0, 2
    %s526 = smul.addr 2, 45
    %s527 = scalar_lea.vmem %s1, %s526
    %528 = vst [vmem:[%s527] sm:%s525] %v524
    %s529 = scalar_lea.vmem [#allocation0], 368
    %v530 = vld [vmem:[%s529] sm:%s255]
    %s531 = sshllo.u32 0, 2
    %s532 = smul.addr 2, 46
    %s533 = scalar_lea.vmem %s1, %s532
    %534 = vst [vmem:[%s533] sm:%s531] %v530
    %s535 = scalar_lea.vmem [#allocation0], 376
    %v536 = vld [vmem:[%s535] sm:%s255]
    %s537 = sshllo.u32 0, 2
    %s538 = smul.addr 2, 47
    %s539 = scalar_lea.vmem %s1, %s538
    %540 = vst [vmem:[%s539] sm:%s537] %v536
    %s541 = scalar_lea.vmem [#allocation0], 384
    %v542 = vld [vmem:[%s541] sm:%s255]
    %s543 = sshllo.u32 0, 2
    %s544 = smul.addr 2, 48
    %s545 = scalar_lea.vmem %s1, %s544
    %546 = vst [vmem:[%s545] sm:%s543] %v542
    %s547 = scalar_lea.vmem [#allocation0], 392
    %v548 = vld [vmem:[%s547] sm:%s255]
    %s549 = sshllo.u32 0, 2
    %s550 = smul.addr 2, 49
    %s551 = scalar_lea.vmem %s1, %s550
    %552 = vst [vmem:[%s551] sm:%s549] %v548
    %s553 = scalar_lea.vmem [#allocation0], 400
    %v554 = vld [vmem:[%s553] sm:%s255]
    %s555 = sshllo.u32 0, 2
    %s556 = smul.addr 2, 50
    %s557 = scalar_lea.vmem %s1, %s556
    %558 = vst [vmem:[%s557] sm:%s555] %v554
    %s559 = scalar_lea.vmem [#allocation0], 408
    %v560 = vld [vmem:[%s559] sm:%s255]
    %s561 = sshllo.u32 0, 2
    %s562 = smul.addr 2, 51
    %s563 = scalar_lea.vmem %s1, %s562
    %564 = vst [vmem:[%s563] sm:%s561] %v560
    %s565 = scalar_lea.vmem [#allocation0], 416
    %v566 = vld [vmem:[%s565] sm:%s255]
    %s567 = sshllo.u32 0, 2
    %s568 = smul.addr 2, 52
    %s569 = scalar_lea.vmem %s1, %s568
    %570 = vst [vmem:[%s569] sm:%s567] %v566
    %s571 = scalar_lea.vmem [#allocation0], 424
    %v572 = vld [vmem:[%s571] sm:%s255]
    %s573 = sshllo.u32 0, 2
    %s574 = smul.addr 2, 53
    %s575 = scalar_lea.vmem %s1, %s574
    %576 = vst [vmem:[%s575] sm:%s573] %v572
    %s577 = scalar_lea.vmem [#allocation0], 432
    %v578 = vld [vmem:[%s577] sm:%s255]
    %s579 = sshllo.u32 0, 2
    %s580 = smul.addr 2, 54
    %s581 = scalar_lea.vmem %s1, %s580
    %582 = vst [vmem:[%s581] sm:%s579] %v578
    %s583 = scalar_lea.vmem [#allocation0], 440
    %v584 = vld [vmem:[%s583] sm:%s255]
    %s585 = sshllo.u32 0, 2
    %s586 = smul.addr 2, 55
    %s587 = scalar_lea.vmem %s1, %s586
    %588 = vst [vmem:[%s587] sm:%s585] %v584
    %s589 = scalar_lea.vmem [#allocation0], 448
    %v590 = vld [vmem:[%s589] sm:%s255]
    %s591 = sshllo.u32 0, 2
    %s592 = smul.addr 2, 56
    %s593 = scalar_lea.vmem %s1, %s592
    %594 = vst [vmem:[%s593] sm:%s591] %v590
    %s595 = scalar_lea.vmem [#allocation0], 456
    %v596 = vld [vmem:[%s595] sm:%s255]
    %s597 = sshllo.u32 0, 2
    %s598 = smul.addr 2, 57
    %s599 = scalar_lea.vmem %s1, %s598
    %600 = vst [vmem:[%s599] sm:%s597] %v596
    %s601 = scalar_lea.vmem [#allocation0], 464
    %v602 = vld [vmem:[%s601] sm:%s255]
    %s603 = sshllo.u32 0, 2
    %s604 = smul.addr 2, 58
    %s605 = scalar_lea.vmem %s1, %s604
    %606 = vst [vmem:[%s605] sm:%s603] %v602
    %s607 = scalar_lea.vmem [#allocation0], 472
    %v608 = vld [vmem:[%s607] sm:%s255]
    %s609 = sshllo.u32 0, 2
    %s610 = smul.addr 2, 59
    %s611 = scalar_lea.vmem %s1, %s610
    %612 = vst [vmem:[%s611] sm:%s609] %v608
    %s613 = scalar_lea.vmem [#allocation0], 480
    %v614 = vld [vmem:[%s613] sm:%s255]
    %s615 = sshllo.u32 0, 2
    %s616 = smul.addr 2, 60
    %s617 = scalar_lea.vmem %s1, %s616
    %618 = vst [vmem:[%s617] sm:%s615] %v614
    %s619 = scalar_lea.vmem [#allocation0], 488
    %v620 = vld [vmem:[%s619] sm:%s255]
    %s621 = sshllo.u32 0, 2
    %s622 = smul.addr 2, 61
    %s623 = scalar_lea.vmem %s1, %s622
    %624 = vst [vmem:[%s623] sm:%s621] %v620
    %s625 = scalar_lea.vmem [#allocation0], 496
    %v626 = vld [vmem:[%s625] sm:%s255]
    %s627 = sshllo.u32 0, 2
    %s628 = smul.addr 2, 62
    %s629 = scalar_lea.vmem %s1, %s628
    %630 = vst [vmem:[%s629] sm:%s627] %v626
    %s631 = scalar_lea.vmem [#allocation0], 504
    %v632 = vld [vmem:[%s631] sm:%s255]
    %s633 = sshllo.u32 0, 2
    %s634 = smul.addr 2, 63
    %s635 = scalar_lea.vmem %s1, %s634
    %636 = vst [vmem:[%s635] sm:%s633] %v632
    %s637 = scalar_lea.vmem [#allocation0], 512
    %v638 = vld [vmem:[%s637] sm:%s255]
    %s639 = sshllo.u32 0, 2
    %s640 = smul.addr 2, 64
    %s641 = scalar_lea.vmem %s1, %s640
    %642 = vst [vmem:[%s641] sm:%s639] %v638
    %s643 = scalar_lea.vmem [#allocation0], 520
    %v644 = vld [vmem:[%s643] sm:%s255]
    %s645 = sshllo.u32 0, 2
    %s646 = smul.addr 2, 65
    %s647 = scalar_lea.vmem %s1, %s646
    %648 = vst [vmem:[%s647] sm:%s645] %v644
    %s649 = scalar_lea.vmem [#allocation0], 528
    %v650 = vld [vmem:[%s649] sm:%s255]
    %s651 = sshllo.u32 0, 2
    %s652 = smul.addr 2, 66
    %s653 = scalar_lea.vmem %s1, %s652
    %654 = vst [vmem:[%s653] sm:%s651] %v650
    %s655 = scalar_lea.vmem [#allocation0], 536
    %v656 = vld [vmem:[%s655] sm:%s255]
    %s657 = sshllo.u32 0, 2
    %s658 = smul.addr 2, 67
    %s659 = scalar_lea.vmem %s1, %s658
    %660 = vst [vmem:[%s659] sm:%s657] %v656
    %s661 = scalar_lea.vmem [#allocation0], 544
    %v662 = vld [vmem:[%s661] sm:%s255]
    %s663 = sshllo.u32 0, 2
    %s664 = smul.addr 2, 68
    %s665 = scalar_lea.vmem %s1, %s664
    %666 = vst [vmem:[%s665] sm:%s663] %v662
    %s667 = scalar_lea.vmem [#allocation0], 552
    %v668 = vld [vmem:[%s667] sm:%s255]
    %s669 = sshllo.u32 0, 2
    %s670 = smul.addr 2, 69
    %s671 = scalar_lea.vmem %s1, %s670
    %672 = vst [vmem:[%s671] sm:%s669] %v668
    %s673 = scalar_lea.vmem [#allocation0], 560
    %v674 = vld [vmem:[%s673] sm:%s255]
    %s675 = sshllo.u32 0, 2
    %s676 = smul.addr 2, 70
    %s677 = scalar_lea.vmem %s1, %s676
    %678 = vst [vmem:[%s677] sm:%s675] %v674
    %s679 = scalar_lea.vmem [#allocation0], 568
    %v680 = vld [vmem:[%s679] sm:%s255]
    %s681 = sshllo.u32 0, 2
    %s682 = smul.addr 2, 71
    %s683 = scalar_lea.vmem %s1, %s682
    %684 = vst [vmem:[%s683] sm:%s681] %v680
    %s685 = scalar_lea.vmem [#allocation0], 576
    %v686 = vld [vmem:[%s685] sm:%s255]
    %s687 = sshllo.u32 0, 2
    %s688 = smul.addr 2, 72
    %s689 = scalar_lea.vmem %s1, %s688
    %690 = vst [vmem:[%s689] sm:%s687] %v686
    %s691 = scalar_lea.vmem [#allocation0], 584
    %v692 = vld [vmem:[%s691] sm:%s255]
    %s693 = sshllo.u32 0, 2
    %s694 = smul.addr 2, 73
    %s695 = scalar_lea.vmem %s1, %s694
    %696 = vst [vmem:[%s695] sm:%s693] %v692
    %s697 = scalar_lea.vmem [#allocation0], 592
    %v698 = vld [vmem:[%s697] sm:%s255]
    %s699 = sshllo.u32 0, 2
    %s700 = smul.addr 2, 74
    %s701 = scalar_lea.vmem %s1, %s700
    %702 = vst [vmem:[%s701] sm:%s699] %v698
    %s703 = scalar_lea.vmem [#allocation0], 600
    %v704 = vld [vmem:[%s703] sm:%s255]
    %s705 = sshllo.u32 0, 2
    %s706 = smul.addr 2, 75
    %s707 = scalar_lea.vmem %s1, %s706
    %708 = vst [vmem:[%s707] sm:%s705] %v704
    %s709 = scalar_lea.vmem [#allocation0], 608
    %v710 = vld [vmem:[%s709] sm:%s255]
    %s711 = sshllo.u32 0, 2
    %s712 = smul.addr 2, 76
    %s713 = scalar_lea.vmem %s1, %s712
    %714 = vst [vmem:[%s713] sm:%s711] %v710
    %s715 = scalar_lea.vmem [#allocation0], 616
    %v716 = vld [vmem:[%s715] sm:%s255]
    %s717 = sshllo.u32 0, 2
    %s718 = smul.addr 2, 77
    %s719 = scalar_lea.vmem %s1, %s718
    %720 = vst [vmem:[%s719] sm:%s717] %v716
    %s721 = scalar_lea.vmem [#allocation0], 624
    %v722 = vld [vmem:[%s721] sm:%s255]
    %s723 = sshllo.u32 0, 2
    %s724 = smul.addr 2, 78
    %s725 = scalar_lea.vmem %s1, %s724
    %726 = vst [vmem:[%s725] sm:%s723] %v722
    %s727 = scalar_lea.vmem [#allocation0], 632
    %v728 = vld [vmem:[%s727] sm:%s255]
    %s729 = sshllo.u32 0, 2
    %s730 = smul.addr 2, 79
    %s731 = scalar_lea.vmem %s1, %s730
    %732 = vst [vmem:[%s731] sm:%s729] %v728
    %s733 = scalar_lea.vmem [#allocation0], 640
    %v734 = vld [vmem:[%s733] sm:%s255]
    %s735 = sshllo.u32 0, 2
    %s736 = smul.addr 2, 80
    %s737 = scalar_lea.vmem %s1, %s736
    %738 = vst [vmem:[%s737] sm:%s735] %v734
    %s739 = scalar_lea.vmem [#allocation0], 648
    %v740 = vld [vmem:[%s739] sm:%s255]
    %s741 = sshllo.u32 0, 2
    %s742 = smul.addr 2, 81
    %s743 = scalar_lea.vmem %s1, %s742
    %744 = vst [vmem:[%s743] sm:%s741] %v740
    %s745 = scalar_lea.vmem [#allocation0], 656
    %v746 = vld [vmem:[%s745] sm:%s255]
    %s747 = sshllo.u32 0, 2
    %s748 = smul.addr 2, 82
    %s749 = scalar_lea.vmem %s1, %s748
    %750 = vst [vmem:[%s749] sm:%s747] %v746
    %s751 = scalar_lea.vmem [#allocation0], 664
    %v752 = vld [vmem:[%s751] sm:%s255]
    %s753 = sshllo.u32 0, 2
    %s754 = smul.addr 2, 83
    %s755 = scalar_lea.vmem %s1, %s754
    %756 = vst [vmem:[%s755] sm:%s753] %v752
    %s757 = scalar_lea.vmem [#allocation0], 672
    %v758 = vld [vmem:[%s757] sm:%s255]
    %s759 = sshllo.u32 0, 2
    %s760 = smul.addr 2, 84
    %s761 = scalar_lea.vmem %s1, %s760
    %762 = vst [vmem:[%s761] sm:%s759] %v758
    %s763 = scalar_lea.vmem [#allocation0], 680
    %v764 = vld [vmem:[%s763] sm:%s255]
    %s765 = sshllo.u32 0, 2
    %s766 = smul.addr 2, 85
    %s767 = scalar_lea.vmem %s1, %s766
    %768 = vst [vmem:[%s767] sm:%s765] %v764
    %s769 = scalar_lea.vmem [#allocation0], 688
    %v770 = vld [vmem:[%s769] sm:%s255]
    %s771 = sshllo.u32 0, 2
    %s772 = smul.addr 2, 86
    %s773 = scalar_lea.vmem %s1, %s772
    %774 = vst [vmem:[%s773] sm:%s771] %v770
    %s775 = scalar_lea.vmem [#allocation0], 696
    %v776 = vld [vmem:[%s775] sm:%s255]
    %s777 = sshllo.u32 0, 2
    %s778 = smul.addr 2, 87
    %s779 = scalar_lea.vmem %s1, %s778
    %780 = vst [vmem:[%s779] sm:%s777] %v776
    %s781 = scalar_lea.vmem [#allocation0], 704
    %v782 = vld [vmem:[%s781] sm:%s255]
    %s783 = sshllo.u32 0, 2
    %s784 = smul.addr 2, 88
    %s785 = scalar_lea.vmem %s1, %s784
    %786 = vst [vmem:[%s785] sm:%s783] %v782
    %s787 = scalar_lea.vmem [#allocation0], 712
    %v788 = vld [vmem:[%s787] sm:%s255]
    %s789 = sshllo.u32 0, 2
    %s790 = smul.addr 2, 89
    %s791 = scalar_lea.vmem %s1, %s790
    %792 = vst [vmem:[%s791] sm:%s789] %v788
    %s793 = scalar_lea.vmem [#allocation0], 720
    %v794 = vld [vmem:[%s793] sm:%s255]
    %s795 = sshllo.u32 0, 2
    %s796 = smul.addr 2, 90
    %s797 = scalar_lea.vmem %s1, %s796
    %798 = vst [vmem:[%s797] sm:%s795] %v794
    %s799 = scalar_lea.vmem [#allocation0], 728
    %v800 = vld [vmem:[%s799] sm:%s255]
    %s801 = sshllo.u32 0, 2
    %s802 = smul.addr 2, 91
    %s803 = scalar_lea.vmem %s1, %s802
    %804 = vst [vmem:[%s803] sm:%s801] %v800
    %s805 = scalar_lea.vmem [#allocation0], 736
    %v806 = vld [vmem:[%s805] sm:%s255]
    %s807 = sshllo.u32 0, 2
    %s808 = smul.addr 2, 92
    %s809 = scalar_lea.vmem %s1, %s808
    %810 = vst [vmem:[%s809] sm:%s807] %v806
    %s811 = scalar_lea.vmem [#allocation0], 744
    %v812 = vld [vmem:[%s811] sm:%s255]
    %s813 = sshllo.u32 0, 2
    %s814 = smul.addr 2, 93
    %s815 = scalar_lea.vmem %s1, %s814
    %816 = vst [vmem:[%s815] sm:%s813] %v812
    %s817 = scalar_lea.vmem [#allocation0], 752
    %v818 = vld [vmem:[%s817] sm:%s255]
    %s819 = sshllo.u32 0, 2
    %s820 = smul.addr 2, 94
    %s821 = scalar_lea.vmem %s1, %s820
    %822 = vst [vmem:[%s821] sm:%s819] %v818
    %s823 = scalar_lea.vmem [#allocation0], 760
    %v824 = vld [vmem:[%s823] sm:%s255]
    %s825 = sshllo.u32 0, 2
    %s826 = smul.addr 2, 95
    %s827 = scalar_lea.vmem %s1, %s826
    %828 = vst [vmem:[%s827] sm:%s825] %v824
    %s829 = scalar_lea.vmem [#allocation0], 768
    %v830 = vld [vmem:[%s829] sm:%s255]
    %s831 = sshllo.u32 0, 2
    %s832 = smul.addr 2, 96
    %s833 = scalar_lea.vmem %s1, %s832
    %834 = vst [vmem:[%s833] sm:%s831] %v830
    %s835 = scalar_lea.vmem [#allocation0], 776
    %v836 = vld [vmem:[%s835] sm:%s255]
    %s837 = sshllo.u32 0, 2
    %s838 = smul.addr 2, 97
    %s839 = scalar_lea.vmem %s1, %s838
    %840 = vst [vmem:[%s839] sm:%s837] %v836
    %s841 = scalar_lea.vmem [#allocation0], 784
    %v842 = vld [vmem:[%s841] sm:%s255]
    %s843 = sshllo.u32 0, 2
    %s844 = smul.addr 2, 98
    %s845 = scalar_lea.vmem %s1, %s844
    %846 = vst [vmem:[%s845] sm:%s843] %v842
    %s847 = scalar_lea.vmem [#allocation0], 792
    %v848 = vld [vmem:[%s847] sm:%s255]
    %s849 = sshllo.u32 0, 2
    %s850 = smul.addr 2, 99
    %s851 = scalar_lea.vmem %s1, %s850
    %852 = vst [vmem:[%s851] sm:%s849] %v848
    %s853 = scalar_lea.vmem [#allocation0], 800
    %v854 = vld [vmem:[%s853] sm:%s255]
    %s855 = sshllo.u32 0, 2
    %s856 = smul.addr 2, 100
    %s857 = scalar_lea.vmem %s1, %s856
    %858 = vst [vmem:[%s857] sm:%s855] %v854
    %s859 = scalar_lea.vmem [#allocation0], 808
    %v860 = vld [vmem:[%s859] sm:%s255]
    %s861 = sshllo.u32 0, 2
    %s862 = smul.addr 2, 101
    %s863 = scalar_lea.vmem %s1, %s862
    %864 = vst [vmem:[%s863] sm:%s861] %v860
    %s865 = scalar_lea.vmem [#allocation0], 816
    %v866 = vld [vmem:[%s865] sm:%s255]
    %s867 = sshllo.u32 0, 2
    %s868 = smul.addr 2, 102
    %s869 = scalar_lea.vmem %s1, %s868
    %870 = vst [vmem:[%s869] sm:%s867] %v866
    %s871 = scalar_lea.vmem [#allocation0], 824
    %v872 = vld [vmem:[%s871] sm:%s255]
    %s873 = sshllo.u32 0, 2
    %s874 = smul.addr 2, 103
    %s875 = scalar_lea.vmem %s1, %s874
    %876 = vst [vmem:[%s875] sm:%s873] %v872
    %s877 = scalar_lea.vmem [#allocation0], 832
    %v878 = vld [vmem:[%s877] sm:%s255]
    %s879 = sshllo.u32 0, 2
    %s880 = smul.addr 2, 104
    %s881 = scalar_lea.vmem %s1, %s880
    %882 = vst [vmem:[%s881] sm:%s879] %v878
    %s883 = scalar_lea.vmem [#allocation0], 840
    %v884 = vld [vmem:[%s883] sm:%s255]
    %s885 = sshllo.u32 0, 2
    %s886 = smul.addr 2, 105
    %s887 = scalar_lea.vmem %s1, %s886
    %888 = vst [vmem:[%s887] sm:%s885] %v884
    %s889 = scalar_lea.vmem [#allocation0], 848
    %v890 = vld [vmem:[%s889] sm:%s255]
    %s891 = sshllo.u32 0, 2
    %s892 = smul.addr 2, 106
    %s893 = scalar_lea.vmem %s1, %s892
    %894 = vst [vmem:[%s893] sm:%s891] %v890
    %s895 = scalar_lea.vmem [#allocation0], 856
    %v896 = vld [vmem:[%s895] sm:%s255]
    %s897 = sshllo.u32 0, 2
    %s898 = smul.addr 2, 107
    %s899 = scalar_lea.vmem %s1, %s898
    %900 = vst [vmem:[%s899] sm:%s897] %v896
    %s901 = scalar_lea.vmem [#allocation0], 864
    %v902 = vld [vmem:[%s901] sm:%s255]
    %s903 = sshllo.u32 0, 2
    %s904 = smul.addr 2, 108
    %s905 = scalar_lea.vmem %s1, %s904
    %906 = vst [vmem:[%s905] sm:%s903] %v902
    %s907 = scalar_lea.vmem [#allocation0], 872
    %v908 = vld [vmem:[%s907] sm:%s255]
    %s909 = sshllo.u32 0, 2
    %s910 = smul.addr 2, 109
    %s911 = scalar_lea.vmem %s1, %s910
    %912 = vst [vmem:[%s911] sm:%s909] %v908
    %s913 = scalar_lea.vmem [#allocation0], 880
    %v914 = vld [vmem:[%s913] sm:%s255]
    %s915 = sshllo.u32 0, 2
    %s916 = smul.addr 2, 110
    %s917 = scalar_lea.vmem %s1, %s916
    %918 = vst [vmem:[%s917] sm:%s915] %v914
    %s919 = scalar_lea.vmem [#allocation0], 888
    %v920 = vld [vmem:[%s919] sm:%s255]
    %s921 = sshllo.u32 0, 2
    %s922 = smul.addr 2, 111
    %s923 = scalar_lea.vmem %s1, %s922
    %924 = vst [vmem:[%s923] sm:%s921] %v920
    %s925 = scalar_lea.vmem [#allocation0], 896
    %v926 = vld [vmem:[%s925] sm:%s255]
    %s927 = sshllo.u32 0, 2
    %s928 = smul.addr 2, 112
    %s929 = scalar_lea.vmem %s1, %s928
    %930 = vst [vmem:[%s929] sm:%s927] %v926
    %s931 = scalar_lea.vmem [#allocation0], 904
    %v932 = vld [vmem:[%s931] sm:%s255]
    %s933 = sshllo.u32 0, 2
    %s934 = smul.addr 2, 113
    %s935 = scalar_lea.vmem %s1, %s934
    %936 = vst [vmem:[%s935] sm:%s933] %v932
    %s937 = scalar_lea.vmem [#allocation0], 912
    %v938 = vld [vmem:[%s937] sm:%s255]
    %s939 = sshllo.u32 0, 2
    %s940 = smul.addr 2, 114
    %s941 = scalar_lea.vmem %s1, %s940
    %942 = vst [vmem:[%s941] sm:%s939] %v938
    %s943 = scalar_lea.vmem [#allocation0], 920
    %v944 = vld [vmem:[%s943] sm:%s255]
    %s945 = sshllo.u32 0, 2
    %s946 = smul.addr 2, 115
    %s947 = scalar_lea.vmem %s1, %s946
    %948 = vst [vmem:[%s947] sm:%s945] %v944
    %s949 = scalar_lea.vmem [#allocation0], 928
    %v950 = vld [vmem:[%s949] sm:%s255]
    %s951 = sshllo.u32 0, 2
    %s952 = smul.addr 2, 116
    %s953 = scalar_lea.vmem %s1, %s952
    %954 = vst [vmem:[%s953] sm:%s951] %v950
    %s955 = scalar_lea.vmem [#allocation0], 936
    %v956 = vld [vmem:[%s955] sm:%s255]
    %s957 = sshllo.u32 0, 2
    %s958 = smul.addr 2, 117
    %s959 = scalar_lea.vmem %s1, %s958
    %960 = vst [vmem:[%s959] sm:%s957] %v956
    %s961 = scalar_lea.vmem [#allocation0], 944
    %v962 = vld [vmem:[%s961] sm:%s255]
    %s963 = sshllo.u32 0, 2
    %s964 = smul.addr 2, 118
    %s965 = scalar_lea.vmem %s1, %s964
    %966 = vst [vmem:[%s965] sm:%s963] %v962
    %s967 = scalar_lea.vmem [#allocation0], 952
    %v968 = vld [vmem:[%s967] sm:%s255]
    %s969 = sshllo.u32 0, 2
    %s970 = smul.addr 2, 119
    %s971 = scalar_lea.vmem %s1, %s970
    %972 = vst [vmem:[%s971] sm:%s969] %v968
    %s973 = scalar_lea.vmem [#allocation0], 960
    %v974 = vld [vmem:[%s973] sm:%s255]
    %s975 = sshllo.u32 0, 2
    %s976 = smul.addr 2, 120
    %s977 = scalar_lea.vmem %s1, %s976
    %978 = vst [vmem:[%s977] sm:%s975] %v974
    %s979 = scalar_lea.vmem [#allocation0], 968
    %v980 = vld [vmem:[%s979] sm:%s255]
    %s981 = sshllo.u32 0, 2
    %s982 = smul.addr 2, 121
    %s983 = scalar_lea.vmem %s1, %s982
    %984 = vst [vmem:[%s983] sm:%s981] %v980
    %s985 = scalar_lea.vmem [#allocation0], 976
    %v986 = vld [vmem:[%s985] sm:%s255]
    %s987 = sshllo.u32 0, 2
    %s988 = smul.addr 2, 122
    %s989 = scalar_lea.vmem %s1, %s988
    %990 = vst [vmem:[%s989] sm:%s987] %v986
    %s991 = scalar_lea.vmem [#allocation0], 984
    %v992 = vld [vmem:[%s991] sm:%s255]
    %s993 = sshllo.u32 0, 2
    %s994 = smul.addr 2, 123
    %s995 = scalar_lea.vmem %s1, %s994
    %996 = vst [vmem:[%s995] sm:%s993] %v992
    %s997 = scalar_lea.vmem [#allocation0], 992
    %v998 = vld [vmem:[%s997] sm:%s255]
    %s999 = sshllo.u32 0, 2
    %s1000 = smul.addr 2, 124
    %s1001 = scalar_lea.vmem %s1, %s1000
    %1002 = vst [vmem:[%s1001] sm:%s999] %v998
    %s1003 = scalar_lea.vmem [#allocation0], 1000
    %v1004 = vld [vmem:[%s1003] sm:%s255]
    %s1005 = sshllo.u32 0, 2
    %s1006 = smul.addr 2, 125
    %s1007 = scalar_lea.vmem %s1, %s1006
    %1008 = vst [vmem:[%s1007] sm:%s1005] %v1004
    %s1009 = scalar_lea.vmem [#allocation0], 1008
    %v1010 = vld [vmem:[%s1009] sm:%s255]
    %s1011 = sshllo.u32 0, 2
    %s1012 = smul.addr 2, 126
    %s1013 = scalar_lea.vmem %s1, %s1012
    %1014 = vst [vmem:[%s1013] sm:%s1011] %v1010
    %s1015 = scalar_lea.vmem [#allocation0], 1016
    %v1016 = vld [vmem:[%s1015] sm:%s255]
    %s1017 = sshllo.u32 0, 2
    %s1018 = smul.addr 2, 127
    %s1019 = scalar_lea.vmem %s1, %s1018
    %1020 = vst [vmem:[%s1019] sm:%s1017] %v1016

// kernel: fwd.5
$region0: #{fwd.5}
  #allocation0 [shape = 'u32[]', space=smem, size = 0x4, offset = 0x4, fixed_abs, tag = 'smem constant byte address 0x4 - core index']
  #allocation1 [shape = 'u32[144,128]{1,0:T(1,128)}', space=vmem, size = 0x12000, scoped, tag = 'internal scratch']
  %s0 = inlined_call_operand.vmem [shape: f32[160,128], index: 0, kind: input, shape index: {}]
  %s1 = inlined_call_operand.vmem [shape: f32[128,128], index: 1, kind: input, shape index: {}]
  %s2 = inlined_call_operand.vmem [shape: f32[1,128], index: 2, kind: input, shape index: {}]
  %s3 = inlined_call_operand.vmem [shape: f32[128,128], index: 3, kind: input, shape index: {}]
  %s4 = inlined_call_operand.vmem [shape: f32[1,128], index: 4, kind: input, shape index: {}]
  %s5 = inlined_call_operand.vmem [shape: f32[160,128], index: 5, kind: output, shape index: {0}]
  %s6 = inlined_call_operand.vmem [shape: f32[160,128], index: 6, kind: output, shape index: {1}]
  %7 = xla_tuple %s5, %s6
  %s8 = sld [smem:[#allocation0]]
  $region38: #{fwd.5} parent=0
    _
  %s10 = ssub.s32 1, %s8
  %s11 = scalar_select 0, %s10, %s8
  // Predicated region
  $region2: #{fwd.5} parent=0 // pred_check
    _
  $region3: #{fwd.5} parent=0 // pred_check_branch
    %13 = sbr.rel (0) target = $region5
  $region4: #{fwd.5} parent=0 // pred_region
    _
  $region5: #{fwd.5} parent=0 // pred_fallthru
    _
  // Predicated region
  $region6: #{fwd.5} parent=0 // pred_check
    _
  $region7: #{fwd.5} parent=0 // pred_check_branch
    %15 = sbr.rel (0) target = $region9
  $region8: #{fwd.5} parent=0 // pred_region
    _
  $region9: #{fwd.5} parent=0 // pred_fallthru
    _
  // Predicated region
  $region10: #{fwd.5} parent=0 // pred_check
    _
  $region11: #{fwd.5} parent=0 // pred_check_branch
    %17 = sbr.rel (0) target = $region13
  $region12: #{fwd.5} parent=0 // pred_region
    _
  $region13: #{fwd.5} parent=0 // pred_fallthru
    _
  // Predicated region
  $region14: #{fwd.5} parent=0 // pred_check
    _
  $region15: #{fwd.5} parent=0 // pred_check_branch
    %19 = sbr.rel (0) target = $region17
  $region16: #{fwd.5} parent=0 // pred_region
    _
  $region17: #{fwd.5} parent=0 // pred_fallthru
    _
  // Predicated region
  $region18: #{fwd.5} parent=0 // pred_check
    _
  $region19: #{fwd.5} parent=0 // pred_check_branch
    %21 = sbr.rel (0) target = $region21
  $region20: #{fwd.5} parent=0 // pred_region
    _
  $region21: #{fwd.5} parent=0 // pred_fallthru
    _
  %v22 = vld [vmem:[%s0] sm:$0xff]
  %v23 = vld [vmem:[%s0 + $0x8] sm:$0xff]
  %v24 = vld [vmem:[%s0 + $0x10] sm:$0xff]
  %v25 = vld [vmem:[%s0 + $0x18] sm:$0xff]
  %v26 = vld [vmem:[%s0 + $0x20] sm:$0xff]
  %v27 = vld [vmem:[%s0 + $0x28] sm:$0xff]
  %v28 = vld [vmem:[%s0 + $0x30] sm:$0xff]
  %v29 = vld [vmem:[%s0 + $0x38] sm:$0xff]
  %v30 = vld [vmem:[%s0 + $0x40] sm:$0xff]
  %v31 = vld [vmem:[%s0 + $0x48] sm:$0xff]
  %v32 = vld [vmem:[%s0 + $0x50] sm:$0xff]
  %v33 = vld [vmem:[%s0 + $0x58] sm:$0xff]
  %v34 = vld [vmem:[%s0 + $0x60] sm:$0xff]
  %v35 = vld [vmem:[%s0 + $0x68] sm:$0xff]
  %v36 = vld [vmem:[%s0 + $0x70] sm:$0xff]
  %v37 = vld [vmem:[%s0 + $0x78] sm:$0xff]
  %v38 = vld [vmem:[%s0 + $0x80] sm:$0xff]
  %v39 = vld [vmem:[%s0 + $0x88] sm:$0xff]
  %v40 = vld [vmem:[%s0 + $0x90] sm:$0xff]
  %v41 = vld [vmem:[%s0 + $0x98] sm:$0xff]
  %v42 = vld [vmem:[%s1] sm:$0xff]
  %v43 = vld [vmem:[%s1 + $0x8] sm:$0xff]
  %v44 = vld [vmem:[%s1 + $0x10] sm:$0xff]
  %v45 = vld [vmem:[%s1 + $0x18] sm:$0xff]
  %v46 = vld [vmem:[%s1 + $0x20] sm:$0xff]
  %v47 = vld [vmem:[%s1 + $0x28] sm:$0xff]
  %v48 = vld [vmem:[%s1 + $0x30] sm:$0xff]
  %v49 = vld [vmem:[%s1 + $0x38] sm:$0xff]
  %v50 = vld [vmem:[%s1 + $0x40] sm:$0xff]
  %v51 = vld [vmem:[%s1 + $0x48] sm:$0xff]
  %v52 = vld [vmem:[%s1 + $0x50] sm:$0xff]
  %v53 = vld [vmem:[%s1 + $0x58] sm:$0xff]
  %v54 = vld [vmem:[%s1 + $0x60] sm:$0xff]
  %v55 = vld [vmem:[%s1 + $0x68] sm:$0xff]
  %v56 = vld [vmem:[%s1 + $0x70] sm:$0xff]
  %v57 = vld [vmem:[%s1 + $0x78] sm:$0xff]
  %v58 = vld [vmem:[%s2] sm:$0x1]
  %v60 = vlaneseq
  %v61 = vshrl.u32 %v60, 7
  %v62 = vsub.s32 0, %v61
  %v63 = vrot.slane %v58, %v62
  %65 = vmatprep.subr.mxu0 0.0
  %66 = vmatpush1.msra.mxu0 %v42
  %67 = vmatprep.subr.mxu0 0.0
  %68 = vmatpush1.msra.mxu0 %v43
  %69 = vmatprep.subr.mxu0 0.0
  %70 = vmatpush1.msra.mxu0 %v44
  %71 = vmatprep.subr.mxu0 0.0
  %72 = vmatpush1.msra.mxu0 %v45
  %73 = vmatprep.subr.mxu0 0.0
  %74 = vmatpush1.msra.mxu0 %v46
  %75 = vmatprep.subr.mxu0 0.0
  %76 = vmatpush1.msra.mxu0 %v47
  %77 = vmatprep.subr.mxu0 0.0
  %78 = vmatpush1.msra.mxu0 %v48
  %79 = vmatprep.subr.mxu0 0.0
  %80 = vmatpush1.msra.mxu0 %v49
  %81 = vmatprep.subr.mxu0 0.0
  %82 = vmatpush1.msra.mxu0 %v50
  %83 = vmatprep.subr.mxu0 0.0
  %84 = vmatpush1.msra.mxu0 %v51
  %85 = vmatprep.subr.mxu0 0.0
  %86 = vmatpush1.msra.mxu0 %v52
  %87 = vmatprep.subr.mxu0 0.0
  %88 = vmatpush1.msra.mxu0 %v53
  %89 = vmatprep.subr.mxu0 0.0
  %90 = vmatpush1.msra.mxu0 %v54
  %91 = vmatprep.subr.mxu0 0.0
  %92 = vmatpush1.msra.mxu0 %v55
  %93 = vmatprep.subr.mxu0 0.0
  %94 = vmatpush1.msra.mxu0 %v56
  %95 = vmatprep.subr.mxu0 0.0
  %96 = vmatpush1.msra.mxu0 %v57
  %97 = vmatprep.subr.mxu0 0.0
  %98 = vmatpush1.msra.mxu0 0.0
  %99 = vmatprep.subr.mxu0 0.0
  %100 = vmatpush1.msra.mxu0 0.0
  %101 = vmatprep.subr.mxu0 0.0
  %102 = vmatpush1.msra.mxu0 0.0
  %103 = vmatprep.subr.mxu0 0.0
  %104 = vmatpush1.msra.mxu0 0.0
  %105 = vmatprep.subr.mxu0 0.0
  %106 = vmatpush1.msra.mxu0 0.0
  %107 = vmatprep.subr.mxu0 0.0
  %108 = vmatpush1.msra.mxu0 0.0
  %109 = vmatprep.subr.mxu0 0.0
  %110 = vmatpush1.msra.mxu0 0.0
  %111 = vmatprep.subr.mxu0 0.0
  %112 = vmatpush1.msra.mxu0 0.0
  %113 = vmatprep.subr.mxu0 0.0
  %114 = vmatpush1.msra.mxu0 0.0
  %115 = vmatprep.subr.mxu0 0.0
  %116 = vmatpush1.msra.mxu0 0.0
  %117 = vmatprep.subr.mxu0 0.0
  %118 = vmatpush1.msra.mxu0 0.0
  %119 = vmatprep.subr.mxu0 0.0
  %120 = vmatpush1.msra.mxu0 0.0
  %121 = vmatprep.subr.mxu0 0.0
  %122 = vmatpush1.msra.mxu0 0.0
  %123 = vmatprep.subr.mxu0 0.0
  %124 = vmatpush1.msra.mxu0 0.0
  %125 = vmatprep.subr.mxu0 0.0
  %126 = vmatpush1.msra.mxu0 0.0
  %127 = vmatprep.subr.mxu0 0.0
  %128 = vmatpush1.msra.mxu0 0.0
  %129 = vmatprep.mubr.f32.mxu0 0.0
  %130 = vmatmul.mubr.f32.gmra.mrb[0].mxu0 %v22
  %v131 = vpop.f32.mrb[0].mxu0
  %v132 = vadd.f32 %v63, %v131
  %v133 = vpop.f32.mrb[0].mxu0
  %134 = vmatprep.mubr.f32.mxu0 0.0
  %135 = vmatmul.mubr.f32.gmra.mrb[0].mxu0 %v23
  %v136 = vpop.f32.mrb[0].mxu0
  %v137 = vadd.f32 %v63, %v136
  %v138 = vpop.f32.mrb[0].mxu0
  %139 = vmatprep.mubr.f32.mxu0 0.0
  %140 = vmatmul.mubr.f32.gmra.mrb[0].mxu0 %v24
  %v141 = vpop.f32.mrb[0].mxu0
  %v142 = vadd.f32 %v63, %v141
  %v143 = vpop.f32.mrb[0].mxu0
  %144 = vmatprep.mubr.f32.mxu0 0.0
  %145 = vmatmul.mubr.f32.gmra.mrb[0].mxu0 %v25
  %v146 = vpop.f32.mrb[0].mxu0
  %v147 = vadd.f32 %v63, %v146
  %v148 = vpop.f32.mrb[0].mxu0
  %149 = vmatprep.mubr.f32.mxu0 0.0
  %150 = vmatmul.mubr.f32.gmra.mrb[0].mxu0 %v26
  %v151 = vpop.f32.mrb[0].mxu0
  %v152 = vadd.f32 %v63, %v151
  %v153 = vpop.f32.mrb[0].mxu0
  %154 = vmatprep.mubr.f32.mxu0 0.0
  %155 = vmatmul.mubr.f32.gmra.mrb[0].mxu0 %v27
  %v156 = vpop.f32.mrb[0].mxu0
  %v157 = vadd.f32 %v63, %v156
  %v158 = vpop.f32.mrb[0].mxu0
  %159 = vmatprep.mubr.f32.mxu0 0.0
  %160 = vmatmul.mubr.f32.gmra.mrb[0].mxu0 %v28
  %v161 = vpop.f32.mrb[0].mxu0
  %v162 = vadd.f32 %v63, %v161
  %v163 = vpop.f32.mrb[0].mxu0
  %164 = vmatprep.mubr.f32.mxu0 0.0
  %165 = vmatmul.mubr.f32.gmra.mrb[0].mxu0 %v29
  %v166 = vpop.f32.mrb[0].mxu0
  %v167 = vadd.f32 %v63, %v166
  %v168 = vpop.f32.mrb[0].mxu0
  %169 = vmatprep.mubr.f32.mxu0 0.0
  %170 = vmatmul.mubr.f32.gmra.mrb[0].mxu0 %v30
  %v171 = vpop.f32.mrb[0].mxu0
  %v172 = vadd.f32 %v63, %v171
  %v173 = vpop.f32.mrb[0].mxu0
  %174 = vmatprep.mubr.f32.mxu0 0.0
  %175 = vmatmul.mubr.f32.gmra.mrb[0].mxu0 %v31
  %v176 = vpop.f32.mrb[0].mxu0
  %v177 = vadd.f32 %v63, %v176
  %v178 = vpop.f32.mrb[0].mxu0
  %179 = vmatprep.mubr.f32.mxu0 0.0
  %180 = vmatmul.mubr.f32.gmra.mrb[0].mxu0 %v32
  %v181 = vpop.f32.mrb[0].mxu0
  %v182 = vadd.f32 %v63, %v181
  %v183 = vpop.f32.mrb[0].mxu0
  %184 = vmatprep.mubr.f32.mxu0 0.0
  %185 = vmatmul.mubr.f32.gmra.mrb[0].mxu0 %v33
  %v186 = vpop.f32.mrb[0].mxu0
  %v187 = vadd.f32 %v63, %v186
  %v188 = vpop.f32.mrb[0].mxu0
  %189 = vmatprep.mubr.f32.mxu0 0.0
  %190 = vmatmul.mubr.f32.gmra.mrb[0].mxu0 %v34
  %v191 = vpop.f32.mrb[0].mxu0
  %v192 = vadd.f32 %v63, %v191
  %v193 = vpop.f32.mrb[0].mxu0
  %194 = vmatprep.mubr.f32.mxu0 0.0
  %195 = vmatmul.mubr.f32.gmra.mrb[0].mxu0 %v35
  %v196 = vpop.f32.mrb[0].mxu0
  %v197 = vadd.f32 %v63, %v196
  %v198 = vpop.f32.mrb[0].mxu0
  %199 = vmatprep.mubr.f32.mxu0 0.0
  %200 = vmatmul.mubr.f32.gmra.mrb[0].mxu0 %v36
  %v201 = vpop.f32.mrb[0].mxu0
  %v202 = vadd.f32 %v63, %v201
  %v203 = vpop.f32.mrb[0].mxu0
  %204 = vmatprep.mubr.f32.mxu0 0.0
  %205 = vmatmul.mubr.f32.gmra.mrb[0].mxu0 %v37
  %v206 = vpop.f32.mrb[0].mxu0
  %v207 = vadd.f32 %v63, %v206
  %v208 = vpop.f32.mrb[0].mxu0
  %209 = vmatprep.mubr.f32.mxu0 0.0
  %210 = vmatmul.mubr.f32.gmra.mrb[0].mxu0 %v38
  %v211 = vpop.f32.mrb[0].mxu0
  %v212 = vadd.f32 %v63, %v211
  %v213 = vpop.f32.mrb[0].mxu0
  %214 = vmatprep.mubr.f32.mxu0 0.0
  %215 = vmatmul.mubr.f32.gmra.mrb[0].mxu0 %v39
  %v216 = vpop.f32.mrb[0].mxu0
  %v217 = vadd.f32 %v63, %v216
  %v218 = vpop.f32.mrb[0].mxu0
  %219 = vmatprep.mubr.f32.mxu0 0.0
  %220 = vmatmul.mubr.f32.gmra.mrb[0].mxu0 %v40
  %v221 = vpop.f32.mrb[0].mxu0
  %v222 = vadd.f32 %v63, %v221
  %v223 = vpop.f32.mrb[0].mxu0
  %224 = vmatprep.mubr.f32.mxu0 0.0
  %225 = vmatmul.mubr.f32.gmra.mrb[0].mxu0 %v41
  %v226 = vpop.f32.mrb[0].mxu0
  %v227 = vadd.f32 %v63, %v226
  %v228 = vpop.f32.mrb[0].mxu0
  %229 = vdwg.mxu0
  %230 = vst [vmem:[%s5] sm:$0xff] %v132
  %231 = vst [vmem:[%s5 + $0x8] sm:$0xff] %v137
  %232 = vst [vmem:[%s5 + $0x10] sm:$0xff] %v142
  %233 = vst [vmem:[%s5 + $0x18] sm:$0xff] %v147
  %234 = vst [vmem:[%s5 + $0x20] sm:$0xff] %v152
  %235 = vst [vmem:[%s5 + $0x28] sm:$0xff] %v157
  %236 = vst [vmem:[%s5 + $0x30] sm:$0xff] %v162
  %237 = vst [vmem:[%s5 + $0x38] sm:$0xff] %v167
  %238 = vst [vmem:[%s5 + $0x40] sm:$0xff] %v172
  %239 = vst [vmem:[%s5 + $0x48] sm:$0xff] %v177
  %240 = vst [vmem:[%s5 + $0x50] sm:$0xff] %v182
  %241 = vst [vmem:[%s5 + $0x58] sm:$0xff] %v187
  %242 = vst [vmem:[%s5 + $0x60] sm:$0xff] %v192
  %243 = vst [vmem:[%s5 + $0x68] sm:$0xff] %v197
  %244 = vst [vmem:[%s5 + $0x70] sm:$0xff] %v202
  %245 = vst [vmem:[%s5 + $0x78] sm:$0xff] %v207
  %246 = vst [vmem:[%s5 + $0x80] sm:$0xff] %v212
  %247 = vst [vmem:[%s5 + $0x88] sm:$0xff] %v217
  %248 = vst [vmem:[%s5 + $0x90] sm:$0xff] %v222
  %249 = vst [vmem:[%s5 + $0x98] sm:$0xff] %v227
  %v250 = vld [vmem:[%s3] sm:$0xff]
  %v251 = vld [vmem:[%s3 + $0x8] sm:$0xff]
  %v252 = vld [vmem:[%s3 + $0x10] sm:$0xff]
  %v253 = vld [vmem:[%s3 + $0x18] sm:$0xff]
  %v254 = vld [vmem:[%s3 + $0x20] sm:$0xff]
  %v255 = vld [vmem:[%s3 + $0x28] sm:$0xff]
  %v256 = vld [vmem:[%s3 + $0x30] sm:$0xff]
  %v257 = vld [vmem:[%s3 + $0x38] sm:$0xff]
  %v258 = vld [vmem:[%s3 + $0x40] sm:$0xff]
  %v259 = vld [vmem:[%s3 + $0x48] sm:$0xff]
  %v260 = vld [vmem:[%s3 + $0x50] sm:$0xff]
  %v261 = vld [vmem:[%s3 + $0x58] sm:$0xff]
  %v262 = vld [vmem:[%s3 + $0x60] sm:$0xff]
  %v263 = vld [vmem:[%s3 + $0x68] sm:$0xff]
  %v264 = vld [vmem:[%s3 + $0x70] sm:$0xff]
  %v265 = vld [vmem:[%s3 + $0x78] sm:$0xff]
  %v266 = vld [vmem:[%s4] sm:$0x1]
  %v268 = vlaneseq
  %v269 = vshrl.u32 %v268, 7
  %v270 = vsub.s32 0, %v269
  %v271 = vrot.slane %v266, %v270
  %273 = vmatprep.subr.mxu0 0.0
  %274 = vmatpush1.msra.mxu0 %v250
  %275 = vmatprep.subr.mxu0 0.0
  %276 = vmatpush1.msra.mxu0 %v251
  %277 = vmatprep.subr.mxu0 0.0
  %278 = vmatpush1.msra.mxu0 %v252
  %279 = vmatprep.subr.mxu0 0.0
  %280 = vmatpush1.msra.mxu0 %v253
  %281 = vmatprep.subr.mxu0 0.0
  %282 = vmatpush1.msra.mxu0 %v254
  %283 = vmatprep.subr.mxu0 0.0
  %284 = vmatpush1.msra.mxu0 %v255
  %285 = vmatprep.subr.mxu0 0.0
  %286 = vmatpush1.msra.mxu0 %v256
  %287 = vmatprep.subr.mxu0 0.0
  %288 = vmatpush1.msra.mxu0 %v257
  %289 = vmatprep.subr.mxu0 0.0
  %290 = vmatpush1.msra.mxu0 %v258
  %291 = vmatprep.subr.mxu0 0.0
  %292 = vmatpush1.msra.mxu0 %v259
  %293 = vmatprep.subr.mxu0 0.0
  %294 = vmatpush1.msra.mxu0 %v260
  %295 = vmatprep.subr.mxu0 0.0
  %296 = vmatpush1.msra.mxu0 %v261
  %297 = vmatprep.subr.mxu0 0.0
  %298 = vmatpush1.msra.mxu0 %v262
  %299 = vmatprep.subr.mxu0 0.0
  %300 = vmatpush1.msra.mxu0 %v263
  %301 = vmatprep.subr.mxu0 0.0
  %302 = vmatpush1.msra.mxu0 %v264
  %303 = vmatprep.subr.mxu0 0.0
  %304 = vmatpush1.msra.mxu0 %v265
  %305 = vmatprep.subr.mxu0 0.0
  %306 = vmatpush1.msra.mxu0 0.0
  %307 = vmatprep.subr.mxu0 0.0
  %308 = vmatpush1.msra.mxu0 0.0
  %309 = vmatprep.subr.mxu0 0.0
  %310 = vmatpush1.msra.mxu0 0.0
  %311 = vmatprep.subr.mxu0 0.0
  %312 = vmatpush1.msra.mxu0 0.0
  %313 = vmatprep.subr.mxu0 0.0
  %314 = vmatpush1.msra.mxu0 0.0
  %315 = vmatprep.subr.mxu0 0.0
  %316 = vmatpush1.msra.mxu0 0.0
  %317 = vmatprep.subr.mxu0 0.0
  %318 = vmatpush1.msra.mxu0 0.0
  %319 = vmatprep.subr.mxu0 0.0
  %320 = vmatpush1.msra.mxu0 0.0
  %321 = vmatprep.subr.mxu0 0.0
  %322 = vmatpush1.msra.mxu0 0.0
  %323 = vmatprep.subr.mxu0 0.0
  %324 = vmatpush1.msra.mxu0 0.0
  %325 = vmatprep.subr.mxu0 0.0
  %326 = vmatpush1.msra.mxu0 0.0
  %327 = vmatprep.subr.mxu0 0.0
  %328 = vmatpush1.msra.mxu0 0.0
  %329 = vmatprep.subr.mxu0 0.0
  %330 = vmatpush1.msra.mxu0 0.0
  %331 = vmatprep.subr.mxu0 0.0
  %332 = vmatpush1.msra.mxu0 0.0
  %333 = vmatprep.subr.mxu0 0.0
  %334 = vmatpush1.msra.mxu0 0.0
  %335 = vmatprep.subr.mxu0 0.0
  %336 = vmatpush1.msra.mxu0 0.0
  %337 = vmatprep.mubr.f32.mxu0 0.0
  %338 = vmatmul.mubr.f32.gmra.mrb[0].mxu0 %v22
  %v339 = vpop.f32.mrb[0].mxu0
  %v340 = vadd.f32 %v271, %v339
  %v341 = vpop.f32.mrb[0].mxu0
  %342 = vmatprep.mubr.f32.mxu0 0.0
  %343 = vmatmul.mubr.f32.gmra.mrb[0].mxu0 %v23
  %v344 = vpop.f32.mrb[0].mxu0
  %v345 = vadd.f32 %v271, %v344
  %v346 = vpop.f32.mrb[0].mxu0
  %347 = vmatprep.mubr.f32.mxu0 0.0
  %348 = vmatmul.mubr.f32.gmra.mrb[0].mxu0 %v24
  %v349 = vpop.f32.mrb[0].mxu0
  %v350 = vadd.f32 %v271, %v349
  %v351 = vpop.f32.mrb[0].mxu0
  %352 = vmatprep.mubr.f32.mxu0 0.0
  %353 = vmatmul.mubr.f32.gmra.mrb[0].mxu0 %v25
  %v354 = vpop.f32.mrb[0].mxu0
  %v355 = vadd.f32 %v271, %v354
  %v356 = vpop.f32.mrb[0].mxu0
  %357 = vmatprep.mubr.f32.mxu0 0.0
  %358 = vmatmul.mubr.f32.gmra.mrb[0].mxu0 %v26
  %v359 = vpop.f32.mrb[0].mxu0
  %v360 = vadd.f32 %v271, %v359
  %v361 = vpop.f32.mrb[0].mxu0
  %362 = vmatprep.mubr.f32.mxu0 0.0
  %363 = vmatmul.mubr.f32.gmra.mrb[0].mxu0 %v27
  %v364 = vpop.f32.mrb[0].mxu0
  %v365 = vadd.f32 %v271, %v364
  %v366 = vpop.f32.mrb[0].mxu0
  %367 = vmatprep.mubr.f32.mxu0 0.0
  %368 = vmatmul.mubr.f32.gmra.mrb[0].mxu0 %v28
  %v369 = vpop.f32.mrb[0].mxu0
  %v370 = vadd.f32 %v271, %v369
  %v371 = vpop.f32.mrb[0].mxu0
  %372 = vmatprep.mubr.f32.mxu0 0.0
  %373 = vmatmul.mubr.f32.gmra.mrb[0].mxu0 %v29
  %v374 = vpop.f32.mrb[0].mxu0
  %v375 = vadd.f32 %v271, %v374
  %v376 = vpop.f32.mrb[0].mxu0
  %377 = vmatprep.mubr.f32.mxu0 0.0
  %378 = vmatmul.mubr.f32.gmra.mrb[0].mxu0 %v30
  %v379 = vpop.f32.mrb[0].mxu0
  %v380 = vadd.f32 %v271, %v379
  %v381 = vpop.f32.mrb[0].mxu0
  %382 = vmatprep.mubr.f32.mxu0 0.0
  %383 = vmatmul.mubr.f32.gmra.mrb[0].mxu0 %v31
  %v384 = vpop.f32.mrb[0].mxu0
  %v385 = vadd.f32 %v271, %v384
  %v386 = vpop.f32.mrb[0].mxu0
  %387 = vmatprep.mubr.f32.mxu0 0.0
  %388 = vmatmul.mubr.f32.gmra.mrb[0].mxu0 %v32
  %v389 = vpop.f32.mrb[0].mxu0
  %v390 = vadd.f32 %v271, %v389
  %v391 = vpop.f32.mrb[0].mxu0
  %392 = vmatprep.mubr.f32.mxu0 0.0
  %393 = vmatmul.mubr.f32.gmra.mrb[0].mxu0 %v33
  %v394 = vpop.f32.mrb[0].mxu0
  %v395 = vadd.f32 %v271, %v394
  %v396 = vpop.f32.mrb[0].mxu0
  %397 = vmatprep.mubr.f32.mxu0 0.0
  %398 = vmatmul.mubr.f32.gmra.mrb[0].mxu0 %v34
  %v399 = vpop.f32.mrb[0].mxu0
  %v400 = vadd.f32 %v271, %v399
  %v401 = vpop.f32.mrb[0].mxu0
  %402 = vmatprep.mubr.f32.mxu0 0.0
  %403 = vmatmul.mubr.f32.gmra.mrb[0].mxu0 %v35
  %v404 = vpop.f32.mrb[0].mxu0
  %v405 = vadd.f32 %v271, %v404
  %v406 = vpop.f32.mrb[0].mxu0
  %407 = vmatprep.mubr.f32.mxu0 0.0
  %408 = vmatmul.mubr.f32.gmra.mrb[0].mxu0 %v36
  %v409 = vpop.f32.mrb[0].mxu0
  %v410 = vadd.f32 %v271, %v409
  %v411 = vpop.f32.mrb[0].mxu0
  %412 = vmatprep.mubr.f32.mxu0 0.0
  %413 = vmatmul.mubr.f32.gmra.mrb[0].mxu0 %v37
  %v414 = vpop.f32.mrb[0].mxu0
  %v415 = vadd.f32 %v271, %v414
  %v416 = vpop.f32.mrb[0].mxu0
  %417 = vmatprep.mubr.f32.mxu0 0.0
  %418 = vmatmul.mubr.f32.gmra.mrb[0].mxu0 %v38
  %v419 = vpop.f32.mrb[0].mxu0
  %v420 = vadd.f32 %v271, %v419
  %v421 = vpop.f32.mrb[0].mxu0
  %422 = vmatprep.mubr.f32.mxu0 0.0
  %423 = vmatmul.mubr.f32.gmra.mrb[0].mxu0 %v39
  %v424 = vpop.f32.mrb[0].mxu0
  %v425 = vadd.f32 %v271, %v424
  %v426 = vpop.f32.mrb[0].mxu0
  %427 = vmatprep.mubr.f32.mxu0 0.0
  %428 = vmatmul.mubr.f32.gmra.mrb[0].mxu0 %v40
  %v429 = vpop.f32.mrb[0].mxu0
  %v430 = vadd.f32 %v271, %v429
  %v431 = vpop.f32.mrb[0].mxu0
  %432 = vmatprep.mubr.f32.mxu0 0.0
  %433 = vmatmul.mubr.f32.gmra.mrb[0].mxu0 %v41
  %v434 = vpop.f32.mrb[0].mxu0
  %v435 = vadd.f32 %v271, %v434
  %v436 = vpop.f32.mrb[0].mxu0
  %437 = vdwg.mxu0
  %438 = vst [vmem:[%s6] sm:$0xff] %v340
  %439 = vst [vmem:[%s6 + $0x8] sm:$0xff] %v345
  %440 = vst [vmem:[%s6 + $0x10] sm:$0xff] %v350
  %441 = vst [vmem:[%s6 + $0x18] sm:$0xff] %v355
  %442 = vst [vmem:[%s6 + $0x20] sm:$0xff] %v360
  %443 = vst [vmem:[%s6 + $0x28] sm:$0xff] %v365
  %444 = vst [vmem:[%s6 + $0x30] sm:$0xff] %v370
  %445 = vst [vmem:[%s6 + $0x38] sm:$0xff] %v375
  %446 = vst [vmem:[%s6 + $0x40] sm:$0xff] %v380
  %447 = vst [vmem:[%s6 + $0x48] sm:$0xff] %v385
  %448 = vst [vmem:[%s6 + $0x50] sm:$0xff] %v390
  %449 = vst [vmem:[%s6 + $0x58] sm:$0xff] %v395
  %450 = vst [vmem:[%s6 + $0x60] sm:$0xff] %v400
  %451 = vst [vmem:[%s6 + $0x68] sm:$0xff] %v405
  %452 = vst [vmem:[%s6 + $0x70] sm:$0xff] %v410
  %453 = vst [vmem:[%s6 + $0x78] sm:$0xff] %v415
  %454 = vst [vmem:[%s6 + $0x80] sm:$0xff] %v420
  %455 = vst [vmem:[%s6 + $0x88] sm:$0xff] %v425
  %456 = vst [vmem:[%s6 + $0x90] sm:$0xff] %v430
  %457 = vst [vmem:[%s6 + $0x98] sm:$0xff] %v435
  // Predicated region
  $region22: #{fwd.5} parent=0 // pred_check
    _
  $region23: #{fwd.5} parent=0 // pred_check_branch
    %459 = sbr.rel (0) target = $region25
  $region24: #{fwd.5} parent=0 // pred_region
    _
  $region25: #{fwd.5} parent=0 // pred_fallthru
    _
  // Predicated region
  $region26: #{fwd.5} parent=0 // pred_check
    _
  $region27: #{fwd.5} parent=0 // pred_check_branch
    %461 = sbr.rel (0) target = $region29
  $region28: #{fwd.5} parent=0 // pred_region
    _
  $region29: #{fwd.5} parent=0 // pred_fallthru
    _
  // Predicated region
  $region30: #{fwd.5} parent=0 // pred_check
    _
  $region31: #{fwd.5} parent=0 // pred_check_branch
    %463 = sbr.rel (0) target = $region33
  $region32: #{fwd.5} parent=0 // pred_region
    _
  $region33: #{fwd.5} parent=0 // pred_fallthru
    _
  // Predicated region
  $region34: #{fwd.5} parent=0 // pred_check
    _
  $region35: #{fwd.5} parent=0 // pred_check_branch
    %465 = sbr.rel (0) target = $region37
  $region36: #{fwd.5} parent=0 // pred_region
    _
  $region37: #{fwd.5} parent=0 // pred_fallthru
    _

// kernel: fwd.7
$region0: #{fwd.7}
  #allocation0 [shape = 'u32[]', space=smem, size = 0x4, offset = 0x4, fixed_abs, tag = 'smem constant byte address 0x4 - core index']
  #allocation1 [shape = 'u32[144,128]{1,0:T(1,128)}', space=vmem, size = 0x12000, scoped, tag = 'internal scratch']
  %s0 = inlined_call_operand.vmem [shape: f32[2,16,128], index: 0, kind: input, shape index: {}]
  %s1 = inlined_call_operand.vmem [shape: f32[2,16,128], index: 1, kind: input, shape index: {}]
  %s2 = inlined_call_operand.vmem [shape: f32[2,128,128], index: 2, kind: input, shape index: {}]
  %s3 = inlined_call_operand.vmem [shape: f32[2,1,128], index: 3, kind: input, shape index: {}]
  %s4 = inlined_call_operand.vmem [shape: f32[2,1,128], index: 4, kind: input, shape index: {}]
  %s5 = inlined_call_operand.vmem [shape: f32[2,1,128], index: 5, kind: input, shape index: {}]
  %s6 = inlined_call_operand.vmem [shape: f32[2,128,256], index: 6, kind: input, shape index: {}]
  %s7 = inlined_call_operand.vmem [shape: f32[2,1,256], index: 7, kind: input, shape index: {}]
  %s8 = inlined_call_operand.vmem [shape: f32[2,256,128], index: 8, kind: input, shape index: {}]
  %s9 = inlined_call_operand.vmem [shape: f32[2,1,128], index: 9, kind: input, shape index: {}]
  %s10 = inlined_call_operand.vmem [shape: f32[2,1,128], index: 10, kind: input, shape index: {}]
  %s11 = inlined_call_operand.vmem [shape: f32[2,1,128], index: 11, kind: input, shape index: {}]
  %s12 = inlined_call_operand.vmem [shape: f32[2,16,128], index: 12, kind: output, shape index: {}]
  %s13 = sld [smem:[#allocation0]]
  $region81: #{fwd.7} parent=0
    _
  %s15 = ssub.s32 1, %s13
  %s16 = scalar_select 0, %s15, %s13
  loop: start=0, step=1, limit=4
  $region2: #{fwd.7} parent=0 // loop_pre_header
    _
  $region3: #{fwd.7} parent=0 // loop_header
    %s18 = sphi 0, %s22
    %p19 = scmp.ge.s32.totalorder %s18, 4
    %s25 = sphi 0, %s37
    %s26 = sphi 0, %s33
    %s27 = sphi 0, %s25
    %s28 = sphi 0, %s26
    %s29 = sphi 0, %s27
    %s30 = sphi 0, %s28
    %s42 = sphi 0, %s44
    %s45 = sphi 0, %s42
    %s46 = sphi 0, %s45
    %s62 = sphi 0, %s46
    %s70 = sphi 0, %s72
    %s73 = sphi 0, %s70
    %s74 = sphi 0, %s73
    %s90 = sphi 0, %s74
    %s96 = sphi 0, %s98
    %s99 = sphi 0, %s96
    %s100 = sphi 0, %s99
    %s116 = sphi 0, %s100
    %s122 = sphi 0, %s124
    %s125 = sphi 0, %s122
    %s126 = sphi 0, %s125
    %s142 = sphi 0, %s126
    %s148 = sphi 0, %s150
    %s151 = sphi 0, %s148
    %s152 = sphi 0, %s151
    %s168 = sphi 0, %s152
    %s174 = sphi 0, %s176
    %s177 = sphi 0, %s174
    %s178 = sphi 0, %s177
    %s194 = sphi 0, %s178
    %s200 = sphi 0, %s202
    %s203 = sphi 0, %s200
    %s204 = sphi 0, %s203
    %s220 = sphi 0, %s204
    %s226 = sphi 0, %s228
    %s229 = sphi 0, %s226
    %s230 = sphi 0, %s229
    %s246 = sphi 0, %s230
    %s252 = sphi 0, %s254
    %s255 = sphi 0, %s252
    %s256 = sphi 0, %s255
    %s272 = sphi 0, %s256
    %s278 = sphi 0, %s280
    %s281 = sphi 0, %s278
    %s282 = sphi 0, %s281
    %s298 = sphi 0, %s282
    %s304 = sphi 0, %s306
    %s307 = sphi 0, %s304
    %s308 = sphi 0, %s307
    %s324 = sphi 0, %s308
    %s330 = sphi 0, %s332
    %s333 = sphi 0, %s330
    %s334 = sphi 0, %s333
    %s350 = sphi 0, %s334
    %s358 = sphi 0, %s360
    %s361 = sphi 0, %s358
    %s362 = sphi 0, %s361
    %s378 = sphi 0, %s362
  $region4: #{fwd.7} parent=0 // loop_header_branch
    %21 = sbr.rel (%p19) target = $region8
  $region5: #{fwd.7} parent=0 // loop_body
    %s23 = ssub.s32 %s18, 1
    %s24 = ssub.s32 %s18, 2
    %s31 = sadd.s32 1, %s26
    %p32 = scmp.ge.s32.totalorder %s31, 1
    %s33 = scalar_select %p32, 0, %s31
    %s34 = sadd.s32 1, %s25
    %s35 = scalar_select %p32, %s34, %s25
    %p36 = scmp.ge.s32.totalorder %s35, 2
    %s37 = scalar_select %p36, 0, %s35
    %s38 = ssub.s32 %s25, %s37
    %s39 = ssub.s32 %s26, %s33
    %s40 = sor.u32 %s38, %s39
    %p41 = scmp.eq.s32.totalorder %s40, 0
    %s43 = sadd.s32 %s42, 1
    %s44 = scalar_select %p41, %s42, %s43
    %p47 = pneg %p41
    %p48 = scmp.eq.s32.totalorder %s18, 1
    %p49 = por %p47, %p48
    %p50 = scmp.ne.s32.totalorder %s42, %s45
    %p51 = scmp.eq.s32.totalorder %s18, 0
    %p52 = por %p50, %p51
    %p53 = scmp.ne.s32.totalorder %s42, %s45
    %p54 = scmp.eq.s32.totalorder %s23, 1
    %p55 = por %p53, %p54
    %p56 = scmp.ne.s32.totalorder %s45, %s46
    %p57 = scmp.eq.s32.totalorder %s23, 0
    %p58 = por %p56, %p57
    %p59 = scmp.ne.s32.totalorder %s45, %s46
    %p60 = scmp.eq.s32.totalorder %s24, 1
    %p61 = por %p59, %p60
    %p63 = scmp.ne.s32.totalorder %s46, %s62
    %p64 = scmp.eq.s32.totalorder %s24, 0
    %p65 = por %p63, %p64
    %s66 = ssub.s32 %s25, %s37
    %s67 = ssub.s32 %s26, %s33
    %s68 = sor.u32 %s66, %s67
    %p69 = scmp.eq.s32.totalorder %s68, 0
    %s71 = sadd.s32 %s70, 1
    %s72 = scalar_select %p69, %s70, %s71
    %p75 = pneg %p69
    %p76 = scmp.eq.s32.totalorder %s18, 1
    %p77 = por %p75, %p76
    %p78 = scmp.ne.s32.totalorder %s70, %s73
    %p79 = scmp.eq.s32.totalorder %s18, 0
    %p80 = por %p78, %p79
    %p81 = scmp.ne.s32.totalorder %s70, %s73
    %p82 = scmp.eq.s32.totalorder %s23, 1
    %p83 = por %p81, %p82
    %p84 = scmp.ne.s32.totalorder %s73, %s74
    %p85 = scmp.eq.s32.totalorder %s23, 0
    %p86 = por %p84, %p85
    %p87 = scmp.ne.s32.totalorder %s73, %s74
    %p88 = scmp.eq.s32.totalorder %s24, 1
    %p89 = por %p87, %p88
    %p91 = scmp.ne.s32.totalorder %s74, %s90
    %p92 = scmp.eq.s32.totalorder %s24, 0
    %p93 = por %p91, %p92
    %s94 = ssub.s32 %s25, %s37
    %p95 = scmp.eq.s32.totalorder %s94, 0
    %s97 = sadd.s32 %s96, 1
    %s98 = scalar_select %p95, %s96, %s97
    %p101 = pneg %p95
    %p102 = scmp.eq.s32.totalorder %s18, 1
    %p103 = por %p101, %p102
    %p104 = scmp.ne.s32.totalorder %s96, %s99
    %p105 = scmp.eq.s32.totalorder %s18, 0
    %p106 = por %p104, %p105
    %p107 = scmp.ne.s32.totalorder %s96, %s99
    %p108 = scmp.eq.s32.totalorder %s23, 1
    %p109 = por %p107, %p108
    %p110 = scmp.ne.s32.totalorder %s99, %s100
    %p111 = scmp.eq.s32.totalorder %s23, 0
    %p112 = por %p110, %p111
    %p113 = scmp.ne.s32.totalorder %s99, %s100
    %p114 = scmp.eq.s32.totalorder %s24, 1
    %p115 = por %p113, %p114
    %p117 = scmp.ne.s32.totalorder %s100, %s116
    %p118 = scmp.eq.s32.totalorder %s24, 0
    %p119 = por %p117, %p118
    %s120 = ssub.s32 %s25, %s37
    %p121 = scmp.eq.s32.totalorder %s120, 0
    %s123 = sadd.s32 %s122, 1
    %s124 = scalar_select %p121, %s122, %s123
    %p127 = pneg %p121
    %p128 = scmp.eq.s32.totalorder %s18, 1
    %p129 = por %p127, %p128
    %p130 = scmp.ne.s32.totalorder %s122, %s125
    %p131 = scmp.eq.s32.totalorder %s18, 0
    %p132 = por %p130, %p131
    %p133 = scmp.ne.s32.totalorder %s122, %s125
    %p134 = scmp.eq.s32.totalorder %s23, 1
    %p135 = por %p133, %p134
    %p136 = scmp.ne.s32.totalorder %s125, %s126
    %p137 = scmp.eq.s32.totalorder %s23, 0
    %p138 = por %p136, %p137
    %p139 = scmp.ne.s32.totalorder %s125, %s126
    %p140 = scmp.eq.s32.totalorder %s24, 1
    %p141 = por %p139, %p140
    %p143 = scmp.ne.s32.totalorder %s126, %s142
    %p144 = scmp.eq.s32.totalorder %s24, 0
    %p145 = por %p143, %p144
    %s146 = ssub.s32 %s25, %s37
    %p147 = scmp.eq.s32.totalorder %s146, 0
    %s149 = sadd.s32 %s148, 1
    %s150 = scalar_select %p147, %s148, %s149
    %p153 = pneg %p147
    %p154 = scmp.eq.s32.totalorder %s18, 1
    %p155 = por %p153, %p154
    %p156 = scmp.ne.s32.totalorder %s148, %s151
    %p157 = scmp.eq.s32.totalorder %s18, 0
    %p158 = por %p156, %p157
    %p159 = scmp.ne.s32.totalorder %s148, %s151
    %p160 = scmp.eq.s32.totalorder %s23, 1
    %p161 = por %p159, %p160
    %p162 = scmp.ne.s32.totalorder %s151, %s152
    %p163 = scmp.eq.s32.totalorder %s23, 0
    %p164 = por %p162, %p163
    %p165 = scmp.ne.s32.totalorder %s151, %s152
    %p166 = scmp.eq.s32.totalorder %s24, 1
    %p167 = por %p165, %p166
    %p169 = scmp.ne.s32.totalorder %s152, %s168
    %p170 = scmp.eq.s32.totalorder %s24, 0
    %p171 = por %p169, %p170
    %s172 = ssub.s32 %s25, %s37
    %p173 = scmp.eq.s32.totalorder %s172, 0
    %s175 = sadd.s32 %s174, 1
    %s176 = scalar_select %p173, %s174, %s175
    %p179 = pneg %p173
    %p180 = scmp.eq.s32.totalorder %s18, 1
    %p181 = por %p179, %p180
    %p182 = scmp.ne.s32.totalorder %s174, %s177
    %p183 = scmp.eq.s32.totalorder %s18, 0
    %p184 = por %p182, %p183
    %p185 = scmp.ne.s32.totalorder %s174, %s177
    %p186 = scmp.eq.s32.totalorder %s23, 1
    %p187 = por %p185, %p186
    %p188 = scmp.ne.s32.totalorder %s177, %s178
    %p189 = scmp.eq.s32.totalorder %s23, 0
    %p190 = por %p188, %p189
    %p191 = scmp.ne.s32.totalorder %s177, %s178
    %p192 = scmp.eq.s32.totalorder %s24, 1
    %p193 = por %p191, %p192
    %p195 = scmp.ne.s32.totalorder %s178, %s194
    %p196 = scmp.eq.s32.totalorder %s24, 0
    %p197 = por %p195, %p196
    %s198 = ssub.s32 %s25, %s37
    %p199 = scmp.eq.s32.totalorder %s198, 0
    %s201 = sadd.s32 %s200, 1
    %s202 = scalar_select %p199, %s200, %s201
    %p205 = pneg %p199
    %p206 = scmp.eq.s32.totalorder %s18, 1
    %p207 = por %p205, %p206
    %p208 = scmp.ne.s32.totalorder %s200, %s203
    %p209 = scmp.eq.s32.totalorder %s18, 0
    %p210 = por %p208, %p209
    %p211 = scmp.ne.s32.totalorder %s200, %s203
    %p212 = scmp.eq.s32.totalorder %s23, 1
    %p213 = por %p211, %p212
    %p214 = scmp.ne.s32.totalorder %s203, %s204
    %p215 = scmp.eq.s32.totalorder %s23, 0
    %p216 = por %p214, %p215
    %p217 = scmp.ne.s32.totalorder %s203, %s204
    %p218 = scmp.eq.s32.totalorder %s24, 1
    %p219 = por %p217, %p218
    %p221 = scmp.ne.s32.totalorder %s204, %s220
    %p222 = scmp.eq.s32.totalorder %s24, 0
    %p223 = por %p221, %p222
    %s224 = ssub.s32 %s25, %s37
    %p225 = scmp.eq.s32.totalorder %s224, 0
    %s227 = sadd.s32 %s226, 1
    %s228 = scalar_select %p225, %s226, %s227
    %p231 = pneg %p225
    %p232 = scmp.eq.s32.totalorder %s18, 1
    %p233 = por %p231, %p232
    %p234 = scmp.ne.s32.totalorder %s226, %s229
    %p235 = scmp.eq.s32.totalorder %s18, 0
    %p236 = por %p234, %p235
    %p237 = scmp.ne.s32.totalorder %s226, %s229
    %p238 = scmp.eq.s32.totalorder %s23, 1
    %p239 = por %p237, %p238
    %p240 = scmp.ne.s32.totalorder %s229, %s230
    %p241 = scmp.eq.s32.totalorder %s23, 0
    %p242 = por %p240, %p241
    %p243 = scmp.ne.s32.totalorder %s229, %s230
    %p244 = scmp.eq.s32.totalorder %s24, 1
    %p245 = por %p243, %p244
    %p247 = scmp.ne.s32.totalorder %s230, %s246
    %p248 = scmp.eq.s32.totalorder %s24, 0
    %p249 = por %p247, %p248
    %s250 = ssub.s32 %s25, %s37
    %p251 = scmp.eq.s32.totalorder %s250, 0
    %s253 = sadd.s32 %s252, 1
    %s254 = scalar_select %p251, %s252, %s253
    %p257 = pneg %p251
    %p258 = scmp.eq.s32.totalorder %s18, 1
    %p259 = por %p257, %p258
    %p260 = scmp.ne.s32.totalorder %s252, %s255
    %p261 = scmp.eq.s32.totalorder %s18, 0
    %p262 = por %p260, %p261
    %p263 = scmp.ne.s32.totalorder %s252, %s255
    %p264 = scmp.eq.s32.totalorder %s23, 1
    %p265 = por %p263, %p264
    %p266 = scmp.ne.s32.totalorder %s255, %s256
    %p267 = scmp.eq.s32.totalorder %s23, 0
    %p268 = por %p266, %p267
    %p269 = scmp.ne.s32.totalorder %s255, %s256
    %p270 = scmp.eq.s32.totalorder %s24, 1
    %p271 = por %p269, %p270
    %p273 = scmp.ne.s32.totalorder %s256, %s272
    %p274 = scmp.eq.s32.totalorder %s24, 0
    %p275 = por %p273, %p274
    %s276 = ssub.s32 %s25, %s37
    %p277 = scmp.eq.s32.totalorder %s276, 0
    %s279 = sadd.s32 %s278, 1
    %s280 = scalar_select %p277, %s278, %s279
    %p283 = pneg %p277
    %p284 = scmp.eq.s32.totalorder %s18, 1
    %p285 = por %p283, %p284
    %p286 = scmp.ne.s32.totalorder %s278, %s281
    %p287 = scmp.eq.s32.totalorder %s18, 0
    %p288 = por %p286, %p287
    %p289 = scmp.ne.s32.totalorder %s278, %s281
    %p290 = scmp.eq.s32.totalorder %s23, 1
    %p291 = por %p289, %p290
    %p292 = scmp.ne.s32.totalorder %s281, %s282
    %p293 = scmp.eq.s32.totalorder %s23, 0
    %p294 = por %p292, %p293
    %p295 = scmp.ne.s32.totalorder %s281, %s282
    %p296 = scmp.eq.s32.totalorder %s24, 1
    %p297 = por %p295, %p296
    %p299 = scmp.ne.s32.totalorder %s282, %s298
    %p300 = scmp.eq.s32.totalorder %s24, 0
    %p301 = por %p299, %p300
    %s302 = ssub.s32 %s25, %s37
    %p303 = scmp.eq.s32.totalorder %s302, 0
    %s305 = sadd.s32 %s304, 1
    %s306 = scalar_select %p303, %s304, %s305
    %p309 = pneg %p303
    %p310 = scmp.eq.s32.totalorder %s18, 1
    %p311 = por %p309, %p310
    %p312 = scmp.ne.s32.totalorder %s304, %s307
    %p313 = scmp.eq.s32.totalorder %s18, 0
    %p314 = por %p312, %p313
    %p315 = scmp.ne.s32.totalorder %s304, %s307
    %p316 = scmp.eq.s32.totalorder %s23, 1
    %p317 = por %p315, %p316
    %p318 = scmp.ne.s32.totalorder %s307, %s308
    %p319 = scmp.eq.s32.totalorder %s23, 0
    %p320 = por %p318, %p319
    %p321 = scmp.ne.s32.totalorder %s307, %s308
    %p322 = scmp.eq.s32.totalorder %s24, 1
    %p323 = por %p321, %p322
    %p325 = scmp.ne.s32.totalorder %s308, %s324
    %p326 = scmp.eq.s32.totalorder %s24, 0
    %p327 = por %p325, %p326
    %s328 = ssub.s32 %s25, %s37
    %p329 = scmp.eq.s32.totalorder %s328, 0
    %s331 = sadd.s32 %s330, 1
    %s332 = scalar_select %p329, %s330, %s331
    %p335 = pneg %p329
    %p336 = scmp.eq.s32.totalorder %s18, 1
    %p337 = por %p335, %p336
    %p338 = scmp.ne.s32.totalorder %s330, %s333
    %p339 = scmp.eq.s32.totalorder %s18, 0
    %p340 = por %p338, %p339
    %p341 = scmp.ne.s32.totalorder %s330, %s333
    %p342 = scmp.eq.s32.totalorder %s23, 1
    %p343 = por %p341, %p342
    %p344 = scmp.ne.s32.totalorder %s333, %s334
    %p345 = scmp.eq.s32.totalorder %s23, 0
    %p346 = por %p344, %p345
    %p347 = scmp.ne.s32.totalorder %s333, %s334
    %p348 = scmp.eq.s32.totalorder %s24, 1
    %p349 = por %p347, %p348
    %p351 = scmp.ne.s32.totalorder %s334, %s350
    %p352 = scmp.eq.s32.totalorder %s24, 0
    %p353 = por %p351, %p352
    %s354 = ssub.s32 %s25, %s37
    %s355 = ssub.s32 %s26, %s33
    %s356 = sor.u32 %s354, %s355
    %p357 = scmp.eq.s32.totalorder %s356, 0
    %s359 = sadd.s32 %s358, 1
    %s360 = scalar_select %p357, %s358, %s359
    %p363 = pneg %p357
    %p364 = scmp.eq.s32.totalorder %s18, 1
    %p365 = por %p363, %p364
    %p366 = scmp.ne.s32.totalorder %s358, %s361
    %p367 = scmp.eq.s32.totalorder %s18, 0
    %p368 = por %p366, %p367
    %p369 = scmp.ne.s32.totalorder %s358, %s361
    %p370 = scmp.eq.s32.totalorder %s23, 1
    %p371 = por %p369, %p370
    %p372 = scmp.ne.s32.totalorder %s361, %s362
    %p373 = scmp.eq.s32.totalorder %s23, 0
    %p374 = por %p372, %p373
    %p375 = scmp.ne.s32.totalorder %s361, %s362
    %p376 = scmp.eq.s32.totalorder %s24, 1
    %p377 = por %p375, %p376
    %p379 = scmp.ne.s32.totalorder %s362, %s378
    %p380 = scmp.eq.s32.totalorder %s24, 0
    %p381 = por %p379, %p380
    %p382 = scmp.le.s32.totalorder 1, %s18
    %p383 = scmp.lt.s32.totalorder %s18, 3
    %p384 = pnand %p382, %p383
    %p385 = pneg %p384
    // Predicated region
    $region9: #{fwd.7} parent=5 // pred_check
      _
    $region10: #{fwd.7} parent=5 // pred_check_branch
      %387 = sbr.rel (%p384) target = $region12
    $region11: #{fwd.7} parent=5 // pred_region
      %s388 = ssub.s32 %s18, 1
    $region12: #{fwd.7} parent=5 // pred_fallthru
      _
    %p389 = scmp.lt.s32.totalorder %s18, 2
    // Predicated region
    $region13: #{fwd.7} parent=5 // pred_check
      %p390 = pneg %p389
    $region14: #{fwd.7} parent=5 // pred_check_branch
      %392 = sbr.rel (%p390) target = $region16
    $region15: #{fwd.7} parent=5 // pred_region
      // Predicated region
      $region17: #{fwd.7} parent=15 // pred_check
        %p393 = pneg %p52
      $region18: #{fwd.7} parent=15 // pred_check_branch
        %395 = sbr.rel (%p393) target = $region20
      $region19: #{fwd.7} parent=15 // pred_region
        %s396 = smul.u32 2, %s26
        %p397 = scmp.lt.s32.totalorder %s25, 1
        %s398 = scalar_select %p397, %s25, 1
        %p399 = scmp.lt.s32.totalorder %s396, 1
        %s400 = scalar_select %p399, %s396, 1
        %s401 = smul.addr %s398, 2
        %s402 = sadd.s32 %s400, %s401
        %s403 = smul.addr %s402, 8
        %s404 = scalar_lea.vmem %s0, %s403
        %s405 = smul.u32 2, %s26
      $region20: #{fwd.7} parent=15 // pred_fallthru
        _
      // Predicated region
      $region21: #{fwd.7} parent=15 // pred_check
        %p406 = pneg %p80
      $region22: #{fwd.7} parent=15 // pred_check_branch
        %408 = sbr.rel (%p406) target = $region24
      $region23: #{fwd.7} parent=15 // pred_region
        %s409 = smul.u32 2, %s26
        %p410 = scmp.lt.s32.totalorder %s25, 1
        %s411 = scalar_select %p410, %s25, 1
        %p412 = scmp.lt.s32.totalorder %s409, 1
        %s413 = scalar_select %p412, %s409, 1
        %s414 = smul.addr %s411, 2
        %s415 = sadd.s32 %s413, %s414
        %s416 = smul.addr %s415, 8
        %s417 = scalar_lea.vmem %s1, %s416
        %s418 = smul.u32 2, %s26
      $region24: #{fwd.7} parent=15 // pred_fallthru
        _
      // Predicated region
      $region25: #{fwd.7} parent=15 // pred_check
        %p419 = pneg %p106
      $region26: #{fwd.7} parent=15 // pred_check_branch
        %421 = sbr.rel (%p419) target = $region28
      $region27: #{fwd.7} parent=15 // pred_region
        %p422 = scmp.lt.s32.totalorder %s25, 1
        %s423 = scalar_select %p422, %s25, 1
        %s424 = smul.addr %s423, 16
        %s425 = smul.addr %s424, 8
        %s426 = scalar_lea.vmem %s2, %s425
      $region28: #{fwd.7} parent=15 // pred_fallthru
        _
      // Predicated region
      $region29: #{fwd.7} parent=15 // pred_check
        %p427 = pneg %p132
      $region30: #{fwd.7} parent=15 // pred_check_branch
        %429 = sbr.rel (%p427) target = $region32
      $region31: #{fwd.7} parent=15 // pred_region
        %p430 = scmp.lt.s32.totalorder %s25, 1
        %s431 = scalar_select %p430, %s25, 1
        %s432 = scalar_lea.vmem %s3, %s431
      $region32: #{fwd.7} parent=15 // pred_fallthru
        _
      // Predicated region
      $region33: #{fwd.7} parent=15 // pred_check
        %p433 = pneg %p158
      $region34: #{fwd.7} parent=15 // pred_check_branch
        %435 = sbr.rel (%p433) target = $region36
      $region35: #{fwd.7} parent=15 // pred_region
        %p436 = scmp.lt.s32.totalorder %s25, 1
        %s437 = scalar_select %p436, %s25, 1
        %s438 = scalar_lea.vmem %s4, %s437
      $region36: #{fwd.7} parent=15 // pred_fallthru
        _
      // Predicated region
      $region37: #{fwd.7} parent=15 // pred_check
        %p439 = pneg %p184
      $region38: #{fwd.7} parent=15 // pred_check_branch
        %441 = sbr.rel (%p439) target = $region40
      $region39: #{fwd.7} parent=15 // pred_region
        %p442 = scmp.lt.s32.totalorder %s25, 1
        %s443 = scalar_select %p442, %s25, 1
        %s444 = scalar_lea.vmem %s5, %s443
      $region40: #{fwd.7} parent=15 // pred_fallthru
        _
      // Predicated region
      $region41: #{fwd.7} parent=15 // pred_check
        %p445 = pneg %p210
      $region42: #{fwd.7} parent=15 // pred_check_branch
        %447 = sbr.rel (%p445) target = $region44
      $region43: #{fwd.7} parent=15 // pred_region
        %p448 = scmp.lt.s32.totalorder %s25, 1
        %s449 = scalar_select %p448, %s25, 1
        %s450 = smul.addr %s449, 32
        %s451 = smul.addr %s450, 8
        %s452 = scalar_lea.vmem %s6, %s451
      $region44: #{fwd.7} parent=15 // pred_fallthru
        _
      // Predicated region
      $region45: #{fwd.7} parent=15 // pred_check
        %p453 = pneg %p236
      $region46: #{fwd.7} parent=15 // pred_check_branch
        %455 = sbr.rel (%p453) target = $region48
      $region47: #{fwd.7} parent=15 // pred_region
        %p456 = scmp.lt.s32.totalorder %s25, 1
        %s457 = scalar_select %p456, %s25, 1
        %s458 = smul.addr %s457, 2
        %s459 = scalar_lea.vmem %s7, %s458
      $region48: #{fwd.7} parent=15 // pred_fallthru
        _
      // Predicated region
      $region49: #{fwd.7} parent=15 // pred_check
        %p460 = pneg %p262
      $region50: #{fwd.7} parent=15 // pred_check_branch
        %462 = sbr.rel (%p460) target = $region52
      $region51: #{fwd.7} parent=15 // pred_region
        %p463 = scmp.lt.s32.totalorder %s25, 1
        %s464 = scalar_select %p463, %s25, 1
        %s465 = smul.addr %s464, 32
        %s466 = smul.addr %s465, 8
        %s467 = scalar_lea.vmem %s8, %s466
      $region52: #{fwd.7} parent=15 // pred_fallthru
        _
      // Predicated region
      $region53: #{fwd.7} parent=15 // pred_check
        %p468 = pneg %p288
      $region54: #{fwd.7} parent=15 // pred_check_branch
        %470 = sbr.rel (%p468) target = $region56
      $region55: #{fwd.7} parent=15 // pred_region
        %p471 = scmp.lt.s32.totalorder %s25, 1
        %s472 = scalar_select %p471, %s25, 1
        %s473 = scalar_lea.vmem %s9, %s472
      $region56: #{fwd.7} parent=15 // pred_fallthru
        _
      // Predicated region
      $region57: #{fwd.7} parent=15 // pred_check
        %p474 = pneg %p314
      $region58: #{fwd.7} parent=15 // pred_check_branch
        %476 = sbr.rel (%p474) target = $region60
      $region59: #{fwd.7} parent=15 // pred_region
        %p477 = scmp.lt.s32.totalorder %s25, 1
        %s478 = scalar_select %p477, %s25, 1
        %s479 = scalar_lea.vmem %s10, %s478
      $region60: #{fwd.7} parent=15 // pred_fallthru
        _
      // Predicated region
      $region61: #{fwd.7} parent=15 // pred_check
        %p480 = pneg %p340
      $region62: #{fwd.7} parent=15 // pred_check_branch
        %482 = sbr.rel (%p480) target = $region64
      $region63: #{fwd.7} parent=15 // pred_region
        %p483 = scmp.lt.s32.totalorder %s25, 1
        %s484 = scalar_select %p483, %s25, 1
        %s485 = scalar_lea.vmem %s11, %s484
      $region64: #{fwd.7} parent=15 // pred_fallthru
        _
    $region16: #{fwd.7} parent=5 // pred_fallthru
      _
    %p486 = scmp.le.s32.totalorder 1, %s18
    %p487 = scmp.lt.s32.totalorder %s18, 3
    %p488 = pnand %p486, %p487
    %p489 = pneg %p488
    // Predicated region
    $region65: #{fwd.7} parent=5 // pred_check
      _
    $region66: #{fwd.7} parent=5 // pred_check_branch
      %491 = sbr.rel (%p488) target = $region68
    $region67: #{fwd.7} parent=5 // pred_region
      %s492 = ssub.s32 %s18, 1
      %s493 = smul.u32 2, %s28
      %p494 = scmp.lt.s32.totalorder %s27, 1
      %s495 = scalar_select %p494, %s27, 1
      %p496 = scmp.lt.s32.totalorder %s493, 1
      %s497 = scalar_select %p496, %s493, 1
      %s498 = smul.addr %s495, 2
      %s499 = sadd.s32 %s497, %s498
      %s500 = smul.addr %s499, 8
      %s501 = scalar_lea.vmem %s0, %s500
      %p502 = pneg %p58
      %p503 = pneg %p55
      %s504 = smul.u32 2, %s28
      %p505 = scmp.lt.s32.totalorder %s27, 1
      %s506 = scalar_select %p505, %s27, 1
      %p507 = scmp.lt.s32.totalorder %s504, 1
      %s508 = scalar_select %p507, %s504, 1
      %s509 = smul.addr %s506, 2
      %s510 = sadd.s32 %s508, %s509
      %s511 = smul.addr %s510, 8
      %s512 = scalar_lea.vmem %s1, %s511
      %p513 = pneg %p86
      %p514 = pneg %p83
      %p515 = scmp.lt.s32.totalorder %s27, 1
      %s516 = scalar_select %p515, %s27, 1
      %s517 = smul.addr %s516, 16
      %s518 = smul.addr %s517, 8
      %s519 = scalar_lea.vmem %s2, %s518
      %p520 = pneg %p112
      %p521 = pneg %p109
      %p522 = scmp.lt.s32.totalorder %s27, 1
      %s523 = scalar_select %p522, %s27, 1
      %s524 = scalar_lea.vmem %s3, %s523
      %p525 = pneg %p138
      %p526 = pneg %p135
      %p527 = scmp.lt.s32.totalorder %s27, 1
      %s528 = scalar_select %p527, %s27, 1
      %s529 = scalar_lea.vmem %s4, %s528
      %p530 = pneg %p164
      %p531 = pneg %p161
      %p532 = scmp.lt.s32.totalorder %s27, 1
      %s533 = scalar_select %p532, %s27, 1
      %s534 = scalar_lea.vmem %s5, %s533
      %p535 = pneg %p190
      %p536 = pneg %p187
      %p537 = scmp.lt.s32.totalorder %s27, 1
      %s538 = scalar_select %p537, %s27, 1
      %s539 = smul.addr %s538, 32
      %s540 = smul.addr %s539, 8
      %s541 = scalar_lea.vmem %s6, %s540
      %p542 = pneg %p216
      %p543 = pneg %p213
      %p544 = scmp.lt.s32.totalorder %s27, 1
      %s545 = scalar_select %p544, %s27, 1
      %s546 = smul.addr %s545, 2
      %s547 = scalar_lea.vmem %s7, %s546
      %p548 = pneg %p242
      %p549 = pneg %p239
      %p550 = scmp.lt.s32.totalorder %s27, 1
      %s551 = scalar_select %p550, %s27, 1
      %s552 = smul.addr %s551, 32
      %s553 = smul.addr %s552, 8
      %s554 = scalar_lea.vmem %s8, %s553
      %p555 = pneg %p268
      %p556 = pneg %p265
      %p557 = scmp.lt.s32.totalorder %s27, 1
      %s558 = scalar_select %p557, %s27, 1
      %s559 = scalar_lea.vmem %s9, %s558
      %p560 = pneg %p294
      %p561 = pneg %p291
      %p562 = scmp.lt.s32.totalorder %s27, 1
      %s563 = scalar_select %p562, %s27, 1
      %s564 = scalar_lea.vmem %s10, %s563
      %p565 = pneg %p320
      %p566 = pneg %p317
      %p567 = scmp.lt.s32.totalorder %s27, 1
      %s568 = scalar_select %p567, %s27, 1
      %s569 = scalar_lea.vmem %s11, %s568
      %p570 = pneg %p346
      %p571 = pneg %p343
      %p572 = pneg %p374
      %p573 = pneg %p371
      %s574 = smul.u32 2, %s28
      %p575 = scmp.lt.s32.totalorder %s27, 1
      %s576 = scalar_select %p575, %s27, 1
      %p577 = scmp.lt.s32.totalorder %s574, 1
      %s578 = scalar_select %p577, %s574, 1
      %s579 = smul.addr %s576, 2
      %s580 = sadd.s32 %s578, %s579
      %s581 = smul.addr %s580, 8
      %s582 = scalar_lea.vmem %s12, %s581
      %s583 = smul.u32 2, %s28
      %p584 = scmp.lt.s32.totalorder %s27, 1
      %s585 = scalar_select %p584, %s27, 1
      %p586 = scmp.lt.s32.totalorder %s583, 1
      %s587 = scalar_select %p586, %s583, 1
      %s588 = smul.addr %s585, 2
      %s589 = sadd.s32 %s587, %s588
      %s590 = smul.addr %s589, 8
      %s591 = scalar_lea.vmem %s0, %s590
      %s592 = smul.u32 2, %s28
      %s593 = smul.u32 2, %s28
      %p594 = scmp.lt.s32.totalorder %s27, 1
      %s595 = scalar_select %p594, %s27, 1
      %p596 = scmp.lt.s32.totalorder %s593, 1
      %s597 = scalar_select %p596, %s593, 1
      %s598 = smul.addr %s595, 2
      %s599 = sadd.s32 %s597, %s598
      %s600 = smul.addr %s599, 8
      %s601 = scalar_lea.vmem %s1, %s600
      %s602 = smul.u32 2, %s28
      %p603 = scmp.lt.s32.totalorder %s27, 1
      %s604 = scalar_select %p603, %s27, 1
      %s605 = smul.addr %s604, 16
      %s606 = smul.addr %s605, 8
      %s607 = scalar_lea.vmem %s2, %s606
      %p608 = scmp.lt.s32.totalorder %s27, 1
      %s609 = scalar_select %p608, %s27, 1
      %s610 = scalar_lea.vmem %s3, %s609
      %p611 = scmp.lt.s32.totalorder %s27, 1
      %s612 = scalar_select %p611, %s27, 1
      %s613 = scalar_lea.vmem %s4, %s612
      %p614 = scmp.lt.s32.totalorder %s27, 1
      %s615 = scalar_select %p614, %s27, 1
      %s616 = scalar_lea.vmem %s5, %s615
      %p617 = scmp.lt.s32.totalorder %s27, 1
      %s618 = scalar_select %p617, %s27, 1
      %s619 = smul.addr %s618, 32
      %s620 = smul.addr %s619, 8
      %s621 = scalar_lea.vmem %s6, %s620
      %p622 = scmp.lt.s32.totalorder %s27, 1
      %s623 = scalar_select %p622, %s27, 1
      %s624 = smul.addr %s623, 2
      %s625 = scalar_lea.vmem %s7, %s624
      %p626 = scmp.lt.s32.totalorder %s27, 1
      %s627 = scalar_select %p626, %s27, 1
      %s628 = smul.addr %s627, 32
      %s629 = smul.addr %s628, 8
      %s630 = scalar_lea.vmem %s8, %s629
      %p631 = scmp.lt.s32.totalorder %s27, 1
      %s632 = scalar_select %p631, %s27, 1
      %s633 = scalar_lea.vmem %s9, %s632
      %p634 = scmp.lt.s32.totalorder %s27, 1
      %s635 = scalar_select %p634, %s27, 1
      %s636 = scalar_lea.vmem %s10, %s635
      %p637 = scmp.lt.s32.totalorder %s27, 1
      %s638 = scalar_select %p637, %s27, 1
      %s639 = scalar_lea.vmem %s11, %s638
      %s640 = smul.u32 2, %s28
      %p641 = scmp.lt.s32.totalorder %s27, 1
      %s642 = scalar_select %p641, %s27, 1
      %p643 = scmp.lt.s32.totalorder %s640, 1
      %s644 = scalar_select %p643, %s640, 1
      %s645 = smul.addr %s642, 2
      %s646 = sadd.s32 %s644, %s645
      %s647 = smul.addr %s646, 8
      %s648 = scalar_lea.vmem %s12, %s647
      %s649 = smul.u32 2, %s28
      %v650 = vld [vmem:[%s591] sm:$0xff]
      %v651 = vld [vmem:[%s591 + $0x8] sm:$0xff]
      %v652 = vld [vmem:[%s607] sm:$0xff]
      %v653 = vld [vmem:[%s607 + $0x8] sm:$0xff]
      %v654 = vld [vmem:[%s607 + $0x10] sm:$0xff]
      %v655 = vld [vmem:[%s607 + $0x18] sm:$0xff]
      %v656 = vld [vmem:[%s607 + $0x20] sm:$0xff]
      %v657 = vld [vmem:[%s607 + $0x28] sm:$0xff]
      %v658 = vld [vmem:[%s607 + $0x30] sm:$0xff]
      %v659 = vld [vmem:[%s607 + $0x38] sm:$0xff]
      %v660 = vld [vmem:[%s607 + $0x40] sm:$0xff]
      %v661 = vld [vmem:[%s607 + $0x48] sm:$0xff]
      %v662 = vld [vmem:[%s607 + $0x50] sm:$0xff]
      %v663 = vld [vmem:[%s607 + $0x58] sm:$0xff]
      %v664 = vld [vmem:[%s607 + $0x60] sm:$0xff]
      %v665 = vld [vmem:[%s607 + $0x68] sm:$0xff]
      %v666 = vld [vmem:[%s607 + $0x70] sm:$0xff]
      %v667 = vld [vmem:[%s607 + $0x78] sm:$0xff]
      %v668 = vld [vmem:[%s610] sm:$0x1]
      %v670 = vlaneseq
      %v671 = vshrl.u32 %v670, 7
      %v672 = vsub.s32 0, %v671
      %v673 = vrot.slane %v668, %v672
      %675 = vmatprep.subr.mxu0 0.0
      %676 = vmatpush1.msra.mxu0 %v652
      %677 = vmatprep.subr.mxu0 0.0
      %678 = vmatpush1.msra.mxu0 %v653
      %679 = vmatprep.subr.mxu0 0.0
      %680 = vmatpush1.msra.mxu0 %v654
      %681 = vmatprep.subr.mxu0 0.0
      %682 = vmatpush1.msra.mxu0 %v655
      %683 = vmatprep.subr.mxu0 0.0
      %684 = vmatpush1.msra.mxu0 %v656
      %685 = vmatprep.subr.mxu0 0.0
      %686 = vmatpush1.msra.mxu0 %v657
      %687 = vmatprep.subr.mxu0 0.0
      %688 = vmatpush1.msra.mxu0 %v658
      %689 = vmatprep.subr.mxu0 0.0
      %690 = vmatpush1.msra.mxu0 %v659
      %691 = vmatprep.subr.mxu0 0.0
      %692 = vmatpush1.msra.mxu0 %v660
      %693 = vmatprep.subr.mxu0 0.0
      %694 = vmatpush1.msra.mxu0 %v661
      %695 = vmatprep.subr.mxu0 0.0
      %696 = vmatpush1.msra.mxu0 %v662
      %697 = vmatprep.subr.mxu0 0.0
      %698 = vmatpush1.msra.mxu0 %v663
      %699 = vmatprep.subr.mxu0 0.0
      %700 = vmatpush1.msra.mxu0 %v664
      %701 = vmatprep.subr.mxu0 0.0
      %702 = vmatpush1.msra.mxu0 %v665
      %703 = vmatprep.subr.mxu0 0.0
      %704 = vmatpush1.msra.mxu0 %v666
      %705 = vmatprep.subr.mxu0 0.0
      %706 = vmatpush1.msra.mxu0 %v667
      %707 = vmatprep.subr.mxu0 0.0
      %708 = vmatpush1.msra.mxu0 0.0
      %709 = vmatprep.subr.mxu0 0.0
      %710 = vmatpush1.msra.mxu0 0.0
      %711 = vmatprep.subr.mxu0 0.0
      %712 = vmatpush1.msra.mxu0 0.0
      %713 = vmatprep.subr.mxu0 0.0
      %714 = vmatpush1.msra.mxu0 0.0
      %715 = vmatprep.subr.mxu0 0.0
      %716 = vmatpush1.msra.mxu0 0.0
      %717 = vmatprep.subr.mxu0 0.0
      %718 = vmatpush1.msra.mxu0 0.0
      %719 = vmatprep.subr.mxu0 0.0
      %720 = vmatpush1.msra.mxu0 0.0
      %721 = vmatprep.subr.mxu0 0.0
      %722 = vmatpush1.msra.mxu0 0.0
      %723 = vmatprep.subr.mxu0 0.0
      %724 = vmatpush1.msra.mxu0 0.0
      %725 = vmatprep.subr.mxu0 0.0
      %726 = vmatpush1.msra.mxu0 0.0
      %727 = vmatprep.subr.mxu0 0.0
      %728 = vmatpush1.msra.mxu0 0.0
      %729 = vmatprep.subr.mxu0 0.0
      %730 = vmatpush1.msra.mxu0 0.0
      %731 = vmatprep.subr.mxu0 0.0
      %732 = vmatpush1.msra.mxu0 0.0
      %733 = vmatprep.subr.mxu0 0.0
      %734 = vmatpush1.msra.mxu0 0.0
      %735 = vmatprep.subr.mxu0 0.0
      %736 = vmatpush1.msra.mxu0 0.0
      %737 = vmatprep.subr.mxu0 0.0
      %738 = vmatpush1.msra.mxu0 0.0
      %739 = vmatprep.mubr.f32.mxu0 0.0
      %740 = vmatmul.mubr.f32.gmra.mrb[0].mxu0 %v650
      %v741 = vpop.f32.mrb[0].mxu0
      %v742 = vadd.f32 %v673, %v741
      %v743 = vpop.f32.mrb[0].mxu0
      %744 = vmatprep.mubr.f32.mxu0 0.0
      %745 = vmatmul.mubr.f32.gmra.mrb[0].mxu0 %v651
      %v746 = vpop.f32.mrb[0].mxu0
      %v747 = vadd.f32 %v673, %v746
      %v748 = vpop.f32.mrb[0].mxu0
      %749 = vdwg.mxu0
      %v750 = vld [vmem:[%s601] sm:$0xff]
      %v751 = vld [vmem:[%s601 + $0x8] sm:$0xff]
      %v752 = vadd.f32 %v750, %v742
      %v753 = vadd.f32 %v751, %v747
      %v754 = vld [vmem:[%s613] sm:$0x1]
      %v755 = vld [vmem:[%s616] sm:$0x1]
      %756 = vadd.xlane.f32.xlu0 %v752
      %v757 = vpop.xlane.xlu0 %756
      %758 = vadd.xlane.f32.xlu0 %v753
      %v759 = vpop.xlane.xlu0 %758
      %v760 = vrcp.pop 128.0
      %v761 = vmul.f32 %v757, %v760
      %v762 = vmul.f32 %v759, %v760
      %v763 = vsub.f32 %v752, %v761
      %v764 = vsub.f32 %v753, %v762
      %v765 = vmul.f32 %v763, %v763
      %v766 = vmul.f32 %v764, %v764
      %767 = vadd.xlane.f32.xlu0 %v765
      %v768 = vpop.xlane.xlu0 %767
      %769 = vadd.xlane.f32.xlu0 %v766
      %v770 = vpop.xlane.xlu0 %769
      %v771 = vmul.f32 %v768, %v760
      %v772 = vmul.f32 %v770, %v760
      %v773 = vadd.f32 %v771, 1e-05
      %v774 = vadd.f32 %v772, 1e-05
      %v775 = vrsqrt.pop %v773
      %v776 = vrsqrt.pop %v774
      %v777 = vmul.f32 %v763, %v775
      %v778 = vmul.f32 %v764, %v776
      %v780 = vlaneseq
      %v781 = vshrl.u32 %v780, 7
      %v782 = vsub.s32 0, %v781
      %v783 = vrot.slane %v754, %v782
      %v785 = vmul.f32 %v777, %v783
      %v786 = vmul.f32 %v778, %v783
      %v788 = vlaneseq
      %v789 = vshrl.u32 %v788, 7
      %v790 = vsub.s32 0, %v789
      %v791 = vrot.slane %v755, %v790
      %v793 = vadd.f32 %v785, %v791
      %v794 = vadd.f32 %v786, %v791
      %v795 = vld [vmem:[%s621] sm:$0xff]
      %v796 = vld [vmem:[%s621 + $0x8] sm:$0xff]
      %v797 = vld [vmem:[%s621 + $0x10] sm:$0xff]
      %v798 = vld [vmem:[%s621 + $0x18] sm:$0xff]
      %v799 = vld [vmem:[%s621 + $0x20] sm:$0xff]
      %v800 = vld [vmem:[%s621 + $0x28] sm:$0xff]
      %v801 = vld [vmem:[%s621 + $0x30] sm:$0xff]
      %v802 = vld [vmem:[%s621 + $0x38] sm:$0xff]
      %v803 = vld [vmem:[%s621 + $0x40] sm:$0xff]
      %v804 = vld [vmem:[%s621 + $0x48] sm:$0xff]
      %v805 = vld [vmem:[%s621 + $0x50] sm:$0xff]
      %v806 = vld [vmem:[%s621 + $0x58] sm:$0xff]
      %v807 = vld [vmem:[%s621 + $0x60] sm:$0xff]
      %v808 = vld [vmem:[%s621 + $0x68] sm:$0xff]
      %v809 = vld [vmem:[%s621 + $0x70] sm:$0xff]
      %v810 = vld [vmem:[%s621 + $0x78] sm:$0xff]
      %v811 = vld [vmem:[%s621 + $0x80] sm:$0xff]
      %v812 = vld [vmem:[%s621 + $0x88] sm:$0xff]
      %v813 = vld [vmem:[%s621 + $0x90] sm:$0xff]
      %v814 = vld [vmem:[%s621 + $0x98] sm:$0xff]
      %v815 = vld [vmem:[%s621 + $0xa0] sm:$0xff]
      %v816 = vld [vmem:[%s621 + $0xa8] sm:$0xff]
      %v817 = vld [vmem:[%s621 + $0xb0] sm:$0xff]
      %v818 = vld [vmem:[%s621 + $0xb8] sm:$0xff]
      %v819 = vld [vmem:[%s621 + $0xc0] sm:$0xff]
      %v820 = vld [vmem:[%s621 + $0xc8] sm:$0xff]
      %v821 = vld [vmem:[%s621 + $0xd0] sm:$0xff]
      %v822 = vld [vmem:[%s621 + $0xd8] sm:$0xff]
      %v823 = vld [vmem:[%s621 + $0xe0] sm:$0xff]
      %v824 = vld [vmem:[%s621 + $0xe8] sm:$0xff]
      %v825 = vld [vmem:[%s621 + $0xf0] sm:$0xff]
      %v826 = vld [vmem:[%s621 + $0xf8] sm:$0xff]
      %v827 = vld [vmem:[%s625] sm:$0x3]
      %v829 = vlaneseq
      %v830 = vshrl.u32 %v829, 7
      %v831 = vsub.s32 0, %v830
      %v832 = vrot.slane %v827, %v831
      %v833 = vlaneseq
      %v834 = vshrl.u32 %v833, 7
      %v835 = vsub.s32 1, %v834
      %v836 = vrot.slane %v827, %v835
      %839 = vmatprep.subr.mxu0 %v796
      %840 = vmatpush1.msra.mxu0 %v795
      %841 = vmatprep.subr.mxu0 %v798
      %842 = vmatpush1.msra.mxu0 %v797
      %843 = vmatprep.subr.mxu0 %v800
      %844 = vmatpush1.msra.mxu0 %v799
      %845 = vmatprep.subr.mxu0 %v802
      %846 = vmatpush1.msra.mxu0 %v801
      %847 = vmatprep.subr.mxu0 %v804
      %848 = vmatpush1.msra.mxu0 %v803
      %849 = vmatprep.subr.mxu0 %v806
      %850 = vmatpush1.msra.mxu0 %v805
      %851 = vmatprep.subr.mxu0 %v808
      %852 = vmatpush1.msra.mxu0 %v807
      %853 = vmatprep.subr.mxu0 %v810
      %854 = vmatpush1.msra.mxu0 %v809
      %855 = vmatprep.subr.mxu0 %v812
      %856 = vmatpush1.msra.mxu0 %v811
      %857 = vmatprep.subr.mxu0 %v814
      %858 = vmatpush1.msra.mxu0 %v813
      %859 = vmatprep.subr.mxu0 %v816
      %860 = vmatpush1.msra.mxu0 %v815
      %861 = vmatprep.subr.mxu0 %v818
      %862 = vmatpush1.msra.mxu0 %v817
      %863 = vmatprep.subr.mxu0 %v820
      %864 = vmatpush1.msra.mxu0 %v819
      %865 = vmatprep.subr.mxu0 %v822
      %866 = vmatpush1.msra.mxu0 %v821
      %867 = vmatprep.subr.mxu0 %v824
      %868 = vmatpush1.msra.mxu0 %v823
      %869 = vmatprep.subr.mxu0 %v826
      %870 = vmatpush1.msra.mxu0 %v825
      %871 = vmatprep.subr.mxu0 0.0
      %872 = vmatpush1.msra.mxu0 0.0
      %873 = vmatprep.subr.mxu0 0.0
      %874 = vmatpush1.msra.mxu0 0.0
      %875 = vmatprep.subr.mxu0 0.0
      %876 = vmatpush1.msra.mxu0 0.0
      %877 = vmatprep.subr.mxu0 0.0
      %878 = vmatpush1.msra.mxu0 0.0
      %879 = vmatprep.subr.mxu0 0.0
      %880 = vmatpush1.msra.mxu0 0.0
      %881 = vmatprep.subr.mxu0 0.0
      %882 = vmatpush1.msra.mxu0 0.0
      %883 = vmatprep.subr.mxu0 0.0
      %884 = vmatpush1.msra.mxu0 0.0
      %885 = vmatprep.subr.mxu0 0.0
      %886 = vmatpush1.msra.mxu0 0.0
      %887 = vmatprep.subr.mxu0 0.0
      %888 = vmatpush1.msra.mxu0 0.0
      %889 = vmatprep.subr.mxu0 0.0
      %890 = vmatpush1.msra.mxu0 0.0
      %891 = vmatprep.subr.mxu0 0.0
      %892 = vmatpush1.msra.mxu0 0.0
      %893 = vmatprep.subr.mxu0 0.0
      %894 = vmatpush1.msra.mxu0 0.0
      %895 = vmatprep.subr.mxu0 0.0
      %896 = vmatpush1.msra.mxu0 0.0
      %897 = vmatprep.subr.mxu0 0.0
      %898 = vmatpush1.msra.mxu0 0.0
      %899 = vmatprep.subr.mxu0 0.0
      %900 = vmatpush1.msra.mxu0 0.0
      %901 = vmatprep.subr.mxu0 0.0
      %902 = vmatpush1.msra.mxu0 0.0
      %903 = vmatprep.mubr.f32.mxu0 0.0
      %904 = vmatmul.mubr.f32.gmra.mrb[0].mxu0 %v793
      %v905 = vpop.f32.mrb[0].mxu0
      %v906 = vadd.f32 %v832, %v905
      %v907 = vpop.f32.mrb[0].mxu0
      %v908 = vadd.f32 %v836, %v907
      %909 = vmatprep.mubr.f32.mxu0 0.0
      %910 = vmatmul.mubr.f32.gmra.mrb[0].mxu0 %v794
      %v911 = vpop.f32.mrb[0].mxu0
      %v912 = vadd.f32 %v832, %v911
      %v913 = vpop.f32.mrb[0].mxu0
      %v914 = vadd.f32 %v836, %v913
      %915 = vdwg.mxu0
      %v916 = vmax.f32 %v906, 0.0
      %v917 = vmax.f32 %v908, 0.0
      %v918 = vmax.f32 %v912, 0.0
      %v919 = vmax.f32 %v914, 0.0
      %v920 = vld [vmem:[%s630] sm:$0xff]
      %v921 = vld [vmem:[%s630 + $0x8] sm:$0xff]
      %v922 = vld [vmem:[%s630 + $0x10] sm:$0xff]
      %v923 = vld [vmem:[%s630 + $0x18] sm:$0xff]
      %v924 = vld [vmem:[%s630 + $0x20] sm:$0xff]
      %v925 = vld [vmem:[%s630 + $0x28] sm:$0xff]
      %v926 = vld [vmem:[%s630 + $0x30] sm:$0xff]
      %v927 = vld [vmem:[%s630 + $0x38] sm:$0xff]
      %v928 = vld [vmem:[%s630 + $0x40] sm:$0xff]
      %v929 = vld [vmem:[%s630 + $0x48] sm:$0xff]
      %v930 = vld [vmem:[%s630 + $0x50] sm:$0xff]
      %v931 = vld [vmem:[%s630 + $0x58] sm:$0xff]
      %v932 = vld [vmem:[%s630 + $0x60] sm:$0xff]
      %v933 = vld [vmem:[%s630 + $0x68] sm:$0xff]
      %v934 = vld [vmem:[%s630 + $0x70] sm:$0xff]
      %v935 = vld [vmem:[%s630 + $0x78] sm:$0xff]
      %v936 = vld [vmem:[%s630 + $0x80] sm:$0xff]
      %v937 = vld [vmem:[%s630 + $0x88] sm:$0xff]
      %v938 = vld [vmem:[%s630 + $0x90] sm:$0xff]
      %v939 = vld [vmem:[%s630 + $0x98] sm:$0xff]
      %v940 = vld [vmem:[%s630 + $0xa0] sm:$0xff]
      %v941 = vld [vmem:[%s630 + $0xa8] sm:$0xff]
      %v942 = vld [vmem:[%s630 + $0xb0] sm:$0xff]
      %v943 = vld [vmem:[%s630 + $0xb8] sm:$0xff]
      %v944 = vld [vmem:[%s630 + $0xc0] sm:$0xff]
      %v945 = vld [vmem:[%s630 + $0xc8] sm:$0xff]
      %v946 = vld [vmem:[%s630 + $0xd0] sm:$0xff]
      %v947 = vld [vmem:[%s630 + $0xd8] sm:$0xff]
      %v948 = vld [vmem:[%s630 + $0xe0] sm:$0xff]
      %v949 = vld [vmem:[%s630 + $0xe8] sm:$0xff]
      %v950 = vld [vmem:[%s630 + $0xf0] sm:$0xff]
      %v951 = vld [vmem:[%s630 + $0xf8] sm:$0xff]
      %v952 = vld [vmem:[%s633] sm:$0x1]
      %v954 = vlaneseq
      %v955 = vshrl.u32 %v954, 7
      %v956 = vsub.s32 0, %v955
      %v957 = vrot.slane %v952, %v956
      %959 = vmatprep.subr.mxu0 0.0
      %960 = vmatpush1.msra.mxu0 %v920
      %961 = vmatprep.subr.mxu0 0.0
      %962 = vmatpush1.msra.mxu0 %v921
      %963 = vmatprep.subr.mxu0 0.0
      %964 = vmatpush1.msra.mxu0 %v922
      %965 = vmatprep.subr.mxu0 0.0
      %966 = vmatpush1.msra.mxu0 %v923
      %967 = vmatprep.subr.mxu0 0.0
      %968 = vmatpush1.msra.mxu0 %v924
      %969 = vmatprep.subr.mxu0 0.0
      %970 = vmatpush1.msra.mxu0 %v925
      %971 = vmatprep.subr.mxu0 0.0
      %972 = vmatpush1.msra.mxu0 %v926
      %973 = vmatprep.subr.mxu0 0.0
      %974 = vmatpush1.msra.mxu0 %v927
      %975 = vmatprep.subr.mxu0 0.0
      %976 = vmatpush1.msra.mxu0 %v928
      %977 = vmatprep.subr.mxu0 0.0
      %978 = vmatpush1.msra.mxu0 %v929
      %979 = vmatprep.subr.mxu0 0.0
      %980 = vmatpush1.msra.mxu0 %v930
      %981 = vmatprep.subr.mxu0 0.0
      %982 = vmatpush1.msra.mxu0 %v931
      %983 = vmatprep.subr.mxu0 0.0
      %984 = vmatpush1.msra.mxu0 %v932
      %985 = vmatprep.subr.mxu0 0.0
      %986 = vmatpush1.msra.mxu0 %v933
      %987 = vmatprep.subr.mxu0 0.0
      %988 = vmatpush1.msra.mxu0 %v934
      %989 = vmatprep.subr.mxu0 0.0
      %990 = vmatpush1.msra.mxu0 %v935
      %991 = vmatprep.subr.mxu0 0.0
      %992 = vmatpush1.msra.mxu0 %v936
      %993 = vmatprep.subr.mxu0 0.0
      %994 = vmatpush1.msra.mxu0 %v937
      %995 = vmatprep.subr.mxu0 0.0
      %996 = vmatpush1.msra.mxu0 %v938
      %997 = vmatprep.subr.mxu0 0.0
      %998 = vmatpush1.msra.mxu0 %v939
      %999 = vmatprep.subr.mxu0 0.0
      %1000 = vmatpush1.msra.mxu0 %v940
      %1001 = vmatprep.subr.mxu0 0.0
      %1002 = vmatpush1.msra.mxu0 %v941
      %1003 = vmatprep.subr.mxu0 0.0
      %1004 = vmatpush1.msra.mxu0 %v942
      %1005 = vmatprep.subr.mxu0 0.0
      %1006 = vmatpush1.msra.mxu0 %v943
      %1007 = vmatprep.subr.mxu0 0.0
      %1008 = vmatpush1.msra.mxu0 %v944
      %1009 = vmatprep.subr.mxu0 0.0
      %1010 = vmatpush1.msra.mxu0 %v945
      %1011 = vmatprep.subr.mxu0 0.0
      %1012 = vmatpush1.msra.mxu0 %v946
      %1013 = vmatprep.subr.mxu0 0.0
      %1014 = vmatpush1.msra.mxu0 %v947
      %1015 = vmatprep.subr.mxu0 0.0
      %1016 = vmatpush1.msra.mxu0 %v948
      %1017 = vmatprep.subr.mxu0 0.0
      %1018 = vmatpush1.msra.mxu0 %v949
      %1019 = vmatprep.subr.mxu0 0.0
      %1020 = vmatpush1.msra.mxu0 %v950
      %1021 = vmatprep.subr.mxu0 0.0
      %1022 = vmatpush1.msra.mxu0 %v951
      %1023 = vmatprep.mubr.f32.mxu0 %v917
      %1024 = vmatmul.mubr.f32.gmra.mrb[0].mxu0 %v916
      %v1025 = vpop.f32.mrb[0].mxu0
      %v1026 = vadd.f32 %v957, %v1025
      %v1027 = vpop.f32.mrb[0].mxu0
      %1028 = vmatprep.mubr.f32.mxu0 %v919
      %1029 = vmatmul.mubr.f32.gmra.mrb[0].mxu0 %v918
      %v1030 = vpop.f32.mrb[0].mxu0
      %v1031 = vadd.f32 %v957, %v1030
      %v1032 = vpop.f32.mrb[0].mxu0
      %1033 = vdwg.mxu0
      %v1034 = vadd.f32 %v793, %v1026
      %v1035 = vadd.f32 %v794, %v1031
      %v1036 = vld [vmem:[%s636] sm:$0x1]
      %v1037 = vld [vmem:[%s639] sm:$0x1]
      %1038 = vadd.xlane.f32.xlu0 %v1034
      %v1039 = vpop.xlane.xlu0 %1038
      %1040 = vadd.xlane.f32.xlu0 %v1035
      %v1041 = vpop.xlane.xlu0 %1040
      %v1042 = vmul.f32 %v1039, %v760
      %v1043 = vmul.f32 %v1041, %v760
      %v1044 = vsub.f32 %v1034, %v1042
      %v1045 = vsub.f32 %v1035, %v1043
      %v1046 = vmul.f32 %v1044, %v1044
      %v1047 = vmul.f32 %v1045, %v1045
      %1048 = vadd.xlane.f32.xlu0 %v1046
      %v1049 = vpop.xlane.xlu0 %1048
      %1050 = vadd.xlane.f32.xlu0 %v1047
      %v1051 = vpop.xlane.xlu0 %1050
      %v1052 = vmul.f32 %v1049, %v760
      %v1053 = vmul.f32 %v1051, %v760
      %v1054 = vadd.f32 %v1052, 1e-05
      %v1055 = vadd.f32 %v1053, 1e-05
      %v1056 = vrsqrt.pop %v1054
      %v1057 = vrsqrt.pop %v1055
      %v1058 = vmul.f32 %v1044, %v1056
      %v1059 = vmul.f32 %v1045, %v1057
      %v1061 = vlaneseq
      %v1062 = vshrl.u32 %v1061, 7
      %v1063 = vsub.s32 0, %v1062
      %v1064 = vrot.slane %v1036, %v1063
      %v1066 = vmul.f32 %v1058, %v1064
      %v1067 = vmul.f32 %v1059, %v1064
      %v1069 = vlaneseq
      %v1070 = vshrl.u32 %v1069, 7
      %v1071 = vsub.s32 0, %v1070
      %v1072 = vrot.slane %v1037, %v1071
      %v1074 = vadd.f32 %v1066, %v1072
      %v1075 = vadd.f32 %v1067, %v1072
      %1076 = vst [vmem:[%s648] sm:$0xff] %v1074
      %1077 = vst [vmem:[%s648 + $0x8] sm:$0xff] %v1075
      %s1078 = smul.u32 2, %s28
      %p1079 = scmp.lt.s32.totalorder %s27, 1
      %s1080 = scalar_select %p1079, %s27, 1
      %p1081 = scmp.lt.s32.totalorder %s1078, 1
      %s1082 = scalar_select %p1081, %s1078, 1
      %s1083 = smul.addr %s1080, 2
      %s1084 = sadd.s32 %s1082, %s1083
      %s1085 = smul.addr %s1084, 8
      %s1086 = scalar_lea.vmem %s12, %s1085
      // Predicated region
      $region69: #{fwd.7} parent=67 // pred_check
        %p1087 = pneg %p371
      $region70: #{fwd.7} parent=67 // pred_check_branch
        %1089 = sbr.rel (%p1087) target = $region72
      $region71: #{fwd.7} parent=67 // pred_region
        %s1090 = smul.u32 2, %s28
      $region72: #{fwd.7} parent=67 // pred_fallthru
        _
    $region68: #{fwd.7} parent=5 // pred_fallthru
      _
    %p1091 = scmp.le.s32.totalorder 2, %s18
    // Predicated region
    $region73: #{fwd.7} parent=5 // pred_check
      %p1092 = pneg %p1091
    $region74: #{fwd.7} parent=5 // pred_check_branch
      %1094 = sbr.rel (%p1092) target = $region76
    $region75: #{fwd.7} parent=5 // pred_region
      %s1095 = ssub.s32 %s18, 2
      // Predicated region
      $region77: #{fwd.7} parent=75 // pred_check
        %p1096 = pneg %p377
      $region78: #{fwd.7} parent=75 // pred_check_branch
        %1098 = sbr.rel (%p1096) target = $region80
      $region79: #{fwd.7} parent=75 // pred_region
        %s1099 = smul.u32 2, %s30
        %p1100 = scmp.lt.s32.totalorder %s29, 1
        %s1101 = scalar_select %p1100, %s29, 1
        %p1102 = scmp.lt.s32.totalorder %s1099, 1
        %s1103 = scalar_select %p1102, %s1099, 1
        %s1104 = smul.addr %s1101, 2
        %s1105 = sadd.s32 %s1103, %s1104
        %s1106 = smul.addr %s1105, 8
        %s1107 = scalar_lea.vmem %s12, %s1106
      $region80: #{fwd.7} parent=75 // pred_fallthru
        _
    $region76: #{fwd.7} parent=5 // pred_fallthru
      _
  $region6: #{fwd.7} parent=0 // loop_footer
    %s22 = sadd.s32 1, %s18
  $region7: #{fwd.7} parent=0 // loop_footer_branch
    %17 = sbr.rel target = $region3
  $region8: #{fwd.7} parent=0 // loop_exit
    _

</llo_original>
